<compile_context>
chip_gen: v7x
topology: tpu7x:2x2x1
jax: 0.10.0
libtpu: 0.0.40
codegen_flags: <defaults>
</compile_context>

<pallas_src>
import functools

import jax
import jax.numpy as jnp
from jax import lax
from jax.experimental import pallas as pl
from jax.experimental.pallas import tpu as pltpu

BN_EPS = 1e-5
LANE = 128


def _round_up(x, m):
    return (x + m - 1) // m * m


# ----------------------------- fused Pallas kernel ---------------------------


def fused_postnet_kernel(x_ref, proj_ref, *rest, n_layers, ksize, seq_len, pad,
                         cins, couts):
    """One batch element per grid step; all layers use VMEM-resident activations.

    rest = [w_0, scale_0, bias_0, ..., w_{n-1}, scale_{n-1}, bias_{n-1},
            o_ref, buf_a, buf_b, col_buf]
      w_i     : (K*Cin_i, Cout_i) compute dtype   im2col-reshaped conv weight
      scale_i : (1, Cout_i) f32                   folded BN scale = gamma/sqrt(var+eps)
      bias_i  : (1, Cout_i) f32                   folded conv bias + BN shift
      buf_a/b : (Lp, Cmax)  VMEM ping-pong activations, Lp = L + 2*pad
      col_buf : (L, K*Cin_max) VMEM im2col staging buffer
    """
    lrefs = rest[:3 * n_layers]
    o_ref = rest[3 * n_layers]
    buf_a = rest[3 * n_layers + 1]
    buf_b = rest[3 * n_layers + 2]
    col_buf = rest[3 * n_layers + 3]
    L = seq_len

    # Zero ONLY the 2*pad halo rows (they are the conv zero-padding).  Interior rows
    # are fully rewritten for every channel a later layer reads, and lane-padded
    # output channels are exact zeros because weights/scale/bias are zero-padded.
    if pad > 0:
        zero_rows = jnp.zeros((pad, buf_a.shape[1]), buf_a.dtype)
        buf_a[:pad, :] = zero_rows
        buf_a[pad + L:, :] = zero_rows
        buf_b[:pad, :] = zero_rows
        buf_b[pad + L:, :] = zero_rows

    # Stage the layer-0 input; the speaker-projection broadcast-add is fused here
    # (f32 add, cast to compute dtype only when writing the VMEM activation buffer).
    x0 = x_ref[0] + proj_ref[0]                       # (L, Cin0_p) + (L, 1) -> f32
    buf_a[pad:pad + L, :cins[0]] = x0.astype(buf_a.dtype)

    bufs = (buf_a, buf_b)
    for i in range(n_layers):                         # static unroll over layers
        w_ref = lrefs[3 * i]
        scale_ref = lrefs[3 * i + 1]
        bias_ref = lrefs[3 * i + 2]
        src = bufs[i % 2]
        dst = bufs[(i + 1) % 2]
        cin, cout = cins[i], couts[i]

        # im2col: K sublane-shifted copies -> one lane-dense (L, K*cin) MXU operand.
        for k in range(ksize):
            col_buf[:, k * cin:(k + 1) * cin] = src[k:k + L, :cin]
        # Single MXU contraction per layer, f32 accumulation.
        y = jnp.dot(col_buf[:, :ksize * cin], w_ref[...],
                    preferred_element_type=jnp.float32)
        # Folded conv bias + eval-mode BatchNorm, f32 epilogue.
        y = y * scale_ref[...] + bias_ref[...]
        if i < n_layers - 1:
            dst[pad:pad + L, :cout] = jnp.tanh(y).astype(dst.dtype)
        else:
            o_ref[0] = y.astype(o_ref.dtype)


# --------------------------------- wrapper -----------------------------------


def _build_and_run(x_in, proj_in, layer_args, *, kernel, B, L, K, Lp, cins_p,
                   couts_p, c_max, cin_max, compute_dtype, single_buffer_weights):
    n_layers = len(cins_p)
    wmode = {"pipeline_mode": pl.Buffered(1)} if single_buffer_weights else {}

    layer_specs = []
    for i in range(n_layers):
        layer_specs += [
            pl.BlockSpec((K * cins_p[i], couts_p[i]), lambda b: (0, 0), **wmode),
            pl.BlockSpec((1, couts_p[i]), lambda b: (0, 0), **wmode),
            pl.BlockSpec((1, couts_p[i]), lambda b: (0, 0), **wmode),
        ]

    # VMEM budget from actual buffer sizes (+ slack), kept under v7x's 64 MiB physical.
    cbytes = jnp.dtype(compute_dtype).itemsize
    wbuf = 1 if single_buffer_weights else 2
    weight_bytes = wbuf * sum(K * cins_p[i] * couts_p[i] * cbytes + 2 * couts_p[i] * 4
                              for i in range(n_layers))
    scratch_bytes = 2 * Lp * c_max * cbytes + L * K * cin_max * cbytes
    io_bytes = 2 * (L * cins_p[0] * 4 + L * 4 + L * couts_p[-1] * 4)
    vmem_limit = int(weight_bytes + scratch_bytes + io_bytes) + (8 << 20)
    vmem_limit = max(16 << 20, min(vmem_limit, 56 << 20))

    return pl.pallas_call(
        kernel,
        out_shape=jax.ShapeDtypeStruct((B, L, couts_p[-1]), jnp.float32),
        grid=(B,),
        in_specs=[
            pl.BlockSpec((1, L, cins_p[0]), lambda b: (b, 0, 0)),   # x (lane-padded)
            pl.BlockSpec((1, L, 1), lambda b: (b, 0, 0)),           # speaker proj
        ] + layer_specs,
        out_specs=pl.BlockSpec((1, L, couts_p[-1]), lambda b: (b, 0, 0)),
        scratch_shapes=[
            pltpu.VMEM((Lp, c_max), compute_dtype),        # ping
            pltpu.VMEM((Lp, c_max), compute_dtype),        # pong
            pltpu.VMEM((L, K * cin_max), compute_dtype),   # im2col staging
        ],
        compiler_params=pltpu.CompilerParams(
            dimension_semantics=("parallel",),
            vmem_limit_bytes=vmem_limit,
        ),
    )(x_in, proj_in, *layer_args)


def multi_speaker_postnet_pallas(x_ncl, wavs, params, *, compute_dtype=jnp.bfloat16):
    """x_ncl: (B, n_mel, T), wavs: (B, spk_dim) -> (B, n_mel, T)."""
    B, n_mel, T = x_ncl.shape
    convs = params["convs"]
    n_layers = len(convs)
    K = convs[0][0].shape[-1]
    pad = (K - 1) // 2
    L = T
    Lp = L + 2 * pad

    # The original (B,C,T) + (B,1,T) broadcast requires the Linear out dim == T.
    assert params["lin_w"].shape[1] == T, "speaker projection dim must equal T"

    # Speaker projection: tiny (B,spk)@(spk,T) linear done in plain XLA; the
    # broadcast-add itself is fused into the kernel (layer-0 staging).
    proj = wavs.astype(jnp.float32) @ params["lin_w"] + params["lin_b"]   # (B, T)
    proj_in = proj[:, :, None].astype(jnp.float32)                        # (B, T, 1)

    cins = [w.shape[1] for (w, *_r) in convs]
    couts = [w.shape[0] for (w, *_r) in convs]
    # Channel chaining so lane-padded columns are never read as real channels.
    for i in range(n_layers - 1):
        assert cins[i + 1] == couts[i], (cins, couts)
    cins_p = [_round_up(c, LANE) for c in cins]
    couts_p = [_round_up(c, LANE) for c in couts]
    for i in range(n_layers - 1):
        assert cins_p[i + 1] == couts_p[i], (cins_p, couts_p)
    c_max = max(max(cins_p), max(couts_p))
    cin_max = max(cins_p)

    # Lane-dense channel padding of the input; kept f32 so the fused projection add
    # happens in f32 (matching the reference's f32 add before the bf16 matmul cast).
    x_in = jnp.pad(jnp.transpose(x_ncl, (0, 2, 1)),
                   ((0, 0), (0, 0), (0, cins_p[0] - n_mel))).astype(jnp.float32)

    layer_args = []
    for i, (w, b, gamma, beta, mean, var) in enumerate(convs):
        cout, cin, _ = w.shape
        # (Cout, Cin, K) -> (K, Cin, Cout) -> zero-pad to lane width -> (K*Cin_p, Cout_p)
        # im2col layout: row k*Cin_p + c  <->  input channel c at tap k.
        w_kio = jnp.transpose(w, (2, 1, 0))
        w_kio = jnp.pad(w_kio, ((0, 0), (0, cins_p[i] - cin), (0, couts_p[i] - cout)))
        w2d = w_kio.reshape(K * cins_p[i], couts_p[i]).astype(compute_dtype)
        # Fold conv bias + eval-mode BatchNorm into per-channel scale / bias (f32).
        scale = gamma / jnp.sqrt(var + BN_EPS)
        bias = (b - mean) * scale + beta
        scale = jnp.pad(scale, (0, couts_p[i] - cout)).reshape(1, couts_p[i]).astype(jnp.float32)
        bias = jnp.pad(bias, (0, couts_p[i] - cout)).reshape(1, couts_p[i]).astype(jnp.float32)
        layer_args += [w2d, scale, bias]

    kernel = functools.partial(
        fused_postnet_kernel,
        n_layers=n_layers, ksize=K, seq_len=L, pad=pad,
        cins=tuple(cins_p), couts=tuple(couts_p))

    run = functools.partial(
        _build_and_run, x_in, proj_in, layer_args, kernel=kernel, B=B, L=L, K=K,
        Lp=Lp, cins_p=cins_p, couts_p=couts_p, c_max=c_max, cin_max=cin_max,
        compute_dtype=compute_dtype)
    try:
        out_p = run(single_buffer_weights=True)
    except Exception:
        # This JAX build rejects pipeline_mode=pl.Buffered(1) on pallas_call specs;
        # fall back to default (double-buffered) constant-index weight specs.
        out_p = run(single_buffer_weights=False)

    out = out_p[:, :, :n_mel]                        # drop lane padding
    return jnp.transpose(out, (0, 2, 1))             # back to (B, n_mel, T)


# ------------------------- pure-JAX reference ---------------------------------


def multi_speaker_postnet_ref(x_ncl, wavs, params, matmul_dtype=jnp.float32):
    proj = wavs @ params["lin_w"] + params["lin_b"]  # (B, T)
    h = x_ncl + proj[:, None, :]
    n = len(params["convs"])
    for i, (w, b, gamma, beta, mean, var) in enumerate(params["convs"]):
        pad = (w.shape[-1] - 1) // 2
        y = lax.conv_general_dilated(
            h.astype(matmul_dtype), w.astype(matmul_dtype),
            window_strides=(1,), padding=[(pad, pad)],
            dimension_numbers=("NCH", "OIH", "NCH"),
            preferred_element_type=jnp.float32)
        y = y + b[None, :, None]
        y = (gamma[None, :, None] * (y - mean[None, :, None])
             / jnp.sqrt(var[None, :, None] + BN_EPS) + beta[None, :, None])
        if i < n - 1:
            y = jnp.tanh(y)
        h = y
    return h


# ------------------------------ params init -----------------------------------


def init_params(key, n_mel, emb_dim, ksize, n_convs, spk_in, proj_dim):
    keys = jax.random.split(key, 2 + 6 * n_convs)
    params = {
        "lin_w": 0.1 * jax.random.normal(keys[0], (spk_in, proj_dim), jnp.float32),
        "lin_b": 0.1 * jax.random.normal(keys[1], (proj_dim,), jnp.float32),
        "convs": [],
    }
    chans = [(n_mel, emb_dim)] + [(emb_dim, emb_dim)] * (n_convs - 2) + [(emb_dim, n_mel)]
    idx = 2
    for cin, cout in chans:
        w = 0.1 * jax.random.normal(keys[idx], (cout, cin, ksize), jnp.float32)
        b = 0.1 * jax.random.normal(keys[idx + 1], (cout,), jnp.float32)
        gamma = 1.0 + 0.1 * jax.random.normal(keys[idx + 2], (cout,), jnp.float32)
        beta = 0.1 * jax.random.normal(keys[idx + 3], (cout,), jnp.float32)
        mean = 0.1 * jax.random.normal(keys[idx + 4], (cout,), jnp.float32)
        var = 1.0 + 0.1 * jax.random.uniform(keys[idx + 5], (cout,), jnp.float32)
        params["convs"].append((w, b, gamma, beta, mean, var))
        idx += 6
    return params


# ---------------------------------- main ---------------------------------------


if __name__ == "__main__":
    # Scaled-down hparams: n_mel_channels=4, postnet_embedding_dim=8,
    # postnet_kernel_size=5, postnet_n_convolutions=5, speaker dim 256->16,
    # speaker_projection out dim 512->16 (== T, required by the original broadcast).
    B, n_mel, emb_dim, ksize, n_convs = 2, 4, 8, 5, 5
    spk_in = 16
    T = 16

    key = jax.random.PRNGKey(0)
    kx, kw, kp = jax.random.split(key, 3)
    x = jax.random.normal(kx, (B, n_mel, T), jnp.float32)      # PyTorch NCL input
    wavs = jax.random.normal(kw, (B, spk_in), jnp.float32)     # speaker embedding
    params = init_params(kp, n_mel, emb_dim, ksize, n_convs, spk_in, T)

    # f32 compute path vs f32 reference.  Tolerance covers MXU precision-mode
    # differences between the XLA conv reference and the in-kernel dot (both use
    # default precision); a structural bug would give O(0.3-1) errors.
    ref_f32 = multi_speaker_postnet_ref(x, wavs, params)
    out_f32 = jax.block_until_ready(
        multi_speaker_postnet_pallas(x, wavs, params, compute_dtype=jnp.float32))
    assert out_f32.shape == (B, n_mel, T), out_f32.shape
    assert jnp.allclose(out_f32, ref_f32, atol=1e-2, rtol=1e-2), \
        float(jnp.max(jnp.abs(out_f32 - ref_f32)))

    # bf16 MXU path (the performance configuration) vs a bf16-operand reference.
    out_bf16 = jax.block_until_ready(
        multi_speaker_postnet_pallas(x, wavs, params, compute_dtype=jnp.bfloat16))
    ref_bf16 = multi_speaker_postnet_ref(x, wavs, params, matmul_dtype=jnp.bfloat16)
    assert out_bf16.shape == (B, n_mel, T), out_bf16.shape
    assert jnp.allclose(out_bf16, ref_bf16, atol=5e-2, rtol=5e-2), \
        float(jnp.max(jnp.abs(out_bf16 - ref_bf16)))

    print("KERNEL_OK")
</pallas_src>

<mosaic_0001>
module attributes {stable_mosaic.version = 11 : i64} {
  func.func @fused_postnet_kernel(%arg0: i32, %arg1: memref<1x16x128xf32, #tpu.memory_space<vmem>>, %arg2: memref<1x16x1xf32, #tpu.memory_space<vmem>>, %arg3: memref<640x128xf32, #tpu.memory_space<vmem>>, %arg4: memref<1x128xf32, #tpu.memory_space<vmem>>, %arg5: memref<1x128xf32, #tpu.memory_space<vmem>>, %arg6: memref<640x128xf32, #tpu.memory_space<vmem>>, %arg7: memref<1x128xf32, #tpu.memory_space<vmem>>, %arg8: memref<1x128xf32, #tpu.memory_space<vmem>>, %arg9: memref<640x128xf32, #tpu.memory_space<vmem>>, %arg10: memref<1x128xf32, #tpu.memory_space<vmem>>, %arg11: memref<1x128xf32, #tpu.memory_space<vmem>>, %arg12: memref<640x128xf32, #tpu.memory_space<vmem>>, %arg13: memref<1x128xf32, #tpu.memory_space<vmem>>, %arg14: memref<1x128xf32, #tpu.memory_space<vmem>>, %arg15: memref<640x128xf32, #tpu.memory_space<vmem>>, %arg16: memref<1x128xf32, #tpu.memory_space<vmem>>, %arg17: memref<1x128xf32, #tpu.memory_space<vmem>>, %arg18: memref<1x16x128xf32, #tpu.memory_space<vmem>>, %arg19: memref<20x128xf32, #tpu.memory_space<vmem>>, %arg20: memref<20x128xf32, #tpu.memory_space<vmem>>, %arg21: memref<16x640xf32, #tpu.memory_space<vmem>>) attributes {dimension_semantics = [#tpu.dimension_semantics<parallel>], iteration_bounds = array<i64: 2>, scalar_prefetch = 0 : i64, scratch_operands = 3 : i64, tpu.core_type = #tpu.core_type<tc>, window_params = [{transform_indices = @transform_0, window_bounds = array<i64: 1, 16, 128>}, {transform_indices = @transform_1, window_bounds = array<i64: 1, 16, 1>}, {pipeline_mode = #tpu.pipeline_mode<synchronous>, transform_indices = @transform_2, window_bounds = array<i64: 640, 128>}, {pipeline_mode = #tpu.pipeline_mode<synchronous>, transform_indices = @transform_3, window_bounds = array<i64: 1, 128>}, {pipeline_mode = #tpu.pipeline_mode<synchronous>, transform_indices = @transform_4, window_bounds = array<i64: 1, 128>}, {pipeline_mode = #tpu.pipeline_mode<synchronous>, transform_indices = @transform_5, window_bounds = array<i64: 640, 128>}, {pipeline_mode = #tpu.pipeline_mode<synchronous>, transform_indices = @transform_6, window_bounds = array<i64: 1, 128>}, {pipeline_mode = #tpu.pipeline_mode<synchronous>, transform_indices = @transform_7, window_bounds = array<i64: 1, 128>}, {pipeline_mode = #tpu.pipeline_mode<synchronous>, transform_indices = @transform_8, window_bounds = array<i64: 640, 128>}, {pipeline_mode = #tpu.pipeline_mode<synchronous>, transform_indices = @transform_9, window_bounds = array<i64: 1, 128>}, {pipeline_mode = #tpu.pipeline_mode<synchronous>, transform_indices = @transform_10, window_bounds = array<i64: 1, 128>}, {pipeline_mode = #tpu.pipeline_mode<synchronous>, transform_indices = @transform_11, window_bounds = array<i64: 640, 128>}, {pipeline_mode = #tpu.pipeline_mode<synchronous>, transform_indices = @transform_12, window_bounds = array<i64: 1, 128>}, {pipeline_mode = #tpu.pipeline_mode<synchronous>, transform_indices = @transform_13, window_bounds = array<i64: 1, 128>}, {pipeline_mode = #tpu.pipeline_mode<synchronous>, transform_indices = @transform_14, window_bounds = array<i64: 640, 128>}, {pipeline_mode = #tpu.pipeline_mode<synchronous>, transform_indices = @transform_15, window_bounds = array<i64: 1, 128>}, {pipeline_mode = #tpu.pipeline_mode<synchronous>, transform_indices = @transform_16, window_bounds = array<i64: 1, 128>}, {transform_indices = @transform_17, window_bounds = array<i64: 1, 16, 128>}]} {
    %cst = arith.constant 0.000000e+00 : f32
    %0 = vector.broadcast %cst : f32 to vector<2x128xf32>
    %c0 = arith.constant 0 : index
    %c0_0 = arith.constant 0 : index
    %1 = vector.load %arg19[%c0, %c0_0] : memref<20x128xf32, #tpu.memory_space<vmem>>, vector<2x128xf32>
    tpu.vector_store %arg19[%c0, %c0_0], %0 {strides = array<i32>} : memref<20x128xf32, #tpu.memory_space<vmem>>, vector<2x128xf32>,
    %c18 = arith.constant 18 : index
    %c0_1 = arith.constant 0 : index
    %2 = vector.load %arg19[%c18, %c0_1] : memref<20x128xf32, #tpu.memory_space<vmem>>, vector<2x128xf32>
    tpu.vector_store %arg19[%c18, %c0_1], %0 {strides = array<i32>} : memref<20x128xf32, #tpu.memory_space<vmem>>, vector<2x128xf32>,
    %c0_2 = arith.constant 0 : index
    %c0_3 = arith.constant 0 : index
    %3 = vector.load %arg20[%c0_2, %c0_3] : memref<20x128xf32, #tpu.memory_space<vmem>>, vector<2x128xf32>
    tpu.vector_store %arg20[%c0_2, %c0_3], %0 {strides = array<i32>} : memref<20x128xf32, #tpu.memory_space<vmem>>, vector<2x128xf32>,
    %c18_4 = arith.constant 18 : index
    %c0_5 = arith.constant 0 : index
    %4 = vector.load %arg20[%c18_4, %c0_5] : memref<20x128xf32, #tpu.memory_space<vmem>>, vector<2x128xf32>
    tpu.vector_store %arg20[%c18_4, %c0_5], %0 {strides = array<i32>} : memref<20x128xf32, #tpu.memory_space<vmem>>, vector<2x128xf32>,
    %c0_6 = arith.constant 0 : index
    %c0_7 = arith.constant 0 : index
    %c0_8 = arith.constant 0 : index
    %5 = vector.load %arg1[%c0_6, %c0_7, %c0_8] : memref<1x16x128xf32, #tpu.memory_space<vmem>>, vector<1x16x128xf32>
    %6 = vector.shape_cast %5 : vector<1x16x128xf32> to vector<16x128xf32>
    %c0_9 = arith.constant 0 : index
    %c0_10 = arith.constant 0 : index
    %c0_11 = arith.constant 0 : index
    %7 = vector.load %arg2[%c0_9, %c0_10, %c0_11] : memref<1x16x1xf32, #tpu.memory_space<vmem>>, vector<1x16x1xf32>
    %8 = vector.shape_cast %7 : vector<1x16x1xf32> to vector<16x1xf32>
    %9 = vector.broadcast %8 : vector<16x1xf32> to vector<16x128xf32>
    %10 = arith.addf %6, %9 : vector<16x128xf32>
    %c2 = arith.constant 2 : index
    %c0_12 = arith.constant 0 : index
    %11 = vector.load %arg19[%c2, %c0_12] : memref<20x128xf32, #tpu.memory_space<vmem>>, vector<16x128xf32>
    tpu.vector_store %arg19[%c2, %c0_12], %10 {strides = array<i32>} : memref<20x128xf32, #tpu.memory_space<vmem>>, vector<16x128xf32>,
    %c0_13 = arith.constant 0 : index
    %c0_14 = arith.constant 0 : index
    %12 = vector.load %arg19[%c0_13, %c0_14] : memref<20x128xf32, #tpu.memory_space<vmem>>, vector<16x128xf32>
    %c0_15 = arith.constant 0 : index
    %c0_16 = arith.constant 0 : index
    %13 = vector.load %arg21[%c0_15, %c0_16] : memref<16x640xf32, #tpu.memory_space<vmem>>, vector<16x128xf32>
    tpu.vector_store %arg21[%c0_15, %c0_16], %12 {strides = array<i32>} : memref<16x640xf32, #tpu.memory_space<vmem>>, vector<16x128xf32>,
    %c1 = arith.constant 1 : index
    %c0_17 = arith.constant 0 : index
    %14 = vector.load %arg19[%c1, %c0_17] : memref<20x128xf32, #tpu.memory_space<vmem>>, vector<16x128xf32>
    %c0_18 = arith.constant 0 : index
    %c128 = arith.constant 128 : index
    %15 = vector.load %arg21[%c0_18, %c128] : memref<16x640xf32, #tpu.memory_space<vmem>>, vector<16x128xf32>
    tpu.vector_store %arg21[%c0_18, %c128], %14 {strides = array<i32>} : memref<16x640xf32, #tpu.memory_space<vmem>>, vector<16x128xf32>,
    %c2_19 = arith.constant 2 : index
    %c0_20 = arith.constant 0 : index
    %16 = vector.load %arg19[%c2_19, %c0_20] : memref<20x128xf32, #tpu.memory_space<vmem>>, vector<16x128xf32>
    %c0_21 = arith.constant 0 : index
    %c256 = arith.constant 256 : index
    %17 = vector.load %arg21[%c0_21, %c256] : memref<16x640xf32, #tpu.memory_space<vmem>>, vector<16x128xf32>
    tpu.vector_store %arg21[%c0_21, %c256], %16 {strides = array<i32>} : memref<16x640xf32, #tpu.memory_space<vmem>>, vector<16x128xf32>,
    %c3 = arith.constant 3 : index
    %c0_22 = arith.constant 0 : index
    %18 = vector.load %arg19[%c3, %c0_22] : memref<20x128xf32, #tpu.memory_space<vmem>>, vector<16x128xf32>
    %c0_23 = arith.constant 0 : index
    %c384 = arith.constant 384 : index
    %19 = vector.load %arg21[%c0_23, %c384] : memref<16x640xf32, #tpu.memory_space<vmem>>, vector<16x128xf32>
    tpu.vector_store %arg21[%c0_23, %c384], %18 {strides = array<i32>} : memref<16x640xf32, #tpu.memory_space<vmem>>, vector<16x128xf32>,
    %c4 = arith.constant 4 : index
    %c0_24 = arith.constant 0 : index
    %20 = vector.load %arg19[%c4, %c0_24] : memref<20x128xf32, #tpu.memory_space<vmem>>, vector<16x128xf32>
    %c0_25 = arith.constant 0 : index
    %c512 = arith.constant 512 : index
    %21 = vector.load %arg21[%c0_25, %c512] : memref<16x640xf32, #tpu.memory_space<vmem>>, vector<16x128xf32>
    tpu.vector_store %arg21[%c0_25, %c512], %20 {strides = array<i32>} : memref<16x640xf32, #tpu.memory_space<vmem>>, vector<16x128xf32>,
    %c0_26 = arith.constant 0 : index
    %c0_27 = arith.constant 0 : index
    %22 = vector.load %arg21[%c0_26, %c0_27] : memref<16x640xf32, #tpu.memory_space<vmem>>, vector<16x640xf32>
    %c0_28 = arith.constant 0 : index
    %c0_29 = arith.constant 0 : index
    %23 = vector.load %arg3[%c0_28, %c0_29] : memref<640x128xf32, #tpu.memory_space<vmem>>, vector<640x128xf32>
    %cst_30 = arith.constant dense<0.000000e+00> : vector<16x128xf32>
    %24 = tpu.matmul %22, %23, %cst_30 {dimension_numbers = #tpu.dot_dimension_numbers<[1], [0], [0], [1], [0, 0, 1, 1], [], []>} : vector<16x640xf32>, vector<640x128xf32>, vector<16x128xf32> -> vector<16x128xf32>
    %c0_31 = arith.constant 0 : index
    %c0_32 = arith.constant 0 : index
    %25 = vector.load %arg4[%c0_31, %c0_32] : memref<1x128xf32, #tpu.memory_space<vmem>>, vector<1x128xf32>
    %26 = vector.broadcast %25 : vector<1x128xf32> to vector<16x128xf32>
    %27 = arith.mulf %24, %26 : vector<16x128xf32>
    %c0_33 = arith.constant 0 : index
    %c0_34 = arith.constant 0 : index
    %28 = vector.load %arg5[%c0_33, %c0_34] : memref<1x128xf32, #tpu.memory_space<vmem>>, vector<1x128xf32>
    %29 = vector.broadcast %28 : vector<1x128xf32> to vector<16x128xf32>
    %30 = arith.addf %27, %29 : vector<16x128xf32>
    %31 = math.tanh %30 : vector<16x128xf32>
    %c2_35 = arith.constant 2 : index
    %c0_36 = arith.constant 0 : index
    %32 = vector.load %arg20[%c2_35, %c0_36] : memref<20x128xf32, #tpu.memory_space<vmem>>, vector<16x128xf32>
    tpu.vector_store %arg20[%c2_35, %c0_36], %31 {strides = array<i32>} : memref<20x128xf32, #tpu.memory_space<vmem>>, vector<16x128xf32>,
    %c0_37 = arith.constant 0 : index
    %c0_38 = arith.constant 0 : index
    %33 = vector.load %arg20[%c0_37, %c0_38] : memref<20x128xf32, #tpu.memory_space<vmem>>, vector<16x128xf32>
    %c0_39 = arith.constant 0 : index
    %c0_40 = arith.constant 0 : index
    %34 = vector.load %arg21[%c0_39, %c0_40] : memref<16x640xf32, #tpu.memory_space<vmem>>, vector<16x128xf32>
    tpu.vector_store %arg21[%c0_39, %c0_40], %33 {strides = array<i32>} : memref<16x640xf32, #tpu.memory_space<vmem>>, vector<16x128xf32>,
    %c1_41 = arith.constant 1 : index
    %c0_42 = arith.constant 0 : index
    %35 = vector.load %arg20[%c1_41, %c0_42] : memref<20x128xf32, #tpu.memory_space<vmem>>, vector<16x128xf32>
    %c0_43 = arith.constant 0 : index
    %c128_44 = arith.constant 128 : index
    %36 = vector.load %arg21[%c0_43, %c128_44] : memref<16x640xf32, #tpu.memory_space<vmem>>, vector<16x128xf32>
    tpu.vector_store %arg21[%c0_43, %c128_44], %35 {strides = array<i32>} : memref<16x640xf32, #tpu.memory_space<vmem>>, vector<16x128xf32>,
    %c2_45 = arith.constant 2 : index
    %c0_46 = arith.constant 0 : index
    %37 = vector.load %arg20[%c2_45, %c0_46] : memref<20x128xf32, #tpu.memory_space<vmem>>, vector<16x128xf32>
    %c0_47 = arith.constant 0 : index
    %c256_48 = arith.constant 256 : index
    %38 = vector.load %arg21[%c0_47, %c256_48] : memref<16x640xf32, #tpu.memory_space<vmem>>, vector<16x128xf32>
    tpu.vector_store %arg21[%c0_47, %c256_48], %37 {strides = array<i32>} : memref<16x640xf32, #tpu.memory_space<vmem>>, vector<16x128xf32>,
    %c3_49 = arith.constant 3 : index
    %c0_50 = arith.constant 0 : index
    %39 = vector.load %arg20[%c3_49, %c0_50] : memref<20x128xf32, #tpu.memory_space<vmem>>, vector<16x128xf32>
    %c0_51 = arith.constant 0 : index
    %c384_52 = arith.constant 384 : index
    %40 = vector.load %arg21[%c0_51, %c384_52] : memref<16x640xf32, #tpu.memory_space<vmem>>, vector<16x128xf32>
    tpu.vector_store %arg21[%c0_51, %c384_52], %39 {strides = array<i32>} : memref<16x640xf32, #tpu.memory_space<vmem>>, vector<16x128xf32>,
    %c4_53 = arith.constant 4 : index
    %c0_54 = arith.constant 0 : index
    %41 = vector.load %arg20[%c4_53, %c0_54] : memref<20x128xf32, #tpu.memory_space<vmem>>, vector<16x128xf32>
    %c0_55 = arith.constant 0 : index
    %c512_56 = arith.constant 512 : index
    %42 = vector.load %arg21[%c0_55, %c512_56] : memref<16x640xf32, #tpu.memory_space<vmem>>, vector<16x128xf32>
    tpu.vector_store %arg21[%c0_55, %c512_56], %41 {strides = array<i32>} : memref<16x640xf32, #tpu.memory_space<vmem>>, vector<16x128xf32>,
    %c0_57 = arith.constant 0 : index
    %c0_58 = arith.constant 0 : index
    %43 = vector.load %arg21[%c0_57, %c0_58] : memref<16x640xf32, #tpu.memory_space<vmem>>, vector<16x640xf32>
    %c0_59 = arith.constant 0 : index
    %c0_60 = arith.constant 0 : index
    %44 = vector.load %arg6[%c0_59, %c0_60] : memref<640x128xf32, #tpu.memory_space<vmem>>, vector<640x128xf32>
    %cst_61 = arith.constant dense<0.000000e+00> : vector<16x128xf32>
    %45 = tpu.matmul %43, %44, %cst_61 {dimension_numbers = #tpu.dot_dimension_numbers<[1], [0], [0], [1], [0, 0, 1, 1], [], []>} : vector<16x640xf32>, vector<640x128xf32>, vector<16x128xf32> -> vector<16x128xf32>
    %c0_62 = arith.constant 0 : index
    %c0_63 = arith.constant 0 : index
    %46 = vector.load %arg7[%c0_62, %c0_63] : memref<1x128xf32, #tpu.memory_space<vmem>>, vector<1x128xf32>
    %47 = vector.broadcast %46 : vector<1x128xf32> to vector<16x128xf32>
    %48 = arith.mulf %45, %47 : vector<16x128xf32>
    %c0_64 = arith.constant 0 : index
    %c0_65 = arith.constant 0 : index
    %49 = vector.load %arg8[%c0_64, %c0_65] : memref<1x128xf32, #tpu.memory_space<vmem>>, vector<1x128xf32>
    %50 = vector.broadcast %49 : vector<1x128xf32> to vector<16x128xf32>
    %51 = arith.addf %48, %50 : vector<16x128xf32>
    %52 = math.tanh %51 : vector<16x128xf32>
    %c2_66 = arith.constant 2 : index
    %c0_67 = arith.constant 0 : index
    %53 = vector.load %arg19[%c2_66, %c0_67] : memref<20x128xf32, #tpu.memory_space<vmem>>, vector<16x128xf32>
    tpu.vector_store %arg19[%c2_66, %c0_67], %52 {strides = array<i32>} : memref<20x128xf32, #tpu.memory_space<vmem>>, vector<16x128xf32>,
    %c0_68 = arith.constant 0 : index
    %c0_69 = arith.constant 0 : index
    %54 = vector.load %arg19[%c0_68, %c0_69] : memref<20x128xf32, #tpu.memory_space<vmem>>, vector<16x128xf32>
    %c0_70 = arith.constant 0 : index
    %c0_71 = arith.constant 0 : index
    %55 = vector.load %arg21[%c0_70, %c0_71] : memref<16x640xf32, #tpu.memory_space<vmem>>, vector<16x128xf32>
    tpu.vector_store %arg21[%c0_70, %c0_71], %54 {strides = array<i32>} : memref<16x640xf32, #tpu.memory_space<vmem>>, vector<16x128xf32>,
    %c1_72 = arith.constant 1 : index
    %c0_73 = arith.constant 0 : index
    %56 = vector.load %arg19[%c1_72, %c0_73] : memref<20x128xf32, #tpu.memory_space<vmem>>, vector<16x128xf32>
    %c0_74 = arith.constant 0 : index
    %c128_75 = arith.constant 128 : index
    %57 = vector.load %arg21[%c0_74, %c128_75] : memref<16x640xf32, #tpu.memory_space<vmem>>, vector<16x128xf32>
    tpu.vector_store %arg21[%c0_74, %c128_75], %56 {strides = array<i32>} : memref<16x640xf32, #tpu.memory_space<vmem>>, vector<16x128xf32>,
    %c2_76 = arith.constant 2 : index
    %c0_77 = arith.constant 0 : index
    %58 = vector.load %arg19[%c2_76, %c0_77] : memref<20x128xf32, #tpu.memory_space<vmem>>, vector<16x128xf32>
    %c0_78 = arith.constant 0 : index
    %c256_79 = arith.constant 256 : index
    %59 = vector.load %arg21[%c0_78, %c256_79] : memref<16x640xf32, #tpu.memory_space<vmem>>, vector<16x128xf32>
    tpu.vector_store %arg21[%c0_78, %c256_79], %58 {strides = array<i32>} : memref<16x640xf32, #tpu.memory_space<vmem>>, vector<16x128xf32>,
    %c3_80 = arith.constant 3 : index
    %c0_81 = arith.constant 0 : index
    %60 = vector.load %arg19[%c3_80, %c0_81] : memref<20x128xf32, #tpu.memory_space<vmem>>, vector<16x128xf32>
    %c0_82 = arith.constant 0 : index
    %c384_83 = arith.constant 384 : index
    %61 = vector.load %arg21[%c0_82, %c384_83] : memref<16x640xf32, #tpu.memory_space<vmem>>, vector<16x128xf32>
    tpu.vector_store %arg21[%c0_82, %c384_83], %60 {strides = array<i32>} : memref<16x640xf32, #tpu.memory_space<vmem>>, vector<16x128xf32>,
    %c4_84 = arith.constant 4 : index
    %c0_85 = arith.constant 0 : index
    %62 = vector.load %arg19[%c4_84, %c0_85] : memref<20x128xf32, #tpu.memory_space<vmem>>, vector<16x128xf32>
    %c0_86 = arith.constant 0 : index
    %c512_87 = arith.constant 512 : index
    %63 = vector.load %arg21[%c0_86, %c512_87] : memref<16x640xf32, #tpu.memory_space<vmem>>, vector<16x128xf32>
    tpu.vector_store %arg21[%c0_86, %c512_87], %62 {strides = array<i32>} : memref<16x640xf32, #tpu.memory_space<vmem>>, vector<16x128xf32>,
    %c0_88 = arith.constant 0 : index
    %c0_89 = arith.constant 0 : index
    %64 = vector.load %arg21[%c0_88, %c0_89] : memref<16x640xf32, #tpu.memory_space<vmem>>, vector<16x640xf32>
    %c0_90 = arith.constant 0 : index
    %c0_91 = arith.constant 0 : index
    %65 = vector.load %arg9[%c0_90, %c0_91] : memref<640x128xf32, #tpu.memory_space<vmem>>, vector<640x128xf32>
    %cst_92 = arith.constant dense<0.000000e+00> : vector<16x128xf32>
    %66 = tpu.matmul %64, %65, %cst_92 {dimension_numbers = #tpu.dot_dimension_numbers<[1], [0], [0], [1], [0, 0, 1, 1], [], []>} : vector<16x640xf32>, vector<640x128xf32>, vector<16x128xf32> -> vector<16x128xf32>
    %c0_93 = arith.constant 0 : index
    %c0_94 = arith.constant 0 : index
    %67 = vector.load %arg10[%c0_93, %c0_94] : memref<1x128xf32, #tpu.memory_space<vmem>>, vector<1x128xf32>
    %68 = vector.broadcast %67 : vector<1x128xf32> to vector<16x128xf32>
    %69 = arith.mulf %66, %68 : vector<16x128xf32>
    %c0_95 = arith.constant 0 : index
    %c0_96 = arith.constant 0 : index
    %70 = vector.load %arg11[%c0_95, %c0_96] : memref<1x128xf32, #tpu.memory_space<vmem>>, vector<1x128xf32>
    %71 = vector.broadcast %70 : vector<1x128xf32> to vector<16x128xf32>
    %72 = arith.addf %69, %71 : vector<16x128xf32>
    %73 = math.tanh %72 : vector<16x128xf32>
    %c2_97 = arith.constant 2 : index
    %c0_98 = arith.constant 0 : index
    %74 = vector.load %arg20[%c2_97, %c0_98] : memref<20x128xf32, #tpu.memory_space<vmem>>, vector<16x128xf32>
    tpu.vector_store %arg20[%c2_97, %c0_98], %73 {strides = array<i32>} : memref<20x128xf32, #tpu.memory_space<vmem>>, vector<16x128xf32>,
    %c0_99 = arith.constant 0 : index
    %c0_100 = arith.constant 0 : index
    %75 = vector.load %arg20[%c0_99, %c0_100] : memref<20x128xf32, #tpu.memory_space<vmem>>, vector<16x128xf32>
    %c0_101 = arith.constant 0 : index
    %c0_102 = arith.constant 0 : index
    %76 = vector.load %arg21[%c0_101, %c0_102] : memref<16x640xf32, #tpu.memory_space<vmem>>, vector<16x128xf32>
    tpu.vector_store %arg21[%c0_101, %c0_102], %75 {strides = array<i32>} : memref<16x640xf32, #tpu.memory_space<vmem>>, vector<16x128xf32>,
    %c1_103 = arith.constant 1 : index
    %c0_104 = arith.constant 0 : index
    %77 = vector.load %arg20[%c1_103, %c0_104] : memref<20x128xf32, #tpu.memory_space<vmem>>, vector<16x128xf32>
    %c0_105 = arith.constant 0 : index
    %c128_106 = arith.constant 128 : index
    %78 = vector.load %arg21[%c0_105, %c128_106] : memref<16x640xf32, #tpu.memory_space<vmem>>, vector<16x128xf32>
    tpu.vector_store %arg21[%c0_105, %c128_106], %77 {strides = array<i32>} : memref<16x640xf32, #tpu.memory_space<vmem>>, vector<16x128xf32>,
    %c2_107 = arith.constant 2 : index
    %c0_108 = arith.constant 0 : index
    %79 = vector.load %arg20[%c2_107, %c0_108] : memref<20x128xf32, #tpu.memory_space<vmem>>, vector<16x128xf32>
    %c0_109 = arith.constant 0 : index
    %c256_110 = arith.constant 256 : index
    %80 = vector.load %arg21[%c0_109, %c256_110] : memref<16x640xf32, #tpu.memory_space<vmem>>, vector<16x128xf32>
    tpu.vector_store %arg21[%c0_109, %c256_110], %79 {strides = array<i32>} : memref<16x640xf32, #tpu.memory_space<vmem>>, vector<16x128xf32>,
    %c3_111 = arith.constant 3 : index
    %c0_112 = arith.constant 0 : index
    %81 = vector.load %arg20[%c3_111, %c0_112] : memref<20x128xf32, #tpu.memory_space<vmem>>, vector<16x128xf32>
    %c0_113 = arith.constant 0 : index
    %c384_114 = arith.constant 384 : index
    %82 = vector.load %arg21[%c0_113, %c384_114] : memref<16x640xf32, #tpu.memory_space<vmem>>, vector<16x128xf32>
    tpu.vector_store %arg21[%c0_113, %c384_114], %81 {strides = array<i32>} : memref<16x640xf32, #tpu.memory_space<vmem>>, vector<16x128xf32>,
    %c4_115 = arith.constant 4 : index
    %c0_116 = arith.constant 0 : index
    %83 = vector.load %arg20[%c4_115, %c0_116] : memref<20x128xf32, #tpu.memory_space<vmem>>, vector<16x128xf32>
    %c0_117 = arith.constant 0 : index
    %c512_118 = arith.constant 512 : index
    %84 = vector.load %arg21[%c0_117, %c512_118] : memref<16x640xf32, #tpu.memory_space<vmem>>, vector<16x128xf32>
    tpu.vector_store %arg21[%c0_117, %c512_118], %83 {strides = array<i32>} : memref<16x640xf32, #tpu.memory_space<vmem>>, vector<16x128xf32>,
    %c0_119 = arith.constant 0 : index
    %c0_120 = arith.constant 0 : index
    %85 = vector.load %arg21[%c0_119, %c0_120] : memref<16x640xf32, #tpu.memory_space<vmem>>, vector<16x640xf32>
    %c0_121 = arith.constant 0 : index
    %c0_122 = arith.constant 0 : index
    %86 = vector.load %arg12[%c0_121, %c0_122] : memref<640x128xf32, #tpu.memory_space<vmem>>, vector<640x128xf32>
    %cst_123 = arith.constant dense<0.000000e+00> : vector<16x128xf32>
    %87 = tpu.matmul %85, %86, %cst_123 {dimension_numbers = #tpu.dot_dimension_numbers<[1], [0], [0], [1], [0, 0, 1, 1], [], []>} : vector<16x640xf32>, vector<640x128xf32>, vector<16x128xf32> -> vector<16x128xf32>
    %c0_124 = arith.constant 0 : index
    %c0_125 = arith.constant 0 : index
    %88 = vector.load %arg13[%c0_124, %c0_125] : memref<1x128xf32, #tpu.memory_space<vmem>>, vector<1x128xf32>
    %89 = vector.broadcast %88 : vector<1x128xf32> to vector<16x128xf32>
    %90 = arith.mulf %87, %89 : vector<16x128xf32>
    %c0_126 = arith.constant 0 : index
    %c0_127 = arith.constant 0 : index
    %91 = vector.load %arg14[%c0_126, %c0_127] : memref<1x128xf32, #tpu.memory_space<vmem>>, vector<1x128xf32>
    %92 = vector.broadcast %91 : vector<1x128xf32> to vector<16x128xf32>
    %93 = arith.addf %90, %92 : vector<16x128xf32>
    %94 = math.tanh %93 : vector<16x128xf32>
    %c2_128 = arith.constant 2 : index
    %c0_129 = arith.constant 0 : index
    %95 = vector.load %arg19[%c2_128, %c0_129] : memref<20x128xf32, #tpu.memory_space<vmem>>, vector<16x128xf32>
    tpu.vector_store %arg19[%c2_128, %c0_129], %94 {strides = array<i32>} : memref<20x128xf32, #tpu.memory_space<vmem>>, vector<16x128xf32>,
    %c0_130 = arith.constant 0 : index
    %c0_131 = arith.constant 0 : index
    %96 = vector.load %arg19[%c0_130, %c0_131] : memref<20x128xf32, #tpu.memory_space<vmem>>, vector<16x128xf32>
    %c0_132 = arith.constant 0 : index
    %c0_133 = arith.constant 0 : index
    %97 = vector.load %arg21[%c0_132, %c0_133] : memref<16x640xf32, #tpu.memory_space<vmem>>, vector<16x128xf32>
    tpu.vector_store %arg21[%c0_132, %c0_133], %96 {strides = array<i32>} : memref<16x640xf32, #tpu.memory_space<vmem>>, vector<16x128xf32>,
    %c1_134 = arith.constant 1 : index
    %c0_135 = arith.constant 0 : index
    %98 = vector.load %arg19[%c1_134, %c0_135] : memref<20x128xf32, #tpu.memory_space<vmem>>, vector<16x128xf32>
    %c0_136 = arith.constant 0 : index
    %c128_137 = arith.constant 128 : index
    %99 = vector.load %arg21[%c0_136, %c128_137] : memref<16x640xf32, #tpu.memory_space<vmem>>, vector<16x128xf32>
    tpu.vector_store %arg21[%c0_136, %c128_137], %98 {strides = array<i32>} : memref<16x640xf32, #tpu.memory_space<vmem>>, vector<16x128xf32>,
    %c2_138 = arith.constant 2 : index
    %c0_139 = arith.constant 0 : index
    %100 = vector.load %arg19[%c2_138, %c0_139] : memref<20x128xf32, #tpu.memory_space<vmem>>, vector<16x128xf32>
    %c0_140 = arith.constant 0 : index
    %c256_141 = arith.constant 256 : index
    %101 = vector.load %arg21[%c0_140, %c256_141] : memref<16x640xf32, #tpu.memory_space<vmem>>, vector<16x128xf32>
    tpu.vector_store %arg21[%c0_140, %c256_141], %100 {strides = array<i32>} : memref<16x640xf32, #tpu.memory_space<vmem>>, vector<16x128xf32>,
    %c3_142 = arith.constant 3 : index
    %c0_143 = arith.constant 0 : index
    %102 = vector.load %arg19[%c3_142, %c0_143] : memref<20x128xf32, #tpu.memory_space<vmem>>, vector<16x128xf32>
    %c0_144 = arith.constant 0 : index
    %c384_145 = arith.constant 384 : index
    %103 = vector.load %arg21[%c0_144, %c384_145] : memref<16x640xf32, #tpu.memory_space<vmem>>, vector<16x128xf32>
    tpu.vector_store %arg21[%c0_144, %c384_145], %102 {strides = array<i32>} : memref<16x640xf32, #tpu.memory_space<vmem>>, vector<16x128xf32>,
    %c4_146 = arith.constant 4 : index
    %c0_147 = arith.constant 0 : index
    %104 = vector.load %arg19[%c4_146, %c0_147] : memref<20x128xf32, #tpu.memory_space<vmem>>, vector<16x128xf32>
    %c0_148 = arith.constant 0 : index
    %c512_149 = arith.constant 512 : index
    %105 = vector.load %arg21[%c0_148, %c512_149] : memref<16x640xf32, #tpu.memory_space<vmem>>, vector<16x128xf32>
    tpu.vector_store %arg21[%c0_148, %c512_149], %104 {strides = array<i32>} : memref<16x640xf32, #tpu.memory_space<vmem>>, vector<16x128xf32>,
    %c0_150 = arith.constant 0 : index
    %c0_151 = arith.constant 0 : index
    %106 = vector.load %arg21[%c0_150, %c0_151] : memref<16x640xf32, #tpu.memory_space<vmem>>, vector<16x640xf32>
    %c0_152 = arith.constant 0 : index
    %c0_153 = arith.constant 0 : index
    %107 = vector.load %arg15[%c0_152, %c0_153] : memref<640x128xf32, #tpu.memory_space<vmem>>, vector<640x128xf32>
    %cst_154 = arith.constant dense<0.000000e+00> : vector<16x128xf32>
    %108 = tpu.matmul %106, %107, %cst_154 {dimension_numbers = #tpu.dot_dimension_numbers<[1], [0], [0], [1], [0, 0, 1, 1], [], []>} : vector<16x640xf32>, vector<640x128xf32>, vector<16x128xf32> -> vector<16x128xf32>
    %c0_155 = arith.constant 0 : index
    %c0_156 = arith.constant 0 : index
    %109 = vector.load %arg16[%c0_155, %c0_156] : memref<1x128xf32, #tpu.memory_space<vmem>>, vector<1x128xf32>
    %110 = vector.broadcast %109 : vector<1x128xf32> to vector<16x128xf32>
    %111 = arith.mulf %108, %110 : vector<16x128xf32>
    %c0_157 = arith.constant 0 : index
    %c0_158 = arith.constant 0 : index
    %112 = vector.load %arg17[%c0_157, %c0_158] : memref<1x128xf32, #tpu.memory_space<vmem>>, vector<1x128xf32>
    %113 = vector.broadcast %112 : vector<1x128xf32> to vector<16x128xf32>
    %114 = arith.addf %111, %113 : vector<16x128xf32>
    %c0_159 = arith.constant 0 : index
    %c0_160 = arith.constant 0 : index
    %c0_161 = arith.constant 0 : index
    %115 = vector.load %arg18[%c0_159, %c0_160, %c0_161] : memref<1x16x128xf32, #tpu.memory_space<vmem>>, vector<1x16x128xf32>
    %116 = vector.shape_cast %115 : vector<1x16x128xf32> to vector<16x128xf32>
    %117 = vector.shape_cast %114 : vector<16x128xf32> to vector<1x16x128xf32>
    tpu.vector_store %arg18[%c0_159, %c0_160, %c0_161], %117 {strides = array<i32>} : memref<1x16x128xf32, #tpu.memory_space<vmem>>, vector<1x16x128xf32>,
    return
  }
  func.func @transform_0(%arg0: i32) -> (i32, i32, i32) {
    %c0_i32 = arith.constant 0 : i32
    %c0_i32_0 = arith.constant 0 : i32
    %c0_i32_1 = arith.constant 0 : i32
    return %arg0, %c0_i32, %c0_i32_0 : i32, i32, i32
  }
  func.func @transform_1(%arg0: i32) -> (i32, i32, i32) {
    %c0_i32 = arith.constant 0 : i32
    %c0_i32_0 = arith.constant 0 : i32
    %c0_i32_1 = arith.constant 0 : i32
    return %arg0, %c0_i32, %c0_i32_0 : i32, i32, i32
  }
  func.func @transform_2(%arg0: i32) -> (i32, i32) {
    %c0_i32 = arith.constant 0 : i32
    %c0_i32_0 = arith.constant 0 : i32
    %c0_i32_1 = arith.constant 0 : i32
    return %c0_i32, %c0_i32_0 : i32, i32
  }
  func.func @transform_3(%arg0: i32) -> (i32, i32) {
    %c0_i32 = arith.constant 0 : i32
    %c0_i32_0 = arith.constant 0 : i32
    %c0_i32_1 = arith.constant 0 : i32
    return %c0_i32, %c0_i32_0 : i32, i32
  }
  func.func @transform_4(%arg0: i32) -> (i32, i32) {
    %c0_i32 = arith.constant 0 : i32
    %c0_i32_0 = arith.constant 0 : i32
    %c0_i32_1 = arith.constant 0 : i32
    return %c0_i32, %c0_i32_0 : i32, i32
  }
  func.func @transform_5(%arg0: i32) -> (i32, i32) {
    %c0_i32 = arith.constant 0 : i32
    %c0_i32_0 = arith.constant 0 : i32
    %c0_i32_1 = arith.constant 0 : i32
    return %c0_i32, %c0_i32_0 : i32, i32
  }
  func.func @transform_6(%arg0: i32) -> (i32, i32) {
    %c0_i32 = arith.constant 0 : i32
    %c0_i32_0 = arith.constant 0 : i32
    %c0_i32_1 = arith.constant 0 : i32
    return %c0_i32, %c0_i32_0 : i32, i32
  }
  func.func @transform_7(%arg0: i32) -> (i32, i32) {
    %c0_i32 = arith.constant 0 : i32
    %c0_i32_0 = arith.constant 0 : i32
    %c0_i32_1 = arith.constant 0 : i32
    return %c0_i32, %c0_i32_0 : i32, i32
  }
  func.func @transform_8(%arg0: i32) -> (i32, i32) {
    %c0_i32 = arith.constant 0 : i32
    %c0_i32_0 = arith.constant 0 : i32
    %c0_i32_1 = arith.constant 0 : i32
    return %c0_i32, %c0_i32_0 : i32, i32
  }
  func.func @transform_9(%arg0: i32) -> (i32, i32) {
    %c0_i32 = arith.constant 0 : i32
    %c0_i32_0 = arith.constant 0 : i32
    %c0_i32_1 = arith.constant 0 : i32
    return %c0_i32, %c0_i32_0 : i32, i32
  }
  func.func @transform_10(%arg0: i32) -> (i32, i32) {
    %c0_i32 = arith.constant 0 : i32
    %c0_i32_0 = arith.constant 0 : i32
    %c0_i32_1 = arith.constant 0 : i32
    return %c0_i32, %c0_i32_0 : i32, i32
  }
  func.func @transform_11(%arg0: i32) -> (i32, i32) {
    %c0_i32 = arith.constant 0 : i32
    %c0_i32_0 = arith.constant 0 : i32
    %c0_i32_1 = arith.constant 0 : i32
    return %c0_i32, %c0_i32_0 : i32, i32
  }
  func.func @transform_12(%arg0: i32) -> (i32, i32) {
    %c0_i32 = arith.constant 0 : i32
    %c0_i32_0 = arith.constant 0 : i32
    %c0_i32_1 = arith.constant 0 : i32
    return %c0_i32, %c0_i32_0 : i32, i32
  }
  func.func @transform_13(%arg0: i32) -> (i32, i32) {
    %c0_i32 = arith.constant 0 : i32
    %c0_i32_0 = arith.constant 0 : i32
    %c0_i32_1 = arith.constant 0 : i32
    return %c0_i32, %c0_i32_0 : i32, i32
  }
  func.func @transform_14(%arg0: i32) -> (i32, i32) {
    %c0_i32 = arith.constant 0 : i32
    %c0_i32_0 = arith.constant 0 : i32
    %c0_i32_1 = arith.constant 0 : i32
    return %c0_i32, %c0_i32_0 : i32, i32
  }
  func.func @transform_15(%arg0: i32) -> (i32, i32) {
    %c0_i32 = arith.constant 0 : i32
    %c0_i32_0 = arith.constant 0 : i32
    %c0_i32_1 = arith.constant 0 : i32
    return %c0_i32, %c0_i32_0 : i32, i32
  }
  func.func @transform_16(%arg0: i32) -> (i32, i32) {
    %c0_i32 = arith.constant 0 : i32
    %c0_i32_0 = arith.constant 0 : i32
    %c0_i32_1 = arith.constant 0 : i32
    return %c0_i32, %c0_i32_0 : i32, i32
  }
  func.func @transform_17(%arg0: i32) -> (i32, i32, i32) {
    %c0_i32 = arith.constant 0 : i32
    %c0_i32_0 = arith.constant 0 : i32
    %c0_i32_1 = arith.constant 0 : i32
    return %arg0, %c0_i32, %c0_i32_0 : i32, i32, i32
  }
}

module attributes {stable_mosaic.version = 11 : i64} {
  func.func @fused_postnet_kernel(%arg0: i32, %arg1: memref<1x16x128xf32, #tpu.memory_space<vmem>>, %arg2: memref<1x16x1xf32, #tpu.memory_space<vmem>>, %arg3: memref<640x128xf32, #tpu.memory_space<vmem>>, %arg4: memref<1x128xf32, #tpu.memory_space<vmem>>, %arg5: memref<1x128xf32, #tpu.memory_space<vmem>>, %arg6: memref<640x128xf32, #tpu.memory_space<vmem>>, %arg7: memref<1x128xf32, #tpu.memory_space<vmem>>, %arg8: memref<1x128xf32, #tpu.memory_space<vmem>>, %arg9: memref<640x128xf32, #tpu.memory_space<vmem>>, %arg10: memref<1x128xf32, #tpu.memory_space<vmem>>, %arg11: memref<1x128xf32, #tpu.memory_space<vmem>>, %arg12: memref<640x128xf32, #tpu.memory_space<vmem>>, %arg13: memref<1x128xf32, #tpu.memory_space<vmem>>, %arg14: memref<1x128xf32, #tpu.memory_space<vmem>>, %arg15: memref<640x128xf32, #tpu.memory_space<vmem>>, %arg16: memref<1x128xf32, #tpu.memory_space<vmem>>, %arg17: memref<1x128xf32, #tpu.memory_space<vmem>>, %arg18: memref<1x16x128xf32, #tpu.memory_space<vmem>>, %arg19: memref<20x128xf32, #tpu.memory_space<vmem>>, %arg20: memref<20x128xf32, #tpu.memory_space<vmem>>, %arg21: memref<16x640xf32, #tpu.memory_space<vmem>>) attributes {dimension_semantics = [#tpu.dimension_semantics<parallel>], iteration_bounds = array<i64: 2>, scalar_prefetch = 0 : i64, scratch_operands = 3 : i64, tpu.core_type = #tpu.core_type<tc>, window_params = [{transform_indices = @transform_0, window_bounds = array<i64: 1, 16, 128>}, {transform_indices = @transform_1, window_bounds = array<i64: 1, 16, 1>}, {pipeline_mode = #tpu.pipeline_mode<synchronous>, transform_indices = @transform_2, window_bounds = array<i64: 640, 128>}, {pipeline_mode = #tpu.pipeline_mode<synchronous>, transform_indices = @transform_3, window_bounds = array<i64: 1, 128>}, {pipeline_mode = #tpu.pipeline_mode<synchronous>, transform_indices = @transform_4, window_bounds = array<i64: 1, 128>}, {pipeline_mode = #tpu.pipeline_mode<synchronous>, transform_indices = @transform_5, window_bounds = array<i64: 640, 128>}, {pipeline_mode = #tpu.pipeline_mode<synchronous>, transform_indices = @transform_6, window_bounds = array<i64: 1, 128>}, {pipeline_mode = #tpu.pipeline_mode<synchronous>, transform_indices = @transform_7, window_bounds = array<i64: 1, 128>}, {pipeline_mode = #tpu.pipeline_mode<synchronous>, transform_indices = @transform_8, window_bounds = array<i64: 640, 128>}, {pipeline_mode = #tpu.pipeline_mode<synchronous>, transform_indices = @transform_9, window_bounds = array<i64: 1, 128>}, {pipeline_mode = #tpu.pipeline_mode<synchronous>, transform_indices = @transform_10, window_bounds = array<i64: 1, 128>}, {pipeline_mode = #tpu.pipeline_mode<synchronous>, transform_indices = @transform_11, window_bounds = array<i64: 640, 128>}, {pipeline_mode = #tpu.pipeline_mode<synchronous>, transform_indices = @transform_12, window_bounds = array<i64: 1, 128>}, {pipeline_mode = #tpu.pipeline_mode<synchronous>, transform_indices = @transform_13, window_bounds = array<i64: 1, 128>}, {pipeline_mode = #tpu.pipeline_mode<synchronous>, transform_indices = @transform_14, window_bounds = array<i64: 640, 128>}, {pipeline_mode = #tpu.pipeline_mode<synchronous>, transform_indices = @transform_15, window_bounds = array<i64: 1, 128>}, {pipeline_mode = #tpu.pipeline_mode<synchronous>, transform_indices = @transform_16, window_bounds = array<i64: 1, 128>}, {transform_indices = @transform_17, window_bounds = array<i64: 1, 16, 128>}]} {
    %cst = arith.constant 0.000000e+00 : f32
    %0 = vector.broadcast %cst : f32 to vector<2x128xf32>
    %c0 = arith.constant 0 : index
    %c0_0 = arith.constant 0 : index
    %1 = vector.load %arg19[%c0, %c0_0] : memref<20x128xf32, #tpu.memory_space<vmem>>, vector<2x128xf32>
    tpu.vector_store %arg19[%c0, %c0_0], %0 {strides = array<i32>} : memref<20x128xf32, #tpu.memory_space<vmem>>, vector<2x128xf32>,
    %c18 = arith.constant 18 : index
    %c0_1 = arith.constant 0 : index
    %2 = vector.load %arg19[%c18, %c0_1] : memref<20x128xf32, #tpu.memory_space<vmem>>, vector<2x128xf32>
    tpu.vector_store %arg19[%c18, %c0_1], %0 {strides = array<i32>} : memref<20x128xf32, #tpu.memory_space<vmem>>, vector<2x128xf32>,
    %c0_2 = arith.constant 0 : index
    %c0_3 = arith.constant 0 : index
    %3 = vector.load %arg20[%c0_2, %c0_3] : memref<20x128xf32, #tpu.memory_space<vmem>>, vector<2x128xf32>
    tpu.vector_store %arg20[%c0_2, %c0_3], %0 {strides = array<i32>} : memref<20x128xf32, #tpu.memory_space<vmem>>, vector<2x128xf32>,
    %c18_4 = arith.constant 18 : index
    %c0_5 = arith.constant 0 : index
    %4 = vector.load %arg20[%c18_4, %c0_5] : memref<20x128xf32, #tpu.memory_space<vmem>>, vector<2x128xf32>
    tpu.vector_store %arg20[%c18_4, %c0_5], %0 {strides = array<i32>} : memref<20x128xf32, #tpu.memory_space<vmem>>, vector<2x128xf32>,
    %c0_6 = arith.constant 0 : index
    %c0_7 = arith.constant 0 : index
    %c0_8 = arith.constant 0 : index
    %5 = vector.load %arg1[%c0_6, %c0_7, %c0_8] : memref<1x16x128xf32, #tpu.memory_space<vmem>>, vector<1x16x128xf32>
    %6 = vector.shape_cast %5 : vector<1x16x128xf32> to vector<16x128xf32>
    %c0_9 = arith.constant 0 : index
    %c0_10 = arith.constant 0 : index
    %c0_11 = arith.constant 0 : index
    %7 = vector.load %arg2[%c0_9, %c0_10, %c0_11] : memref<1x16x1xf32, #tpu.memory_space<vmem>>, vector<1x16x1xf32>
    %8 = vector.shape_cast %7 : vector<1x16x1xf32> to vector<16x1xf32>
    %9 = vector.broadcast %8 : vector<16x1xf32> to vector<16x128xf32>
    %10 = arith.addf %6, %9 : vector<16x128xf32>
    %c2 = arith.constant 2 : index
    %c0_12 = arith.constant 0 : index
    %11 = vector.load %arg19[%c2, %c0_12] : memref<20x128xf32, #tpu.memory_space<vmem>>, vector<16x128xf32>
    tpu.vector_store %arg19[%c2, %c0_12], %10 {strides = array<i32>} : memref<20x128xf32, #tpu.memory_space<vmem>>, vector<16x128xf32>,
    %c0_13 = arith.constant 0 : index
    %c0_14 = arith.constant 0 : index
    %12 = vector.load %arg19[%c0_13, %c0_14] : memref<20x128xf32, #tpu.memory_space<vmem>>, vector<16x128xf32>
    %c0_15 = arith.constant 0 : index
    %c0_16 = arith.constant 0 : index
    %13 = vector.load %arg21[%c0_15, %c0_16] : memref<16x640xf32, #tpu.memory_space<vmem>>, vector<16x128xf32>
    tpu.vector_store %arg21[%c0_15, %c0_16], %12 {strides = array<i32>} : memref<16x640xf32, #tpu.memory_space<vmem>>, vector<16x128xf32>,
    %c1 = arith.constant 1 : index
    %c0_17 = arith.constant 0 : index
    %14 = vector.load %arg19[%c1, %c0_17] : memref<20x128xf32, #tpu.memory_space<vmem>>, vector<16x128xf32>
    %c0_18 = arith.constant 0 : index
    %c128 = arith.constant 128 : index
    %15 = vector.load %arg21[%c0_18, %c128] : memref<16x640xf32, #tpu.memory_space<vmem>>, vector<16x128xf32>
    tpu.vector_store %arg21[%c0_18, %c128], %14 {strides = array<i32>} : memref<16x640xf32, #tpu.memory_space<vmem>>, vector<16x128xf32>,
    %c2_19 = arith.constant 2 : index
    %c0_20 = arith.constant 0 : index
    %16 = vector.load %arg19[%c2_19, %c0_20] : memref<20x128xf32, #tpu.memory_space<vmem>>, vector<16x128xf32>
    %c0_21 = arith.constant 0 : index
    %c256 = arith.constant 256 : index
    %17 = vector.load %arg21[%c0_21, %c256] : memref<16x640xf32, #tpu.memory_space<vmem>>, vector<16x128xf32>
    tpu.vector_store %arg21[%c0_21, %c256], %16 {strides = array<i32>} : memref<16x640xf32, #tpu.memory_space<vmem>>, vector<16x128xf32>,
    %c3 = arith.constant 3 : index
    %c0_22 = arith.constant 0 : index
    %18 = vector.load %arg19[%c3, %c0_22] : memref<20x128xf32, #tpu.memory_space<vmem>>, vector<16x128xf32>
    %c0_23 = arith.constant 0 : index
    %c384 = arith.constant 384 : index
    %19 = vector.load %arg21[%c0_23, %c384] : memref<16x640xf32, #tpu.memory_space<vmem>>, vector<16x128xf32>
    tpu.vector_store %arg21[%c0_23, %c384], %18 {strides = array<i32>} : memref<16x640xf32, #tpu.memory_space<vmem>>, vector<16x128xf32>,
    %c4 = arith.constant 4 : index
    %c0_24 = arith.constant 0 : index
    %20 = vector.load %arg19[%c4, %c0_24] : memref<20x128xf32, #tpu.memory_space<vmem>>, vector<16x128xf32>
    %c0_25 = arith.constant 0 : index
    %c512 = arith.constant 512 : index
    %21 = vector.load %arg21[%c0_25, %c512] : memref<16x640xf32, #tpu.memory_space<vmem>>, vector<16x128xf32>
    tpu.vector_store %arg21[%c0_25, %c512], %20 {strides = array<i32>} : memref<16x640xf32, #tpu.memory_space<vmem>>, vector<16x128xf32>,
    %c0_26 = arith.constant 0 : index
    %c0_27 = arith.constant 0 : index
    %22 = vector.load %arg21[%c0_26, %c0_27] : memref<16x640xf32, #tpu.memory_space<vmem>>, vector<16x640xf32>
    %c0_28 = arith.constant 0 : index
    %c0_29 = arith.constant 0 : index
    %23 = vector.load %arg3[%c0_28, %c0_29] : memref<640x128xf32, #tpu.memory_space<vmem>>, vector<640x128xf32>
    %cst_30 = arith.constant dense<0.000000e+00> : vector<16x128xf32>
    %24 = tpu.matmul %22, %23, %cst_30 {dimension_numbers = #tpu.dot_dimension_numbers<[1], [0], [0], [1], [0, 0, 1, 1], [], []>} : vector<16x640xf32>, vector<640x128xf32>, vector<16x128xf32> -> vector<16x128xf32>
    %c0_31 = arith.constant 0 : index
    %c0_32 = arith.constant 0 : index
    %25 = vector.load %arg4[%c0_31, %c0_32] : memref<1x128xf32, #tpu.memory_space<vmem>>, vector<1x128xf32>
    %26 = vector.broadcast %25 : vector<1x128xf32> to vector<16x128xf32>
    %27 = arith.mulf %24, %26 : vector<16x128xf32>
    %c0_33 = arith.constant 0 : index
    %c0_34 = arith.constant 0 : index
    %28 = vector.load %arg5[%c0_33, %c0_34] : memref<1x128xf32, #tpu.memory_space<vmem>>, vector<1x128xf32>
    %29 = vector.broadcast %28 : vector<1x128xf32> to vector<16x128xf32>
    %30 = arith.addf %27, %29 : vector<16x128xf32>
    %31 = math.tanh %30 : vector<16x128xf32>
    %c2_35 = arith.constant 2 : index
    %c0_36 = arith.constant 0 : index
    %32 = vector.load %arg20[%c2_35, %c0_36] : memref<20x128xf32, #tpu.memory_space<vmem>>, vector<16x128xf32>
    tpu.vector_store %arg20[%c2_35, %c0_36], %31 {strides = array<i32>} : memref<20x128xf32, #tpu.memory_space<vmem>>, vector<16x128xf32>,
    %c0_37 = arith.constant 0 : index
    %c0_38 = arith.constant 0 : index
    %33 = vector.load %arg20[%c0_37, %c0_38] : memref<20x128xf32, #tpu.memory_space<vmem>>, vector<16x128xf32>
    %c0_39 = arith.constant 0 : index
    %c0_40 = arith.constant 0 : index
    %34 = vector.load %arg21[%c0_39, %c0_40] : memref<16x640xf32, #tpu.memory_space<vmem>>, vector<16x128xf32>
    tpu.vector_store %arg21[%c0_39, %c0_40], %33 {strides = array<i32>} : memref<16x640xf32, #tpu.memory_space<vmem>>, vector<16x128xf32>,
    %c1_41 = arith.constant 1 : index
    %c0_42 = arith.constant 0 : index
    %35 = vector.load %arg20[%c1_41, %c0_42] : memref<20x128xf32, #tpu.memory_space<vmem>>, vector<16x128xf32>
    %c0_43 = arith.constant 0 : index
    %c128_44 = arith.constant 128 : index
    %36 = vector.load %arg21[%c0_43, %c128_44] : memref<16x640xf32, #tpu.memory_space<vmem>>, vector<16x128xf32>
    tpu.vector_store %arg21[%c0_43, %c128_44], %35 {strides = array<i32>} : memref<16x640xf32, #tpu.memory_space<vmem>>, vector<16x128xf32>,
    %c2_45 = arith.constant 2 : index
    %c0_46 = arith.constant 0 : index
    %37 = vector.load %arg20[%c2_45, %c0_46] : memref<20x128xf32, #tpu.memory_space<vmem>>, vector<16x128xf32>
    %c0_47 = arith.constant 0 : index
    %c256_48 = arith.constant 256 : index
    %38 = vector.load %arg21[%c0_47, %c256_48] : memref<16x640xf32, #tpu.memory_space<vmem>>, vector<16x128xf32>
    tpu.vector_store %arg21[%c0_47, %c256_48], %37 {strides = array<i32>} : memref<16x640xf32, #tpu.memory_space<vmem>>, vector<16x128xf32>,
    %c3_49 = arith.constant 3 : index
    %c0_50 = arith.constant 0 : index
    %39 = vector.load %arg20[%c3_49, %c0_50] : memref<20x128xf32, #tpu.memory_space<vmem>>, vector<16x128xf32>
    %c0_51 = arith.constant 0 : index
    %c384_52 = arith.constant 384 : index
    %40 = vector.load %arg21[%c0_51, %c384_52] : memref<16x640xf32, #tpu.memory_space<vmem>>, vector<16x128xf32>
    tpu.vector_store %arg21[%c0_51, %c384_52], %39 {strides = array<i32>} : memref<16x640xf32, #tpu.memory_space<vmem>>, vector<16x128xf32>,
    %c4_53 = arith.constant 4 : index
    %c0_54 = arith.constant 0 : index
    %41 = vector.load %arg20[%c4_53, %c0_54] : memref<20x128xf32, #tpu.memory_space<vmem>>, vector<16x128xf32>
    %c0_55 = arith.constant 0 : index
    %c512_56 = arith.constant 512 : index
    %42 = vector.load %arg21[%c0_55, %c512_56] : memref<16x640xf32, #tpu.memory_space<vmem>>, vector<16x128xf32>
    tpu.vector_store %arg21[%c0_55, %c512_56], %41 {strides = array<i32>} : memref<16x640xf32, #tpu.memory_space<vmem>>, vector<16x128xf32>,
    %c0_57 = arith.constant 0 : index
    %c0_58 = arith.constant 0 : index
    %43 = vector.load %arg21[%c0_57, %c0_58] : memref<16x640xf32, #tpu.memory_space<vmem>>, vector<16x640xf32>
    %c0_59 = arith.constant 0 : index
    %c0_60 = arith.constant 0 : index
    %44 = vector.load %arg6[%c0_59, %c0_60] : memref<640x128xf32, #tpu.memory_space<vmem>>, vector<640x128xf32>
    %cst_61 = arith.constant dense<0.000000e+00> : vector<16x128xf32>
    %45 = tpu.matmul %43, %44, %cst_61 {dimension_numbers = #tpu.dot_dimension_numbers<[1], [0], [0], [1], [0, 0, 1, 1], [], []>} : vector<16x640xf32>, vector<640x128xf32>, vector<16x128xf32> -> vector<16x128xf32>
    %c0_62 = arith.constant 0 : index
    %c0_63 = arith.constant 0 : index
    %46 = vector.load %arg7[%c0_62, %c0_63] : memref<1x128xf32, #tpu.memory_space<vmem>>, vector<1x128xf32>
    %47 = vector.broadcast %46 : vector<1x128xf32> to vector<16x128xf32>
    %48 = arith.mulf %45, %47 : vector<16x128xf32>
    %c0_64 = arith.constant 0 : index
    %c0_65 = arith.constant 0 : index
    %49 = vector.load %arg8[%c0_64, %c0_65] : memref<1x128xf32, #tpu.memory_space<vmem>>, vector<1x128xf32>
    %50 = vector.broadcast %49 : vector<1x128xf32> to vector<16x128xf32>
    %51 = arith.addf %48, %50 : vector<16x128xf32>
    %52 = math.tanh %51 : vector<16x128xf32>
    %c2_66 = arith.constant 2 : index
    %c0_67 = arith.constant 0 : index
    %53 = vector.load %arg19[%c2_66, %c0_67] : memref<20x128xf32, #tpu.memory_space<vmem>>, vector<16x128xf32>
    tpu.vector_store %arg19[%c2_66, %c0_67], %52 {strides = array<i32>} : memref<20x128xf32, #tpu.memory_space<vmem>>, vector<16x128xf32>,
    %c0_68 = arith.constant 0 : index
    %c0_69 = arith.constant 0 : index
    %54 = vector.load %arg19[%c0_68, %c0_69] : memref<20x128xf32, #tpu.memory_space<vmem>>, vector<16x128xf32>
    %c0_70 = arith.constant 0 : index
    %c0_71 = arith.constant 0 : index
    %55 = vector.load %arg21[%c0_70, %c0_71] : memref<16x640xf32, #tpu.memory_space<vmem>>, vector<16x128xf32>
    tpu.vector_store %arg21[%c0_70, %c0_71], %54 {strides = array<i32>} : memref<16x640xf32, #tpu.memory_space<vmem>>, vector<16x128xf32>,
    %c1_72 = arith.constant 1 : index
    %c0_73 = arith.constant 0 : index
    %56 = vector.load %arg19[%c1_72, %c0_73] : memref<20x128xf32, #tpu.memory_space<vmem>>, vector<16x128xf32>
    %c0_74 = arith.constant 0 : index
    %c128_75 = arith.constant 128 : index
    %57 = vector.load %arg21[%c0_74, %c128_75] : memref<16x640xf32, #tpu.memory_space<vmem>>, vector<16x128xf32>
    tpu.vector_store %arg21[%c0_74, %c128_75], %56 {strides = array<i32>} : memref<16x640xf32, #tpu.memory_space<vmem>>, vector<16x128xf32>,
    %c2_76 = arith.constant 2 : index
    %c0_77 = arith.constant 0 : index
    %58 = vector.load %arg19[%c2_76, %c0_77] : memref<20x128xf32, #tpu.memory_space<vmem>>, vector<16x128xf32>
    %c0_78 = arith.constant 0 : index
    %c256_79 = arith.constant 256 : index
    %59 = vector.load %arg21[%c0_78, %c256_79] : memref<16x640xf32, #tpu.memory_space<vmem>>, vector<16x128xf32>
    tpu.vector_store %arg21[%c0_78, %c256_79], %58 {strides = array<i32>} : memref<16x640xf32, #tpu.memory_space<vmem>>, vector<16x128xf32>,
    %c3_80 = arith.constant 3 : index
    %c0_81 = arith.constant 0 : index
    %60 = vector.load %arg19[%c3_80, %c0_81] : memref<20x128xf32, #tpu.memory_space<vmem>>, vector<16x128xf32>
    %c0_82 = arith.constant 0 : index
    %c384_83 = arith.constant 384 : index
    %61 = vector.load %arg21[%c0_82, %c384_83] : memref<16x640xf32, #tpu.memory_space<vmem>>, vector<16x128xf32>
    tpu.vector_store %arg21[%c0_82, %c384_83], %60 {strides = array<i32>} : memref<16x640xf32, #tpu.memory_space<vmem>>, vector<16x128xf32>,
    %c4_84 = arith.constant 4 : index
    %c0_85 = arith.constant 0 : index
    %62 = vector.load %arg19[%c4_84, %c0_85] : memref<20x128xf32, #tpu.memory_space<vmem>>, vector<16x128xf32>
    %c0_86 = arith.constant 0 : index
    %c512_87 = arith.constant 512 : index
    %63 = vector.load %arg21[%c0_86, %c512_87] : memref<16x640xf32, #tpu.memory_space<vmem>>, vector<16x128xf32>
    tpu.vector_store %arg21[%c0_86, %c512_87], %62 {strides = array<i32>} : memref<16x640xf32, #tpu.memory_space<vmem>>, vector<16x128xf32>,
    %c0_88 = arith.constant 0 : index
    %c0_89 = arith.constant 0 : index
    %64 = vector.load %arg21[%c0_88, %c0_89] : memref<16x640xf32, #tpu.memory_space<vmem>>, vector<16x640xf32>
    %c0_90 = arith.constant 0 : index
    %c0_91 = arith.constant 0 : index
    %65 = vector.load %arg9[%c0_90, %c0_91] : memref<640x128xf32, #tpu.memory_space<vmem>>, vector<640x128xf32>
    %cst_92 = arith.constant dense<0.000000e+00> : vector<16x128xf32>
    %66 = tpu.matmul %64, %65, %cst_92 {dimension_numbers = #tpu.dot_dimension_numbers<[1], [0], [0], [1], [0, 0, 1, 1], [], []>} : vector<16x640xf32>, vector<640x128xf32>, vector<16x128xf32> -> vector<16x128xf32>
    %c0_93 = arith.constant 0 : index
    %c0_94 = arith.constant 0 : index
    %67 = vector.load %arg10[%c0_93, %c0_94] : memref<1x128xf32, #tpu.memory_space<vmem>>, vector<1x128xf32>
    %68 = vector.broadcast %67 : vector<1x128xf32> to vector<16x128xf32>
    %69 = arith.mulf %66, %68 : vector<16x128xf32>
    %c0_95 = arith.constant 0 : index
    %c0_96 = arith.constant 0 : index
    %70 = vector.load %arg11[%c0_95, %c0_96] : memref<1x128xf32, #tpu.memory_space<vmem>>, vector<1x128xf32>
    %71 = vector.broadcast %70 : vector<1x128xf32> to vector<16x128xf32>
    %72 = arith.addf %69, %71 : vector<16x128xf32>
    %73 = math.tanh %72 : vector<16x128xf32>
    %c2_97 = arith.constant 2 : index
    %c0_98 = arith.constant 0 : index
    %74 = vector.load %arg20[%c2_97, %c0_98] : memref<20x128xf32, #tpu.memory_space<vmem>>, vector<16x128xf32>
    tpu.vector_store %arg20[%c2_97, %c0_98], %73 {strides = array<i32>} : memref<20x128xf32, #tpu.memory_space<vmem>>, vector<16x128xf32>,
    %c0_99 = arith.constant 0 : index
    %c0_100 = arith.constant 0 : index
    %75 = vector.load %arg20[%c0_99, %c0_100] : memref<20x128xf32, #tpu.memory_space<vmem>>, vector<16x128xf32>
    %c0_101 = arith.constant 0 : index
    %c0_102 = arith.constant 0 : index
    %76 = vector.load %arg21[%c0_101, %c0_102] : memref<16x640xf32, #tpu.memory_space<vmem>>, vector<16x128xf32>
    tpu.vector_store %arg21[%c0_101, %c0_102], %75 {strides = array<i32>} : memref<16x640xf32, #tpu.memory_space<vmem>>, vector<16x128xf32>,
    %c1_103 = arith.constant 1 : index
    %c0_104 = arith.constant 0 : index
    %77 = vector.load %arg20[%c1_103, %c0_104] : memref<20x128xf32, #tpu.memory_space<vmem>>, vector<16x128xf32>
    %c0_105 = arith.constant 0 : index
    %c128_106 = arith.constant 128 : index
    %78 = vector.load %arg21[%c0_105, %c128_106] : memref<16x640xf32, #tpu.memory_space<vmem>>, vector<16x128xf32>
    tpu.vector_store %arg21[%c0_105, %c128_106], %77 {strides = array<i32>} : memref<16x640xf32, #tpu.memory_space<vmem>>, vector<16x128xf32>,
    %c2_107 = arith.constant 2 : index
    %c0_108 = arith.constant 0 : index
    %79 = vector.load %arg20[%c2_107, %c0_108] : memref<20x128xf32, #tpu.memory_space<vmem>>, vector<16x128xf32>
    %c0_109 = arith.constant 0 : index
    %c256_110 = arith.constant 256 : index
    %80 = vector.load %arg21[%c0_109, %c256_110] : memref<16x640xf32, #tpu.memory_space<vmem>>, vector<16x128xf32>
    tpu.vector_store %arg21[%c0_109, %c256_110], %79 {strides = array<i32>} : memref<16x640xf32, #tpu.memory_space<vmem>>, vector<16x128xf32>,
    %c3_111 = arith.constant 3 : index
    %c0_112 = arith.constant 0 : index
    %81 = vector.load %arg20[%c3_111, %c0_112] : memref<20x128xf32, #tpu.memory_space<vmem>>, vector<16x128xf32>
    %c0_113 = arith.constant 0 : index
    %c384_114 = arith.constant 384 : index
    %82 = vector.load %arg21[%c0_113, %c384_114] : memref<16x640xf32, #tpu.memory_space<vmem>>, vector<16x128xf32>
    tpu.vector_store %arg21[%c0_113, %c384_114], %81 {strides = array<i32>} : memref<16x640xf32, #tpu.memory_space<vmem>>, vector<16x128xf32>,
    %c4_115 = arith.constant 4 : index
    %c0_116 = arith.constant 0 : index
    %83 = vector.load %arg20[%c4_115, %c0_116] : memref<20x128xf32, #tpu.memory_space<vmem>>, vector<16x128xf32>
    %c0_117 = arith.constant 0 : index
    %c512_118 = arith.constant 512 : index
    %84 = vector.load %arg21[%c0_117, %c512_118] : memref<16x640xf32, #tpu.memory_space<vmem>>, vector<16x128xf32>
    tpu.vector_store %arg21[%c0_117, %c512_118], %83 {strides = array<i32>} : memref<16x640xf32, #tpu.memory_space<vmem>>, vector<16x128xf32>,
    %c0_119 = arith.constant 0 : index
    %c0_120 = arith.constant 0 : index
    %85 = vector.load %arg21[%c0_119, %c0_120] : memref<16x640xf32, #tpu.memory_space<vmem>>, vector<16x640xf32>
    %c0_121 = arith.constant 0 : index
    %c0_122 = arith.constant 0 : index
    %86 = vector.load %arg12[%c0_121, %c0_122] : memref<640x128xf32, #tpu.memory_space<vmem>>, vector<640x128xf32>
    %cst_123 = arith.constant dense<0.000000e+00> : vector<16x128xf32>
    %87 = tpu.matmul %85, %86, %cst_123 {dimension_numbers = #tpu.dot_dimension_numbers<[1], [0], [0], [1], [0, 0, 1, 1], [], []>} : vector<16x640xf32>, vector<640x128xf32>, vector<16x128xf32> -> vector<16x128xf32>
    %c0_124 = arith.constant 0 : index
    %c0_125 = arith.constant 0 : index
    %88 = vector.load %arg13[%c0_124, %c0_125] : memref<1x128xf32, #tpu.memory_space<vmem>>, vector<1x128xf32>
    %89 = vector.broadcast %88 : vector<1x128xf32> to vector<16x128xf32>
    %90 = arith.mulf %87, %89 : vector<16x128xf32>
    %c0_126 = arith.constant 0 : index
    %c0_127 = arith.constant 0 : index
    %91 = vector.load %arg14[%c0_126, %c0_127] : memref<1x128xf32, #tpu.memory_space<vmem>>, vector<1x128xf32>
    %92 = vector.broadcast %91 : vector<1x128xf32> to vector<16x128xf32>
    %93 = arith.addf %90, %92 : vector<16x128xf32>
    %94 = math.tanh %93 : vector<16x128xf32>
    %c2_128 = arith.constant 2 : index
    %c0_129 = arith.constant 0 : index
    %95 = vector.load %arg19[%c2_128, %c0_129] : memref<20x128xf32, #tpu.memory_space<vmem>>, vector<16x128xf32>
    tpu.vector_store %arg19[%c2_128, %c0_129], %94 {strides = array<i32>} : memref<20x128xf32, #tpu.memory_space<vmem>>, vector<16x128xf32>,
    %c0_130 = arith.constant 0 : index
    %c0_131 = arith.constant 0 : index
    %96 = vector.load %arg19[%c0_130, %c0_131] : memref<20x128xf32, #tpu.memory_space<vmem>>, vector<16x128xf32>
    %c0_132 = arith.constant 0 : index
    %c0_133 = arith.constant 0 : index
    %97 = vector.load %arg21[%c0_132, %c0_133] : memref<16x640xf32, #tpu.memory_space<vmem>>, vector<16x128xf32>
    tpu.vector_store %arg21[%c0_132, %c0_133], %96 {strides = array<i32>} : memref<16x640xf32, #tpu.memory_space<vmem>>, vector<16x128xf32>,
    %c1_134 = arith.constant 1 : index
    %c0_135 = arith.constant 0 : index
    %98 = vector.load %arg19[%c1_134, %c0_135] : memref<20x128xf32, #tpu.memory_space<vmem>>, vector<16x128xf32>
    %c0_136 = arith.constant 0 : index
    %c128_137 = arith.constant 128 : index
    %99 = vector.load %arg21[%c0_136, %c128_137] : memref<16x640xf32, #tpu.memory_space<vmem>>, vector<16x128xf32>
    tpu.vector_store %arg21[%c0_136, %c128_137], %98 {strides = array<i32>} : memref<16x640xf32, #tpu.memory_space<vmem>>, vector<16x128xf32>,
    %c2_138 = arith.constant 2 : index
    %c0_139 = arith.constant 0 : index
    %100 = vector.load %arg19[%c2_138, %c0_139] : memref<20x128xf32, #tpu.memory_space<vmem>>, vector<16x128xf32>
    %c0_140 = arith.constant 0 : index
    %c256_141 = arith.constant 256 : index
    %101 = vector.load %arg21[%c0_140, %c256_141] : memref<16x640xf32, #tpu.memory_space<vmem>>, vector<16x128xf32>
    tpu.vector_store %arg21[%c0_140, %c256_141], %100 {strides = array<i32>} : memref<16x640xf32, #tpu.memory_space<vmem>>, vector<16x128xf32>,
    %c3_142 = arith.constant 3 : index
    %c0_143 = arith.constant 0 : index
    %102 = vector.load %arg19[%c3_142, %c0_143] : memref<20x128xf32, #tpu.memory_space<vmem>>, vector<16x128xf32>
    %c0_144 = arith.constant 0 : index
    %c384_145 = arith.constant 384 : index
    %103 = vector.load %arg21[%c0_144, %c384_145] : memref<16x640xf32, #tpu.memory_space<vmem>>, vector<16x128xf32>
    tpu.vector_store %arg21[%c0_144, %c384_145], %102 {strides = array<i32>} : memref<16x640xf32, #tpu.memory_space<vmem>>, vector<16x128xf32>,
    %c4_146 = arith.constant 4 : index
    %c0_147 = arith.constant 0 : index
    %104 = vector.load %arg19[%c4_146, %c0_147] : memref<20x128xf32, #tpu.memory_space<vmem>>, vector<16x128xf32>
    %c0_148 = arith.constant 0 : index
    %c512_149 = arith.constant 512 : index
    %105 = vector.load %arg21[%c0_148, %c512_149] : memref<16x640xf32, #tpu.memory_space<vmem>>, vector<16x128xf32>
    tpu.vector_store %arg21[%c0_148, %c512_149], %104 {strides = array<i32>} : memref<16x640xf32, #tpu.memory_space<vmem>>, vector<16x128xf32>,
    %c0_150 = arith.constant 0 : index
    %c0_151 = arith.constant 0 : index
    %106 = vector.load %arg21[%c0_150, %c0_151] : memref<16x640xf32, #tpu.memory_space<vmem>>, vector<16x640xf32>
    %c0_152 = arith.constant 0 : index
    %c0_153 = arith.constant 0 : index
    %107 = vector.load %arg15[%c0_152, %c0_153] : memref<640x128xf32, #tpu.memory_space<vmem>>, vector<640x128xf32>
    %cst_154 = arith.constant dense<0.000000e+00> : vector<16x128xf32>
    %108 = tpu.matmul %106, %107, %cst_154 {dimension_numbers = #tpu.dot_dimension_numbers<[1], [0], [0], [1], [0, 0, 1, 1], [], []>} : vector<16x640xf32>, vector<640x128xf32>, vector<16x128xf32> -> vector<16x128xf32>
    %c0_155 = arith.constant 0 : index
    %c0_156 = arith.constant 0 : index
    %109 = vector.load %arg16[%c0_155, %c0_156] : memref<1x128xf32, #tpu.memory_space<vmem>>, vector<1x128xf32>
    %110 = vector.broadcast %109 : vector<1x128xf32> to vector<16x128xf32>
    %111 = arith.mulf %108, %110 : vector<16x128xf32>
    %c0_157 = arith.constant 0 : index
    %c0_158 = arith.constant 0 : index
    %112 = vector.load %arg17[%c0_157, %c0_158] : memref<1x128xf32, #tpu.memory_space<vmem>>, vector<1x128xf32>
    %113 = vector.broadcast %112 : vector<1x128xf32> to vector<16x128xf32>
    %114 = arith.addf %111, %113 : vector<16x128xf32>
    %c0_159 = arith.constant 0 : index
    %c0_160 = arith.constant 0 : index
    %c0_161 = arith.constant 0 : index
    %115 = vector.load %arg18[%c0_159, %c0_160, %c0_161] : memref<1x16x128xf32, #tpu.memory_space<vmem>>, vector<1x16x128xf32>
    %116 = vector.shape_cast %115 : vector<1x16x128xf32> to vector<16x128xf32>
    %117 = vector.shape_cast %114 : vector<16x128xf32> to vector<1x16x128xf32>
    tpu.vector_store %arg18[%c0_159, %c0_160, %c0_161], %117 {strides = array<i32>} : memref<1x16x128xf32, #tpu.memory_space<vmem>>, vector<1x16x128xf32>,
    return
  }
  func.func @transform_0(%arg0: i32) -> (i32, i32, i32) {
    %c0_i32 = arith.constant 0 : i32
    %c0_i32_0 = arith.constant 0 : i32
    %c0_i32_1 = arith.constant 0 : i32
    return %arg0, %c0_i32, %c0_i32_0 : i32, i32, i32
  }
  func.func @transform_1(%arg0: i32) -> (i32, i32, i32) {
    %c0_i32 = arith.constant 0 : i32
    %c0_i32_0 = arith.constant 0 : i32
    %c0_i32_1 = arith.constant 0 : i32
    return %arg0, %c0_i32, %c0_i32_0 : i32, i32, i32
  }
  func.func @transform_2(%arg0: i32) -> (i32, i32) {
    %c0_i32 = arith.constant 0 : i32
    %c0_i32_0 = arith.constant 0 : i32
    %c0_i32_1 = arith.constant 0 : i32
    return %c0_i32, %c0_i32_0 : i32, i32
  }
  func.func @transform_3(%arg0: i32) -> (i32, i32) {
    %c0_i32 = arith.constant 0 : i32
    %c0_i32_0 = arith.constant 0 : i32
    %c0_i32_1 = arith.constant 0 : i32
    return %c0_i32, %c0_i32_0 : i32, i32
  }
  func.func @transform_4(%arg0: i32) -> (i32, i32) {
    %c0_i32 = arith.constant 0 : i32
    %c0_i32_0 = arith.constant 0 : i32
    %c0_i32_1 = arith.constant 0 : i32
    return %c0_i32, %c0_i32_0 : i32, i32
  }
  func.func @transform_5(%arg0: i32) -> (i32, i32) {
    %c0_i32 = arith.constant 0 : i32
    %c0_i32_0 = arith.constant 0 : i32
    %c0_i32_1 = arith.constant 0 : i32
    return %c0_i32, %c0_i32_0 : i32, i32
  }
  func.func @transform_6(%arg0: i32) -> (i32, i32) {
    %c0_i32 = arith.constant 0 : i32
    %c0_i32_0 = arith.constant 0 : i32
    %c0_i32_1 = arith.constant 0 : i32
    return %c0_i32, %c0_i32_0 : i32, i32
  }
  func.func @transform_7(%arg0: i32) -> (i32, i32) {
    %c0_i32 = arith.constant 0 : i32
    %c0_i32_0 = arith.constant 0 : i32
    %c0_i32_1 = arith.constant 0 : i32
    return %c0_i32, %c0_i32_0 : i32, i32
  }
  func.func @transform_8(%arg0: i32) -> (i32, i32) {
    %c0_i32 = arith.constant 0 : i32
    %c0_i32_0 = arith.constant 0 : i32
    %c0_i32_1 = arith.constant 0 : i32
    return %c0_i32, %c0_i32_0 : i32, i32
  }
  func.func @transform_9(%arg0: i32) -> (i32, i32) {
    %c0_i32 = arith.constant 0 : i32
    %c0_i32_0 = arith.constant 0 : i32
    %c0_i32_1 = arith.constant 0 : i32
    return %c0_i32, %c0_i32_0 : i32, i32
  }
  func.func @transform_10(%arg0: i32) -> (i32, i32) {
    %c0_i32 = arith.constant 0 : i32
    %c0_i32_0 = arith.constant 0 : i32
    %c0_i32_1 = arith.constant 0 : i32
    return %c0_i32, %c0_i32_0 : i32, i32
  }
  func.func @transform_11(%arg0: i32) -> (i32, i32) {
    %c0_i32 = arith.constant 0 : i32
    %c0_i32_0 = arith.constant 0 : i32
    %c0_i32_1 = arith.constant 0 : i32
    return %c0_i32, %c0_i32_0 : i32, i32
  }
  func.func @transform_12(%arg0: i32) -> (i32, i32) {
    %c0_i32 = arith.constant 0 : i32
    %c0_i32_0 = arith.constant 0 : i32
    %c0_i32_1 = arith.constant 0 : i32
    return %c0_i32, %c0_i32_0 : i32, i32
  }
  func.func @transform_13(%arg0: i32) -> (i32, i32) {
    %c0_i32 = arith.constant 0 : i32
    %c0_i32_0 = arith.constant 0 : i32
    %c0_i32_1 = arith.constant 0 : i32
    return %c0_i32, %c0_i32_0 : i32, i32
  }
  func.func @transform_14(%arg0: i32) -> (i32, i32) {
    %c0_i32 = arith.constant 0 : i32
    %c0_i32_0 = arith.constant 0 : i32
    %c0_i32_1 = arith.constant 0 : i32
    return %c0_i32, %c0_i32_0 : i32, i32
  }
  func.func @transform_15(%arg0: i32) -> (i32, i32) {
    %c0_i32 = arith.constant 0 : i32
    %c0_i32_0 = arith.constant 0 : i32
    %c0_i32_1 = arith.constant 0 : i32
    return %c0_i32, %c0_i32_0 : i32, i32
  }
  func.func @transform_16(%arg0: i32) -> (i32, i32) {
    %c0_i32 = arith.constant 0 : i32
    %c0_i32_0 = arith.constant 0 : i32
    %c0_i32_1 = arith.constant 0 : i32
    return %c0_i32, %c0_i32_0 : i32, i32
  }
  func.func @transform_17(%arg0: i32) -> (i32, i32, i32) {
    %c0_i32 = arith.constant 0 : i32
    %c0_i32_0 = arith.constant 0 : i32
    %c0_i32_1 = arith.constant 0 : i32
    return %arg0, %c0_i32, %c0_i32_0 : i32, i32, i32
  }
}

</mosaic_0001>

<llo_original>
// kernel: tpu_custom_call.1
$region0: #{tpu_custom_call.1}
  #allocation0 [shape = 'u32[]', space=smem, size = 0x4, offset = 0x4, fixed_abs, tag = 'smem constant byte address 0x4 - core index']
  #allocation1 [shape = 'u32[144,128]{1,0:T(1,128)}', space=vmem, size = 0x12000, scoped, tag = 'internal scratch']
  #allocation2 [shape = 'f32[20,128]{1,0:T(8,128)}', space=vmem, size = 0x3000, scoped, tag = 'scratch operand']
  #allocation3 [shape = 'f32[20,128]{1,0:T(8,128)}', space=vmem, size = 0x3000, scoped, tag = 'scratch operand']
  #allocation4 [shape = 'f32[16,640]{1,0:T(8,128)}', space=vmem, size = 0xa000, scoped, tag = 'scratch operand']
  %s0 = inlined_call_operand.vmem [shape: f32[2,16,128], index: 0, kind: input, shape index: {}]
  %s1 = inlined_call_operand.vmem [shape: f32[2,16,1], index: 1, kind: input, shape index: {}]
  %s2 = inlined_call_operand.hbm [shape: f32[640,128], index: 2, kind: input, shape index: {}]
  %s3 = inlined_call_operand.vmem [shape: f32[1,128], index: 3, kind: input, shape index: {}]
  %s4 = inlined_call_operand.vmem [shape: f32[1,128], index: 4, kind: input, shape index: {}]
  %s5 = inlined_call_operand.hbm [shape: f32[640,128], index: 5, kind: input, shape index: {}]
  %s6 = inlined_call_operand.vmem [shape: f32[1,128], index: 6, kind: input, shape index: {}]
  %s7 = inlined_call_operand.vmem [shape: f32[1,128], index: 7, kind: input, shape index: {}]
  %s8 = inlined_call_operand.hbm [shape: f32[640,128], index: 8, kind: input, shape index: {}]
  %s9 = inlined_call_operand.vmem [shape: f32[1,128], index: 9, kind: input, shape index: {}]
  %s10 = inlined_call_operand.vmem [shape: f32[1,128], index: 10, kind: input, shape index: {}]
  %s11 = inlined_call_operand.hbm [shape: f32[640,128], index: 11, kind: input, shape index: {}]
  %s12 = inlined_call_operand.vmem [shape: f32[1,128], index: 12, kind: input, shape index: {}]
  %s13 = inlined_call_operand.vmem [shape: f32[1,128], index: 13, kind: input, shape index: {}]
  %s14 = inlined_call_operand.hbm [shape: f32[640,128], index: 14, kind: input, shape index: {}]
  %s15 = inlined_call_operand.vmem [shape: f32[1,128], index: 15, kind: input, shape index: {}]
  %s16 = inlined_call_operand.vmem [shape: f32[1,128], index: 16, kind: input, shape index: {}]
  %s17 = inlined_call_operand.hbm [shape: f32[2,16,128], index: 17, kind: output, shape index: {}]
  %s18 = sld [smem:[#allocation0]]
  $region121: #{tpu_custom_call.1} parent=0
    _
  %s20 = ssub.s32 1, %s18
  %s21 = scalar_select 0, %s20, %s18
  $region1: #{tpu_custom_call.1} parent=0
    #allocation5 [shape = 'u8[327680]{0}', space=vmem, size = 0x50000, scoped, tag = 'input window, operand 2, single buffered']
    #allocation6 [shape = 's32[2]{0}', space=sflag, size = 0x8, scoped, tag = 'scoped memory for tpu_custom_call.1']
    #allocation7 [shape = 's32[2]{0}', space=sflag, size = 0x8, scoped, tag = 'scoped memory for tpu_custom_call.1']
    #allocation8 [shape = 'u8[327680]{0}', space=vmem, size = 0x50000, scoped, tag = 'input window, operand 5, single buffered']
    #allocation9 [shape = 's32[1]{0}', space=sflag, size = 0x4, scoped, tag = 'scoped memory for tpu_custom_call.1']
    #allocation10 [shape = 'u8[327680]{0}', space=vmem, size = 0x50000, scoped, tag = 'input window, operand 8, single buffered']
    #allocation11 [shape = 'u8[327680]{0}', space=vmem, size = 0x50000, scoped, tag = 'input window, operand 11, single buffered']
    #allocation12 [shape = 's32[1]{0}', space=sflag, size = 0x4, scoped, tag = 'scoped memory for tpu_custom_call.1']
    #allocation13 [shape = 'u8[327680]{0}', space=vmem, size = 0x50000, scoped, tag = 'input window, operand 14, single buffered']
    #allocation14 [shape = 'u8[16384]{0}', space=vmem, size = 0x4000, scoped, tag = 'output window, operand 0']
    %22 = vsyncpa [#allocation6], 0
    %23 = vsyncpa [#allocation9], 0
    %24 = vsyncpa [#allocation12], 0
    %25 = vsyncpa [#allocation7], 0
    %s26 = scalar_lea.sflag [#allocation7], 1
    %27 = vsyncpa %s26, 0
    loop: start=0, step=1, limit=4
    $region2: #{tpu_custom_call.1} parent=1 // loop_pre_header
      _
    $region3: #{tpu_custom_call.1} parent=1 // loop_header
      %s29 = sphi 0, %s33
      %p30 = scmp.ge.s32.totalorder %s29, 4
      %s39 = sphi 0, %s41
      %s42 = sphi 0, %s39
      %s43 = sphi 0, %s42
      %s59 = sphi 0, %s43
      %s65 = sphi 0, %s67
      %s68 = sphi 0, %s65
      %s69 = sphi 0, %s68
      %s85 = sphi 0, %s69
      %s89 = sphi 0, %s89
      %s91 = sphi 0, %s89
      %s92 = sphi 0, %s91
      %s106 = sphi 0, %s92
      %s110 = sphi 0, %s110
      %s112 = sphi 0, %s110
      %s113 = sphi 0, %s112
      %s127 = sphi 0, %s113
      %s131 = sphi 0, %s131
      %s133 = sphi 0, %s131
      %s134 = sphi 0, %s133
      %s148 = sphi 0, %s134
      %s152 = sphi 0, %s152
      %s154 = sphi 0, %s152
      %s155 = sphi 0, %s154
      %s169 = sphi 0, %s155
      %s173 = sphi 0, %s173
      %s175 = sphi 0, %s173
      %s176 = sphi 0, %s175
      %s190 = sphi 0, %s176
      %s194 = sphi 0, %s194
      %s196 = sphi 0, %s194
      %s197 = sphi 0, %s196
      %s211 = sphi 0, %s197
      %s215 = sphi 0, %s215
      %s217 = sphi 0, %s215
      %s218 = sphi 0, %s217
      %s232 = sphi 0, %s218
      %s236 = sphi 0, %s236
      %s238 = sphi 0, %s236
      %s239 = sphi 0, %s238
      %s253 = sphi 0, %s239
      %s257 = sphi 0, %s257
      %s259 = sphi 0, %s257
      %s260 = sphi 0, %s259
      %s274 = sphi 0, %s260
      %s278 = sphi 0, %s278
      %s280 = sphi 0, %s278
      %s281 = sphi 0, %s280
      %s295 = sphi 0, %s281
      %s299 = sphi 0, %s299
      %s301 = sphi 0, %s299
      %s302 = sphi 0, %s301
      %s316 = sphi 0, %s302
      %s320 = sphi 0, %s320
      %s322 = sphi 0, %s320
      %s323 = sphi 0, %s322
      %s337 = sphi 0, %s323
      %s341 = sphi 0, %s341
      %s343 = sphi 0, %s341
      %s344 = sphi 0, %s343
      %s358 = sphi 0, %s344
      %s362 = sphi 0, %s362
      %s364 = sphi 0, %s362
      %s365 = sphi 0, %s364
      %s379 = sphi 0, %s365
      %s383 = sphi 0, %s383
      %s385 = sphi 0, %s383
      %s386 = sphi 0, %s385
      %s400 = sphi 0, %s386
      %s406 = sphi 0, %s408
      %s409 = sphi 0, %s406
      %s410 = sphi 0, %s409
      %s426 = sphi 0, %s410
    $region4: #{tpu_custom_call.1} parent=1 // loop_header_branch
      %32 = sbr.rel (%p30) target = $region8
    $region5: #{tpu_custom_call.1} parent=1 // loop_body
      %s34 = ssub.s32 %s29, 1
      %s35 = ssub.s32 %s29, 2
      %s36 = sadd.s32 %s29, 1
      %s37 = ssub.s32 %s29, %s36
      %p38 = scmp.eq.s32.totalorder %s37, 0
      %s40 = sadd.s32 %s39, 1
      %s41 = scalar_select %p38, %s39, %s40
      %p44 = pneg %p38
      %p45 = scmp.eq.s32.totalorder %s29, 1
      %p46 = por %p44, %p45
      %p47 = scmp.ne.s32.totalorder %s39, %s42
      %p48 = scmp.eq.s32.totalorder %s29, 0
      %p49 = por %p47, %p48
      %p50 = scmp.ne.s32.totalorder %s39, %s42
      %p51 = scmp.eq.s32.totalorder %s34, 1
      %p52 = por %p50, %p51
      %p53 = scmp.ne.s32.totalorder %s42, %s43
      %p54 = scmp.eq.s32.totalorder %s34, 0
      %p55 = por %p53, %p54
      %p56 = scmp.ne.s32.totalorder %s42, %s43
      %p57 = scmp.eq.s32.totalorder %s35, 1
      %p58 = por %p56, %p57
      %p60 = scmp.ne.s32.totalorder %s43, %s59
      %p61 = scmp.eq.s32.totalorder %s35, 0
      %p62 = por %p60, %p61
      %s63 = ssub.s32 %s29, %s36
      %p64 = scmp.eq.s32.totalorder %s63, 0
      %s66 = sadd.s32 %s65, 1
      %s67 = scalar_select %p64, %s65, %s66
      %p70 = pneg %p64
      %p71 = scmp.eq.s32.totalorder %s29, 1
      %p72 = por %p70, %p71
      %p73 = scmp.ne.s32.totalorder %s65, %s68
      %p74 = scmp.eq.s32.totalorder %s29, 0
      %p75 = por %p73, %p74
      %p76 = scmp.ne.s32.totalorder %s65, %s68
      %p77 = scmp.eq.s32.totalorder %s34, 1
      %p78 = por %p76, %p77
      %p79 = scmp.ne.s32.totalorder %s68, %s69
      %p80 = scmp.eq.s32.totalorder %s34, 0
      %p81 = por %p79, %p80
      %p82 = scmp.ne.s32.totalorder %s68, %s69
      %p83 = scmp.eq.s32.totalorder %s35, 1
      %p84 = por %p82, %p83
      %p86 = scmp.ne.s32.totalorder %s69, %s85
      %p87 = scmp.eq.s32.totalorder %s35, 0
      %p88 = por %p86, %p87
      %s90 = sadd.s32 %s89, 1
      %p93 = scmp.eq.s32.totalorder %s29, 1
      %p94 = scmp.ne.s32.totalorder %s89, %s91
      %p95 = scmp.eq.s32.totalorder %s29, 0
      %p96 = por %p94, %p95
      %p97 = scmp.ne.s32.totalorder %s89, %s91
      %p98 = scmp.eq.s32.totalorder %s34, 1
      %p99 = por %p97, %p98
      %p100 = scmp.ne.s32.totalorder %s91, %s92
      %p101 = scmp.eq.s32.totalorder %s34, 0
      %p102 = por %p100, %p101
      %p103 = scmp.ne.s32.totalorder %s91, %s92
      %p104 = scmp.eq.s32.totalorder %s35, 1
      %p105 = por %p103, %p104
      %p107 = scmp.ne.s32.totalorder %s92, %s106
      %p108 = scmp.eq.s32.totalorder %s35, 0
      %p109 = por %p107, %p108
      %s111 = sadd.s32 %s110, 1
      %p114 = scmp.eq.s32.totalorder %s29, 1
      %p115 = scmp.ne.s32.totalorder %s110, %s112
      %p116 = scmp.eq.s32.totalorder %s29, 0
      %p117 = por %p115, %p116
      %p118 = scmp.ne.s32.totalorder %s110, %s112
      %p119 = scmp.eq.s32.totalorder %s34, 1
      %p120 = por %p118, %p119
      %p121 = scmp.ne.s32.totalorder %s112, %s113
      %p122 = scmp.eq.s32.totalorder %s34, 0
      %p123 = por %p121, %p122
      %p124 = scmp.ne.s32.totalorder %s112, %s113
      %p125 = scmp.eq.s32.totalorder %s35, 1
      %p126 = por %p124, %p125
      %p128 = scmp.ne.s32.totalorder %s113, %s127
      %p129 = scmp.eq.s32.totalorder %s35, 0
      %p130 = por %p128, %p129
      %s132 = sadd.s32 %s131, 1
      %p135 = scmp.eq.s32.totalorder %s29, 1
      %p136 = scmp.ne.s32.totalorder %s131, %s133
      %p137 = scmp.eq.s32.totalorder %s29, 0
      %p138 = por %p136, %p137
      %p139 = scmp.ne.s32.totalorder %s131, %s133
      %p140 = scmp.eq.s32.totalorder %s34, 1
      %p141 = por %p139, %p140
      %p142 = scmp.ne.s32.totalorder %s133, %s134
      %p143 = scmp.eq.s32.totalorder %s34, 0
      %p144 = por %p142, %p143
      %p145 = scmp.ne.s32.totalorder %s133, %s134
      %p146 = scmp.eq.s32.totalorder %s35, 1
      %p147 = por %p145, %p146
      %p149 = scmp.ne.s32.totalorder %s134, %s148
      %p150 = scmp.eq.s32.totalorder %s35, 0
      %p151 = por %p149, %p150
      %s153 = sadd.s32 %s152, 1
      %p156 = scmp.eq.s32.totalorder %s29, 1
      %p157 = scmp.ne.s32.totalorder %s152, %s154
      %p158 = scmp.eq.s32.totalorder %s29, 0
      %p159 = por %p157, %p158
      %p160 = scmp.ne.s32.totalorder %s152, %s154
      %p161 = scmp.eq.s32.totalorder %s34, 1
      %p162 = por %p160, %p161
      %p163 = scmp.ne.s32.totalorder %s154, %s155
      %p164 = scmp.eq.s32.totalorder %s34, 0
      %p165 = por %p163, %p164
      %p166 = scmp.ne.s32.totalorder %s154, %s155
      %p167 = scmp.eq.s32.totalorder %s35, 1
      %p168 = por %p166, %p167
      %p170 = scmp.ne.s32.totalorder %s155, %s169
      %p171 = scmp.eq.s32.totalorder %s35, 0
      %p172 = por %p170, %p171
      %s174 = sadd.s32 %s173, 1
      %p177 = scmp.eq.s32.totalorder %s29, 1
      %p178 = scmp.ne.s32.totalorder %s173, %s175
      %p179 = scmp.eq.s32.totalorder %s29, 0
      %p180 = por %p178, %p179
      %p181 = scmp.ne.s32.totalorder %s173, %s175
      %p182 = scmp.eq.s32.totalorder %s34, 1
      %p183 = por %p181, %p182
      %p184 = scmp.ne.s32.totalorder %s175, %s176
      %p185 = scmp.eq.s32.totalorder %s34, 0
      %p186 = por %p184, %p185
      %p187 = scmp.ne.s32.totalorder %s175, %s176
      %p188 = scmp.eq.s32.totalorder %s35, 1
      %p189 = por %p187, %p188
      %p191 = scmp.ne.s32.totalorder %s176, %s190
      %p192 = scmp.eq.s32.totalorder %s35, 0
      %p193 = por %p191, %p192
      %s195 = sadd.s32 %s194, 1
      %p198 = scmp.eq.s32.totalorder %s29, 1
      %p199 = scmp.ne.s32.totalorder %s194, %s196
      %p200 = scmp.eq.s32.totalorder %s29, 0
      %p201 = por %p199, %p200
      %p202 = scmp.ne.s32.totalorder %s194, %s196
      %p203 = scmp.eq.s32.totalorder %s34, 1
      %p204 = por %p202, %p203
      %p205 = scmp.ne.s32.totalorder %s196, %s197
      %p206 = scmp.eq.s32.totalorder %s34, 0
      %p207 = por %p205, %p206
      %p208 = scmp.ne.s32.totalorder %s196, %s197
      %p209 = scmp.eq.s32.totalorder %s35, 1
      %p210 = por %p208, %p209
      %p212 = scmp.ne.s32.totalorder %s197, %s211
      %p213 = scmp.eq.s32.totalorder %s35, 0
      %p214 = por %p212, %p213
      %s216 = sadd.s32 %s215, 1
      %p219 = scmp.eq.s32.totalorder %s29, 1
      %p220 = scmp.ne.s32.totalorder %s215, %s217
      %p221 = scmp.eq.s32.totalorder %s29, 0
      %p222 = por %p220, %p221
      %p223 = scmp.ne.s32.totalorder %s215, %s217
      %p224 = scmp.eq.s32.totalorder %s34, 1
      %p225 = por %p223, %p224
      %p226 = scmp.ne.s32.totalorder %s217, %s218
      %p227 = scmp.eq.s32.totalorder %s34, 0
      %p228 = por %p226, %p227
      %p229 = scmp.ne.s32.totalorder %s217, %s218
      %p230 = scmp.eq.s32.totalorder %s35, 1
      %p231 = por %p229, %p230
      %p233 = scmp.ne.s32.totalorder %s218, %s232
      %p234 = scmp.eq.s32.totalorder %s35, 0
      %p235 = por %p233, %p234
      %s237 = sadd.s32 %s236, 1
      %p240 = scmp.eq.s32.totalorder %s29, 1
      %p241 = scmp.ne.s32.totalorder %s236, %s238
      %p242 = scmp.eq.s32.totalorder %s29, 0
      %p243 = por %p241, %p242
      %p244 = scmp.ne.s32.totalorder %s236, %s238
      %p245 = scmp.eq.s32.totalorder %s34, 1
      %p246 = por %p244, %p245
      %p247 = scmp.ne.s32.totalorder %s238, %s239
      %p248 = scmp.eq.s32.totalorder %s34, 0
      %p249 = por %p247, %p248
      %p250 = scmp.ne.s32.totalorder %s238, %s239
      %p251 = scmp.eq.s32.totalorder %s35, 1
      %p252 = por %p250, %p251
      %p254 = scmp.ne.s32.totalorder %s239, %s253
      %p255 = scmp.eq.s32.totalorder %s35, 0
      %p256 = por %p254, %p255
      %s258 = sadd.s32 %s257, 1
      %p261 = scmp.eq.s32.totalorder %s29, 1
      %p262 = scmp.ne.s32.totalorder %s257, %s259
      %p263 = scmp.eq.s32.totalorder %s29, 0
      %p264 = por %p262, %p263
      %p265 = scmp.ne.s32.totalorder %s257, %s259
      %p266 = scmp.eq.s32.totalorder %s34, 1
      %p267 = por %p265, %p266
      %p268 = scmp.ne.s32.totalorder %s259, %s260
      %p269 = scmp.eq.s32.totalorder %s34, 0
      %p270 = por %p268, %p269
      %p271 = scmp.ne.s32.totalorder %s259, %s260
      %p272 = scmp.eq.s32.totalorder %s35, 1
      %p273 = por %p271, %p272
      %p275 = scmp.ne.s32.totalorder %s260, %s274
      %p276 = scmp.eq.s32.totalorder %s35, 0
      %p277 = por %p275, %p276
      %s279 = sadd.s32 %s278, 1
      %p282 = scmp.eq.s32.totalorder %s29, 1
      %p283 = scmp.ne.s32.totalorder %s278, %s280
      %p284 = scmp.eq.s32.totalorder %s29, 0
      %p285 = por %p283, %p284
      %p286 = scmp.ne.s32.totalorder %s278, %s280
      %p287 = scmp.eq.s32.totalorder %s34, 1
      %p288 = por %p286, %p287
      %p289 = scmp.ne.s32.totalorder %s280, %s281
      %p290 = scmp.eq.s32.totalorder %s34, 0
      %p291 = por %p289, %p290
      %p292 = scmp.ne.s32.totalorder %s280, %s281
      %p293 = scmp.eq.s32.totalorder %s35, 1
      %p294 = por %p292, %p293
      %p296 = scmp.ne.s32.totalorder %s281, %s295
      %p297 = scmp.eq.s32.totalorder %s35, 0
      %p298 = por %p296, %p297
      %s300 = sadd.s32 %s299, 1
      %p303 = scmp.eq.s32.totalorder %s29, 1
      %p304 = scmp.ne.s32.totalorder %s299, %s301
      %p305 = scmp.eq.s32.totalorder %s29, 0
      %p306 = por %p304, %p305
      %p307 = scmp.ne.s32.totalorder %s299, %s301
      %p308 = scmp.eq.s32.totalorder %s34, 1
      %p309 = por %p307, %p308
      %p310 = scmp.ne.s32.totalorder %s301, %s302
      %p311 = scmp.eq.s32.totalorder %s34, 0
      %p312 = por %p310, %p311
      %p313 = scmp.ne.s32.totalorder %s301, %s302
      %p314 = scmp.eq.s32.totalorder %s35, 1
      %p315 = por %p313, %p314
      %p317 = scmp.ne.s32.totalorder %s302, %s316
      %p318 = scmp.eq.s32.totalorder %s35, 0
      %p319 = por %p317, %p318
      %s321 = sadd.s32 %s320, 1
      %p324 = scmp.eq.s32.totalorder %s29, 1
      %p325 = scmp.ne.s32.totalorder %s320, %s322
      %p326 = scmp.eq.s32.totalorder %s29, 0
      %p327 = por %p325, %p326
      %p328 = scmp.ne.s32.totalorder %s320, %s322
      %p329 = scmp.eq.s32.totalorder %s34, 1
      %p330 = por %p328, %p329
      %p331 = scmp.ne.s32.totalorder %s322, %s323
      %p332 = scmp.eq.s32.totalorder %s34, 0
      %p333 = por %p331, %p332
      %p334 = scmp.ne.s32.totalorder %s322, %s323
      %p335 = scmp.eq.s32.totalorder %s35, 1
      %p336 = por %p334, %p335
      %p338 = scmp.ne.s32.totalorder %s323, %s337
      %p339 = scmp.eq.s32.totalorder %s35, 0
      %p340 = por %p338, %p339
      %s342 = sadd.s32 %s341, 1
      %p345 = scmp.eq.s32.totalorder %s29, 1
      %p346 = scmp.ne.s32.totalorder %s341, %s343
      %p347 = scmp.eq.s32.totalorder %s29, 0
      %p348 = por %p346, %p347
      %p349 = scmp.ne.s32.totalorder %s341, %s343
      %p350 = scmp.eq.s32.totalorder %s34, 1
      %p351 = por %p349, %p350
      %p352 = scmp.ne.s32.totalorder %s343, %s344
      %p353 = scmp.eq.s32.totalorder %s34, 0
      %p354 = por %p352, %p353
      %p355 = scmp.ne.s32.totalorder %s343, %s344
      %p356 = scmp.eq.s32.totalorder %s35, 1
      %p357 = por %p355, %p356
      %p359 = scmp.ne.s32.totalorder %s344, %s358
      %p360 = scmp.eq.s32.totalorder %s35, 0
      %p361 = por %p359, %p360
      %s363 = sadd.s32 %s362, 1
      %p366 = scmp.eq.s32.totalorder %s29, 1
      %p367 = scmp.ne.s32.totalorder %s362, %s364
      %p368 = scmp.eq.s32.totalorder %s29, 0
      %p369 = por %p367, %p368
      %p370 = scmp.ne.s32.totalorder %s362, %s364
      %p371 = scmp.eq.s32.totalorder %s34, 1
      %p372 = por %p370, %p371
      %p373 = scmp.ne.s32.totalorder %s364, %s365
      %p374 = scmp.eq.s32.totalorder %s34, 0
      %p375 = por %p373, %p374
      %p376 = scmp.ne.s32.totalorder %s364, %s365
      %p377 = scmp.eq.s32.totalorder %s35, 1
      %p378 = por %p376, %p377
      %p380 = scmp.ne.s32.totalorder %s365, %s379
      %p381 = scmp.eq.s32.totalorder %s35, 0
      %p382 = por %p380, %p381
      %s384 = sadd.s32 %s383, 1
      %p387 = scmp.eq.s32.totalorder %s29, 1
      %p388 = scmp.ne.s32.totalorder %s383, %s385
      %p389 = scmp.eq.s32.totalorder %s29, 0
      %p390 = por %p388, %p389
      %p391 = scmp.ne.s32.totalorder %s383, %s385
      %p392 = scmp.eq.s32.totalorder %s34, 1
      %p393 = por %p391, %p392
      %p394 = scmp.ne.s32.totalorder %s385, %s386
      %p395 = scmp.eq.s32.totalorder %s34, 0
      %p396 = por %p394, %p395
      %p397 = scmp.ne.s32.totalorder %s385, %s386
      %p398 = scmp.eq.s32.totalorder %s35, 1
      %p399 = por %p397, %p398
      %p401 = scmp.ne.s32.totalorder %s386, %s400
      %p402 = scmp.eq.s32.totalorder %s35, 0
      %p403 = por %p401, %p402
      %s404 = ssub.s32 %s29, %s36
      %p405 = scmp.eq.s32.totalorder %s404, 0
      %s407 = sadd.s32 %s406, 1
      %s408 = scalar_select %p405, %s406, %s407
      %p411 = pneg %p405
      %p412 = scmp.eq.s32.totalorder %s29, 1
      %p413 = por %p411, %p412
      %p414 = scmp.ne.s32.totalorder %s406, %s409
      %p415 = scmp.eq.s32.totalorder %s29, 0
      %p416 = por %p414, %p415
      %p417 = scmp.ne.s32.totalorder %s406, %s409
      %p418 = scmp.eq.s32.totalorder %s34, 1
      %p419 = por %p417, %p418
      %p420 = scmp.ne.s32.totalorder %s409, %s410
      %p421 = scmp.eq.s32.totalorder %s34, 0
      %p422 = por %p420, %p421
      %p423 = scmp.ne.s32.totalorder %s409, %s410
      %p424 = scmp.eq.s32.totalorder %s35, 1
      %p425 = por %p423, %p424
      %p427 = scmp.ne.s32.totalorder %s410, %s426
      %p428 = scmp.eq.s32.totalorder %s35, 0
      %p429 = por %p427, %p428
      %p430 = scmp.le.s32.totalorder 1, %s29
      %p431 = scmp.lt.s32.totalorder %s29, 3
      %p432 = pnand %p430, %p431
      %p433 = pneg %p432
      // Predicated region
      $region9: #{tpu_custom_call.1} parent=5 // pred_check
        _
      $region10: #{tpu_custom_call.1} parent=5 // pred_check_branch
        %435 = sbr.rel (%p432) target = $region12
      $region11: #{tpu_custom_call.1} parent=5 // pred_region
        %s436 = ssub.s32 %s29, 1
        // Predicated region
        $region13: #{tpu_custom_call.1} parent=11 // pred_check
          %p437 = pneg %p102
        $region14: #{tpu_custom_call.1} parent=11 // pred_check_branch
          %439 = sbr.rel (%p437) target = $region16
        $region15: #{tpu_custom_call.1} parent=11 // pred_region
          %s441 = ssub.s32 10240, 10240
          %442 = vsyncadd [#allocation6], %s441
          %s443 = sshll.u32 [#allocation5], 4
          %s444 = int_to_ptr.vmem [resolvable:$true] %s443
          %449 = dma.hbm_to_vmem [thread:$0]  %s2, 10240, %s444, [#allocation6], 128, 128, 8
        $region16: #{tpu_custom_call.1} parent=11 // pred_fallthru
          _
        // Predicated region
        $region17: #{tpu_custom_call.1} parent=11 // pred_check
          %p450 = pneg %p123
        $region18: #{tpu_custom_call.1} parent=11 // pred_check_branch
          %452 = sbr.rel (%p450) target = $region20
        $region19: #{tpu_custom_call.1} parent=11 // pred_region
          _
        $region20: #{tpu_custom_call.1} parent=11 // pred_fallthru
          _
        // Predicated region
        $region21: #{tpu_custom_call.1} parent=11 // pred_check
          %p453 = pneg %p144
        $region22: #{tpu_custom_call.1} parent=11 // pred_check_branch
          %455 = sbr.rel (%p453) target = $region24
        $region23: #{tpu_custom_call.1} parent=11 // pred_region
          _
        $region24: #{tpu_custom_call.1} parent=11 // pred_fallthru
          _
        // Predicated region
        $region25: #{tpu_custom_call.1} parent=11 // pred_check
          %p456 = pneg %p165
        $region26: #{tpu_custom_call.1} parent=11 // pred_check_branch
          %458 = sbr.rel (%p456) target = $region28
        $region27: #{tpu_custom_call.1} parent=11 // pred_region
          %s460 = ssub.s32 10240, 10240
          %461 = vsyncadd [#allocation9], %s460
          %s462 = sshll.u32 [#allocation8], 4
          %s463 = int_to_ptr.vmem [resolvable:$true] %s462
          %468 = dma.hbm_to_vmem [thread:$0]  %s5, 10240, %s463, [#allocation9], 128, 128, 8
        $region28: #{tpu_custom_call.1} parent=11 // pred_fallthru
          _
        // Predicated region
        $region29: #{tpu_custom_call.1} parent=11 // pred_check
          %p469 = pneg %p186
        $region30: #{tpu_custom_call.1} parent=11 // pred_check_branch
          %471 = sbr.rel (%p469) target = $region32
        $region31: #{tpu_custom_call.1} parent=11 // pred_region
          _
        $region32: #{tpu_custom_call.1} parent=11 // pred_fallthru
          _
        // Predicated region
        $region33: #{tpu_custom_call.1} parent=11 // pred_check
          %p472 = pneg %p207
        $region34: #{tpu_custom_call.1} parent=11 // pred_check_branch
          %474 = sbr.rel (%p472) target = $region36
        $region35: #{tpu_custom_call.1} parent=11 // pred_region
          _
        $region36: #{tpu_custom_call.1} parent=11 // pred_fallthru
          _
        // Predicated region
        $region37: #{tpu_custom_call.1} parent=11 // pred_check
          %p475 = pneg %p228
        $region38: #{tpu_custom_call.1} parent=11 // pred_check_branch
          %477 = sbr.rel (%p475) target = $region40
        $region39: #{tpu_custom_call.1} parent=11 // pred_region
          %s479 = ssub.s32 10240, 10240
          %480 = vsyncadd [#allocation9], %s479
          %s481 = sshll.u32 [#allocation10], 4
          %s482 = int_to_ptr.vmem [resolvable:$true] %s481
          %487 = dma.hbm_to_vmem [thread:$0]  %s8, 10240, %s482, [#allocation9], 128, 128, 8
        $region40: #{tpu_custom_call.1} parent=11 // pred_fallthru
          _
        // Predicated region
        $region41: #{tpu_custom_call.1} parent=11 // pred_check
          %p488 = pneg %p249
        $region42: #{tpu_custom_call.1} parent=11 // pred_check_branch
          %490 = sbr.rel (%p488) target = $region44
        $region43: #{tpu_custom_call.1} parent=11 // pred_region
          _
        $region44: #{tpu_custom_call.1} parent=11 // pred_fallthru
          _
        // Predicated region
        $region45: #{tpu_custom_call.1} parent=11 // pred_check
          %p491 = pneg %p270
        $region46: #{tpu_custom_call.1} parent=11 // pred_check_branch
          %493 = sbr.rel (%p491) target = $region48
        $region47: #{tpu_custom_call.1} parent=11 // pred_region
          _
        $region48: #{tpu_custom_call.1} parent=11 // pred_fallthru
          _
        // Predicated region
        $region49: #{tpu_custom_call.1} parent=11 // pred_check
          %p494 = pneg %p291
        $region50: #{tpu_custom_call.1} parent=11 // pred_check_branch
          %496 = sbr.rel (%p494) target = $region52
        $region51: #{tpu_custom_call.1} parent=11 // pred_region
          %s498 = ssub.s32 10240, 10240
          %499 = vsyncadd [#allocation12], %s498
          %s500 = sshll.u32 [#allocation11], 4
          %s501 = int_to_ptr.vmem [resolvable:$true] %s500
          %506 = dma.hbm_to_vmem [thread:$0]  %s11, 10240, %s501, [#allocation12], 128, 128, 8
        $region52: #{tpu_custom_call.1} parent=11 // pred_fallthru
          _
        // Predicated region
        $region53: #{tpu_custom_call.1} parent=11 // pred_check
          %p507 = pneg %p312
        $region54: #{tpu_custom_call.1} parent=11 // pred_check_branch
          %509 = sbr.rel (%p507) target = $region56
        $region55: #{tpu_custom_call.1} parent=11 // pred_region
          _
        $region56: #{tpu_custom_call.1} parent=11 // pred_fallthru
          _
        // Predicated region
        $region57: #{tpu_custom_call.1} parent=11 // pred_check
          %p510 = pneg %p333
        $region58: #{tpu_custom_call.1} parent=11 // pred_check_branch
          %512 = sbr.rel (%p510) target = $region60
        $region59: #{tpu_custom_call.1} parent=11 // pred_region
          _
        $region60: #{tpu_custom_call.1} parent=11 // pred_fallthru
          _
        // Predicated region
        $region61: #{tpu_custom_call.1} parent=11 // pred_check
          %p513 = pneg %p354
        $region62: #{tpu_custom_call.1} parent=11 // pred_check_branch
          %515 = sbr.rel (%p513) target = $region64
        $region63: #{tpu_custom_call.1} parent=11 // pred_region
          %s517 = ssub.s32 10240, 10240
          %518 = vsyncadd [#allocation12], %s517
          %s519 = sshll.u32 [#allocation13], 4
          %s520 = int_to_ptr.vmem [resolvable:$true] %s519
          %525 = dma.hbm_to_vmem [thread:$0]  %s14, 10240, %s520, [#allocation12], 128, 128, 8
        $region64: #{tpu_custom_call.1} parent=11 // pred_fallthru
          _
        // Predicated region
        $region65: #{tpu_custom_call.1} parent=11 // pred_check
          %p526 = pneg %p375
        $region66: #{tpu_custom_call.1} parent=11 // pred_check_branch
          %528 = sbr.rel (%p526) target = $region68
        $region67: #{tpu_custom_call.1} parent=11 // pred_region
          _
        $region68: #{tpu_custom_call.1} parent=11 // pred_fallthru
          _
        // Predicated region
        $region69: #{tpu_custom_call.1} parent=11 // pred_check
          %p529 = pneg %p396
        $region70: #{tpu_custom_call.1} parent=11 // pred_check_branch
          %531 = sbr.rel (%p529) target = $region72
        $region71: #{tpu_custom_call.1} parent=11 // pred_region
          _
        $region72: #{tpu_custom_call.1} parent=11 // pred_fallthru
          _
      $region12: #{tpu_custom_call.1} parent=5 // pred_fallthru
        _
      %p532 = scmp.lt.s32.totalorder %s29, 2
      // Predicated region
      $region73: #{tpu_custom_call.1} parent=5 // pred_check
        %p533 = pneg %p532
      $region74: #{tpu_custom_call.1} parent=5 // pred_check_branch
        %535 = sbr.rel (%p533) target = $region76
      $region75: #{tpu_custom_call.1} parent=5 // pred_region
        // Predicated region
        $region77: #{tpu_custom_call.1} parent=75 // pred_check
          %p536 = pneg %p49
        $region78: #{tpu_custom_call.1} parent=75 // pred_check_branch
          %538 = sbr.rel (%p536) target = $region80
        $region79: #{tpu_custom_call.1} parent=75 // pred_region
          %p539 = scmp.lt.s32.totalorder %s29, 1
          %s540 = scalar_select %p539, %s29, 1
          %s541 = smul.addr %s540, 2
          %s542 = smul.addr %s541, 8
          %s543 = scalar_lea.vmem %s0, %s542
        $region80: #{tpu_custom_call.1} parent=75 // pred_fallthru
          _
        // Predicated region
        $region81: #{tpu_custom_call.1} parent=75 // pred_check
          %p544 = pneg %p75
        $region82: #{tpu_custom_call.1} parent=75 // pred_check_branch
          %546 = sbr.rel (%p544) target = $region84
        $region83: #{tpu_custom_call.1} parent=75 // pred_region
          %p547 = scmp.lt.s32.totalorder %s29, 1
          %s548 = scalar_select %p547, %s29, 1
          %s549 = smul.addr %s548, 2
          %s550 = smul.addr %s549, 8
          %s551 = scalar_lea.vmem %s1, %s550
        $region84: #{tpu_custom_call.1} parent=75 // pred_fallthru
          _
      $region76: #{tpu_custom_call.1} parent=5 // pred_fallthru
        _
      %p552 = scmp.le.s32.totalorder 1, %s29
      %p553 = scmp.lt.s32.totalorder %s29, 3
      %p554 = pnand %p552, %p553
      %p555 = pneg %p554
      // Predicated region
      $region85: #{tpu_custom_call.1} parent=5 // pred_check
        _
      $region86: #{tpu_custom_call.1} parent=5 // pred_check_branch
        %557 = sbr.rel (%p554) target = $region88
      $region87: #{tpu_custom_call.1} parent=5 // pred_region
        %s558 = ssub.s32 %s29, 1
        // Predicated region
        $region89: #{tpu_custom_call.1} parent=87 // pred_check
          %p559 = pneg %p102
        $region90: #{tpu_custom_call.1} parent=87 // pred_check_branch
          %561 = sbr.rel (%p559) target = $region92
        $region91: #{tpu_custom_call.1} parent=87 // pred_region
          %562 = dma.done [#allocation6], 10240
        $region92: #{tpu_custom_call.1} parent=87 // pred_fallthru
          _
        // Predicated region
        $region93: #{tpu_custom_call.1} parent=87 // pred_check
          %p563 = pneg %p165
        $region94: #{tpu_custom_call.1} parent=87 // pred_check_branch
          %565 = sbr.rel (%p563) target = $region96
        $region95: #{tpu_custom_call.1} parent=87 // pred_region
          %566 = dma.done [#allocation9], 10240
        $region96: #{tpu_custom_call.1} parent=87 // pred_fallthru
          _
        // Predicated region
        $region97: #{tpu_custom_call.1} parent=87 // pred_check
          %p567 = pneg %p228
        $region98: #{tpu_custom_call.1} parent=87 // pred_check_branch
          %569 = sbr.rel (%p567) target = $region100
        $region99: #{tpu_custom_call.1} parent=87 // pred_region
          %570 = dma.done [#allocation9], 10240
        $region100: #{tpu_custom_call.1} parent=87 // pred_fallthru
          _
        // Predicated region
        $region101: #{tpu_custom_call.1} parent=87 // pred_check
          %p571 = pneg %p291
        $region102: #{tpu_custom_call.1} parent=87 // pred_check_branch
          %573 = sbr.rel (%p571) target = $region104
        $region103: #{tpu_custom_call.1} parent=87 // pred_region
          %574 = dma.done [#allocation12], 10240
        $region104: #{tpu_custom_call.1} parent=87 // pred_fallthru
          _
        // Predicated region
        $region105: #{tpu_custom_call.1} parent=87 // pred_check
          %p575 = pneg %p354
        $region106: #{tpu_custom_call.1} parent=87 // pred_check_branch
          %577 = sbr.rel (%p575) target = $region108
        $region107: #{tpu_custom_call.1} parent=87 // pred_region
          %578 = dma.done [#allocation12], 10240
        $region108: #{tpu_custom_call.1} parent=87 // pred_fallthru
          _
        %p579 = scmp.lt.s32.totalorder %s34, 1
        %s580 = scalar_select %p579, %s34, 1
        %s581 = smul.addr %s580, 2
        %s582 = smul.addr %s581, 8
        %s583 = scalar_lea.vmem %s0, %s582
        %p584 = pneg %p55
        %p585 = pneg %p52
        %p586 = scmp.lt.s32.totalorder %s34, 1
        %s587 = scalar_select %p586, %s34, 1
        %s588 = smul.addr %s587, 2
        %s589 = smul.addr %s588, 8
        %s590 = scalar_lea.vmem %s1, %s589
        %p591 = pneg %p81
        %p592 = pneg %p78
        %p593 = pneg %p102
        %p594 = pneg %p99
        %p595 = pneg %p123
        %p596 = pneg %p120
        %p597 = pneg %p144
        %p598 = pneg %p141
        %p599 = pneg %p165
        %p600 = pneg %p162
        %p601 = pneg %p186
        %p602 = pneg %p183
        %p603 = pneg %p207
        %p604 = pneg %p204
        %p605 = pneg %p228
        %p606 = pneg %p225
        %p607 = pneg %p249
        %p608 = pneg %p246
        %p609 = pneg %p270
        %p610 = pneg %p267
        %p611 = pneg %p291
        %p612 = pneg %p288
        %p613 = pneg %p312
        %p614 = pneg %p309
        %p615 = pneg %p333
        %p616 = pneg %p330
        %p617 = pneg %p354
        %p618 = pneg %p351
        %p619 = pneg %p375
        %p620 = pneg %p372
        %p621 = pneg %p396
        %p622 = pneg %p393
        %p623 = pneg %p422
        %p624 = pneg %p419
        %s625 = sand.u32 %s409, 1
        %s626 = scalar_lea.sflag [#allocation7], %s625
        %s627 = sand.u32 %s409, 1
        %s628 = smul.addr %s627, 16
        %s629 = scalar_lea.vmem [#allocation14], %s628
        %p630 = scmp.lt.s32.totalorder %s34, 1
        %s631 = scalar_select %p630, %s34, 1
        %s632 = smul.addr %s631, 2
        %s633 = smul.addr %s632, 8
        %s634 = scalar_lea.vmem %s0, %s633
        %p635 = scmp.lt.s32.totalorder %s34, 1
        %s636 = scalar_select %p635, %s34, 1
        %s637 = smul.addr %s636, 2
        %s638 = smul.addr %s637, 8
        %s639 = scalar_lea.vmem %s1, %s638
        %640 = vst [vmem:[#allocation2] sm:$0x3] 0.0
        %641 = vst [vmem:[#allocation2 + $0x12] sm:$0x3] 0.0
        %642 = vst [vmem:[#allocation3] sm:$0x3] 0.0
        %643 = vst [vmem:[#allocation3 + $0x12] sm:$0x3] 0.0
        %v644 = vld [vmem:[%s634] sm:$0xff]
        %v645 = vld [vmem:[%s634 + $0x8] sm:$0xff]
        %v646 = vld [vmem:[%s639] sm:$0xff]
        %v647 = vld [vmem:[%s639 + $0x8] sm:$0xff]
        %649 = vset.pattern.permute.xlu0 0
        %650 = vperm.xlu0 %649, %v646
        %v651 = vpop.permute.xlu0 %650
        %654 = vset.pattern.permute.xlu0 0
        %655 = vperm.xlu0 %654, %v647
        %v656 = vpop.permute.xlu0 %655
        %v658 = vadd.f32 %v644, %v651
        %v659 = vadd.f32 %v645, %v656
        %660 = vst [vmem:[#allocation2 + $0x2] sm:$0xff] %v658
        %661 = vst [vmem:[#allocation2 + $0xa] sm:$0xff] %v659
        %v662 = vld [vmem:[#allocation2] sm:$0xff]
        %v663 = vld [vmem:[#allocation2 + $0x8] sm:$0xff]
        %664 = vst [vmem:[#allocation4] sm:$0xff] %v662
        %665 = vst [vmem:[#allocation4 + $0x28] sm:$0xff] %v663
        %v666 = vld [vmem:[#allocation2 + $0x1] sm:$0xff]
        %v667 = vld [vmem:[#allocation2 + $0x9] sm:$0xff]
        %668 = vst [vmem:[#allocation4 + $0x8] sm:$0xff] %v666
        %669 = vst [vmem:[#allocation4 + $0x30] sm:$0xff] %v667
        %v670 = vld [vmem:[#allocation2 + $0x2] sm:$0xff]
        %v671 = vld [vmem:[#allocation2 + $0xa] sm:$0xff]
        %672 = vst [vmem:[#allocation4 + $0x10] sm:$0xff] %v670
        %673 = vst [vmem:[#allocation4 + $0x38] sm:$0xff] %v671
        %v674 = vld [vmem:[#allocation2 + $0x3] sm:$0xff]
        %v675 = vld [vmem:[#allocation2 + $0xb] sm:$0xff]
        %676 = vst [vmem:[#allocation4 + $0x18] sm:$0xff] %v674
        %677 = vst [vmem:[#allocation4 + $0x40] sm:$0xff] %v675
        %v678 = vld [vmem:[#allocation2 + $0x4] sm:$0xff]
        %v679 = vld [vmem:[#allocation2 + $0xc] sm:$0xff]
        %680 = vst [vmem:[#allocation4 + $0x20] sm:$0xff] %v678
        %681 = vst [vmem:[#allocation4 + $0x48] sm:$0xff] %v679
        %v682 = vld [vmem:[#allocation4] sm:$0xff]
        %v683 = vld [vmem:[#allocation4 + $0x8] sm:$0xff]
        %v684 = vld [vmem:[#allocation4 + $0x10] sm:$0xff]
        %v685 = vld [vmem:[#allocation4 + $0x18] sm:$0xff]
        %v686 = vld [vmem:[#allocation4 + $0x20] sm:$0xff]
        %v687 = vld [vmem:[#allocation4 + $0x28] sm:$0xff]
        %v688 = vld [vmem:[#allocation4 + $0x30] sm:$0xff]
        %v689 = vld [vmem:[#allocation4 + $0x38] sm:$0xff]
        %v690 = vld [vmem:[#allocation4 + $0x40] sm:$0xff]
        %v691 = vld [vmem:[#allocation4 + $0x48] sm:$0xff]
        %v692 = vld [vmem:[#allocation5] sm:$0xff]
        %v693 = vld [vmem:[#allocation5 + $0x8] sm:$0xff]
        %v694 = vld [vmem:[#allocation5 + $0x10] sm:$0xff]
        %v695 = vld [vmem:[#allocation5 + $0x18] sm:$0xff]
        %v696 = vld [vmem:[#allocation5 + $0x20] sm:$0xff]
        %v697 = vld [vmem:[#allocation5 + $0x28] sm:$0xff]
        %v698 = vld [vmem:[#allocation5 + $0x30] sm:$0xff]
        %v699 = vld [vmem:[#allocation5 + $0x38] sm:$0xff]
        %v700 = vld [vmem:[#allocation5 + $0x40] sm:$0xff]
        %v701 = vld [vmem:[#allocation5 + $0x48] sm:$0xff]
        %v702 = vld [vmem:[#allocation5 + $0x50] sm:$0xff]
        %v703 = vld [vmem:[#allocation5 + $0x58] sm:$0xff]
        %v704 = vld [vmem:[#allocation5 + $0x60] sm:$0xff]
        %v705 = vld [vmem:[#allocation5 + $0x68] sm:$0xff]
        %v706 = vld [vmem:[#allocation5 + $0x70] sm:$0xff]
        %v707 = vld [vmem:[#allocation5 + $0x78] sm:$0xff]
        %v708 = vld [vmem:[#allocation5 + $0x80] sm:$0xff]
        %v709 = vld [vmem:[#allocation5 + $0x88] sm:$0xff]
        %v710 = vld [vmem:[#allocation5 + $0x90] sm:$0xff]
        %v711 = vld [vmem:[#allocation5 + $0x98] sm:$0xff]
        %v712 = vld [vmem:[#allocation5 + $0xa0] sm:$0xff]
        %v713 = vld [vmem:[#allocation5 + $0xa8] sm:$0xff]
        %v714 = vld [vmem:[#allocation5 + $0xb0] sm:$0xff]
        %v715 = vld [vmem:[#allocation5 + $0xb8] sm:$0xff]
        %v716 = vld [vmem:[#allocation5 + $0xc0] sm:$0xff]
        %v717 = vld [vmem:[#allocation5 + $0xc8] sm:$0xff]
        %v718 = vld [vmem:[#allocation5 + $0xd0] sm:$0xff]
        %v719 = vld [vmem:[#allocation5 + $0xd8] sm:$0xff]
        %v720 = vld [vmem:[#allocation5 + $0xe0] sm:$0xff]
        %v721 = vld [vmem:[#allocation5 + $0xe8] sm:$0xff]
        %v722 = vld [vmem:[#allocation5 + $0xf0] sm:$0xff]
        %v723 = vld [vmem:[#allocation5 + $0xf8] sm:$0xff]
        %v724 = vld [vmem:[#allocation5 + $0x100] sm:$0xff]
        %v725 = vld [vmem:[#allocation5 + $0x108] sm:$0xff]
        %v726 = vld [vmem:[#allocation5 + $0x110] sm:$0xff]
        %v727 = vld [vmem:[#allocation5 + $0x118] sm:$0xff]
        %v728 = vld [vmem:[#allocation5 + $0x120] sm:$0xff]
        %v729 = vld [vmem:[#allocation5 + $0x128] sm:$0xff]
        %v730 = vld [vmem:[#allocation5 + $0x130] sm:$0xff]
        %v731 = vld [vmem:[#allocation5 + $0x138] sm:$0xff]
        %v732 = vld [vmem:[#allocation5 + $0x140] sm:$0xff]
        %v733 = vld [vmem:[#allocation5 + $0x148] sm:$0xff]
        %v734 = vld [vmem:[#allocation5 + $0x150] sm:$0xff]
        %v735 = vld [vmem:[#allocation5 + $0x158] sm:$0xff]
        %v736 = vld [vmem:[#allocation5 + $0x160] sm:$0xff]
        %v737 = vld [vmem:[#allocation5 + $0x168] sm:$0xff]
        %v738 = vld [vmem:[#allocation5 + $0x170] sm:$0xff]
        %v739 = vld [vmem:[#allocation5 + $0x178] sm:$0xff]
        %v740 = vld [vmem:[#allocation5 + $0x180] sm:$0xff]
        %v741 = vld [vmem:[#allocation5 + $0x188] sm:$0xff]
        %v742 = vld [vmem:[#allocation5 + $0x190] sm:$0xff]
        %v743 = vld [vmem:[#allocation5 + $0x198] sm:$0xff]
        %v744 = vld [vmem:[#allocation5 + $0x1a0] sm:$0xff]
        %v745 = vld [vmem:[#allocation5 + $0x1a8] sm:$0xff]
        %v746 = vld [vmem:[#allocation5 + $0x1b0] sm:$0xff]
        %v747 = vld [vmem:[#allocation5 + $0x1b8] sm:$0xff]
        %v748 = vld [vmem:[#allocation5 + $0x1c0] sm:$0xff]
        %v749 = vld [vmem:[#allocation5 + $0x1c8] sm:$0xff]
        %v750 = vld [vmem:[#allocation5 + $0x1d0] sm:$0xff]
        %v751 = vld [vmem:[#allocation5 + $0x1d8] sm:$0xff]
        %v752 = vld [vmem:[#allocation5 + $0x1e0] sm:$0xff]
        %v753 = vld [vmem:[#allocation5 + $0x1e8] sm:$0xff]
        %v754 = vld [vmem:[#allocation5 + $0x1f0] sm:$0xff]
        %v755 = vld [vmem:[#allocation5 + $0x1f8] sm:$0xff]
        %v756 = vld [vmem:[#allocation5 + $0x200] sm:$0xff]
        %v757 = vld [vmem:[#allocation5 + $0x208] sm:$0xff]
        %v758 = vld [vmem:[#allocation5 + $0x210] sm:$0xff]
        %v759 = vld [vmem:[#allocation5 + $0x218] sm:$0xff]
        %v760 = vld [vmem:[#allocation5 + $0x220] sm:$0xff]
        %v761 = vld [vmem:[#allocation5 + $0x228] sm:$0xff]
        %v762 = vld [vmem:[#allocation5 + $0x230] sm:$0xff]
        %v763 = vld [vmem:[#allocation5 + $0x238] sm:$0xff]
        %v764 = vld [vmem:[#allocation5 + $0x240] sm:$0xff]
        %v765 = vld [vmem:[#allocation5 + $0x248] sm:$0xff]
        %v766 = vld [vmem:[#allocation5 + $0x250] sm:$0xff]
        %v767 = vld [vmem:[#allocation5 + $0x258] sm:$0xff]
        %v768 = vld [vmem:[#allocation5 + $0x260] sm:$0xff]
        %v769 = vld [vmem:[#allocation5 + $0x268] sm:$0xff]
        %v770 = vld [vmem:[#allocation5 + $0x270] sm:$0xff]
        %v771 = vld [vmem:[#allocation5 + $0x278] sm:$0xff]
        %772 = vmatprep.subr.mxu0 0.0
        %773 = vmatpush1.msra.mxu0 %v692
        %774 = vmatprep.subr.mxu0 0.0
        %775 = vmatpush1.msra.mxu0 %v693
        %776 = vmatprep.subr.mxu0 0.0
        %777 = vmatpush1.msra.mxu0 %v694
        %778 = vmatprep.subr.mxu0 0.0
        %779 = vmatpush1.msra.mxu0 %v695
        %780 = vmatprep.subr.mxu0 0.0
        %781 = vmatpush1.msra.mxu0 %v696
        %782 = vmatprep.subr.mxu0 0.0
        %783 = vmatpush1.msra.mxu0 %v697
        %784 = vmatprep.subr.mxu0 0.0
        %785 = vmatpush1.msra.mxu0 %v698
        %786 = vmatprep.subr.mxu0 0.0
        %787 = vmatpush1.msra.mxu0 %v699
        %788 = vmatprep.subr.mxu0 0.0
        %789 = vmatpush1.msra.mxu0 %v700
        %790 = vmatprep.subr.mxu0 0.0
        %791 = vmatpush1.msra.mxu0 %v701
        %792 = vmatprep.subr.mxu0 0.0
        %793 = vmatpush1.msra.mxu0 %v702
        %794 = vmatprep.subr.mxu0 0.0
        %795 = vmatpush1.msra.mxu0 %v703
        %796 = vmatprep.subr.mxu0 0.0
        %797 = vmatpush1.msra.mxu0 %v704
        %798 = vmatprep.subr.mxu0 0.0
        %799 = vmatpush1.msra.mxu0 %v705
        %800 = vmatprep.subr.mxu0 0.0
        %801 = vmatpush1.msra.mxu0 %v706
        %802 = vmatprep.subr.mxu0 0.0
        %803 = vmatpush1.msra.mxu0 %v707
        %804 = vmatprep.subr.mxu0 0.0
        %805 = vmatpush1.msra.mxu0 %v708
        %806 = vmatprep.subr.mxu0 0.0
        %807 = vmatpush1.msra.mxu0 %v709
        %808 = vmatprep.subr.mxu0 0.0
        %809 = vmatpush1.msra.mxu0 %v710
        %810 = vmatprep.subr.mxu0 0.0
        %811 = vmatpush1.msra.mxu0 %v711
        %812 = vmatprep.subr.mxu0 0.0
        %813 = vmatpush1.msra.mxu0 %v712
        %814 = vmatprep.subr.mxu0 0.0
        %815 = vmatpush1.msra.mxu0 %v713
        %816 = vmatprep.subr.mxu0 0.0
        %817 = vmatpush1.msra.mxu0 %v714
        %818 = vmatprep.subr.mxu0 0.0
        %819 = vmatpush1.msra.mxu0 %v715
        %820 = vmatprep.subr.mxu0 0.0
        %821 = vmatpush1.msra.mxu0 %v716
        %822 = vmatprep.subr.mxu0 0.0
        %823 = vmatpush1.msra.mxu0 %v717
        %824 = vmatprep.subr.mxu0 0.0
        %825 = vmatpush1.msra.mxu0 %v718
        %826 = vmatprep.subr.mxu0 0.0
        %827 = vmatpush1.msra.mxu0 %v719
        %828 = vmatprep.subr.mxu0 0.0
        %829 = vmatpush1.msra.mxu0 %v720
        %830 = vmatprep.subr.mxu0 0.0
        %831 = vmatpush1.msra.mxu0 %v721
        %832 = vmatprep.subr.mxu0 0.0
        %833 = vmatpush1.msra.mxu0 %v722
        %834 = vmatprep.subr.mxu0 0.0
        %835 = vmatpush1.msra.mxu0 %v723
        %836 = vmatprep.mubr.f32.mxu0 %v683
        %837 = vmatmul.mubr.f32.gmra.mrb[0].mxu0 %v682
        %v838 = vpop.f32.mrb[0].mxu0
        %v839 = vadd.f32 0.0, %v838
        %v840 = vpop.f32.mrb[0].mxu0
        %841 = vmatprep.mubr.f32.mxu0 %v688
        %842 = vmatmul.mubr.f32.gmra.mrb[0].mxu0 %v687
        %v843 = vpop.f32.mrb[0].mxu0
        %v844 = vadd.f32 0.0, %v843
        %v845 = vpop.f32.mrb[0].mxu0
        %846 = vdwg.mxu0
        %847 = vmatprep.subr.mxu0 0.0
        %848 = vmatpush1.msra.mxu0 %v724
        %849 = vmatprep.subr.mxu0 0.0
        %850 = vmatpush1.msra.mxu0 %v725
        %851 = vmatprep.subr.mxu0 0.0
        %852 = vmatpush1.msra.mxu0 %v726
        %853 = vmatprep.subr.mxu0 0.0
        %854 = vmatpush1.msra.mxu0 %v727
        %855 = vmatprep.subr.mxu0 0.0
        %856 = vmatpush1.msra.mxu0 %v728
        %857 = vmatprep.subr.mxu0 0.0
        %858 = vmatpush1.msra.mxu0 %v729
        %859 = vmatprep.subr.mxu0 0.0
        %860 = vmatpush1.msra.mxu0 %v730
        %861 = vmatprep.subr.mxu0 0.0
        %862 = vmatpush1.msra.mxu0 %v731
        %863 = vmatprep.subr.mxu0 0.0
        %864 = vmatpush1.msra.mxu0 %v732
        %865 = vmatprep.subr.mxu0 0.0
        %866 = vmatpush1.msra.mxu0 %v733
        %867 = vmatprep.subr.mxu0 0.0
        %868 = vmatpush1.msra.mxu0 %v734
        %869 = vmatprep.subr.mxu0 0.0
        %870 = vmatpush1.msra.mxu0 %v735
        %871 = vmatprep.subr.mxu0 0.0
        %872 = vmatpush1.msra.mxu0 %v736
        %873 = vmatprep.subr.mxu0 0.0
        %874 = vmatpush1.msra.mxu0 %v737
        %875 = vmatprep.subr.mxu0 0.0
        %876 = vmatpush1.msra.mxu0 %v738
        %877 = vmatprep.subr.mxu0 0.0
        %878 = vmatpush1.msra.mxu0 %v739
        %879 = vmatprep.subr.mxu0 0.0
        %880 = vmatpush1.msra.mxu0 %v740
        %881 = vmatprep.subr.mxu0 0.0
        %882 = vmatpush1.msra.mxu0 %v741
        %883 = vmatprep.subr.mxu0 0.0
        %884 = vmatpush1.msra.mxu0 %v742
        %885 = vmatprep.subr.mxu0 0.0
        %886 = vmatpush1.msra.mxu0 %v743
        %887 = vmatprep.subr.mxu0 0.0
        %888 = vmatpush1.msra.mxu0 %v744
        %889 = vmatprep.subr.mxu0 0.0
        %890 = vmatpush1.msra.mxu0 %v745
        %891 = vmatprep.subr.mxu0 0.0
        %892 = vmatpush1.msra.mxu0 %v746
        %893 = vmatprep.subr.mxu0 0.0
        %894 = vmatpush1.msra.mxu0 %v747
        %895 = vmatprep.subr.mxu0 0.0
        %896 = vmatpush1.msra.mxu0 %v748
        %897 = vmatprep.subr.mxu0 0.0
        %898 = vmatpush1.msra.mxu0 %v749
        %899 = vmatprep.subr.mxu0 0.0
        %900 = vmatpush1.msra.mxu0 %v750
        %901 = vmatprep.subr.mxu0 0.0
        %902 = vmatpush1.msra.mxu0 %v751
        %903 = vmatprep.subr.mxu0 0.0
        %904 = vmatpush1.msra.mxu0 %v752
        %905 = vmatprep.subr.mxu0 0.0
        %906 = vmatpush1.msra.mxu0 %v753
        %907 = vmatprep.subr.mxu0 0.0
        %908 = vmatpush1.msra.mxu0 %v754
        %909 = vmatprep.subr.mxu0 0.0
        %910 = vmatpush1.msra.mxu0 %v755
        %911 = vmatprep.mubr.f32.mxu0 %v685
        %912 = vmatmul.mubr.f32.gmra.mrb[0].mxu0 %v684
        %v913 = vpop.f32.mrb[0].mxu0
        %v914 = vadd.f32 %v839, %v913
        %v915 = vpop.f32.mrb[0].mxu0
        %916 = vmatprep.mubr.f32.mxu0 %v690
        %917 = vmatmul.mubr.f32.gmra.mrb[0].mxu0 %v689
        %v918 = vpop.f32.mrb[0].mxu0
        %v919 = vadd.f32 %v844, %v918
        %v920 = vpop.f32.mrb[0].mxu0
        %921 = vdwg.mxu0
        %922 = vmatprep.subr.mxu0 0.0
        %923 = vmatpush1.msra.mxu0 %v756
        %924 = vmatprep.subr.mxu0 0.0
        %925 = vmatpush1.msra.mxu0 %v757
        %926 = vmatprep.subr.mxu0 0.0
        %927 = vmatpush1.msra.mxu0 %v758
        %928 = vmatprep.subr.mxu0 0.0
        %929 = vmatpush1.msra.mxu0 %v759
        %930 = vmatprep.subr.mxu0 0.0
        %931 = vmatpush1.msra.mxu0 %v760
        %932 = vmatprep.subr.mxu0 0.0
        %933 = vmatpush1.msra.mxu0 %v761
        %934 = vmatprep.subr.mxu0 0.0
        %935 = vmatpush1.msra.mxu0 %v762
        %936 = vmatprep.subr.mxu0 0.0
        %937 = vmatpush1.msra.mxu0 %v763
        %938 = vmatprep.subr.mxu0 0.0
        %939 = vmatpush1.msra.mxu0 %v764
        %940 = vmatprep.subr.mxu0 0.0
        %941 = vmatpush1.msra.mxu0 %v765
        %942 = vmatprep.subr.mxu0 0.0
        %943 = vmatpush1.msra.mxu0 %v766
        %944 = vmatprep.subr.mxu0 0.0
        %945 = vmatpush1.msra.mxu0 %v767
        %946 = vmatprep.subr.mxu0 0.0
        %947 = vmatpush1.msra.mxu0 %v768
        %948 = vmatprep.subr.mxu0 0.0
        %949 = vmatpush1.msra.mxu0 %v769
        %950 = vmatprep.subr.mxu0 0.0
        %951 = vmatpush1.msra.mxu0 %v770
        %952 = vmatprep.subr.mxu0 0.0
        %953 = vmatpush1.msra.mxu0 %v771
        %954 = vmatprep.subr.mxu0 0.0
        %955 = vmatpush1.msra.mxu0 0.0
        %956 = vmatprep.subr.mxu0 0.0
        %957 = vmatpush1.msra.mxu0 0.0
        %958 = vmatprep.subr.mxu0 0.0
        %959 = vmatpush1.msra.mxu0 0.0
        %960 = vmatprep.subr.mxu0 0.0
        %961 = vmatpush1.msra.mxu0 0.0
        %962 = vmatprep.subr.mxu0 0.0
        %963 = vmatpush1.msra.mxu0 0.0
        %964 = vmatprep.subr.mxu0 0.0
        %965 = vmatpush1.msra.mxu0 0.0
        %966 = vmatprep.subr.mxu0 0.0
        %967 = vmatpush1.msra.mxu0 0.0
        %968 = vmatprep.subr.mxu0 0.0
        %969 = vmatpush1.msra.mxu0 0.0
        %970 = vmatprep.subr.mxu0 0.0
        %971 = vmatpush1.msra.mxu0 0.0
        %972 = vmatprep.subr.mxu0 0.0
        %973 = vmatpush1.msra.mxu0 0.0
        %974 = vmatprep.subr.mxu0 0.0
        %975 = vmatpush1.msra.mxu0 0.0
        %976 = vmatprep.subr.mxu0 0.0
        %977 = vmatpush1.msra.mxu0 0.0
        %978 = vmatprep.subr.mxu0 0.0
        %979 = vmatpush1.msra.mxu0 0.0
        %980 = vmatprep.subr.mxu0 0.0
        %981 = vmatpush1.msra.mxu0 0.0
        %982 = vmatprep.subr.mxu0 0.0
        %983 = vmatpush1.msra.mxu0 0.0
        %984 = vmatprep.subr.mxu0 0.0
        %985 = vmatpush1.msra.mxu0 0.0
        %986 = vmatprep.mubr.f32.mxu0 0.0
        %987 = vmatmul.mubr.f32.gmra.mrb[0].mxu0 %v686
        %v988 = vpop.f32.mrb[0].mxu0
        %v989 = vadd.f32 %v914, %v988
        %v990 = vpop.f32.mrb[0].mxu0
        %991 = vmatprep.mubr.f32.mxu0 0.0
        %992 = vmatmul.mubr.f32.gmra.mrb[0].mxu0 %v691
        %v993 = vpop.f32.mrb[0].mxu0
        %v994 = vadd.f32 %v919, %v993
        %v995 = vpop.f32.mrb[0].mxu0
        %996 = vdwg.mxu0
        %v997 = vld [vmem:[%s3] sm:$0x1]
        %v999 = vlaneseq
        %v1000 = vshrl.u32 %v999, 7
        %v1001 = vsub.s32 0, %v1000
        %v1002 = vrot.slane %v997, %v1001
        %v1004 = vmul.f32 %v989, %v1002
        %v1005 = vmul.f32 %v994, %v1002
        %v1006 = vld [vmem:[%s4] sm:$0x1]
        %v1008 = vlaneseq
        %v1009 = vshrl.u32 %v1008, 7
        %v1010 = vsub.s32 0, %v1009
        %v1011 = vrot.slane %v1006, %v1010
        %v1013 = vadd.f32 %v1004, %v1011
        %v1014 = vadd.f32 %v1005, %v1011
        %v1015 = vtanh.pop %v1013
        %v1016 = vtanh.pop %v1014
        %1017 = vst [vmem:[#allocation3 + $0x2] sm:$0xff] %v1015
        %1018 = vst [vmem:[#allocation3 + $0xa] sm:$0xff] %v1016
        %v1019 = vld [vmem:[#allocation3] sm:$0xff]
        %v1020 = vld [vmem:[#allocation3 + $0x8] sm:$0xff]
        %1021 = vst [vmem:[#allocation4] sm:$0xff] %v1019
        %1022 = vst [vmem:[#allocation4 + $0x28] sm:$0xff] %v1020
        %v1023 = vld [vmem:[#allocation3 + $0x1] sm:$0xff]
        %v1024 = vld [vmem:[#allocation3 + $0x9] sm:$0xff]
        %1025 = vst [vmem:[#allocation4 + $0x8] sm:$0xff] %v1023
        %1026 = vst [vmem:[#allocation4 + $0x30] sm:$0xff] %v1024
        %v1027 = vld [vmem:[#allocation3 + $0x2] sm:$0xff]
        %v1028 = vld [vmem:[#allocation3 + $0xa] sm:$0xff]
        %1029 = vst [vmem:[#allocation4 + $0x10] sm:$0xff] %v1027
        %1030 = vst [vmem:[#allocation4 + $0x38] sm:$0xff] %v1028
        %v1031 = vld [vmem:[#allocation3 + $0x3] sm:$0xff]
        %v1032 = vld [vmem:[#allocation3 + $0xb] sm:$0xff]
        %1033 = vst [vmem:[#allocation4 + $0x18] sm:$0xff] %v1031
        %1034 = vst [vmem:[#allocation4 + $0x40] sm:$0xff] %v1032
        %v1035 = vld [vmem:[#allocation3 + $0x4] sm:$0xff]
        %v1036 = vld [vmem:[#allocation3 + $0xc] sm:$0xff]
        %1037 = vst [vmem:[#allocation4 + $0x20] sm:$0xff] %v1035
        %1038 = vst [vmem:[#allocation4 + $0x48] sm:$0xff] %v1036
        %v1039 = vld [vmem:[#allocation4] sm:$0xff]
        %v1040 = vld [vmem:[#allocation4 + $0x8] sm:$0xff]
        %v1041 = vld [vmem:[#allocation4 + $0x10] sm:$0xff]
        %v1042 = vld [vmem:[#allocation4 + $0x18] sm:$0xff]
        %v1043 = vld [vmem:[#allocation4 + $0x20] sm:$0xff]
        %v1044 = vld [vmem:[#allocation4 + $0x28] sm:$0xff]
        %v1045 = vld [vmem:[#allocation4 + $0x30] sm:$0xff]
        %v1046 = vld [vmem:[#allocation4 + $0x38] sm:$0xff]
        %v1047 = vld [vmem:[#allocation4 + $0x40] sm:$0xff]
        %v1048 = vld [vmem:[#allocation4 + $0x48] sm:$0xff]
        %v1049 = vld [vmem:[#allocation8] sm:$0xff]
        %v1050 = vld [vmem:[#allocation8 + $0x8] sm:$0xff]
        %v1051 = vld [vmem:[#allocation8 + $0x10] sm:$0xff]
        %v1052 = vld [vmem:[#allocation8 + $0x18] sm:$0xff]
        %v1053 = vld [vmem:[#allocation8 + $0x20] sm:$0xff]
        %v1054 = vld [vmem:[#allocation8 + $0x28] sm:$0xff]
        %v1055 = vld [vmem:[#allocation8 + $0x30] sm:$0xff]
        %v1056 = vld [vmem:[#allocation8 + $0x38] sm:$0xff]
        %v1057 = vld [vmem:[#allocation8 + $0x40] sm:$0xff]
        %v1058 = vld [vmem:[#allocation8 + $0x48] sm:$0xff]
        %v1059 = vld [vmem:[#allocation8 + $0x50] sm:$0xff]
        %v1060 = vld [vmem:[#allocation8 + $0x58] sm:$0xff]
        %v1061 = vld [vmem:[#allocation8 + $0x60] sm:$0xff]
        %v1062 = vld [vmem:[#allocation8 + $0x68] sm:$0xff]
        %v1063 = vld [vmem:[#allocation8 + $0x70] sm:$0xff]
        %v1064 = vld [vmem:[#allocation8 + $0x78] sm:$0xff]
        %v1065 = vld [vmem:[#allocation8 + $0x80] sm:$0xff]
        %v1066 = vld [vmem:[#allocation8 + $0x88] sm:$0xff]
        %v1067 = vld [vmem:[#allocation8 + $0x90] sm:$0xff]
        %v1068 = vld [vmem:[#allocation8 + $0x98] sm:$0xff]
        %v1069 = vld [vmem:[#allocation8 + $0xa0] sm:$0xff]
        %v1070 = vld [vmem:[#allocation8 + $0xa8] sm:$0xff]
        %v1071 = vld [vmem:[#allocation8 + $0xb0] sm:$0xff]
        %v1072 = vld [vmem:[#allocation8 + $0xb8] sm:$0xff]
        %v1073 = vld [vmem:[#allocation8 + $0xc0] sm:$0xff]
        %v1074 = vld [vmem:[#allocation8 + $0xc8] sm:$0xff]
        %v1075 = vld [vmem:[#allocation8 + $0xd0] sm:$0xff]
        %v1076 = vld [vmem:[#allocation8 + $0xd8] sm:$0xff]
        %v1077 = vld [vmem:[#allocation8 + $0xe0] sm:$0xff]
        %v1078 = vld [vmem:[#allocation8 + $0xe8] sm:$0xff]
        %v1079 = vld [vmem:[#allocation8 + $0xf0] sm:$0xff]
        %v1080 = vld [vmem:[#allocation8 + $0xf8] sm:$0xff]
        %v1081 = vld [vmem:[#allocation8 + $0x100] sm:$0xff]
        %v1082 = vld [vmem:[#allocation8 + $0x108] sm:$0xff]
        %v1083 = vld [vmem:[#allocation8 + $0x110] sm:$0xff]
        %v1084 = vld [vmem:[#allocation8 + $0x118] sm:$0xff]
        %v1085 = vld [vmem:[#allocation8 + $0x120] sm:$0xff]
        %v1086 = vld [vmem:[#allocation8 + $0x128] sm:$0xff]
        %v1087 = vld [vmem:[#allocation8 + $0x130] sm:$0xff]
        %v1088 = vld [vmem:[#allocation8 + $0x138] sm:$0xff]
        %v1089 = vld [vmem:[#allocation8 + $0x140] sm:$0xff]
        %v1090 = vld [vmem:[#allocation8 + $0x148] sm:$0xff]
        %v1091 = vld [vmem:[#allocation8 + $0x150] sm:$0xff]
        %v1092 = vld [vmem:[#allocation8 + $0x158] sm:$0xff]
        %v1093 = vld [vmem:[#allocation8 + $0x160] sm:$0xff]
        %v1094 = vld [vmem:[#allocation8 + $0x168] sm:$0xff]
        %v1095 = vld [vmem:[#allocation8 + $0x170] sm:$0xff]
        %v1096 = vld [vmem:[#allocation8 + $0x178] sm:$0xff]
        %v1097 = vld [vmem:[#allocation8 + $0x180] sm:$0xff]
        %v1098 = vld [vmem:[#allocation8 + $0x188] sm:$0xff]
        %v1099 = vld [vmem:[#allocation8 + $0x190] sm:$0xff]
        %v1100 = vld [vmem:[#allocation8 + $0x198] sm:$0xff]
        %v1101 = vld [vmem:[#allocation8 + $0x1a0] sm:$0xff]
        %v1102 = vld [vmem:[#allocation8 + $0x1a8] sm:$0xff]
        %v1103 = vld [vmem:[#allocation8 + $0x1b0] sm:$0xff]
        %v1104 = vld [vmem:[#allocation8 + $0x1b8] sm:$0xff]
        %v1105 = vld [vmem:[#allocation8 + $0x1c0] sm:$0xff]
        %v1106 = vld [vmem:[#allocation8 + $0x1c8] sm:$0xff]
        %v1107 = vld [vmem:[#allocation8 + $0x1d0] sm:$0xff]
        %v1108 = vld [vmem:[#allocation8 + $0x1d8] sm:$0xff]
        %v1109 = vld [vmem:[#allocation8 + $0x1e0] sm:$0xff]
        %v1110 = vld [vmem:[#allocation8 + $0x1e8] sm:$0xff]
        %v1111 = vld [vmem:[#allocation8 + $0x1f0] sm:$0xff]
        %v1112 = vld [vmem:[#allocation8 + $0x1f8] sm:$0xff]
        %v1113 = vld [vmem:[#allocation8 + $0x200] sm:$0xff]
        %v1114 = vld [vmem:[#allocation8 + $0x208] sm:$0xff]
        %v1115 = vld [vmem:[#allocation8 + $0x210] sm:$0xff]
        %v1116 = vld [vmem:[#allocation8 + $0x218] sm:$0xff]
        %v1117 = vld [vmem:[#allocation8 + $0x220] sm:$0xff]
        %v1118 = vld [vmem:[#allocation8 + $0x228] sm:$0xff]
        %v1119 = vld [vmem:[#allocation8 + $0x230] sm:$0xff]
        %v1120 = vld [vmem:[#allocation8 + $0x238] sm:$0xff]
        %v1121 = vld [vmem:[#allocation8 + $0x240] sm:$0xff]
        %v1122 = vld [vmem:[#allocation8 + $0x248] sm:$0xff]
        %v1123 = vld [vmem:[#allocation8 + $0x250] sm:$0xff]
        %v1124 = vld [vmem:[#allocation8 + $0x258] sm:$0xff]
        %v1125 = vld [vmem:[#allocation8 + $0x260] sm:$0xff]
        %v1126 = vld [vmem:[#allocation8 + $0x268] sm:$0xff]
        %v1127 = vld [vmem:[#allocation8 + $0x270] sm:$0xff]
        %v1128 = vld [vmem:[#allocation8 + $0x278] sm:$0xff]
        %1129 = vmatprep.subr.mxu0 0.0
        %1130 = vmatpush1.msra.mxu0 %v1049
        %1131 = vmatprep.subr.mxu0 0.0
        %1132 = vmatpush1.msra.mxu0 %v1050
        %1133 = vmatprep.subr.mxu0 0.0
        %1134 = vmatpush1.msra.mxu0 %v1051
        %1135 = vmatprep.subr.mxu0 0.0
        %1136 = vmatpush1.msra.mxu0 %v1052
        %1137 = vmatprep.subr.mxu0 0.0
        %1138 = vmatpush1.msra.mxu0 %v1053
        %1139 = vmatprep.subr.mxu0 0.0
        %1140 = vmatpush1.msra.mxu0 %v1054
        %1141 = vmatprep.subr.mxu0 0.0
        %1142 = vmatpush1.msra.mxu0 %v1055
        %1143 = vmatprep.subr.mxu0 0.0
        %1144 = vmatpush1.msra.mxu0 %v1056
        %1145 = vmatprep.subr.mxu0 0.0
        %1146 = vmatpush1.msra.mxu0 %v1057
        %1147 = vmatprep.subr.mxu0 0.0
        %1148 = vmatpush1.msra.mxu0 %v1058
        %1149 = vmatprep.subr.mxu0 0.0
        %1150 = vmatpush1.msra.mxu0 %v1059
        %1151 = vmatprep.subr.mxu0 0.0
        %1152 = vmatpush1.msra.mxu0 %v1060
        %1153 = vmatprep.subr.mxu0 0.0
        %1154 = vmatpush1.msra.mxu0 %v1061
        %1155 = vmatprep.subr.mxu0 0.0
        %1156 = vmatpush1.msra.mxu0 %v1062
        %1157 = vmatprep.subr.mxu0 0.0
        %1158 = vmatpush1.msra.mxu0 %v1063
        %1159 = vmatprep.subr.mxu0 0.0
        %1160 = vmatpush1.msra.mxu0 %v1064
        %1161 = vmatprep.subr.mxu0 0.0
        %1162 = vmatpush1.msra.mxu0 %v1065
        %1163 = vmatprep.subr.mxu0 0.0
        %1164 = vmatpush1.msra.mxu0 %v1066
        %1165 = vmatprep.subr.mxu0 0.0
        %1166 = vmatpush1.msra.mxu0 %v1067
        %1167 = vmatprep.subr.mxu0 0.0
        %1168 = vmatpush1.msra.mxu0 %v1068
        %1169 = vmatprep.subr.mxu0 0.0
        %1170 = vmatpush1.msra.mxu0 %v1069
        %1171 = vmatprep.subr.mxu0 0.0
        %1172 = vmatpush1.msra.mxu0 %v1070
        %1173 = vmatprep.subr.mxu0 0.0
        %1174 = vmatpush1.msra.mxu0 %v1071
        %1175 = vmatprep.subr.mxu0 0.0
        %1176 = vmatpush1.msra.mxu0 %v1072
        %1177 = vmatprep.subr.mxu0 0.0
        %1178 = vmatpush1.msra.mxu0 %v1073
        %1179 = vmatprep.subr.mxu0 0.0
        %1180 = vmatpush1.msra.mxu0 %v1074
        %1181 = vmatprep.subr.mxu0 0.0
        %1182 = vmatpush1.msra.mxu0 %v1075
        %1183 = vmatprep.subr.mxu0 0.0
        %1184 = vmatpush1.msra.mxu0 %v1076
        %1185 = vmatprep.subr.mxu0 0.0
        %1186 = vmatpush1.msra.mxu0 %v1077
        %1187 = vmatprep.subr.mxu0 0.0
        %1188 = vmatpush1.msra.mxu0 %v1078
        %1189 = vmatprep.subr.mxu0 0.0
        %1190 = vmatpush1.msra.mxu0 %v1079
        %1191 = vmatprep.subr.mxu0 0.0
        %1192 = vmatpush1.msra.mxu0 %v1080
        %1193 = vmatprep.mubr.f32.mxu0 %v1040
        %1194 = vmatmul.mubr.f32.gmra.mrb[0].mxu0 %v1039
        %v1195 = vpop.f32.mrb[0].mxu0
        %v1196 = vadd.f32 0.0, %v1195
        %v1197 = vpop.f32.mrb[0].mxu0
        %1198 = vmatprep.mubr.f32.mxu0 %v1045
        %1199 = vmatmul.mubr.f32.gmra.mrb[0].mxu0 %v1044
        %v1200 = vpop.f32.mrb[0].mxu0
        %v1201 = vadd.f32 0.0, %v1200
        %v1202 = vpop.f32.mrb[0].mxu0
        %1203 = vdwg.mxu0
        %1204 = vmatprep.subr.mxu0 0.0
        %1205 = vmatpush1.msra.mxu0 %v1081
        %1206 = vmatprep.subr.mxu0 0.0
        %1207 = vmatpush1.msra.mxu0 %v1082
        %1208 = vmatprep.subr.mxu0 0.0
        %1209 = vmatpush1.msra.mxu0 %v1083
        %1210 = vmatprep.subr.mxu0 0.0
        %1211 = vmatpush1.msra.mxu0 %v1084
        %1212 = vmatprep.subr.mxu0 0.0
        %1213 = vmatpush1.msra.mxu0 %v1085
        %1214 = vmatprep.subr.mxu0 0.0
        %1215 = vmatpush1.msra.mxu0 %v1086
        %1216 = vmatprep.subr.mxu0 0.0
        %1217 = vmatpush1.msra.mxu0 %v1087
        %1218 = vmatprep.subr.mxu0 0.0
        %1219 = vmatpush1.msra.mxu0 %v1088
        %1220 = vmatprep.subr.mxu0 0.0
        %1221 = vmatpush1.msra.mxu0 %v1089
        %1222 = vmatprep.subr.mxu0 0.0
        %1223 = vmatpush1.msra.mxu0 %v1090
        %1224 = vmatprep.subr.mxu0 0.0
        %1225 = vmatpush1.msra.mxu0 %v1091
        %1226 = vmatprep.subr.mxu0 0.0
        %1227 = vmatpush1.msra.mxu0 %v1092
        %1228 = vmatprep.subr.mxu0 0.0
        %1229 = vmatpush1.msra.mxu0 %v1093
        %1230 = vmatprep.subr.mxu0 0.0
        %1231 = vmatpush1.msra.mxu0 %v1094
        %1232 = vmatprep.subr.mxu0 0.0
        %1233 = vmatpush1.msra.mxu0 %v1095
        %1234 = vmatprep.subr.mxu0 0.0
        %1235 = vmatpush1.msra.mxu0 %v1096
        %1236 = vmatprep.subr.mxu0 0.0
        %1237 = vmatpush1.msra.mxu0 %v1097
        %1238 = vmatprep.subr.mxu0 0.0
        %1239 = vmatpush1.msra.mxu0 %v1098
        %1240 = vmatprep.subr.mxu0 0.0
        %1241 = vmatpush1.msra.mxu0 %v1099
        %1242 = vmatprep.subr.mxu0 0.0
        %1243 = vmatpush1.msra.mxu0 %v1100
        %1244 = vmatprep.subr.mxu0 0.0
        %1245 = vmatpush1.msra.mxu0 %v1101
        %1246 = vmatprep.subr.mxu0 0.0
        %1247 = vmatpush1.msra.mxu0 %v1102
        %1248 = vmatprep.subr.mxu0 0.0
        %1249 = vmatpush1.msra.mxu0 %v1103
        %1250 = vmatprep.subr.mxu0 0.0
        %1251 = vmatpush1.msra.mxu0 %v1104
        %1252 = vmatprep.subr.mxu0 0.0
        %1253 = vmatpush1.msra.mxu0 %v1105
        %1254 = vmatprep.subr.mxu0 0.0
        %1255 = vmatpush1.msra.mxu0 %v1106
        %1256 = vmatprep.subr.mxu0 0.0
        %1257 = vmatpush1.msra.mxu0 %v1107
        %1258 = vmatprep.subr.mxu0 0.0
        %1259 = vmatpush1.msra.mxu0 %v1108
        %1260 = vmatprep.subr.mxu0 0.0
        %1261 = vmatpush1.msra.mxu0 %v1109
        %1262 = vmatprep.subr.mxu0 0.0
        %1263 = vmatpush1.msra.mxu0 %v1110
        %1264 = vmatprep.subr.mxu0 0.0
        %1265 = vmatpush1.msra.mxu0 %v1111
        %1266 = vmatprep.subr.mxu0 0.0
        %1267 = vmatpush1.msra.mxu0 %v1112
        %1268 = vmatprep.mubr.f32.mxu0 %v1042
        %1269 = vmatmul.mubr.f32.gmra.mrb[0].mxu0 %v1041
        %v1270 = vpop.f32.mrb[0].mxu0
        %v1271 = vadd.f32 %v1196, %v1270
        %v1272 = vpop.f32.mrb[0].mxu0
        %1273 = vmatprep.mubr.f32.mxu0 %v1047
        %1274 = vmatmul.mubr.f32.gmra.mrb[0].mxu0 %v1046
        %v1275 = vpop.f32.mrb[0].mxu0
        %v1276 = vadd.f32 %v1201, %v1275
        %v1277 = vpop.f32.mrb[0].mxu0
        %1278 = vdwg.mxu0
        %1279 = vmatprep.subr.mxu0 0.0
        %1280 = vmatpush1.msra.mxu0 %v1113
        %1281 = vmatprep.subr.mxu0 0.0
        %1282 = vmatpush1.msra.mxu0 %v1114
        %1283 = vmatprep.subr.mxu0 0.0
        %1284 = vmatpush1.msra.mxu0 %v1115
        %1285 = vmatprep.subr.mxu0 0.0
        %1286 = vmatpush1.msra.mxu0 %v1116
        %1287 = vmatprep.subr.mxu0 0.0
        %1288 = vmatpush1.msra.mxu0 %v1117
        %1289 = vmatprep.subr.mxu0 0.0
        %1290 = vmatpush1.msra.mxu0 %v1118
        %1291 = vmatprep.subr.mxu0 0.0
        %1292 = vmatpush1.msra.mxu0 %v1119
        %1293 = vmatprep.subr.mxu0 0.0
        %1294 = vmatpush1.msra.mxu0 %v1120
        %1295 = vmatprep.subr.mxu0 0.0
        %1296 = vmatpush1.msra.mxu0 %v1121
        %1297 = vmatprep.subr.mxu0 0.0
        %1298 = vmatpush1.msra.mxu0 %v1122
        %1299 = vmatprep.subr.mxu0 0.0
        %1300 = vmatpush1.msra.mxu0 %v1123
        %1301 = vmatprep.subr.mxu0 0.0
        %1302 = vmatpush1.msra.mxu0 %v1124
        %1303 = vmatprep.subr.mxu0 0.0
        %1304 = vmatpush1.msra.mxu0 %v1125
        %1305 = vmatprep.subr.mxu0 0.0
        %1306 = vmatpush1.msra.mxu0 %v1126
        %1307 = vmatprep.subr.mxu0 0.0
        %1308 = vmatpush1.msra.mxu0 %v1127
        %1309 = vmatprep.subr.mxu0 0.0
        %1310 = vmatpush1.msra.mxu0 %v1128
        %1311 = vmatprep.subr.mxu0 0.0
        %1312 = vmatpush1.msra.mxu0 0.0
        %1313 = vmatprep.subr.mxu0 0.0
        %1314 = vmatpush1.msra.mxu0 0.0
        %1315 = vmatprep.subr.mxu0 0.0
        %1316 = vmatpush1.msra.mxu0 0.0
        %1317 = vmatprep.subr.mxu0 0.0
        %1318 = vmatpush1.msra.mxu0 0.0
        %1319 = vmatprep.subr.mxu0 0.0
        %1320 = vmatpush1.msra.mxu0 0.0
        %1321 = vmatprep.subr.mxu0 0.0
        %1322 = vmatpush1.msra.mxu0 0.0
        %1323 = vmatprep.subr.mxu0 0.0
        %1324 = vmatpush1.msra.mxu0 0.0
        %1325 = vmatprep.subr.mxu0 0.0
        %1326 = vmatpush1.msra.mxu0 0.0
        %1327 = vmatprep.subr.mxu0 0.0
        %1328 = vmatpush1.msra.mxu0 0.0
        %1329 = vmatprep.subr.mxu0 0.0
        %1330 = vmatpush1.msra.mxu0 0.0
        %1331 = vmatprep.subr.mxu0 0.0
        %1332 = vmatpush1.msra.mxu0 0.0
        %1333 = vmatprep.subr.mxu0 0.0
        %1334 = vmatpush1.msra.mxu0 0.0
        %1335 = vmatprep.subr.mxu0 0.0
        %1336 = vmatpush1.msra.mxu0 0.0
        %1337 = vmatprep.subr.mxu0 0.0
        %1338 = vmatpush1.msra.mxu0 0.0
        %1339 = vmatprep.subr.mxu0 0.0
        %1340 = vmatpush1.msra.mxu0 0.0
        %1341 = vmatprep.subr.mxu0 0.0
        %1342 = vmatpush1.msra.mxu0 0.0
        %1343 = vmatprep.mubr.f32.mxu0 0.0
        %1344 = vmatmul.mubr.f32.gmra.mrb[0].mxu0 %v1043
        %v1345 = vpop.f32.mrb[0].mxu0
        %v1346 = vadd.f32 %v1271, %v1345
        %v1347 = vpop.f32.mrb[0].mxu0
        %1348 = vmatprep.mubr.f32.mxu0 0.0
        %1349 = vmatmul.mubr.f32.gmra.mrb[0].mxu0 %v1048
        %v1350 = vpop.f32.mrb[0].mxu0
        %v1351 = vadd.f32 %v1276, %v1350
        %v1352 = vpop.f32.mrb[0].mxu0
        %1353 = vdwg.mxu0
        %v1354 = vld [vmem:[%s6] sm:$0x1]
        %v1356 = vlaneseq
        %v1357 = vshrl.u32 %v1356, 7
        %v1358 = vsub.s32 0, %v1357
        %v1359 = vrot.slane %v1354, %v1358
        %v1361 = vmul.f32 %v1346, %v1359
        %v1362 = vmul.f32 %v1351, %v1359
        %v1363 = vld [vmem:[%s7] sm:$0x1]
        %v1365 = vlaneseq
        %v1366 = vshrl.u32 %v1365, 7
        %v1367 = vsub.s32 0, %v1366
        %v1368 = vrot.slane %v1363, %v1367
        %v1370 = vadd.f32 %v1361, %v1368
        %v1371 = vadd.f32 %v1362, %v1368
        %v1372 = vtanh.pop %v1370
        %v1373 = vtanh.pop %v1371
        %1374 = vst [vmem:[#allocation2 + $0x2] sm:$0xff] %v1372
        %1375 = vst [vmem:[#allocation2 + $0xa] sm:$0xff] %v1373
        %v1376 = vld [vmem:[#allocation2] sm:$0xff]
        %v1377 = vld [vmem:[#allocation2 + $0x8] sm:$0xff]
        %1378 = vst [vmem:[#allocation4] sm:$0xff] %v1376
        %1379 = vst [vmem:[#allocation4 + $0x28] sm:$0xff] %v1377
        %v1380 = vld [vmem:[#allocation2 + $0x1] sm:$0xff]
        %v1381 = vld [vmem:[#allocation2 + $0x9] sm:$0xff]
        %1382 = vst [vmem:[#allocation4 + $0x8] sm:$0xff] %v1380
        %1383 = vst [vmem:[#allocation4 + $0x30] sm:$0xff] %v1381
        %v1384 = vld [vmem:[#allocation2 + $0x2] sm:$0xff]
        %v1385 = vld [vmem:[#allocation2 + $0xa] sm:$0xff]
        %1386 = vst [vmem:[#allocation4 + $0x10] sm:$0xff] %v1384
        %1387 = vst [vmem:[#allocation4 + $0x38] sm:$0xff] %v1385
        %v1388 = vld [vmem:[#allocation2 + $0x3] sm:$0xff]
        %v1389 = vld [vmem:[#allocation2 + $0xb] sm:$0xff]
        %1390 = vst [vmem:[#allocation4 + $0x18] sm:$0xff] %v1388
        %1391 = vst [vmem:[#allocation4 + $0x40] sm:$0xff] %v1389
        %v1392 = vld [vmem:[#allocation2 + $0x4] sm:$0xff]
        %v1393 = vld [vmem:[#allocation2 + $0xc] sm:$0xff]
        %1394 = vst [vmem:[#allocation4 + $0x20] sm:$0xff] %v1392
        %1395 = vst [vmem:[#allocation4 + $0x48] sm:$0xff] %v1393
        %v1396 = vld [vmem:[#allocation4] sm:$0xff]
        %v1397 = vld [vmem:[#allocation4 + $0x8] sm:$0xff]
        %v1398 = vld [vmem:[#allocation4 + $0x10] sm:$0xff]
        %v1399 = vld [vmem:[#allocation4 + $0x18] sm:$0xff]
        %v1400 = vld [vmem:[#allocation4 + $0x20] sm:$0xff]
        %v1401 = vld [vmem:[#allocation4 + $0x28] sm:$0xff]
        %v1402 = vld [vmem:[#allocation4 + $0x30] sm:$0xff]
        %v1403 = vld [vmem:[#allocation4 + $0x38] sm:$0xff]
        %v1404 = vld [vmem:[#allocation4 + $0x40] sm:$0xff]
        %v1405 = vld [vmem:[#allocation4 + $0x48] sm:$0xff]
        %v1406 = vld [vmem:[#allocation10] sm:$0xff]
        %v1407 = vld [vmem:[#allocation10 + $0x8] sm:$0xff]
        %v1408 = vld [vmem:[#allocation10 + $0x10] sm:$0xff]
        %v1409 = vld [vmem:[#allocation10 + $0x18] sm:$0xff]
        %v1410 = vld [vmem:[#allocation10 + $0x20] sm:$0xff]
        %v1411 = vld [vmem:[#allocation10 + $0x28] sm:$0xff]
        %v1412 = vld [vmem:[#allocation10 + $0x30] sm:$0xff]
        %v1413 = vld [vmem:[#allocation10 + $0x38] sm:$0xff]
        %v1414 = vld [vmem:[#allocation10 + $0x40] sm:$0xff]
        %v1415 = vld [vmem:[#allocation10 + $0x48] sm:$0xff]
        %v1416 = vld [vmem:[#allocation10 + $0x50] sm:$0xff]
        %v1417 = vld [vmem:[#allocation10 + $0x58] sm:$0xff]
        %v1418 = vld [vmem:[#allocation10 + $0x60] sm:$0xff]
        %v1419 = vld [vmem:[#allocation10 + $0x68] sm:$0xff]
        %v1420 = vld [vmem:[#allocation10 + $0x70] sm:$0xff]
        %v1421 = vld [vmem:[#allocation10 + $0x78] sm:$0xff]
        %v1422 = vld [vmem:[#allocation10 + $0x80] sm:$0xff]
        %v1423 = vld [vmem:[#allocation10 + $0x88] sm:$0xff]
        %v1424 = vld [vmem:[#allocation10 + $0x90] sm:$0xff]
        %v1425 = vld [vmem:[#allocation10 + $0x98] sm:$0xff]
        %v1426 = vld [vmem:[#allocation10 + $0xa0] sm:$0xff]
        %v1427 = vld [vmem:[#allocation10 + $0xa8] sm:$0xff]
        %v1428 = vld [vmem:[#allocation10 + $0xb0] sm:$0xff]
        %v1429 = vld [vmem:[#allocation10 + $0xb8] sm:$0xff]
        %v1430 = vld [vmem:[#allocation10 + $0xc0] sm:$0xff]
        %v1431 = vld [vmem:[#allocation10 + $0xc8] sm:$0xff]
        %v1432 = vld [vmem:[#allocation10 + $0xd0] sm:$0xff]
        %v1433 = vld [vmem:[#allocation10 + $0xd8] sm:$0xff]
        %v1434 = vld [vmem:[#allocation10 + $0xe0] sm:$0xff]
        %v1435 = vld [vmem:[#allocation10 + $0xe8] sm:$0xff]
        %v1436 = vld [vmem:[#allocation10 + $0xf0] sm:$0xff]
        %v1437 = vld [vmem:[#allocation10 + $0xf8] sm:$0xff]
        %v1438 = vld [vmem:[#allocation10 + $0x100] sm:$0xff]
        %v1439 = vld [vmem:[#allocation10 + $0x108] sm:$0xff]
        %v1440 = vld [vmem:[#allocation10 + $0x110] sm:$0xff]
        %v1441 = vld [vmem:[#allocation10 + $0x118] sm:$0xff]
        %v1442 = vld [vmem:[#allocation10 + $0x120] sm:$0xff]
        %v1443 = vld [vmem:[#allocation10 + $0x128] sm:$0xff]
        %v1444 = vld [vmem:[#allocation10 + $0x130] sm:$0xff]
        %v1445 = vld [vmem:[#allocation10 + $0x138] sm:$0xff]
        %v1446 = vld [vmem:[#allocation10 + $0x140] sm:$0xff]
        %v1447 = vld [vmem:[#allocation10 + $0x148] sm:$0xff]
        %v1448 = vld [vmem:[#allocation10 + $0x150] sm:$0xff]
        %v1449 = vld [vmem:[#allocation10 + $0x158] sm:$0xff]
        %v1450 = vld [vmem:[#allocation10 + $0x160] sm:$0xff]
        %v1451 = vld [vmem:[#allocation10 + $0x168] sm:$0xff]
        %v1452 = vld [vmem:[#allocation10 + $0x170] sm:$0xff]
        %v1453 = vld [vmem:[#allocation10 + $0x178] sm:$0xff]
        %v1454 = vld [vmem:[#allocation10 + $0x180] sm:$0xff]
        %v1455 = vld [vmem:[#allocation10 + $0x188] sm:$0xff]
        %v1456 = vld [vmem:[#allocation10 + $0x190] sm:$0xff]
        %v1457 = vld [vmem:[#allocation10 + $0x198] sm:$0xff]
        %v1458 = vld [vmem:[#allocation10 + $0x1a0] sm:$0xff]
        %v1459 = vld [vmem:[#allocation10 + $0x1a8] sm:$0xff]
        %v1460 = vld [vmem:[#allocation10 + $0x1b0] sm:$0xff]
        %v1461 = vld [vmem:[#allocation10 + $0x1b8] sm:$0xff]
        %v1462 = vld [vmem:[#allocation10 + $0x1c0] sm:$0xff]
        %v1463 = vld [vmem:[#allocation10 + $0x1c8] sm:$0xff]
        %v1464 = vld [vmem:[#allocation10 + $0x1d0] sm:$0xff]
        %v1465 = vld [vmem:[#allocation10 + $0x1d8] sm:$0xff]
        %v1466 = vld [vmem:[#allocation10 + $0x1e0] sm:$0xff]
        %v1467 = vld [vmem:[#allocation10 + $0x1e8] sm:$0xff]
        %v1468 = vld [vmem:[#allocation10 + $0x1f0] sm:$0xff]
        %v1469 = vld [vmem:[#allocation10 + $0x1f8] sm:$0xff]
        %v1470 = vld [vmem:[#allocation10 + $0x200] sm:$0xff]
        %v1471 = vld [vmem:[#allocation10 + $0x208] sm:$0xff]
        %v1472 = vld [vmem:[#allocation10 + $0x210] sm:$0xff]
        %v1473 = vld [vmem:[#allocation10 + $0x218] sm:$0xff]
        %v1474 = vld [vmem:[#allocation10 + $0x220] sm:$0xff]
        %v1475 = vld [vmem:[#allocation10 + $0x228] sm:$0xff]
        %v1476 = vld [vmem:[#allocation10 + $0x230] sm:$0xff]
        %v1477 = vld [vmem:[#allocation10 + $0x238] sm:$0xff]
        %v1478 = vld [vmem:[#allocation10 + $0x240] sm:$0xff]
        %v1479 = vld [vmem:[#allocation10 + $0x248] sm:$0xff]
        %v1480 = vld [vmem:[#allocation10 + $0x250] sm:$0xff]
        %v1481 = vld [vmem:[#allocation10 + $0x258] sm:$0xff]
        %v1482 = vld [vmem:[#allocation10 + $0x260] sm:$0xff]
        %v1483 = vld [vmem:[#allocation10 + $0x268] sm:$0xff]
        %v1484 = vld [vmem:[#allocation10 + $0x270] sm:$0xff]
        %v1485 = vld [vmem:[#allocation10 + $0x278] sm:$0xff]
        %1486 = vmatprep.subr.mxu0 0.0
        %1487 = vmatpush1.msra.mxu0 %v1406
        %1488 = vmatprep.subr.mxu0 0.0
        %1489 = vmatpush1.msra.mxu0 %v1407
        %1490 = vmatprep.subr.mxu0 0.0
        %1491 = vmatpush1.msra.mxu0 %v1408
        %1492 = vmatprep.subr.mxu0 0.0
        %1493 = vmatpush1.msra.mxu0 %v1409
        %1494 = vmatprep.subr.mxu0 0.0
        %1495 = vmatpush1.msra.mxu0 %v1410
        %1496 = vmatprep.subr.mxu0 0.0
        %1497 = vmatpush1.msra.mxu0 %v1411
        %1498 = vmatprep.subr.mxu0 0.0
        %1499 = vmatpush1.msra.mxu0 %v1412
        %1500 = vmatprep.subr.mxu0 0.0
        %1501 = vmatpush1.msra.mxu0 %v1413
        %1502 = vmatprep.subr.mxu0 0.0
        %1503 = vmatpush1.msra.mxu0 %v1414
        %1504 = vmatprep.subr.mxu0 0.0
        %1505 = vmatpush1.msra.mxu0 %v1415
        %1506 = vmatprep.subr.mxu0 0.0
        %1507 = vmatpush1.msra.mxu0 %v1416
        %1508 = vmatprep.subr.mxu0 0.0
        %1509 = vmatpush1.msra.mxu0 %v1417
        %1510 = vmatprep.subr.mxu0 0.0
        %1511 = vmatpush1.msra.mxu0 %v1418
        %1512 = vmatprep.subr.mxu0 0.0
        %1513 = vmatpush1.msra.mxu0 %v1419
        %1514 = vmatprep.subr.mxu0 0.0
        %1515 = vmatpush1.msra.mxu0 %v1420
        %1516 = vmatprep.subr.mxu0 0.0
        %1517 = vmatpush1.msra.mxu0 %v1421
        %1518 = vmatprep.subr.mxu0 0.0
        %1519 = vmatpush1.msra.mxu0 %v1422
        %1520 = vmatprep.subr.mxu0 0.0
        %1521 = vmatpush1.msra.mxu0 %v1423
        %1522 = vmatprep.subr.mxu0 0.0
        %1523 = vmatpush1.msra.mxu0 %v1424
        %1524 = vmatprep.subr.mxu0 0.0
        %1525 = vmatpush1.msra.mxu0 %v1425
        %1526 = vmatprep.subr.mxu0 0.0
        %1527 = vmatpush1.msra.mxu0 %v1426
        %1528 = vmatprep.subr.mxu0 0.0
        %1529 = vmatpush1.msra.mxu0 %v1427
        %1530 = vmatprep.subr.mxu0 0.0
        %1531 = vmatpush1.msra.mxu0 %v1428
        %1532 = vmatprep.subr.mxu0 0.0
        %1533 = vmatpush1.msra.mxu0 %v1429
        %1534 = vmatprep.subr.mxu0 0.0
        %1535 = vmatpush1.msra.mxu0 %v1430
        %1536 = vmatprep.subr.mxu0 0.0
        %1537 = vmatpush1.msra.mxu0 %v1431
        %1538 = vmatprep.subr.mxu0 0.0
        %1539 = vmatpush1.msra.mxu0 %v1432
        %1540 = vmatprep.subr.mxu0 0.0
        %1541 = vmatpush1.msra.mxu0 %v1433
        %1542 = vmatprep.subr.mxu0 0.0
        %1543 = vmatpush1.msra.mxu0 %v1434
        %1544 = vmatprep.subr.mxu0 0.0
        %1545 = vmatpush1.msra.mxu0 %v1435
        %1546 = vmatprep.subr.mxu0 0.0
        %1547 = vmatpush1.msra.mxu0 %v1436
        %1548 = vmatprep.subr.mxu0 0.0
        %1549 = vmatpush1.msra.mxu0 %v1437
        %1550 = vmatprep.mubr.f32.mxu0 %v1397
        %1551 = vmatmul.mubr.f32.gmra.mrb[0].mxu0 %v1396
        %v1552 = vpop.f32.mrb[0].mxu0
        %v1553 = vadd.f32 0.0, %v1552
        %v1554 = vpop.f32.mrb[0].mxu0
        %1555 = vmatprep.mubr.f32.mxu0 %v1402
        %1556 = vmatmul.mubr.f32.gmra.mrb[0].mxu0 %v1401
        %v1557 = vpop.f32.mrb[0].mxu0
        %v1558 = vadd.f32 0.0, %v1557
        %v1559 = vpop.f32.mrb[0].mxu0
        %1560 = vdwg.mxu0
        %1561 = vmatprep.subr.mxu0 0.0
        %1562 = vmatpush1.msra.mxu0 %v1438
        %1563 = vmatprep.subr.mxu0 0.0
        %1564 = vmatpush1.msra.mxu0 %v1439
        %1565 = vmatprep.subr.mxu0 0.0
        %1566 = vmatpush1.msra.mxu0 %v1440
        %1567 = vmatprep.subr.mxu0 0.0
        %1568 = vmatpush1.msra.mxu0 %v1441
        %1569 = vmatprep.subr.mxu0 0.0
        %1570 = vmatpush1.msra.mxu0 %v1442
        %1571 = vmatprep.subr.mxu0 0.0
        %1572 = vmatpush1.msra.mxu0 %v1443
        %1573 = vmatprep.subr.mxu0 0.0
        %1574 = vmatpush1.msra.mxu0 %v1444
        %1575 = vmatprep.subr.mxu0 0.0
        %1576 = vmatpush1.msra.mxu0 %v1445
        %1577 = vmatprep.subr.mxu0 0.0
        %1578 = vmatpush1.msra.mxu0 %v1446
        %1579 = vmatprep.subr.mxu0 0.0
        %1580 = vmatpush1.msra.mxu0 %v1447
        %1581 = vmatprep.subr.mxu0 0.0
        %1582 = vmatpush1.msra.mxu0 %v1448
        %1583 = vmatprep.subr.mxu0 0.0
        %1584 = vmatpush1.msra.mxu0 %v1449
        %1585 = vmatprep.subr.mxu0 0.0
        %1586 = vmatpush1.msra.mxu0 %v1450
        %1587 = vmatprep.subr.mxu0 0.0
        %1588 = vmatpush1.msra.mxu0 %v1451
        %1589 = vmatprep.subr.mxu0 0.0
        %1590 = vmatpush1.msra.mxu0 %v1452
        %1591 = vmatprep.subr.mxu0 0.0
        %1592 = vmatpush1.msra.mxu0 %v1453
        %1593 = vmatprep.subr.mxu0 0.0
        %1594 = vmatpush1.msra.mxu0 %v1454
        %1595 = vmatprep.subr.mxu0 0.0
        %1596 = vmatpush1.msra.mxu0 %v1455
        %1597 = vmatprep.subr.mxu0 0.0
        %1598 = vmatpush1.msra.mxu0 %v1456
        %1599 = vmatprep.subr.mxu0 0.0
        %1600 = vmatpush1.msra.mxu0 %v1457
        %1601 = vmatprep.subr.mxu0 0.0
        %1602 = vmatpush1.msra.mxu0 %v1458
        %1603 = vmatprep.subr.mxu0 0.0
        %1604 = vmatpush1.msra.mxu0 %v1459
        %1605 = vmatprep.subr.mxu0 0.0
        %1606 = vmatpush1.msra.mxu0 %v1460
        %1607 = vmatprep.subr.mxu0 0.0
        %1608 = vmatpush1.msra.mxu0 %v1461
        %1609 = vmatprep.subr.mxu0 0.0
        %1610 = vmatpush1.msra.mxu0 %v1462
        %1611 = vmatprep.subr.mxu0 0.0
        %1612 = vmatpush1.msra.mxu0 %v1463
        %1613 = vmatprep.subr.mxu0 0.0
        %1614 = vmatpush1.msra.mxu0 %v1464
        %1615 = vmatprep.subr.mxu0 0.0
        %1616 = vmatpush1.msra.mxu0 %v1465
        %1617 = vmatprep.subr.mxu0 0.0
        %1618 = vmatpush1.msra.mxu0 %v1466
        %1619 = vmatprep.subr.mxu0 0.0
        %1620 = vmatpush1.msra.mxu0 %v1467
        %1621 = vmatprep.subr.mxu0 0.0
        %1622 = vmatpush1.msra.mxu0 %v1468
        %1623 = vmatprep.subr.mxu0 0.0
        %1624 = vmatpush1.msra.mxu0 %v1469
        %1625 = vmatprep.mubr.f32.mxu0 %v1399
        %1626 = vmatmul.mubr.f32.gmra.mrb[0].mxu0 %v1398
        %v1627 = vpop.f32.mrb[0].mxu0
        %v1628 = vadd.f32 %v1553, %v1627
        %v1629 = vpop.f32.mrb[0].mxu0
        %1630 = vmatprep.mubr.f32.mxu0 %v1404
        %1631 = vmatmul.mubr.f32.gmra.mrb[0].mxu0 %v1403
        %v1632 = vpop.f32.mrb[0].mxu0
        %v1633 = vadd.f32 %v1558, %v1632
        %v1634 = vpop.f32.mrb[0].mxu0
        %1635 = vdwg.mxu0
        %1636 = vmatprep.subr.mxu0 0.0
        %1637 = vmatpush1.msra.mxu0 %v1470
        %1638 = vmatprep.subr.mxu0 0.0
        %1639 = vmatpush1.msra.mxu0 %v1471
        %1640 = vmatprep.subr.mxu0 0.0
        %1641 = vmatpush1.msra.mxu0 %v1472
        %1642 = vmatprep.subr.mxu0 0.0
        %1643 = vmatpush1.msra.mxu0 %v1473
        %1644 = vmatprep.subr.mxu0 0.0
        %1645 = vmatpush1.msra.mxu0 %v1474
        %1646 = vmatprep.subr.mxu0 0.0
        %1647 = vmatpush1.msra.mxu0 %v1475
        %1648 = vmatprep.subr.mxu0 0.0
        %1649 = vmatpush1.msra.mxu0 %v1476
        %1650 = vmatprep.subr.mxu0 0.0
        %1651 = vmatpush1.msra.mxu0 %v1477
        %1652 = vmatprep.subr.mxu0 0.0
        %1653 = vmatpush1.msra.mxu0 %v1478
        %1654 = vmatprep.subr.mxu0 0.0
        %1655 = vmatpush1.msra.mxu0 %v1479
        %1656 = vmatprep.subr.mxu0 0.0
        %1657 = vmatpush1.msra.mxu0 %v1480
        %1658 = vmatprep.subr.mxu0 0.0
        %1659 = vmatpush1.msra.mxu0 %v1481
        %1660 = vmatprep.subr.mxu0 0.0
        %1661 = vmatpush1.msra.mxu0 %v1482
        %1662 = vmatprep.subr.mxu0 0.0
        %1663 = vmatpush1.msra.mxu0 %v1483
        %1664 = vmatprep.subr.mxu0 0.0
        %1665 = vmatpush1.msra.mxu0 %v1484
        %1666 = vmatprep.subr.mxu0 0.0
        %1667 = vmatpush1.msra.mxu0 %v1485
        %1668 = vmatprep.subr.mxu0 0.0
        %1669 = vmatpush1.msra.mxu0 0.0
        %1670 = vmatprep.subr.mxu0 0.0
        %1671 = vmatpush1.msra.mxu0 0.0
        %1672 = vmatprep.subr.mxu0 0.0
        %1673 = vmatpush1.msra.mxu0 0.0
        %1674 = vmatprep.subr.mxu0 0.0
        %1675 = vmatpush1.msra.mxu0 0.0
        %1676 = vmatprep.subr.mxu0 0.0
        %1677 = vmatpush1.msra.mxu0 0.0
        %1678 = vmatprep.subr.mxu0 0.0
        %1679 = vmatpush1.msra.mxu0 0.0
        %1680 = vmatprep.subr.mxu0 0.0
        %1681 = vmatpush1.msra.mxu0 0.0
        %1682 = vmatprep.subr.mxu0 0.0
        %1683 = vmatpush1.msra.mxu0 0.0
        %1684 = vmatprep.subr.mxu0 0.0
        %1685 = vmatpush1.msra.mxu0 0.0
        %1686 = vmatprep.subr.mxu0 0.0
        %1687 = vmatpush1.msra.mxu0 0.0
        %1688 = vmatprep.subr.mxu0 0.0
        %1689 = vmatpush1.msra.mxu0 0.0
        %1690 = vmatprep.subr.mxu0 0.0
        %1691 = vmatpush1.msra.mxu0 0.0
        %1692 = vmatprep.subr.mxu0 0.0
        %1693 = vmatpush1.msra.mxu0 0.0
        %1694 = vmatprep.subr.mxu0 0.0
        %1695 = vmatpush1.msra.mxu0 0.0
        %1696 = vmatprep.subr.mxu0 0.0
        %1697 = vmatpush1.msra.mxu0 0.0
        %1698 = vmatprep.subr.mxu0 0.0
        %1699 = vmatpush1.msra.mxu0 0.0
        %1700 = vmatprep.mubr.f32.mxu0 0.0
        %1701 = vmatmul.mubr.f32.gmra.mrb[0].mxu0 %v1400
        %v1702 = vpop.f32.mrb[0].mxu0
        %v1703 = vadd.f32 %v1628, %v1702
        %v1704 = vpop.f32.mrb[0].mxu0
        %1705 = vmatprep.mubr.f32.mxu0 0.0
        %1706 = vmatmul.mubr.f32.gmra.mrb[0].mxu0 %v1405
        %v1707 = vpop.f32.mrb[0].mxu0
        %v1708 = vadd.f32 %v1633, %v1707
        %v1709 = vpop.f32.mrb[0].mxu0
        %1710 = vdwg.mxu0
        %v1711 = vld [vmem:[%s9] sm:$0x1]
        %v1713 = vlaneseq
        %v1714 = vshrl.u32 %v1713, 7
        %v1715 = vsub.s32 0, %v1714
        %v1716 = vrot.slane %v1711, %v1715
        %v1718 = vmul.f32 %v1703, %v1716
        %v1719 = vmul.f32 %v1708, %v1716
        %v1720 = vld [vmem:[%s10] sm:$0x1]
        %v1722 = vlaneseq
        %v1723 = vshrl.u32 %v1722, 7
        %v1724 = vsub.s32 0, %v1723
        %v1725 = vrot.slane %v1720, %v1724
        %v1727 = vadd.f32 %v1718, %v1725
        %v1728 = vadd.f32 %v1719, %v1725
        %v1729 = vtanh.pop %v1727
        %v1730 = vtanh.pop %v1728
        %1731 = vst [vmem:[#allocation3 + $0x2] sm:$0xff] %v1729
        %1732 = vst [vmem:[#allocation3 + $0xa] sm:$0xff] %v1730
        %v1733 = vld [vmem:[#allocation3] sm:$0xff]
        %v1734 = vld [vmem:[#allocation3 + $0x8] sm:$0xff]
        %1735 = vst [vmem:[#allocation4] sm:$0xff] %v1733
        %1736 = vst [vmem:[#allocation4 + $0x28] sm:$0xff] %v1734
        %v1737 = vld [vmem:[#allocation3 + $0x1] sm:$0xff]
        %v1738 = vld [vmem:[#allocation3 + $0x9] sm:$0xff]
        %1739 = vst [vmem:[#allocation4 + $0x8] sm:$0xff] %v1737
        %1740 = vst [vmem:[#allocation4 + $0x30] sm:$0xff] %v1738
        %v1741 = vld [vmem:[#allocation3 + $0x2] sm:$0xff]
        %v1742 = vld [vmem:[#allocation3 + $0xa] sm:$0xff]
        %1743 = vst [vmem:[#allocation4 + $0x10] sm:$0xff] %v1741
        %1744 = vst [vmem:[#allocation4 + $0x38] sm:$0xff] %v1742
        %v1745 = vld [vmem:[#allocation3 + $0x3] sm:$0xff]
        %v1746 = vld [vmem:[#allocation3 + $0xb] sm:$0xff]
        %1747 = vst [vmem:[#allocation4 + $0x18] sm:$0xff] %v1745
        %1748 = vst [vmem:[#allocation4 + $0x40] sm:$0xff] %v1746
        %v1749 = vld [vmem:[#allocation3 + $0x4] sm:$0xff]
        %v1750 = vld [vmem:[#allocation3 + $0xc] sm:$0xff]
        %1751 = vst [vmem:[#allocation4 + $0x20] sm:$0xff] %v1749
        %1752 = vst [vmem:[#allocation4 + $0x48] sm:$0xff] %v1750
        %v1753 = vld [vmem:[#allocation4] sm:$0xff]
        %v1754 = vld [vmem:[#allocation4 + $0x8] sm:$0xff]
        %v1755 = vld [vmem:[#allocation4 + $0x10] sm:$0xff]
        %v1756 = vld [vmem:[#allocation4 + $0x18] sm:$0xff]
        %v1757 = vld [vmem:[#allocation4 + $0x20] sm:$0xff]
        %v1758 = vld [vmem:[#allocation4 + $0x28] sm:$0xff]
        %v1759 = vld [vmem:[#allocation4 + $0x30] sm:$0xff]
        %v1760 = vld [vmem:[#allocation4 + $0x38] sm:$0xff]
        %v1761 = vld [vmem:[#allocation4 + $0x40] sm:$0xff]
        %v1762 = vld [vmem:[#allocation4 + $0x48] sm:$0xff]
        %v1763 = vld [vmem:[#allocation11] sm:$0xff]
        %v1764 = vld [vmem:[#allocation11 + $0x8] sm:$0xff]
        %v1765 = vld [vmem:[#allocation11 + $0x10] sm:$0xff]
        %v1766 = vld [vmem:[#allocation11 + $0x18] sm:$0xff]
        %v1767 = vld [vmem:[#allocation11 + $0x20] sm:$0xff]
        %v1768 = vld [vmem:[#allocation11 + $0x28] sm:$0xff]
        %v1769 = vld [vmem:[#allocation11 + $0x30] sm:$0xff]
        %v1770 = vld [vmem:[#allocation11 + $0x38] sm:$0xff]
        %v1771 = vld [vmem:[#allocation11 + $0x40] sm:$0xff]
        %v1772 = vld [vmem:[#allocation11 + $0x48] sm:$0xff]
        %v1773 = vld [vmem:[#allocation11 + $0x50] sm:$0xff]
        %v1774 = vld [vmem:[#allocation11 + $0x58] sm:$0xff]
        %v1775 = vld [vmem:[#allocation11 + $0x60] sm:$0xff]
        %v1776 = vld [vmem:[#allocation11 + $0x68] sm:$0xff]
        %v1777 = vld [vmem:[#allocation11 + $0x70] sm:$0xff]
        %v1778 = vld [vmem:[#allocation11 + $0x78] sm:$0xff]
        %v1779 = vld [vmem:[#allocation11 + $0x80] sm:$0xff]
        %v1780 = vld [vmem:[#allocation11 + $0x88] sm:$0xff]
        %v1781 = vld [vmem:[#allocation11 + $0x90] sm:$0xff]
        %v1782 = vld [vmem:[#allocation11 + $0x98] sm:$0xff]
        %v1783 = vld [vmem:[#allocation11 + $0xa0] sm:$0xff]
        %v1784 = vld [vmem:[#allocation11 + $0xa8] sm:$0xff]
        %v1785 = vld [vmem:[#allocation11 + $0xb0] sm:$0xff]
        %v1786 = vld [vmem:[#allocation11 + $0xb8] sm:$0xff]
        %v1787 = vld [vmem:[#allocation11 + $0xc0] sm:$0xff]
        %v1788 = vld [vmem:[#allocation11 + $0xc8] sm:$0xff]
        %v1789 = vld [vmem:[#allocation11 + $0xd0] sm:$0xff]
        %v1790 = vld [vmem:[#allocation11 + $0xd8] sm:$0xff]
        %v1791 = vld [vmem:[#allocation11 + $0xe0] sm:$0xff]
        %v1792 = vld [vmem:[#allocation11 + $0xe8] sm:$0xff]
        %v1793 = vld [vmem:[#allocation11 + $0xf0] sm:$0xff]
        %v1794 = vld [vmem:[#allocation11 + $0xf8] sm:$0xff]
        %v1795 = vld [vmem:[#allocation11 + $0x100] sm:$0xff]
        %v1796 = vld [vmem:[#allocation11 + $0x108] sm:$0xff]
        %v1797 = vld [vmem:[#allocation11 + $0x110] sm:$0xff]
        %v1798 = vld [vmem:[#allocation11 + $0x118] sm:$0xff]
        %v1799 = vld [vmem:[#allocation11 + $0x120] sm:$0xff]
        %v1800 = vld [vmem:[#allocation11 + $0x128] sm:$0xff]
        %v1801 = vld [vmem:[#allocation11 + $0x130] sm:$0xff]
        %v1802 = vld [vmem:[#allocation11 + $0x138] sm:$0xff]
        %v1803 = vld [vmem:[#allocation11 + $0x140] sm:$0xff]
        %v1804 = vld [vmem:[#allocation11 + $0x148] sm:$0xff]
        %v1805 = vld [vmem:[#allocation11 + $0x150] sm:$0xff]
        %v1806 = vld [vmem:[#allocation11 + $0x158] sm:$0xff]
        %v1807 = vld [vmem:[#allocation11 + $0x160] sm:$0xff]
        %v1808 = vld [vmem:[#allocation11 + $0x168] sm:$0xff]
        %v1809 = vld [vmem:[#allocation11 + $0x170] sm:$0xff]
        %v1810 = vld [vmem:[#allocation11 + $0x178] sm:$0xff]
        %v1811 = vld [vmem:[#allocation11 + $0x180] sm:$0xff]
        %v1812 = vld [vmem:[#allocation11 + $0x188] sm:$0xff]
        %v1813 = vld [vmem:[#allocation11 + $0x190] sm:$0xff]
        %v1814 = vld [vmem:[#allocation11 + $0x198] sm:$0xff]
        %v1815 = vld [vmem:[#allocation11 + $0x1a0] sm:$0xff]
        %v1816 = vld [vmem:[#allocation11 + $0x1a8] sm:$0xff]
        %v1817 = vld [vmem:[#allocation11 + $0x1b0] sm:$0xff]
        %v1818 = vld [vmem:[#allocation11 + $0x1b8] sm:$0xff]
        %v1819 = vld [vmem:[#allocation11 + $0x1c0] sm:$0xff]
        %v1820 = vld [vmem:[#allocation11 + $0x1c8] sm:$0xff]
        %v1821 = vld [vmem:[#allocation11 + $0x1d0] sm:$0xff]
        %v1822 = vld [vmem:[#allocation11 + $0x1d8] sm:$0xff]
        %v1823 = vld [vmem:[#allocation11 + $0x1e0] sm:$0xff]
        %v1824 = vld [vmem:[#allocation11 + $0x1e8] sm:$0xff]
        %v1825 = vld [vmem:[#allocation11 + $0x1f0] sm:$0xff]
        %v1826 = vld [vmem:[#allocation11 + $0x1f8] sm:$0xff]
        %v1827 = vld [vmem:[#allocation11 + $0x200] sm:$0xff]
        %v1828 = vld [vmem:[#allocation11 + $0x208] sm:$0xff]
        %v1829 = vld [vmem:[#allocation11 + $0x210] sm:$0xff]
        %v1830 = vld [vmem:[#allocation11 + $0x218] sm:$0xff]
        %v1831 = vld [vmem:[#allocation11 + $0x220] sm:$0xff]
        %v1832 = vld [vmem:[#allocation11 + $0x228] sm:$0xff]
        %v1833 = vld [vmem:[#allocation11 + $0x230] sm:$0xff]
        %v1834 = vld [vmem:[#allocation11 + $0x238] sm:$0xff]
        %v1835 = vld [vmem:[#allocation11 + $0x240] sm:$0xff]
        %v1836 = vld [vmem:[#allocation11 + $0x248] sm:$0xff]
        %v1837 = vld [vmem:[#allocation11 + $0x250] sm:$0xff]
        %v1838 = vld [vmem:[#allocation11 + $0x258] sm:$0xff]
        %v1839 = vld [vmem:[#allocation11 + $0x260] sm:$0xff]
        %v1840 = vld [vmem:[#allocation11 + $0x268] sm:$0xff]
        %v1841 = vld [vmem:[#allocation11 + $0x270] sm:$0xff]
        %v1842 = vld [vmem:[#allocation11 + $0x278] sm:$0xff]
        %1843 = vmatprep.subr.mxu0 0.0
        %1844 = vmatpush1.msra.mxu0 %v1763
        %1845 = vmatprep.subr.mxu0 0.0
        %1846 = vmatpush1.msra.mxu0 %v1764
        %1847 = vmatprep.subr.mxu0 0.0
        %1848 = vmatpush1.msra.mxu0 %v1765
        %1849 = vmatprep.subr.mxu0 0.0
        %1850 = vmatpush1.msra.mxu0 %v1766
        %1851 = vmatprep.subr.mxu0 0.0
        %1852 = vmatpush1.msra.mxu0 %v1767
        %1853 = vmatprep.subr.mxu0 0.0
        %1854 = vmatpush1.msra.mxu0 %v1768
        %1855 = vmatprep.subr.mxu0 0.0
        %1856 = vmatpush1.msra.mxu0 %v1769
        %1857 = vmatprep.subr.mxu0 0.0
        %1858 = vmatpush1.msra.mxu0 %v1770
        %1859 = vmatprep.subr.mxu0 0.0
        %1860 = vmatpush1.msra.mxu0 %v1771
        %1861 = vmatprep.subr.mxu0 0.0
        %1862 = vmatpush1.msra.mxu0 %v1772
        %1863 = vmatprep.subr.mxu0 0.0
        %1864 = vmatpush1.msra.mxu0 %v1773
        %1865 = vmatprep.subr.mxu0 0.0
        %1866 = vmatpush1.msra.mxu0 %v1774
        %1867 = vmatprep.subr.mxu0 0.0
        %1868 = vmatpush1.msra.mxu0 %v1775
        %1869 = vmatprep.subr.mxu0 0.0
        %1870 = vmatpush1.msra.mxu0 %v1776
        %1871 = vmatprep.subr.mxu0 0.0
        %1872 = vmatpush1.msra.mxu0 %v1777
        %1873 = vmatprep.subr.mxu0 0.0
        %1874 = vmatpush1.msra.mxu0 %v1778
        %1875 = vmatprep.subr.mxu0 0.0
        %1876 = vmatpush1.msra.mxu0 %v1779
        %1877 = vmatprep.subr.mxu0 0.0
        %1878 = vmatpush1.msra.mxu0 %v1780
        %1879 = vmatprep.subr.mxu0 0.0
        %1880 = vmatpush1.msra.mxu0 %v1781
        %1881 = vmatprep.subr.mxu0 0.0
        %1882 = vmatpush1.msra.mxu0 %v1782
        %1883 = vmatprep.subr.mxu0 0.0
        %1884 = vmatpush1.msra.mxu0 %v1783
        %1885 = vmatprep.subr.mxu0 0.0
        %1886 = vmatpush1.msra.mxu0 %v1784
        %1887 = vmatprep.subr.mxu0 0.0
        %1888 = vmatpush1.msra.mxu0 %v1785
        %1889 = vmatprep.subr.mxu0 0.0
        %1890 = vmatpush1.msra.mxu0 %v1786
        %1891 = vmatprep.subr.mxu0 0.0
        %1892 = vmatpush1.msra.mxu0 %v1787
        %1893 = vmatprep.subr.mxu0 0.0
        %1894 = vmatpush1.msra.mxu0 %v1788
        %1895 = vmatprep.subr.mxu0 0.0
        %1896 = vmatpush1.msra.mxu0 %v1789
        %1897 = vmatprep.subr.mxu0 0.0
        %1898 = vmatpush1.msra.mxu0 %v1790
        %1899 = vmatprep.subr.mxu0 0.0
        %1900 = vmatpush1.msra.mxu0 %v1791
        %1901 = vmatprep.subr.mxu0 0.0
        %1902 = vmatpush1.msra.mxu0 %v1792
        %1903 = vmatprep.subr.mxu0 0.0
        %1904 = vmatpush1.msra.mxu0 %v1793
        %1905 = vmatprep.subr.mxu0 0.0
        %1906 = vmatpush1.msra.mxu0 %v1794
        %1907 = vmatprep.mubr.f32.mxu0 %v1754
        %1908 = vmatmul.mubr.f32.gmra.mrb[0].mxu0 %v1753
        %v1909 = vpop.f32.mrb[0].mxu0
        %v1910 = vadd.f32 0.0, %v1909
        %v1911 = vpop.f32.mrb[0].mxu0
        %1912 = vmatprep.mubr.f32.mxu0 %v1759
        %1913 = vmatmul.mubr.f32.gmra.mrb[0].mxu0 %v1758
        %v1914 = vpop.f32.mrb[0].mxu0
        %v1915 = vadd.f32 0.0, %v1914
        %v1916 = vpop.f32.mrb[0].mxu0
        %1917 = vdwg.mxu0
        %1918 = vmatprep.subr.mxu0 0.0
        %1919 = vmatpush1.msra.mxu0 %v1795
        %1920 = vmatprep.subr.mxu0 0.0
        %1921 = vmatpush1.msra.mxu0 %v1796
        %1922 = vmatprep.subr.mxu0 0.0
        %1923 = vmatpush1.msra.mxu0 %v1797
        %1924 = vmatprep.subr.mxu0 0.0
        %1925 = vmatpush1.msra.mxu0 %v1798
        %1926 = vmatprep.subr.mxu0 0.0
        %1927 = vmatpush1.msra.mxu0 %v1799
        %1928 = vmatprep.subr.mxu0 0.0
        %1929 = vmatpush1.msra.mxu0 %v1800
        %1930 = vmatprep.subr.mxu0 0.0
        %1931 = vmatpush1.msra.mxu0 %v1801
        %1932 = vmatprep.subr.mxu0 0.0
        %1933 = vmatpush1.msra.mxu0 %v1802
        %1934 = vmatprep.subr.mxu0 0.0
        %1935 = vmatpush1.msra.mxu0 %v1803
        %1936 = vmatprep.subr.mxu0 0.0
        %1937 = vmatpush1.msra.mxu0 %v1804
        %1938 = vmatprep.subr.mxu0 0.0
        %1939 = vmatpush1.msra.mxu0 %v1805
        %1940 = vmatprep.subr.mxu0 0.0
        %1941 = vmatpush1.msra.mxu0 %v1806
        %1942 = vmatprep.subr.mxu0 0.0
        %1943 = vmatpush1.msra.mxu0 %v1807
        %1944 = vmatprep.subr.mxu0 0.0
        %1945 = vmatpush1.msra.mxu0 %v1808
        %1946 = vmatprep.subr.mxu0 0.0
        %1947 = vmatpush1.msra.mxu0 %v1809
        %1948 = vmatprep.subr.mxu0 0.0
        %1949 = vmatpush1.msra.mxu0 %v1810
        %1950 = vmatprep.subr.mxu0 0.0
        %1951 = vmatpush1.msra.mxu0 %v1811
        %1952 = vmatprep.subr.mxu0 0.0
        %1953 = vmatpush1.msra.mxu0 %v1812
        %1954 = vmatprep.subr.mxu0 0.0
        %1955 = vmatpush1.msra.mxu0 %v1813
        %1956 = vmatprep.subr.mxu0 0.0
        %1957 = vmatpush1.msra.mxu0 %v1814
        %1958 = vmatprep.subr.mxu0 0.0
        %1959 = vmatpush1.msra.mxu0 %v1815
        %1960 = vmatprep.subr.mxu0 0.0
        %1961 = vmatpush1.msra.mxu0 %v1816
        %1962 = vmatprep.subr.mxu0 0.0
        %1963 = vmatpush1.msra.mxu0 %v1817
        %1964 = vmatprep.subr.mxu0 0.0
        %1965 = vmatpush1.msra.mxu0 %v1818
        %1966 = vmatprep.subr.mxu0 0.0
        %1967 = vmatpush1.msra.mxu0 %v1819
        %1968 = vmatprep.subr.mxu0 0.0
        %1969 = vmatpush1.msra.mxu0 %v1820
        %1970 = vmatprep.subr.mxu0 0.0
        %1971 = vmatpush1.msra.mxu0 %v1821
        %1972 = vmatprep.subr.mxu0 0.0
        %1973 = vmatpush1.msra.mxu0 %v1822
        %1974 = vmatprep.subr.mxu0 0.0
        %1975 = vmatpush1.msra.mxu0 %v1823
        %1976 = vmatprep.subr.mxu0 0.0
        %1977 = vmatpush1.msra.mxu0 %v1824
        %1978 = vmatprep.subr.mxu0 0.0
        %1979 = vmatpush1.msra.mxu0 %v1825
        %1980 = vmatprep.subr.mxu0 0.0
        %1981 = vmatpush1.msra.mxu0 %v1826
        %1982 = vmatprep.mubr.f32.mxu0 %v1756
        %1983 = vmatmul.mubr.f32.gmra.mrb[0].mxu0 %v1755
        %v1984 = vpop.f32.mrb[0].mxu0
        %v1985 = vadd.f32 %v1910, %v1984
        %v1986 = vpop.f32.mrb[0].mxu0
        %1987 = vmatprep.mubr.f32.mxu0 %v1761
        %1988 = vmatmul.mubr.f32.gmra.mrb[0].mxu0 %v1760
        %v1989 = vpop.f32.mrb[0].mxu0
        %v1990 = vadd.f32 %v1915, %v1989
        %v1991 = vpop.f32.mrb[0].mxu0
        %1992 = vdwg.mxu0
        %1993 = vmatprep.subr.mxu0 0.0
        %1994 = vmatpush1.msra.mxu0 %v1827
        %1995 = vmatprep.subr.mxu0 0.0
        %1996 = vmatpush1.msra.mxu0 %v1828
        %1997 = vmatprep.subr.mxu0 0.0
        %1998 = vmatpush1.msra.mxu0 %v1829
        %1999 = vmatprep.subr.mxu0 0.0
        %2000 = vmatpush1.msra.mxu0 %v1830
        %2001 = vmatprep.subr.mxu0 0.0
        %2002 = vmatpush1.msra.mxu0 %v1831
        %2003 = vmatprep.subr.mxu0 0.0
        %2004 = vmatpush1.msra.mxu0 %v1832
        %2005 = vmatprep.subr.mxu0 0.0
        %2006 = vmatpush1.msra.mxu0 %v1833
        %2007 = vmatprep.subr.mxu0 0.0
        %2008 = vmatpush1.msra.mxu0 %v1834
        %2009 = vmatprep.subr.mxu0 0.0
        %2010 = vmatpush1.msra.mxu0 %v1835
        %2011 = vmatprep.subr.mxu0 0.0
        %2012 = vmatpush1.msra.mxu0 %v1836
        %2013 = vmatprep.subr.mxu0 0.0
        %2014 = vmatpush1.msra.mxu0 %v1837
        %2015 = vmatprep.subr.mxu0 0.0
        %2016 = vmatpush1.msra.mxu0 %v1838
        %2017 = vmatprep.subr.mxu0 0.0
        %2018 = vmatpush1.msra.mxu0 %v1839
        %2019 = vmatprep.subr.mxu0 0.0
        %2020 = vmatpush1.msra.mxu0 %v1840
        %2021 = vmatprep.subr.mxu0 0.0
        %2022 = vmatpush1.msra.mxu0 %v1841
        %2023 = vmatprep.subr.mxu0 0.0
        %2024 = vmatpush1.msra.mxu0 %v1842
        %2025 = vmatprep.subr.mxu0 0.0
        %2026 = vmatpush1.msra.mxu0 0.0
        %2027 = vmatprep.subr.mxu0 0.0
        %2028 = vmatpush1.msra.mxu0 0.0
        %2029 = vmatprep.subr.mxu0 0.0
        %2030 = vmatpush1.msra.mxu0 0.0
        %2031 = vmatprep.subr.mxu0 0.0
        %2032 = vmatpush1.msra.mxu0 0.0
        %2033 = vmatprep.subr.mxu0 0.0
        %2034 = vmatpush1.msra.mxu0 0.0
        %2035 = vmatprep.subr.mxu0 0.0
        %2036 = vmatpush1.msra.mxu0 0.0
        %2037 = vmatprep.subr.mxu0 0.0
        %2038 = vmatpush1.msra.mxu0 0.0
        %2039 = vmatprep.subr.mxu0 0.0
        %2040 = vmatpush1.msra.mxu0 0.0
        %2041 = vmatprep.subr.mxu0 0.0
        %2042 = vmatpush1.msra.mxu0 0.0
        %2043 = vmatprep.subr.mxu0 0.0
        %2044 = vmatpush1.msra.mxu0 0.0
        %2045 = vmatprep.subr.mxu0 0.0
        %2046 = vmatpush1.msra.mxu0 0.0
        %2047 = vmatprep.subr.mxu0 0.0
        %2048 = vmatpush1.msra.mxu0 0.0
        %2049 = vmatprep.subr.mxu0 0.0
        %2050 = vmatpush1.msra.mxu0 0.0
        %2051 = vmatprep.subr.mxu0 0.0
        %2052 = vmatpush1.msra.mxu0 0.0
        %2053 = vmatprep.subr.mxu0 0.0
        %2054 = vmatpush1.msra.mxu0 0.0
        %2055 = vmatprep.subr.mxu0 0.0
        %2056 = vmatpush1.msra.mxu0 0.0
        %2057 = vmatprep.mubr.f32.mxu0 0.0
        %2058 = vmatmul.mubr.f32.gmra.mrb[0].mxu0 %v1757
        %v2059 = vpop.f32.mrb[0].mxu0
        %v2060 = vadd.f32 %v1985, %v2059
        %v2061 = vpop.f32.mrb[0].mxu0
        %2062 = vmatprep.mubr.f32.mxu0 0.0
        %2063 = vmatmul.mubr.f32.gmra.mrb[0].mxu0 %v1762
        %v2064 = vpop.f32.mrb[0].mxu0
        %v2065 = vadd.f32 %v1990, %v2064
        %v2066 = vpop.f32.mrb[0].mxu0
        %2067 = vdwg.mxu0
        %v2068 = vld [vmem:[%s12] sm:$0x1]
        %v2070 = vlaneseq
        %v2071 = vshrl.u32 %v2070, 7
        %v2072 = vsub.s32 0, %v2071
        %v2073 = vrot.slane %v2068, %v2072
        %v2075 = vmul.f32 %v2060, %v2073
        %v2076 = vmul.f32 %v2065, %v2073
        %v2077 = vld [vmem:[%s13] sm:$0x1]
        %v2079 = vlaneseq
        %v2080 = vshrl.u32 %v2079, 7
        %v2081 = vsub.s32 0, %v2080
        %v2082 = vrot.slane %v2077, %v2081
        %v2084 = vadd.f32 %v2075, %v2082
        %v2085 = vadd.f32 %v2076, %v2082
        %v2086 = vtanh.pop %v2084
        %v2087 = vtanh.pop %v2085
        %2088 = vst [vmem:[#allocation2 + $0x2] sm:$0xff] %v2086
        %2089 = vst [vmem:[#allocation2 + $0xa] sm:$0xff] %v2087
        %v2090 = vld [vmem:[#allocation2] sm:$0xff]
        %v2091 = vld [vmem:[#allocation2 + $0x8] sm:$0xff]
        %2092 = vst [vmem:[#allocation4] sm:$0xff] %v2090
        %2093 = vst [vmem:[#allocation4 + $0x28] sm:$0xff] %v2091
        %v2094 = vld [vmem:[#allocation2 + $0x1] sm:$0xff]
        %v2095 = vld [vmem:[#allocation2 + $0x9] sm:$0xff]
        %2096 = vst [vmem:[#allocation4 + $0x8] sm:$0xff] %v2094
        %2097 = vst [vmem:[#allocation4 + $0x30] sm:$0xff] %v2095
        %v2098 = vld [vmem:[#allocation2 + $0x2] sm:$0xff]
        %v2099 = vld [vmem:[#allocation2 + $0xa] sm:$0xff]
        %2100 = vst [vmem:[#allocation4 + $0x10] sm:$0xff] %v2098
        %2101 = vst [vmem:[#allocation4 + $0x38] sm:$0xff] %v2099
        %v2102 = vld [vmem:[#allocation2 + $0x3] sm:$0xff]
        %v2103 = vld [vmem:[#allocation2 + $0xb] sm:$0xff]
        %2104 = vst [vmem:[#allocation4 + $0x18] sm:$0xff] %v2102
        %2105 = vst [vmem:[#allocation4 + $0x40] sm:$0xff] %v2103
        %v2106 = vld [vmem:[#allocation2 + $0x4] sm:$0xff]
        %v2107 = vld [vmem:[#allocation2 + $0xc] sm:$0xff]
        %2108 = vst [vmem:[#allocation4 + $0x20] sm:$0xff] %v2106
        %2109 = vst [vmem:[#allocation4 + $0x48] sm:$0xff] %v2107
        %v2110 = vld [vmem:[#allocation4] sm:$0xff]
        %v2111 = vld [vmem:[#allocation4 + $0x8] sm:$0xff]
        %v2112 = vld [vmem:[#allocation4 + $0x10] sm:$0xff]
        %v2113 = vld [vmem:[#allocation4 + $0x18] sm:$0xff]
        %v2114 = vld [vmem:[#allocation4 + $0x20] sm:$0xff]
        %v2115 = vld [vmem:[#allocation4 + $0x28] sm:$0xff]
        %v2116 = vld [vmem:[#allocation4 + $0x30] sm:$0xff]
        %v2117 = vld [vmem:[#allocation4 + $0x38] sm:$0xff]
        %v2118 = vld [vmem:[#allocation4 + $0x40] sm:$0xff]
        %v2119 = vld [vmem:[#allocation4 + $0x48] sm:$0xff]
        %v2120 = vld [vmem:[#allocation13] sm:$0xff]
        %v2121 = vld [vmem:[#allocation13 + $0x8] sm:$0xff]
        %v2122 = vld [vmem:[#allocation13 + $0x10] sm:$0xff]
        %v2123 = vld [vmem:[#allocation13 + $0x18] sm:$0xff]
        %v2124 = vld [vmem:[#allocation13 + $0x20] sm:$0xff]
        %v2125 = vld [vmem:[#allocation13 + $0x28] sm:$0xff]
        %v2126 = vld [vmem:[#allocation13 + $0x30] sm:$0xff]
        %v2127 = vld [vmem:[#allocation13 + $0x38] sm:$0xff]
        %v2128 = vld [vmem:[#allocation13 + $0x40] sm:$0xff]
        %v2129 = vld [vmem:[#allocation13 + $0x48] sm:$0xff]
        %v2130 = vld [vmem:[#allocation13 + $0x50] sm:$0xff]
        %v2131 = vld [vmem:[#allocation13 + $0x58] sm:$0xff]
        %v2132 = vld [vmem:[#allocation13 + $0x60] sm:$0xff]
        %v2133 = vld [vmem:[#allocation13 + $0x68] sm:$0xff]
        %v2134 = vld [vmem:[#allocation13 + $0x70] sm:$0xff]
        %v2135 = vld [vmem:[#allocation13 + $0x78] sm:$0xff]
        %v2136 = vld [vmem:[#allocation13 + $0x80] sm:$0xff]
        %v2137 = vld [vmem:[#allocation13 + $0x88] sm:$0xff]
        %v2138 = vld [vmem:[#allocation13 + $0x90] sm:$0xff]
        %v2139 = vld [vmem:[#allocation13 + $0x98] sm:$0xff]
        %v2140 = vld [vmem:[#allocation13 + $0xa0] sm:$0xff]
        %v2141 = vld [vmem:[#allocation13 + $0xa8] sm:$0xff]
        %v2142 = vld [vmem:[#allocation13 + $0xb0] sm:$0xff]
        %v2143 = vld [vmem:[#allocation13 + $0xb8] sm:$0xff]
        %v2144 = vld [vmem:[#allocation13 + $0xc0] sm:$0xff]
        %v2145 = vld [vmem:[#allocation13 + $0xc8] sm:$0xff]
        %v2146 = vld [vmem:[#allocation13 + $0xd0] sm:$0xff]
        %v2147 = vld [vmem:[#allocation13 + $0xd8] sm:$0xff]
        %v2148 = vld [vmem:[#allocation13 + $0xe0] sm:$0xff]
        %v2149 = vld [vmem:[#allocation13 + $0xe8] sm:$0xff]
        %v2150 = vld [vmem:[#allocation13 + $0xf0] sm:$0xff]
        %v2151 = vld [vmem:[#allocation13 + $0xf8] sm:$0xff]
        %v2152 = vld [vmem:[#allocation13 + $0x100] sm:$0xff]
        %v2153 = vld [vmem:[#allocation13 + $0x108] sm:$0xff]
        %v2154 = vld [vmem:[#allocation13 + $0x110] sm:$0xff]
        %v2155 = vld [vmem:[#allocation13 + $0x118] sm:$0xff]
        %v2156 = vld [vmem:[#allocation13 + $0x120] sm:$0xff]
        %v2157 = vld [vmem:[#allocation13 + $0x128] sm:$0xff]
        %v2158 = vld [vmem:[#allocation13 + $0x130] sm:$0xff]
        %v2159 = vld [vmem:[#allocation13 + $0x138] sm:$0xff]
        %v2160 = vld [vmem:[#allocation13 + $0x140] sm:$0xff]
        %v2161 = vld [vmem:[#allocation13 + $0x148] sm:$0xff]
        %v2162 = vld [vmem:[#allocation13 + $0x150] sm:$0xff]
        %v2163 = vld [vmem:[#allocation13 + $0x158] sm:$0xff]
        %v2164 = vld [vmem:[#allocation13 + $0x160] sm:$0xff]
        %v2165 = vld [vmem:[#allocation13 + $0x168] sm:$0xff]
        %v2166 = vld [vmem:[#allocation13 + $0x170] sm:$0xff]
        %v2167 = vld [vmem:[#allocation13 + $0x178] sm:$0xff]
        %v2168 = vld [vmem:[#allocation13 + $0x180] sm:$0xff]
        %v2169 = vld [vmem:[#allocation13 + $0x188] sm:$0xff]
        %v2170 = vld [vmem:[#allocation13 + $0x190] sm:$0xff]
        %v2171 = vld [vmem:[#allocation13 + $0x198] sm:$0xff]
        %v2172 = vld [vmem:[#allocation13 + $0x1a0] sm:$0xff]
        %v2173 = vld [vmem:[#allocation13 + $0x1a8] sm:$0xff]
        %v2174 = vld [vmem:[#allocation13 + $0x1b0] sm:$0xff]
        %v2175 = vld [vmem:[#allocation13 + $0x1b8] sm:$0xff]
        %v2176 = vld [vmem:[#allocation13 + $0x1c0] sm:$0xff]
        %v2177 = vld [vmem:[#allocation13 + $0x1c8] sm:$0xff]
        %v2178 = vld [vmem:[#allocation13 + $0x1d0] sm:$0xff]
        %v2179 = vld [vmem:[#allocation13 + $0x1d8] sm:$0xff]
        %v2180 = vld [vmem:[#allocation13 + $0x1e0] sm:$0xff]
        %v2181 = vld [vmem:[#allocation13 + $0x1e8] sm:$0xff]
        %v2182 = vld [vmem:[#allocation13 + $0x1f0] sm:$0xff]
        %v2183 = vld [vmem:[#allocation13 + $0x1f8] sm:$0xff]
        %v2184 = vld [vmem:[#allocation13 + $0x200] sm:$0xff]
        %v2185 = vld [vmem:[#allocation13 + $0x208] sm:$0xff]
        %v2186 = vld [vmem:[#allocation13 + $0x210] sm:$0xff]
        %v2187 = vld [vmem:[#allocation13 + $0x218] sm:$0xff]
        %v2188 = vld [vmem:[#allocation13 + $0x220] sm:$0xff]
        %v2189 = vld [vmem:[#allocation13 + $0x228] sm:$0xff]
        %v2190 = vld [vmem:[#allocation13 + $0x230] sm:$0xff]
        %v2191 = vld [vmem:[#allocation13 + $0x238] sm:$0xff]
        %v2192 = vld [vmem:[#allocation13 + $0x240] sm:$0xff]
        %v2193 = vld [vmem:[#allocation13 + $0x248] sm:$0xff]
        %v2194 = vld [vmem:[#allocation13 + $0x250] sm:$0xff]
        %v2195 = vld [vmem:[#allocation13 + $0x258] sm:$0xff]
        %v2196 = vld [vmem:[#allocation13 + $0x260] sm:$0xff]
        %v2197 = vld [vmem:[#allocation13 + $0x268] sm:$0xff]
        %v2198 = vld [vmem:[#allocation13 + $0x270] sm:$0xff]
        %v2199 = vld [vmem:[#allocation13 + $0x278] sm:$0xff]
        %2200 = vmatprep.subr.mxu0 0.0
        %2201 = vmatpush1.msra.mxu0 %v2120
        %2202 = vmatprep.subr.mxu0 0.0
        %2203 = vmatpush1.msra.mxu0 %v2121
        %2204 = vmatprep.subr.mxu0 0.0
        %2205 = vmatpush1.msra.mxu0 %v2122
        %2206 = vmatprep.subr.mxu0 0.0
        %2207 = vmatpush1.msra.mxu0 %v2123
        %2208 = vmatprep.subr.mxu0 0.0
        %2209 = vmatpush1.msra.mxu0 %v2124
        %2210 = vmatprep.subr.mxu0 0.0
        %2211 = vmatpush1.msra.mxu0 %v2125
        %2212 = vmatprep.subr.mxu0 0.0
        %2213 = vmatpush1.msra.mxu0 %v2126
        %2214 = vmatprep.subr.mxu0 0.0
        %2215 = vmatpush1.msra.mxu0 %v2127
        %2216 = vmatprep.subr.mxu0 0.0
        %2217 = vmatpush1.msra.mxu0 %v2128
        %2218 = vmatprep.subr.mxu0 0.0
        %2219 = vmatpush1.msra.mxu0 %v2129
        %2220 = vmatprep.subr.mxu0 0.0
        %2221 = vmatpush1.msra.mxu0 %v2130
        %2222 = vmatprep.subr.mxu0 0.0
        %2223 = vmatpush1.msra.mxu0 %v2131
        %2224 = vmatprep.subr.mxu0 0.0
        %2225 = vmatpush1.msra.mxu0 %v2132
        %2226 = vmatprep.subr.mxu0 0.0
        %2227 = vmatpush1.msra.mxu0 %v2133
        %2228 = vmatprep.subr.mxu0 0.0
        %2229 = vmatpush1.msra.mxu0 %v2134
        %2230 = vmatprep.subr.mxu0 0.0
        %2231 = vmatpush1.msra.mxu0 %v2135
        %2232 = vmatprep.subr.mxu0 0.0
        %2233 = vmatpush1.msra.mxu0 %v2136
        %2234 = vmatprep.subr.mxu0 0.0
        %2235 = vmatpush1.msra.mxu0 %v2137
        %2236 = vmatprep.subr.mxu0 0.0
        %2237 = vmatpush1.msra.mxu0 %v2138
        %2238 = vmatprep.subr.mxu0 0.0
        %2239 = vmatpush1.msra.mxu0 %v2139
        %2240 = vmatprep.subr.mxu0 0.0
        %2241 = vmatpush1.msra.mxu0 %v2140
        %2242 = vmatprep.subr.mxu0 0.0
        %2243 = vmatpush1.msra.mxu0 %v2141
        %2244 = vmatprep.subr.mxu0 0.0
        %2245 = vmatpush1.msra.mxu0 %v2142
        %2246 = vmatprep.subr.mxu0 0.0
        %2247 = vmatpush1.msra.mxu0 %v2143
        %2248 = vmatprep.subr.mxu0 0.0
        %2249 = vmatpush1.msra.mxu0 %v2144
        %2250 = vmatprep.subr.mxu0 0.0
        %2251 = vmatpush1.msra.mxu0 %v2145
        %2252 = vmatprep.subr.mxu0 0.0
        %2253 = vmatpush1.msra.mxu0 %v2146
        %2254 = vmatprep.subr.mxu0 0.0
        %2255 = vmatpush1.msra.mxu0 %v2147
        %2256 = vmatprep.subr.mxu0 0.0
        %2257 = vmatpush1.msra.mxu0 %v2148
        %2258 = vmatprep.subr.mxu0 0.0
        %2259 = vmatpush1.msra.mxu0 %v2149
        %2260 = vmatprep.subr.mxu0 0.0
        %2261 = vmatpush1.msra.mxu0 %v2150
        %2262 = vmatprep.subr.mxu0 0.0
        %2263 = vmatpush1.msra.mxu0 %v2151
        %2264 = vmatprep.mubr.f32.mxu0 %v2111
        %2265 = vmatmul.mubr.f32.gmra.mrb[0].mxu0 %v2110
        %v2266 = vpop.f32.mrb[0].mxu0
        %v2267 = vadd.f32 0.0, %v2266
        %v2268 = vpop.f32.mrb[0].mxu0
        %2269 = vmatprep.mubr.f32.mxu0 %v2116
        %2270 = vmatmul.mubr.f32.gmra.mrb[0].mxu0 %v2115
        %v2271 = vpop.f32.mrb[0].mxu0
        %v2272 = vadd.f32 0.0, %v2271
        %v2273 = vpop.f32.mrb[0].mxu0
        %2274 = vdwg.mxu0
        %2275 = vmatprep.subr.mxu0 0.0
        %2276 = vmatpush1.msra.mxu0 %v2152
        %2277 = vmatprep.subr.mxu0 0.0
        %2278 = vmatpush1.msra.mxu0 %v2153
        %2279 = vmatprep.subr.mxu0 0.0
        %2280 = vmatpush1.msra.mxu0 %v2154
        %2281 = vmatprep.subr.mxu0 0.0
        %2282 = vmatpush1.msra.mxu0 %v2155
        %2283 = vmatprep.subr.mxu0 0.0
        %2284 = vmatpush1.msra.mxu0 %v2156
        %2285 = vmatprep.subr.mxu0 0.0
        %2286 = vmatpush1.msra.mxu0 %v2157
        %2287 = vmatprep.subr.mxu0 0.0
        %2288 = vmatpush1.msra.mxu0 %v2158
        %2289 = vmatprep.subr.mxu0 0.0
        %2290 = vmatpush1.msra.mxu0 %v2159
        %2291 = vmatprep.subr.mxu0 0.0
        %2292 = vmatpush1.msra.mxu0 %v2160
        %2293 = vmatprep.subr.mxu0 0.0
        %2294 = vmatpush1.msra.mxu0 %v2161
        %2295 = vmatprep.subr.mxu0 0.0
        %2296 = vmatpush1.msra.mxu0 %v2162
        %2297 = vmatprep.subr.mxu0 0.0
        %2298 = vmatpush1.msra.mxu0 %v2163
        %2299 = vmatprep.subr.mxu0 0.0
        %2300 = vmatpush1.msra.mxu0 %v2164
        %2301 = vmatprep.subr.mxu0 0.0
        %2302 = vmatpush1.msra.mxu0 %v2165
        %2303 = vmatprep.subr.mxu0 0.0
        %2304 = vmatpush1.msra.mxu0 %v2166
        %2305 = vmatprep.subr.mxu0 0.0
        %2306 = vmatpush1.msra.mxu0 %v2167
        %2307 = vmatprep.subr.mxu0 0.0
        %2308 = vmatpush1.msra.mxu0 %v2168
        %2309 = vmatprep.subr.mxu0 0.0
        %2310 = vmatpush1.msra.mxu0 %v2169
        %2311 = vmatprep.subr.mxu0 0.0
        %2312 = vmatpush1.msra.mxu0 %v2170
        %2313 = vmatprep.subr.mxu0 0.0
        %2314 = vmatpush1.msra.mxu0 %v2171
        %2315 = vmatprep.subr.mxu0 0.0
        %2316 = vmatpush1.msra.mxu0 %v2172
        %2317 = vmatprep.subr.mxu0 0.0
        %2318 = vmatpush1.msra.mxu0 %v2173
        %2319 = vmatprep.subr.mxu0 0.0
        %2320 = vmatpush1.msra.mxu0 %v2174
        %2321 = vmatprep.subr.mxu0 0.0
        %2322 = vmatpush1.msra.mxu0 %v2175
        %2323 = vmatprep.subr.mxu0 0.0
        %2324 = vmatpush1.msra.mxu0 %v2176
        %2325 = vmatprep.subr.mxu0 0.0
        %2326 = vmatpush1.msra.mxu0 %v2177
        %2327 = vmatprep.subr.mxu0 0.0
        %2328 = vmatpush1.msra.mxu0 %v2178
        %2329 = vmatprep.subr.mxu0 0.0
        %2330 = vmatpush1.msra.mxu0 %v2179
        %2331 = vmatprep.subr.mxu0 0.0
        %2332 = vmatpush1.msra.mxu0 %v2180
        %2333 = vmatprep.subr.mxu0 0.0
        %2334 = vmatpush1.msra.mxu0 %v2181
        %2335 = vmatprep.subr.mxu0 0.0
        %2336 = vmatpush1.msra.mxu0 %v2182
        %2337 = vmatprep.subr.mxu0 0.0
        %2338 = vmatpush1.msra.mxu0 %v2183
        %2339 = vmatprep.mubr.f32.mxu0 %v2113
        %2340 = vmatmul.mubr.f32.gmra.mrb[0].mxu0 %v2112
        %v2341 = vpop.f32.mrb[0].mxu0
        %v2342 = vadd.f32 %v2267, %v2341
        %v2343 = vpop.f32.mrb[0].mxu0
        %2344 = vmatprep.mubr.f32.mxu0 %v2118
        %2345 = vmatmul.mubr.f32.gmra.mrb[0].mxu0 %v2117
        %v2346 = vpop.f32.mrb[0].mxu0
        %v2347 = vadd.f32 %v2272, %v2346
        %v2348 = vpop.f32.mrb[0].mxu0
        %2349 = vdwg.mxu0
        %2350 = vmatprep.subr.mxu0 0.0
        %2351 = vmatpush1.msra.mxu0 %v2184
        %2352 = vmatprep.subr.mxu0 0.0
        %2353 = vmatpush1.msra.mxu0 %v2185
        %2354 = vmatprep.subr.mxu0 0.0
        %2355 = vmatpush1.msra.mxu0 %v2186
        %2356 = vmatprep.subr.mxu0 0.0
        %2357 = vmatpush1.msra.mxu0 %v2187
        %2358 = vmatprep.subr.mxu0 0.0
        %2359 = vmatpush1.msra.mxu0 %v2188
        %2360 = vmatprep.subr.mxu0 0.0
        %2361 = vmatpush1.msra.mxu0 %v2189
        %2362 = vmatprep.subr.mxu0 0.0
        %2363 = vmatpush1.msra.mxu0 %v2190
        %2364 = vmatprep.subr.mxu0 0.0
        %2365 = vmatpush1.msra.mxu0 %v2191
        %2366 = vmatprep.subr.mxu0 0.0
        %2367 = vmatpush1.msra.mxu0 %v2192
        %2368 = vmatprep.subr.mxu0 0.0
        %2369 = vmatpush1.msra.mxu0 %v2193
        %2370 = vmatprep.subr.mxu0 0.0
        %2371 = vmatpush1.msra.mxu0 %v2194
        %2372 = vmatprep.subr.mxu0 0.0
        %2373 = vmatpush1.msra.mxu0 %v2195
        %2374 = vmatprep.subr.mxu0 0.0
        %2375 = vmatpush1.msra.mxu0 %v2196
        %2376 = vmatprep.subr.mxu0 0.0
        %2377 = vmatpush1.msra.mxu0 %v2197
        %2378 = vmatprep.subr.mxu0 0.0
        %2379 = vmatpush1.msra.mxu0 %v2198
        %2380 = vmatprep.subr.mxu0 0.0
        %2381 = vmatpush1.msra.mxu0 %v2199
        %2382 = vmatprep.subr.mxu0 0.0
        %2383 = vmatpush1.msra.mxu0 0.0
        %2384 = vmatprep.subr.mxu0 0.0
        %2385 = vmatpush1.msra.mxu0 0.0
        %2386 = vmatprep.subr.mxu0 0.0
        %2387 = vmatpush1.msra.mxu0 0.0
        %2388 = vmatprep.subr.mxu0 0.0
        %2389 = vmatpush1.msra.mxu0 0.0
        %2390 = vmatprep.subr.mxu0 0.0
        %2391 = vmatpush1.msra.mxu0 0.0
        %2392 = vmatprep.subr.mxu0 0.0
        %2393 = vmatpush1.msra.mxu0 0.0
        %2394 = vmatprep.subr.mxu0 0.0
        %2395 = vmatpush1.msra.mxu0 0.0
        %2396 = vmatprep.subr.mxu0 0.0
        %2397 = vmatpush1.msra.mxu0 0.0
        %2398 = vmatprep.subr.mxu0 0.0
        %2399 = vmatpush1.msra.mxu0 0.0
        %2400 = vmatprep.subr.mxu0 0.0
        %2401 = vmatpush1.msra.mxu0 0.0
        %2402 = vmatprep.subr.mxu0 0.0
        %2403 = vmatpush1.msra.mxu0 0.0
        %2404 = vmatprep.subr.mxu0 0.0
        %2405 = vmatpush1.msra.mxu0 0.0
        %2406 = vmatprep.subr.mxu0 0.0
        %2407 = vmatpush1.msra.mxu0 0.0
        %2408 = vmatprep.subr.mxu0 0.0
        %2409 = vmatpush1.msra.mxu0 0.0
        %2410 = vmatprep.subr.mxu0 0.0
        %2411 = vmatpush1.msra.mxu0 0.0
        %2412 = vmatprep.subr.mxu0 0.0
        %2413 = vmatpush1.msra.mxu0 0.0
        %2414 = vmatprep.mubr.f32.mxu0 0.0
        %2415 = vmatmul.mubr.f32.gmra.mrb[0].mxu0 %v2114
        %v2416 = vpop.f32.mrb[0].mxu0
        %v2417 = vadd.f32 %v2342, %v2416
        %v2418 = vpop.f32.mrb[0].mxu0
        %2419 = vmatprep.mubr.f32.mxu0 0.0
        %2420 = vmatmul.mubr.f32.gmra.mrb[0].mxu0 %v2119
        %v2421 = vpop.f32.mrb[0].mxu0
        %v2422 = vadd.f32 %v2347, %v2421
        %v2423 = vpop.f32.mrb[0].mxu0
        %2424 = vdwg.mxu0
        %v2425 = vld [vmem:[%s15] sm:$0x1]
        %v2427 = vlaneseq
        %v2428 = vshrl.u32 %v2427, 7
        %v2429 = vsub.s32 0, %v2428
        %v2430 = vrot.slane %v2425, %v2429
        %v2432 = vmul.f32 %v2417, %v2430
        %v2433 = vmul.f32 %v2422, %v2430
        %v2434 = vld [vmem:[%s16] sm:$0x1]
        %v2436 = vlaneseq
        %v2437 = vshrl.u32 %v2436, 7
        %v2438 = vsub.s32 0, %v2437
        %v2439 = vrot.slane %v2434, %v2438
        %v2441 = vadd.f32 %v2432, %v2439
        %v2442 = vadd.f32 %v2433, %v2439
        %2443 = vst [vmem:[%s629] sm:$0xff] %v2441
        %2444 = vst [vmem:[%s629 + $0x8] sm:$0xff] %v2442
        %s2445 = sand.u32 %s409, 1
        %s2446 = scalar_lea.sflag [#allocation7], %s2445
        %s2447 = sand.u32 %s409, 1
        %s2448 = smul.addr %s2447, 16
        %s2449 = scalar_lea.vmem [#allocation14], %s2448
        // Predicated region
        $region109: #{tpu_custom_call.1} parent=87 // pred_check
          %p2450 = pneg %p419
        $region110: #{tpu_custom_call.1} parent=87 // pred_check_branch
          %2452 = sbr.rel (%p2450) target = $region112
        $region111: #{tpu_custom_call.1} parent=87 // pred_region
          %s2454 = ssub.s32 256, 256
          %2455 = vsyncadd %s2446, %s2454
          %s2456 = smul.addr %s34, 2
          %s2457 = smul.addr %s2456, 128
          %s2458 = scalar_lea.hbm %s17, %s2457
          %s2459 = sshll.u32 %s2449, 4
          %s2460 = int_to_ptr.vmem [resolvable:$true] %s2459
          %2465 = dma.vmem_to_hbm [thread:$0]  %s2460, 256, %s2458, %s2446, 128, 128, 8
        $region112: #{tpu_custom_call.1} parent=87 // pred_fallthru
          _
      $region88: #{tpu_custom_call.1} parent=5 // pred_fallthru
        _
      %p2466 = scmp.le.s32.totalorder 2, %s29
      // Predicated region
      $region113: #{tpu_custom_call.1} parent=5 // pred_check
        %p2467 = pneg %p2466
      $region114: #{tpu_custom_call.1} parent=5 // pred_check_branch
        %2469 = sbr.rel (%p2467) target = $region116
      $region115: #{tpu_custom_call.1} parent=5 // pred_region
        %s2470 = ssub.s32 %s29, 2
        // Predicated region
        $region117: #{tpu_custom_call.1} parent=115 // pred_check
          %p2471 = pneg %p425
        $region118: #{tpu_custom_call.1} parent=115 // pred_check_branch
          %2473 = sbr.rel (%p2471) target = $region120
        $region119: #{tpu_custom_call.1} parent=115 // pred_region
          %s2474 = sand.u32 %s410, 1
          %s2475 = scalar_lea.sflag [#allocation7], %s2474
          %s2476 = sand.u32 %s410, 1
          %s2477 = smul.addr %s2476, 16
          %s2478 = scalar_lea.vmem [#allocation14], %s2477
          %2479 = dma.done %s2475, 256
        $region120: #{tpu_custom_call.1} parent=115 // pred_fallthru
          _
      $region116: #{tpu_custom_call.1} parent=5 // pred_fallthru
        _
    $region6: #{tpu_custom_call.1} parent=1 // loop_footer
      %s33 = sadd.s32 1, %s29
    $region7: #{tpu_custom_call.1} parent=1 // loop_footer_branch
      %28 = sbr.rel target = $region3
    $region8: #{tpu_custom_call.1} parent=1 // loop_exit
      _
    %2480 = vsyncpa [#allocation6], 1
    %s2481 = scalar_lea.sflag [#allocation6], 1
    %2482 = vsyncpa %s2481, 1
    %2483 = vsyncpa [#allocation9], 1
    %2484 = vsyncpa [#allocation12], 1
    %2485 = vsyncpa [#allocation7], 1
    %s2486 = scalar_lea.sflag [#allocation7], 1
    %2487 = vsyncpa %s2486, 1

// kernel: tpu_custom_call.1
$region0: #{tpu_custom_call.1}
  #allocation0 [shape = 'u32[]', space=smem, size = 0x4, offset = 0x4, fixed_abs, tag = 'smem constant byte address 0x4 - core index']
  #allocation1 [shape = 'u32[144,128]{1,0:T(1,128)}', space=vmem, size = 0x12000, scoped, tag = 'internal scratch']
  #allocation2 [shape = 'f32[20,128]{1,0:T(8,128)}', space=vmem, size = 0x3000, scoped, tag = 'scratch operand']
  #allocation3 [shape = 'f32[20,128]{1,0:T(8,128)}', space=vmem, size = 0x3000, scoped, tag = 'scratch operand']
  #allocation4 [shape = 'f32[16,640]{1,0:T(8,128)}', space=vmem, size = 0xa000, scoped, tag = 'scratch operand']
  %s0 = inlined_call_operand.vmem [shape: f32[2,16,128], index: 0, kind: input, shape index: {}]
  %s1 = inlined_call_operand.vmem [shape: f32[2,16,1], index: 1, kind: input, shape index: {}]
  %s2 = inlined_call_operand.hbm [shape: f32[640,128], index: 2, kind: input, shape index: {}]
  %s3 = inlined_call_operand.vmem [shape: f32[1,128], index: 3, kind: input, shape index: {}]
  %s4 = inlined_call_operand.vmem [shape: f32[1,128], index: 4, kind: input, shape index: {}]
  %s5 = inlined_call_operand.hbm [shape: f32[640,128], index: 5, kind: input, shape index: {}]
  %s6 = inlined_call_operand.vmem [shape: f32[1,128], index: 6, kind: input, shape index: {}]
  %s7 = inlined_call_operand.vmem [shape: f32[1,128], index: 7, kind: input, shape index: {}]
  %s8 = inlined_call_operand.hbm [shape: f32[640,128], index: 8, kind: input, shape index: {}]
  %s9 = inlined_call_operand.vmem [shape: f32[1,128], index: 9, kind: input, shape index: {}]
  %s10 = inlined_call_operand.vmem [shape: f32[1,128], index: 10, kind: input, shape index: {}]
  %s11 = inlined_call_operand.hbm [shape: f32[640,128], index: 11, kind: input, shape index: {}]
  %s12 = inlined_call_operand.vmem [shape: f32[1,128], index: 12, kind: input, shape index: {}]
  %s13 = inlined_call_operand.vmem [shape: f32[1,128], index: 13, kind: input, shape index: {}]
  %s14 = inlined_call_operand.hbm [shape: f32[640,128], index: 14, kind: input, shape index: {}]
  %s15 = inlined_call_operand.vmem [shape: f32[1,128], index: 15, kind: input, shape index: {}]
  %s16 = inlined_call_operand.vmem [shape: f32[1,128], index: 16, kind: input, shape index: {}]
  %s17 = inlined_call_operand.hbm [shape: f32[2,16,128], index: 17, kind: output, shape index: {}]
  %s18 = sld [smem:[#allocation0]]
  $region121: #{tpu_custom_call.1} parent=0
    _
  %s20 = ssub.s32 1, %s18
  %s21 = scalar_select 0, %s20, %s18
  $region1: #{tpu_custom_call.1} parent=0
    #allocation5 [shape = 'u8[327680]{0}', space=vmem, size = 0x50000, scoped, tag = 'input window, operand 2, single buffered']
    #allocation6 [shape = 's32[2]{0}', space=sflag, size = 0x8, scoped, tag = 'scoped memory for tpu_custom_call.1']
    #allocation7 [shape = 's32[2]{0}', space=sflag, size = 0x8, scoped, tag = 'scoped memory for tpu_custom_call.1']
    #allocation8 [shape = 'u8[327680]{0}', space=vmem, size = 0x50000, scoped, tag = 'input window, operand 5, single buffered']
    #allocation9 [shape = 's32[1]{0}', space=sflag, size = 0x4, scoped, tag = 'scoped memory for tpu_custom_call.1']
    #allocation10 [shape = 'u8[327680]{0}', space=vmem, size = 0x50000, scoped, tag = 'input window, operand 8, single buffered']
    #allocation11 [shape = 'u8[327680]{0}', space=vmem, size = 0x50000, scoped, tag = 'input window, operand 11, single buffered']
    #allocation12 [shape = 's32[1]{0}', space=sflag, size = 0x4, scoped, tag = 'scoped memory for tpu_custom_call.1']
    #allocation13 [shape = 'u8[327680]{0}', space=vmem, size = 0x50000, scoped, tag = 'input window, operand 14, single buffered']
    #allocation14 [shape = 'u8[16384]{0}', space=vmem, size = 0x4000, scoped, tag = 'output window, operand 0']
    %22 = vsyncpa [#allocation6], 0
    %23 = vsyncpa [#allocation9], 0
    %24 = vsyncpa [#allocation12], 0
    %25 = vsyncpa [#allocation7], 0
    %s26 = scalar_lea.sflag [#allocation7], 1
    %27 = vsyncpa %s26, 0
    loop: start=0, step=1, limit=4
    $region2: #{tpu_custom_call.1} parent=1 // loop_pre_header
      _
    $region3: #{tpu_custom_call.1} parent=1 // loop_header
      %s29 = sphi 0, %s33
      %p30 = scmp.ge.s32.totalorder %s29, 4
      %s39 = sphi 0, %s41
      %s42 = sphi 0, %s39
      %s43 = sphi 0, %s42
      %s59 = sphi 0, %s43
      %s65 = sphi 0, %s67
      %s68 = sphi 0, %s65
      %s69 = sphi 0, %s68
      %s85 = sphi 0, %s69
      %s89 = sphi 0, %s89
      %s91 = sphi 0, %s89
      %s92 = sphi 0, %s91
      %s106 = sphi 0, %s92
      %s110 = sphi 0, %s110
      %s112 = sphi 0, %s110
      %s113 = sphi 0, %s112
      %s127 = sphi 0, %s113
      %s131 = sphi 0, %s131
      %s133 = sphi 0, %s131
      %s134 = sphi 0, %s133
      %s148 = sphi 0, %s134
      %s152 = sphi 0, %s152
      %s154 = sphi 0, %s152
      %s155 = sphi 0, %s154
      %s169 = sphi 0, %s155
      %s173 = sphi 0, %s173
      %s175 = sphi 0, %s173
      %s176 = sphi 0, %s175
      %s190 = sphi 0, %s176
      %s194 = sphi 0, %s194
      %s196 = sphi 0, %s194
      %s197 = sphi 0, %s196
      %s211 = sphi 0, %s197
      %s215 = sphi 0, %s215
      %s217 = sphi 0, %s215
      %s218 = sphi 0, %s217
      %s232 = sphi 0, %s218
      %s236 = sphi 0, %s236
      %s238 = sphi 0, %s236
      %s239 = sphi 0, %s238
      %s253 = sphi 0, %s239
      %s257 = sphi 0, %s257
      %s259 = sphi 0, %s257
      %s260 = sphi 0, %s259
      %s274 = sphi 0, %s260
      %s278 = sphi 0, %s278
      %s280 = sphi 0, %s278
      %s281 = sphi 0, %s280
      %s295 = sphi 0, %s281
      %s299 = sphi 0, %s299
      %s301 = sphi 0, %s299
      %s302 = sphi 0, %s301
      %s316 = sphi 0, %s302
      %s320 = sphi 0, %s320
      %s322 = sphi 0, %s320
      %s323 = sphi 0, %s322
      %s337 = sphi 0, %s323
      %s341 = sphi 0, %s341
      %s343 = sphi 0, %s341
      %s344 = sphi 0, %s343
      %s358 = sphi 0, %s344
      %s362 = sphi 0, %s362
      %s364 = sphi 0, %s362
      %s365 = sphi 0, %s364
      %s379 = sphi 0, %s365
      %s383 = sphi 0, %s383
      %s385 = sphi 0, %s383
      %s386 = sphi 0, %s385
      %s400 = sphi 0, %s386
      %s406 = sphi 0, %s408
      %s409 = sphi 0, %s406
      %s410 = sphi 0, %s409
      %s426 = sphi 0, %s410
    $region4: #{tpu_custom_call.1} parent=1 // loop_header_branch
      %32 = sbr.rel (%p30) target = $region8
    $region5: #{tpu_custom_call.1} parent=1 // loop_body
      %s34 = ssub.s32 %s29, 1
      %s35 = ssub.s32 %s29, 2
      %s36 = sadd.s32 %s29, 1
      %s37 = ssub.s32 %s29, %s36
      %p38 = scmp.eq.s32.totalorder %s37, 0
      %s40 = sadd.s32 %s39, 1
      %s41 = scalar_select %p38, %s39, %s40
      %p44 = pneg %p38
      %p45 = scmp.eq.s32.totalorder %s29, 1
      %p46 = por %p44, %p45
      %p47 = scmp.ne.s32.totalorder %s39, %s42
      %p48 = scmp.eq.s32.totalorder %s29, 0
      %p49 = por %p47, %p48
      %p50 = scmp.ne.s32.totalorder %s39, %s42
      %p51 = scmp.eq.s32.totalorder %s34, 1
      %p52 = por %p50, %p51
      %p53 = scmp.ne.s32.totalorder %s42, %s43
      %p54 = scmp.eq.s32.totalorder %s34, 0
      %p55 = por %p53, %p54
      %p56 = scmp.ne.s32.totalorder %s42, %s43
      %p57 = scmp.eq.s32.totalorder %s35, 1
      %p58 = por %p56, %p57
      %p60 = scmp.ne.s32.totalorder %s43, %s59
      %p61 = scmp.eq.s32.totalorder %s35, 0
      %p62 = por %p60, %p61
      %s63 = ssub.s32 %s29, %s36
      %p64 = scmp.eq.s32.totalorder %s63, 0
      %s66 = sadd.s32 %s65, 1
      %s67 = scalar_select %p64, %s65, %s66
      %p70 = pneg %p64
      %p71 = scmp.eq.s32.totalorder %s29, 1
      %p72 = por %p70, %p71
      %p73 = scmp.ne.s32.totalorder %s65, %s68
      %p74 = scmp.eq.s32.totalorder %s29, 0
      %p75 = por %p73, %p74
      %p76 = scmp.ne.s32.totalorder %s65, %s68
      %p77 = scmp.eq.s32.totalorder %s34, 1
      %p78 = por %p76, %p77
      %p79 = scmp.ne.s32.totalorder %s68, %s69
      %p80 = scmp.eq.s32.totalorder %s34, 0
      %p81 = por %p79, %p80
      %p82 = scmp.ne.s32.totalorder %s68, %s69
      %p83 = scmp.eq.s32.totalorder %s35, 1
      %p84 = por %p82, %p83
      %p86 = scmp.ne.s32.totalorder %s69, %s85
      %p87 = scmp.eq.s32.totalorder %s35, 0
      %p88 = por %p86, %p87
      %s90 = sadd.s32 %s89, 1
      %p93 = scmp.eq.s32.totalorder %s29, 1
      %p94 = scmp.ne.s32.totalorder %s89, %s91
      %p95 = scmp.eq.s32.totalorder %s29, 0
      %p96 = por %p94, %p95
      %p97 = scmp.ne.s32.totalorder %s89, %s91
      %p98 = scmp.eq.s32.totalorder %s34, 1
      %p99 = por %p97, %p98
      %p100 = scmp.ne.s32.totalorder %s91, %s92
      %p101 = scmp.eq.s32.totalorder %s34, 0
      %p102 = por %p100, %p101
      %p103 = scmp.ne.s32.totalorder %s91, %s92
      %p104 = scmp.eq.s32.totalorder %s35, 1
      %p105 = por %p103, %p104
      %p107 = scmp.ne.s32.totalorder %s92, %s106
      %p108 = scmp.eq.s32.totalorder %s35, 0
      %p109 = por %p107, %p108
      %s111 = sadd.s32 %s110, 1
      %p114 = scmp.eq.s32.totalorder %s29, 1
      %p115 = scmp.ne.s32.totalorder %s110, %s112
      %p116 = scmp.eq.s32.totalorder %s29, 0
      %p117 = por %p115, %p116
      %p118 = scmp.ne.s32.totalorder %s110, %s112
      %p119 = scmp.eq.s32.totalorder %s34, 1
      %p120 = por %p118, %p119
      %p121 = scmp.ne.s32.totalorder %s112, %s113
      %p122 = scmp.eq.s32.totalorder %s34, 0
      %p123 = por %p121, %p122
      %p124 = scmp.ne.s32.totalorder %s112, %s113
      %p125 = scmp.eq.s32.totalorder %s35, 1
      %p126 = por %p124, %p125
      %p128 = scmp.ne.s32.totalorder %s113, %s127
      %p129 = scmp.eq.s32.totalorder %s35, 0
      %p130 = por %p128, %p129
      %s132 = sadd.s32 %s131, 1
      %p135 = scmp.eq.s32.totalorder %s29, 1
      %p136 = scmp.ne.s32.totalorder %s131, %s133
      %p137 = scmp.eq.s32.totalorder %s29, 0
      %p138 = por %p136, %p137
      %p139 = scmp.ne.s32.totalorder %s131, %s133
      %p140 = scmp.eq.s32.totalorder %s34, 1
      %p141 = por %p139, %p140
      %p142 = scmp.ne.s32.totalorder %s133, %s134
      %p143 = scmp.eq.s32.totalorder %s34, 0
      %p144 = por %p142, %p143
      %p145 = scmp.ne.s32.totalorder %s133, %s134
      %p146 = scmp.eq.s32.totalorder %s35, 1
      %p147 = por %p145, %p146
      %p149 = scmp.ne.s32.totalorder %s134, %s148
      %p150 = scmp.eq.s32.totalorder %s35, 0
      %p151 = por %p149, %p150
      %s153 = sadd.s32 %s152, 1
      %p156 = scmp.eq.s32.totalorder %s29, 1
      %p157 = scmp.ne.s32.totalorder %s152, %s154
      %p158 = scmp.eq.s32.totalorder %s29, 0
      %p159 = por %p157, %p158
      %p160 = scmp.ne.s32.totalorder %s152, %s154
      %p161 = scmp.eq.s32.totalorder %s34, 1
      %p162 = por %p160, %p161
      %p163 = scmp.ne.s32.totalorder %s154, %s155
      %p164 = scmp.eq.s32.totalorder %s34, 0
      %p165 = por %p163, %p164
      %p166 = scmp.ne.s32.totalorder %s154, %s155
      %p167 = scmp.eq.s32.totalorder %s35, 1
      %p168 = por %p166, %p167
      %p170 = scmp.ne.s32.totalorder %s155, %s169
      %p171 = scmp.eq.s32.totalorder %s35, 0
      %p172 = por %p170, %p171
      %s174 = sadd.s32 %s173, 1
      %p177 = scmp.eq.s32.totalorder %s29, 1
      %p178 = scmp.ne.s32.totalorder %s173, %s175
      %p179 = scmp.eq.s32.totalorder %s29, 0
      %p180 = por %p178, %p179
      %p181 = scmp.ne.s32.totalorder %s173, %s175
      %p182 = scmp.eq.s32.totalorder %s34, 1
      %p183 = por %p181, %p182
      %p184 = scmp.ne.s32.totalorder %s175, %s176
      %p185 = scmp.eq.s32.totalorder %s34, 0
      %p186 = por %p184, %p185
      %p187 = scmp.ne.s32.totalorder %s175, %s176
      %p188 = scmp.eq.s32.totalorder %s35, 1
      %p189 = por %p187, %p188
      %p191 = scmp.ne.s32.totalorder %s176, %s190
      %p192 = scmp.eq.s32.totalorder %s35, 0
      %p193 = por %p191, %p192
      %s195 = sadd.s32 %s194, 1
      %p198 = scmp.eq.s32.totalorder %s29, 1
      %p199 = scmp.ne.s32.totalorder %s194, %s196
      %p200 = scmp.eq.s32.totalorder %s29, 0
      %p201 = por %p199, %p200
      %p202 = scmp.ne.s32.totalorder %s194, %s196
      %p203 = scmp.eq.s32.totalorder %s34, 1
      %p204 = por %p202, %p203
      %p205 = scmp.ne.s32.totalorder %s196, %s197
      %p206 = scmp.eq.s32.totalorder %s34, 0
      %p207 = por %p205, %p206
      %p208 = scmp.ne.s32.totalorder %s196, %s197
      %p209 = scmp.eq.s32.totalorder %s35, 1
      %p210 = por %p208, %p209
      %p212 = scmp.ne.s32.totalorder %s197, %s211
      %p213 = scmp.eq.s32.totalorder %s35, 0
      %p214 = por %p212, %p213
      %s216 = sadd.s32 %s215, 1
      %p219 = scmp.eq.s32.totalorder %s29, 1
      %p220 = scmp.ne.s32.totalorder %s215, %s217
      %p221 = scmp.eq.s32.totalorder %s29, 0
      %p222 = por %p220, %p221
      %p223 = scmp.ne.s32.totalorder %s215, %s217
      %p224 = scmp.eq.s32.totalorder %s34, 1
      %p225 = por %p223, %p224
      %p226 = scmp.ne.s32.totalorder %s217, %s218
      %p227 = scmp.eq.s32.totalorder %s34, 0
      %p228 = por %p226, %p227
      %p229 = scmp.ne.s32.totalorder %s217, %s218
      %p230 = scmp.eq.s32.totalorder %s35, 1
      %p231 = por %p229, %p230
      %p233 = scmp.ne.s32.totalorder %s218, %s232
      %p234 = scmp.eq.s32.totalorder %s35, 0
      %p235 = por %p233, %p234
      %s237 = sadd.s32 %s236, 1
      %p240 = scmp.eq.s32.totalorder %s29, 1
      %p241 = scmp.ne.s32.totalorder %s236, %s238
      %p242 = scmp.eq.s32.totalorder %s29, 0
      %p243 = por %p241, %p242
      %p244 = scmp.ne.s32.totalorder %s236, %s238
      %p245 = scmp.eq.s32.totalorder %s34, 1
      %p246 = por %p244, %p245
      %p247 = scmp.ne.s32.totalorder %s238, %s239
      %p248 = scmp.eq.s32.totalorder %s34, 0
      %p249 = por %p247, %p248
      %p250 = scmp.ne.s32.totalorder %s238, %s239
      %p251 = scmp.eq.s32.totalorder %s35, 1
      %p252 = por %p250, %p251
      %p254 = scmp.ne.s32.totalorder %s239, %s253
      %p255 = scmp.eq.s32.totalorder %s35, 0
      %p256 = por %p254, %p255
      %s258 = sadd.s32 %s257, 1
      %p261 = scmp.eq.s32.totalorder %s29, 1
      %p262 = scmp.ne.s32.totalorder %s257, %s259
      %p263 = scmp.eq.s32.totalorder %s29, 0
      %p264 = por %p262, %p263
      %p265 = scmp.ne.s32.totalorder %s257, %s259
      %p266 = scmp.eq.s32.totalorder %s34, 1
      %p267 = por %p265, %p266
      %p268 = scmp.ne.s32.totalorder %s259, %s260
      %p269 = scmp.eq.s32.totalorder %s34, 0
      %p270 = por %p268, %p269
      %p271 = scmp.ne.s32.totalorder %s259, %s260
      %p272 = scmp.eq.s32.totalorder %s35, 1
      %p273 = por %p271, %p272
      %p275 = scmp.ne.s32.totalorder %s260, %s274
      %p276 = scmp.eq.s32.totalorder %s35, 0
      %p277 = por %p275, %p276
      %s279 = sadd.s32 %s278, 1
      %p282 = scmp.eq.s32.totalorder %s29, 1
      %p283 = scmp.ne.s32.totalorder %s278, %s280
      %p284 = scmp.eq.s32.totalorder %s29, 0
      %p285 = por %p283, %p284
      %p286 = scmp.ne.s32.totalorder %s278, %s280
      %p287 = scmp.eq.s32.totalorder %s34, 1
      %p288 = por %p286, %p287
      %p289 = scmp.ne.s32.totalorder %s280, %s281
      %p290 = scmp.eq.s32.totalorder %s34, 0
      %p291 = por %p289, %p290
      %p292 = scmp.ne.s32.totalorder %s280, %s281
      %p293 = scmp.eq.s32.totalorder %s35, 1
      %p294 = por %p292, %p293
      %p296 = scmp.ne.s32.totalorder %s281, %s295
      %p297 = scmp.eq.s32.totalorder %s35, 0
      %p298 = por %p296, %p297
      %s300 = sadd.s32 %s299, 1
      %p303 = scmp.eq.s32.totalorder %s29, 1
      %p304 = scmp.ne.s32.totalorder %s299, %s301
      %p305 = scmp.eq.s32.totalorder %s29, 0
      %p306 = por %p304, %p305
      %p307 = scmp.ne.s32.totalorder %s299, %s301
      %p308 = scmp.eq.s32.totalorder %s34, 1
      %p309 = por %p307, %p308
      %p310 = scmp.ne.s32.totalorder %s301, %s302
      %p311 = scmp.eq.s32.totalorder %s34, 0
      %p312 = por %p310, %p311
      %p313 = scmp.ne.s32.totalorder %s301, %s302
      %p314 = scmp.eq.s32.totalorder %s35, 1
      %p315 = por %p313, %p314
      %p317 = scmp.ne.s32.totalorder %s302, %s316
      %p318 = scmp.eq.s32.totalorder %s35, 0
      %p319 = por %p317, %p318
      %s321 = sadd.s32 %s320, 1
      %p324 = scmp.eq.s32.totalorder %s29, 1
      %p325 = scmp.ne.s32.totalorder %s320, %s322
      %p326 = scmp.eq.s32.totalorder %s29, 0
      %p327 = por %p325, %p326
      %p328 = scmp.ne.s32.totalorder %s320, %s322
      %p329 = scmp.eq.s32.totalorder %s34, 1
      %p330 = por %p328, %p329
      %p331 = scmp.ne.s32.totalorder %s322, %s323
      %p332 = scmp.eq.s32.totalorder %s34, 0
      %p333 = por %p331, %p332
      %p334 = scmp.ne.s32.totalorder %s322, %s323
      %p335 = scmp.eq.s32.totalorder %s35, 1
      %p336 = por %p334, %p335
      %p338 = scmp.ne.s32.totalorder %s323, %s337
      %p339 = scmp.eq.s32.totalorder %s35, 0
      %p340 = por %p338, %p339
      %s342 = sadd.s32 %s341, 1
      %p345 = scmp.eq.s32.totalorder %s29, 1
      %p346 = scmp.ne.s32.totalorder %s341, %s343
      %p347 = scmp.eq.s32.totalorder %s29, 0
      %p348 = por %p346, %p347
      %p349 = scmp.ne.s32.totalorder %s341, %s343
      %p350 = scmp.eq.s32.totalorder %s34, 1
      %p351 = por %p349, %p350
      %p352 = scmp.ne.s32.totalorder %s343, %s344
      %p353 = scmp.eq.s32.totalorder %s34, 0
      %p354 = por %p352, %p353
      %p355 = scmp.ne.s32.totalorder %s343, %s344
      %p356 = scmp.eq.s32.totalorder %s35, 1
      %p357 = por %p355, %p356
      %p359 = scmp.ne.s32.totalorder %s344, %s358
      %p360 = scmp.eq.s32.totalorder %s35, 0
      %p361 = por %p359, %p360
      %s363 = sadd.s32 %s362, 1
      %p366 = scmp.eq.s32.totalorder %s29, 1
      %p367 = scmp.ne.s32.totalorder %s362, %s364
      %p368 = scmp.eq.s32.totalorder %s29, 0
      %p369 = por %p367, %p368
      %p370 = scmp.ne.s32.totalorder %s362, %s364
      %p371 = scmp.eq.s32.totalorder %s34, 1
      %p372 = por %p370, %p371
      %p373 = scmp.ne.s32.totalorder %s364, %s365
      %p374 = scmp.eq.s32.totalorder %s34, 0
      %p375 = por %p373, %p374
      %p376 = scmp.ne.s32.totalorder %s364, %s365
      %p377 = scmp.eq.s32.totalorder %s35, 1
      %p378 = por %p376, %p377
      %p380 = scmp.ne.s32.totalorder %s365, %s379
      %p381 = scmp.eq.s32.totalorder %s35, 0
      %p382 = por %p380, %p381
      %s384 = sadd.s32 %s383, 1
      %p387 = scmp.eq.s32.totalorder %s29, 1
      %p388 = scmp.ne.s32.totalorder %s383, %s385
      %p389 = scmp.eq.s32.totalorder %s29, 0
      %p390 = por %p388, %p389
      %p391 = scmp.ne.s32.totalorder %s383, %s385
      %p392 = scmp.eq.s32.totalorder %s34, 1
      %p393 = por %p391, %p392
      %p394 = scmp.ne.s32.totalorder %s385, %s386
      %p395 = scmp.eq.s32.totalorder %s34, 0
      %p396 = por %p394, %p395
      %p397 = scmp.ne.s32.totalorder %s385, %s386
      %p398 = scmp.eq.s32.totalorder %s35, 1
      %p399 = por %p397, %p398
      %p401 = scmp.ne.s32.totalorder %s386, %s400
      %p402 = scmp.eq.s32.totalorder %s35, 0
      %p403 = por %p401, %p402
      %s404 = ssub.s32 %s29, %s36
      %p405 = scmp.eq.s32.totalorder %s404, 0
      %s407 = sadd.s32 %s406, 1
      %s408 = scalar_select %p405, %s406, %s407
      %p411 = pneg %p405
      %p412 = scmp.eq.s32.totalorder %s29, 1
      %p413 = por %p411, %p412
      %p414 = scmp.ne.s32.totalorder %s406, %s409
      %p415 = scmp.eq.s32.totalorder %s29, 0
      %p416 = por %p414, %p415
      %p417 = scmp.ne.s32.totalorder %s406, %s409
      %p418 = scmp.eq.s32.totalorder %s34, 1
      %p419 = por %p417, %p418
      %p420 = scmp.ne.s32.totalorder %s409, %s410
      %p421 = scmp.eq.s32.totalorder %s34, 0
      %p422 = por %p420, %p421
      %p423 = scmp.ne.s32.totalorder %s409, %s410
      %p424 = scmp.eq.s32.totalorder %s35, 1
      %p425 = por %p423, %p424
      %p427 = scmp.ne.s32.totalorder %s410, %s426
      %p428 = scmp.eq.s32.totalorder %s35, 0
      %p429 = por %p427, %p428
      %p430 = scmp.le.s32.totalorder 1, %s29
      %p431 = scmp.lt.s32.totalorder %s29, 3
      %p432 = pnand %p430, %p431
      %p433 = pneg %p432
      // Predicated region
      $region9: #{tpu_custom_call.1} parent=5 // pred_check
        _
      $region10: #{tpu_custom_call.1} parent=5 // pred_check_branch
        %435 = sbr.rel (%p432) target = $region12
      $region11: #{tpu_custom_call.1} parent=5 // pred_region
        %s436 = ssub.s32 %s29, 1
        // Predicated region
        $region13: #{tpu_custom_call.1} parent=11 // pred_check
          %p437 = pneg %p102
        $region14: #{tpu_custom_call.1} parent=11 // pred_check_branch
          %439 = sbr.rel (%p437) target = $region16
        $region15: #{tpu_custom_call.1} parent=11 // pred_region
          %s441 = ssub.s32 10240, 10240
          %442 = vsyncadd [#allocation6], %s441
          %s443 = sshll.u32 [#allocation5], 4
          %s444 = int_to_ptr.vmem [resolvable:$true] %s443
          %449 = dma.hbm_to_vmem [thread:$0]  %s2, 10240, %s444, [#allocation6], 128, 128, 8
        $region16: #{tpu_custom_call.1} parent=11 // pred_fallthru
          _
        // Predicated region
        $region17: #{tpu_custom_call.1} parent=11 // pred_check
          %p450 = pneg %p123
        $region18: #{tpu_custom_call.1} parent=11 // pred_check_branch
          %452 = sbr.rel (%p450) target = $region20
        $region19: #{tpu_custom_call.1} parent=11 // pred_region
          _
        $region20: #{tpu_custom_call.1} parent=11 // pred_fallthru
          _
        // Predicated region
        $region21: #{tpu_custom_call.1} parent=11 // pred_check
          %p453 = pneg %p144
        $region22: #{tpu_custom_call.1} parent=11 // pred_check_branch
          %455 = sbr.rel (%p453) target = $region24
        $region23: #{tpu_custom_call.1} parent=11 // pred_region
          _
        $region24: #{tpu_custom_call.1} parent=11 // pred_fallthru
          _
        // Predicated region
        $region25: #{tpu_custom_call.1} parent=11 // pred_check
          %p456 = pneg %p165
        $region26: #{tpu_custom_call.1} parent=11 // pred_check_branch
          %458 = sbr.rel (%p456) target = $region28
        $region27: #{tpu_custom_call.1} parent=11 // pred_region
          %s460 = ssub.s32 10240, 10240
          %461 = vsyncadd [#allocation9], %s460
          %s462 = sshll.u32 [#allocation8], 4
          %s463 = int_to_ptr.vmem [resolvable:$true] %s462
          %468 = dma.hbm_to_vmem [thread:$0]  %s5, 10240, %s463, [#allocation9], 128, 128, 8
        $region28: #{tpu_custom_call.1} parent=11 // pred_fallthru
          _
        // Predicated region
        $region29: #{tpu_custom_call.1} parent=11 // pred_check
          %p469 = pneg %p186
        $region30: #{tpu_custom_call.1} parent=11 // pred_check_branch
          %471 = sbr.rel (%p469) target = $region32
        $region31: #{tpu_custom_call.1} parent=11 // pred_region
          _
        $region32: #{tpu_custom_call.1} parent=11 // pred_fallthru
          _
        // Predicated region
        $region33: #{tpu_custom_call.1} parent=11 // pred_check
          %p472 = pneg %p207
        $region34: #{tpu_custom_call.1} parent=11 // pred_check_branch
          %474 = sbr.rel (%p472) target = $region36
        $region35: #{tpu_custom_call.1} parent=11 // pred_region
          _
        $region36: #{tpu_custom_call.1} parent=11 // pred_fallthru
          _
        // Predicated region
        $region37: #{tpu_custom_call.1} parent=11 // pred_check
          %p475 = pneg %p228
        $region38: #{tpu_custom_call.1} parent=11 // pred_check_branch
          %477 = sbr.rel (%p475) target = $region40
        $region39: #{tpu_custom_call.1} parent=11 // pred_region
          %s479 = ssub.s32 10240, 10240
          %480 = vsyncadd [#allocation9], %s479
          %s481 = sshll.u32 [#allocation10], 4
          %s482 = int_to_ptr.vmem [resolvable:$true] %s481
          %487 = dma.hbm_to_vmem [thread:$0]  %s8, 10240, %s482, [#allocation9], 128, 128, 8
        $region40: #{tpu_custom_call.1} parent=11 // pred_fallthru
          _
        // Predicated region
        $region41: #{tpu_custom_call.1} parent=11 // pred_check
          %p488 = pneg %p249
        $region42: #{tpu_custom_call.1} parent=11 // pred_check_branch
          %490 = sbr.rel (%p488) target = $region44
        $region43: #{tpu_custom_call.1} parent=11 // pred_region
          _
        $region44: #{tpu_custom_call.1} parent=11 // pred_fallthru
          _
        // Predicated region
        $region45: #{tpu_custom_call.1} parent=11 // pred_check
          %p491 = pneg %p270
        $region46: #{tpu_custom_call.1} parent=11 // pred_check_branch
          %493 = sbr.rel (%p491) target = $region48
        $region47: #{tpu_custom_call.1} parent=11 // pred_region
          _
        $region48: #{tpu_custom_call.1} parent=11 // pred_fallthru
          _
        // Predicated region
        $region49: #{tpu_custom_call.1} parent=11 // pred_check
          %p494 = pneg %p291
        $region50: #{tpu_custom_call.1} parent=11 // pred_check_branch
          %496 = sbr.rel (%p494) target = $region52
        $region51: #{tpu_custom_call.1} parent=11 // pred_region
          %s498 = ssub.s32 10240, 10240
          %499 = vsyncadd [#allocation12], %s498
          %s500 = sshll.u32 [#allocation11], 4
          %s501 = int_to_ptr.vmem [resolvable:$true] %s500
          %506 = dma.hbm_to_vmem [thread:$0]  %s11, 10240, %s501, [#allocation12], 128, 128, 8
        $region52: #{tpu_custom_call.1} parent=11 // pred_fallthru
          _
        // Predicated region
        $region53: #{tpu_custom_call.1} parent=11 // pred_check
          %p507 = pneg %p312
        $region54: #{tpu_custom_call.1} parent=11 // pred_check_branch
          %509 = sbr.rel (%p507) target = $region56
        $region55: #{tpu_custom_call.1} parent=11 // pred_region
          _
        $region56: #{tpu_custom_call.1} parent=11 // pred_fallthru
          _
        // Predicated region
        $region57: #{tpu_custom_call.1} parent=11 // pred_check
          %p510 = pneg %p333
        $region58: #{tpu_custom_call.1} parent=11 // pred_check_branch
          %512 = sbr.rel (%p510) target = $region60
        $region59: #{tpu_custom_call.1} parent=11 // pred_region
          _
        $region60: #{tpu_custom_call.1} parent=11 // pred_fallthru
          _
        // Predicated region
        $region61: #{tpu_custom_call.1} parent=11 // pred_check
          %p513 = pneg %p354
        $region62: #{tpu_custom_call.1} parent=11 // pred_check_branch
          %515 = sbr.rel (%p513) target = $region64
        $region63: #{tpu_custom_call.1} parent=11 // pred_region
          %s517 = ssub.s32 10240, 10240
          %518 = vsyncadd [#allocation12], %s517
          %s519 = sshll.u32 [#allocation13], 4
          %s520 = int_to_ptr.vmem [resolvable:$true] %s519
          %525 = dma.hbm_to_vmem [thread:$0]  %s14, 10240, %s520, [#allocation12], 128, 128, 8
        $region64: #{tpu_custom_call.1} parent=11 // pred_fallthru
          _
        // Predicated region
        $region65: #{tpu_custom_call.1} parent=11 // pred_check
          %p526 = pneg %p375
        $region66: #{tpu_custom_call.1} parent=11 // pred_check_branch
          %528 = sbr.rel (%p526) target = $region68
        $region67: #{tpu_custom_call.1} parent=11 // pred_region
          _
        $region68: #{tpu_custom_call.1} parent=11 // pred_fallthru
          _
        // Predicated region
        $region69: #{tpu_custom_call.1} parent=11 // pred_check
          %p529 = pneg %p396
        $region70: #{tpu_custom_call.1} parent=11 // pred_check_branch
          %531 = sbr.rel (%p529) target = $region72
        $region71: #{tpu_custom_call.1} parent=11 // pred_region
          _
        $region72: #{tpu_custom_call.1} parent=11 // pred_fallthru
          _
      $region12: #{tpu_custom_call.1} parent=5 // pred_fallthru
        _
      %p532 = scmp.lt.s32.totalorder %s29, 2
      // Predicated region
      $region73: #{tpu_custom_call.1} parent=5 // pred_check
        %p533 = pneg %p532
      $region74: #{tpu_custom_call.1} parent=5 // pred_check_branch
        %535 = sbr.rel (%p533) target = $region76
      $region75: #{tpu_custom_call.1} parent=5 // pred_region
        // Predicated region
        $region77: #{tpu_custom_call.1} parent=75 // pred_check
          %p536 = pneg %p49
        $region78: #{tpu_custom_call.1} parent=75 // pred_check_branch
          %538 = sbr.rel (%p536) target = $region80
        $region79: #{tpu_custom_call.1} parent=75 // pred_region
          %p539 = scmp.lt.s32.totalorder %s29, 1
          %s540 = scalar_select %p539, %s29, 1
          %s541 = smul.addr %s540, 2
          %s542 = smul.addr %s541, 8
          %s543 = scalar_lea.vmem %s0, %s542
        $region80: #{tpu_custom_call.1} parent=75 // pred_fallthru
          _
        // Predicated region
        $region81: #{tpu_custom_call.1} parent=75 // pred_check
          %p544 = pneg %p75
        $region82: #{tpu_custom_call.1} parent=75 // pred_check_branch
          %546 = sbr.rel (%p544) target = $region84
        $region83: #{tpu_custom_call.1} parent=75 // pred_region
          %p547 = scmp.lt.s32.totalorder %s29, 1
          %s548 = scalar_select %p547, %s29, 1
          %s549 = smul.addr %s548, 2
          %s550 = smul.addr %s549, 8
          %s551 = scalar_lea.vmem %s1, %s550
        $region84: #{tpu_custom_call.1} parent=75 // pred_fallthru
          _
      $region76: #{tpu_custom_call.1} parent=5 // pred_fallthru
        _
      %p552 = scmp.le.s32.totalorder 1, %s29
      %p553 = scmp.lt.s32.totalorder %s29, 3
      %p554 = pnand %p552, %p553
      %p555 = pneg %p554
      // Predicated region
      $region85: #{tpu_custom_call.1} parent=5 // pred_check
        _
      $region86: #{tpu_custom_call.1} parent=5 // pred_check_branch
        %557 = sbr.rel (%p554) target = $region88
      $region87: #{tpu_custom_call.1} parent=5 // pred_region
        %s558 = ssub.s32 %s29, 1
        // Predicated region
        $region89: #{tpu_custom_call.1} parent=87 // pred_check
          %p559 = pneg %p102
        $region90: #{tpu_custom_call.1} parent=87 // pred_check_branch
          %561 = sbr.rel (%p559) target = $region92
        $region91: #{tpu_custom_call.1} parent=87 // pred_region
          %562 = dma.done [#allocation6], 10240
        $region92: #{tpu_custom_call.1} parent=87 // pred_fallthru
          _
        // Predicated region
        $region93: #{tpu_custom_call.1} parent=87 // pred_check
          %p563 = pneg %p165
        $region94: #{tpu_custom_call.1} parent=87 // pred_check_branch
          %565 = sbr.rel (%p563) target = $region96
        $region95: #{tpu_custom_call.1} parent=87 // pred_region
          %566 = dma.done [#allocation9], 10240
        $region96: #{tpu_custom_call.1} parent=87 // pred_fallthru
          _
        // Predicated region
        $region97: #{tpu_custom_call.1} parent=87 // pred_check
          %p567 = pneg %p228
        $region98: #{tpu_custom_call.1} parent=87 // pred_check_branch
          %569 = sbr.rel (%p567) target = $region100
        $region99: #{tpu_custom_call.1} parent=87 // pred_region
          %570 = dma.done [#allocation9], 10240
        $region100: #{tpu_custom_call.1} parent=87 // pred_fallthru
          _
        // Predicated region
        $region101: #{tpu_custom_call.1} parent=87 // pred_check
          %p571 = pneg %p291
        $region102: #{tpu_custom_call.1} parent=87 // pred_check_branch
          %573 = sbr.rel (%p571) target = $region104
        $region103: #{tpu_custom_call.1} parent=87 // pred_region
          %574 = dma.done [#allocation12], 10240
        $region104: #{tpu_custom_call.1} parent=87 // pred_fallthru
          _
        // Predicated region
        $region105: #{tpu_custom_call.1} parent=87 // pred_check
          %p575 = pneg %p354
        $region106: #{tpu_custom_call.1} parent=87 // pred_check_branch
          %577 = sbr.rel (%p575) target = $region108
        $region107: #{tpu_custom_call.1} parent=87 // pred_region
          %578 = dma.done [#allocation12], 10240
        $region108: #{tpu_custom_call.1} parent=87 // pred_fallthru
          _
        %p579 = scmp.lt.s32.totalorder %s34, 1
        %s580 = scalar_select %p579, %s34, 1
        %s581 = smul.addr %s580, 2
        %s582 = smul.addr %s581, 8
        %s583 = scalar_lea.vmem %s0, %s582
        %p584 = pneg %p55
        %p585 = pneg %p52
        %p586 = scmp.lt.s32.totalorder %s34, 1
        %s587 = scalar_select %p586, %s34, 1
        %s588 = smul.addr %s587, 2
        %s589 = smul.addr %s588, 8
        %s590 = scalar_lea.vmem %s1, %s589
        %p591 = pneg %p81
        %p592 = pneg %p78
        %p593 = pneg %p102
        %p594 = pneg %p99
        %p595 = pneg %p123
        %p596 = pneg %p120
        %p597 = pneg %p144
        %p598 = pneg %p141
        %p599 = pneg %p165
        %p600 = pneg %p162
        %p601 = pneg %p186
        %p602 = pneg %p183
        %p603 = pneg %p207
        %p604 = pneg %p204
        %p605 = pneg %p228
        %p606 = pneg %p225
        %p607 = pneg %p249
        %p608 = pneg %p246
        %p609 = pneg %p270
        %p610 = pneg %p267
        %p611 = pneg %p291
        %p612 = pneg %p288
        %p613 = pneg %p312
        %p614 = pneg %p309
        %p615 = pneg %p333
        %p616 = pneg %p330
        %p617 = pneg %p354
        %p618 = pneg %p351
        %p619 = pneg %p375
        %p620 = pneg %p372
        %p621 = pneg %p396
        %p622 = pneg %p393
        %p623 = pneg %p422
        %p624 = pneg %p419
        %s625 = sand.u32 %s409, 1
        %s626 = scalar_lea.sflag [#allocation7], %s625
        %s627 = sand.u32 %s409, 1
        %s628 = smul.addr %s627, 16
        %s629 = scalar_lea.vmem [#allocation14], %s628
        %p630 = scmp.lt.s32.totalorder %s34, 1
        %s631 = scalar_select %p630, %s34, 1
        %s632 = smul.addr %s631, 2
        %s633 = smul.addr %s632, 8
        %s634 = scalar_lea.vmem %s0, %s633
        %p635 = scmp.lt.s32.totalorder %s34, 1
        %s636 = scalar_select %p635, %s34, 1
        %s637 = smul.addr %s636, 2
        %s638 = smul.addr %s637, 8
        %s639 = scalar_lea.vmem %s1, %s638
        %640 = vst [vmem:[#allocation2] sm:$0x3] 0.0
        %641 = vst [vmem:[#allocation2 + $0x12] sm:$0x3] 0.0
        %642 = vst [vmem:[#allocation3] sm:$0x3] 0.0
        %643 = vst [vmem:[#allocation3 + $0x12] sm:$0x3] 0.0
        %v644 = vld [vmem:[%s634] sm:$0xff]
        %v645 = vld [vmem:[%s634 + $0x8] sm:$0xff]
        %v646 = vld [vmem:[%s639] sm:$0xff]
        %v647 = vld [vmem:[%s639 + $0x8] sm:$0xff]
        %649 = vset.pattern.permute.xlu0 0
        %650 = vperm.xlu0 %649, %v646
        %v651 = vpop.permute.xlu0 %650
        %654 = vset.pattern.permute.xlu0 0
        %655 = vperm.xlu0 %654, %v647
        %v656 = vpop.permute.xlu0 %655
        %v658 = vadd.f32 %v644, %v651
        %v659 = vadd.f32 %v645, %v656
        %660 = vst [vmem:[#allocation2 + $0x2] sm:$0xff] %v658
        %661 = vst [vmem:[#allocation2 + $0xa] sm:$0xff] %v659
        %v662 = vld [vmem:[#allocation2] sm:$0xff]
        %v663 = vld [vmem:[#allocation2 + $0x8] sm:$0xff]
        %664 = vst [vmem:[#allocation4] sm:$0xff] %v662
        %665 = vst [vmem:[#allocation4 + $0x28] sm:$0xff] %v663
        %v666 = vld [vmem:[#allocation2 + $0x1] sm:$0xff]
        %v667 = vld [vmem:[#allocation2 + $0x9] sm:$0xff]
        %668 = vst [vmem:[#allocation4 + $0x8] sm:$0xff] %v666
        %669 = vst [vmem:[#allocation4 + $0x30] sm:$0xff] %v667
        %v670 = vld [vmem:[#allocation2 + $0x2] sm:$0xff]
        %v671 = vld [vmem:[#allocation2 + $0xa] sm:$0xff]
        %672 = vst [vmem:[#allocation4 + $0x10] sm:$0xff] %v670
        %673 = vst [vmem:[#allocation4 + $0x38] sm:$0xff] %v671
        %v674 = vld [vmem:[#allocation2 + $0x3] sm:$0xff]
        %v675 = vld [vmem:[#allocation2 + $0xb] sm:$0xff]
        %676 = vst [vmem:[#allocation4 + $0x18] sm:$0xff] %v674
        %677 = vst [vmem:[#allocation4 + $0x40] sm:$0xff] %v675
        %v678 = vld [vmem:[#allocation2 + $0x4] sm:$0xff]
        %v679 = vld [vmem:[#allocation2 + $0xc] sm:$0xff]
        %680 = vst [vmem:[#allocation4 + $0x20] sm:$0xff] %v678
        %681 = vst [vmem:[#allocation4 + $0x48] sm:$0xff] %v679
        %v682 = vld [vmem:[#allocation4] sm:$0xff]
        %v683 = vld [vmem:[#allocation4 + $0x8] sm:$0xff]
        %v684 = vld [vmem:[#allocation4 + $0x10] sm:$0xff]
        %v685 = vld [vmem:[#allocation4 + $0x18] sm:$0xff]
        %v686 = vld [vmem:[#allocation4 + $0x20] sm:$0xff]
        %v687 = vld [vmem:[#allocation4 + $0x28] sm:$0xff]
        %v688 = vld [vmem:[#allocation4 + $0x30] sm:$0xff]
        %v689 = vld [vmem:[#allocation4 + $0x38] sm:$0xff]
        %v690 = vld [vmem:[#allocation4 + $0x40] sm:$0xff]
        %v691 = vld [vmem:[#allocation4 + $0x48] sm:$0xff]
        %v692 = vld [vmem:[#allocation5] sm:$0xff]
        %v693 = vld [vmem:[#allocation5 + $0x8] sm:$0xff]
        %v694 = vld [vmem:[#allocation5 + $0x10] sm:$0xff]
        %v695 = vld [vmem:[#allocation5 + $0x18] sm:$0xff]
        %v696 = vld [vmem:[#allocation5 + $0x20] sm:$0xff]
        %v697 = vld [vmem:[#allocation5 + $0x28] sm:$0xff]
        %v698 = vld [vmem:[#allocation5 + $0x30] sm:$0xff]
        %v699 = vld [vmem:[#allocation5 + $0x38] sm:$0xff]
        %v700 = vld [vmem:[#allocation5 + $0x40] sm:$0xff]
        %v701 = vld [vmem:[#allocation5 + $0x48] sm:$0xff]
        %v702 = vld [vmem:[#allocation5 + $0x50] sm:$0xff]
        %v703 = vld [vmem:[#allocation5 + $0x58] sm:$0xff]
        %v704 = vld [vmem:[#allocation5 + $0x60] sm:$0xff]
        %v705 = vld [vmem:[#allocation5 + $0x68] sm:$0xff]
        %v706 = vld [vmem:[#allocation5 + $0x70] sm:$0xff]
        %v707 = vld [vmem:[#allocation5 + $0x78] sm:$0xff]
        %v708 = vld [vmem:[#allocation5 + $0x80] sm:$0xff]
        %v709 = vld [vmem:[#allocation5 + $0x88] sm:$0xff]
        %v710 = vld [vmem:[#allocation5 + $0x90] sm:$0xff]
        %v711 = vld [vmem:[#allocation5 + $0x98] sm:$0xff]
        %v712 = vld [vmem:[#allocation5 + $0xa0] sm:$0xff]
        %v713 = vld [vmem:[#allocation5 + $0xa8] sm:$0xff]
        %v714 = vld [vmem:[#allocation5 + $0xb0] sm:$0xff]
        %v715 = vld [vmem:[#allocation5 + $0xb8] sm:$0xff]
        %v716 = vld [vmem:[#allocation5 + $0xc0] sm:$0xff]
        %v717 = vld [vmem:[#allocation5 + $0xc8] sm:$0xff]
        %v718 = vld [vmem:[#allocation5 + $0xd0] sm:$0xff]
        %v719 = vld [vmem:[#allocation5 + $0xd8] sm:$0xff]
        %v720 = vld [vmem:[#allocation5 + $0xe0] sm:$0xff]
        %v721 = vld [vmem:[#allocation5 + $0xe8] sm:$0xff]
        %v722 = vld [vmem:[#allocation5 + $0xf0] sm:$0xff]
        %v723 = vld [vmem:[#allocation5 + $0xf8] sm:$0xff]
        %v724 = vld [vmem:[#allocation5 + $0x100] sm:$0xff]
        %v725 = vld [vmem:[#allocation5 + $0x108] sm:$0xff]
        %v726 = vld [vmem:[#allocation5 + $0x110] sm:$0xff]
        %v727 = vld [vmem:[#allocation5 + $0x118] sm:$0xff]
        %v728 = vld [vmem:[#allocation5 + $0x120] sm:$0xff]
        %v729 = vld [vmem:[#allocation5 + $0x128] sm:$0xff]
        %v730 = vld [vmem:[#allocation5 + $0x130] sm:$0xff]
        %v731 = vld [vmem:[#allocation5 + $0x138] sm:$0xff]
        %v732 = vld [vmem:[#allocation5 + $0x140] sm:$0xff]
        %v733 = vld [vmem:[#allocation5 + $0x148] sm:$0xff]
        %v734 = vld [vmem:[#allocation5 + $0x150] sm:$0xff]
        %v735 = vld [vmem:[#allocation5 + $0x158] sm:$0xff]
        %v736 = vld [vmem:[#allocation5 + $0x160] sm:$0xff]
        %v737 = vld [vmem:[#allocation5 + $0x168] sm:$0xff]
        %v738 = vld [vmem:[#allocation5 + $0x170] sm:$0xff]
        %v739 = vld [vmem:[#allocation5 + $0x178] sm:$0xff]
        %v740 = vld [vmem:[#allocation5 + $0x180] sm:$0xff]
        %v741 = vld [vmem:[#allocation5 + $0x188] sm:$0xff]
        %v742 = vld [vmem:[#allocation5 + $0x190] sm:$0xff]
        %v743 = vld [vmem:[#allocation5 + $0x198] sm:$0xff]
        %v744 = vld [vmem:[#allocation5 + $0x1a0] sm:$0xff]
        %v745 = vld [vmem:[#allocation5 + $0x1a8] sm:$0xff]
        %v746 = vld [vmem:[#allocation5 + $0x1b0] sm:$0xff]
        %v747 = vld [vmem:[#allocation5 + $0x1b8] sm:$0xff]
        %v748 = vld [vmem:[#allocation5 + $0x1c0] sm:$0xff]
        %v749 = vld [vmem:[#allocation5 + $0x1c8] sm:$0xff]
        %v750 = vld [vmem:[#allocation5 + $0x1d0] sm:$0xff]
        %v751 = vld [vmem:[#allocation5 + $0x1d8] sm:$0xff]
        %v752 = vld [vmem:[#allocation5 + $0x1e0] sm:$0xff]
        %v753 = vld [vmem:[#allocation5 + $0x1e8] sm:$0xff]
        %v754 = vld [vmem:[#allocation5 + $0x1f0] sm:$0xff]
        %v755 = vld [vmem:[#allocation5 + $0x1f8] sm:$0xff]
        %v756 = vld [vmem:[#allocation5 + $0x200] sm:$0xff]
        %v757 = vld [vmem:[#allocation5 + $0x208] sm:$0xff]
        %v758 = vld [vmem:[#allocation5 + $0x210] sm:$0xff]
        %v759 = vld [vmem:[#allocation5 + $0x218] sm:$0xff]
        %v760 = vld [vmem:[#allocation5 + $0x220] sm:$0xff]
        %v761 = vld [vmem:[#allocation5 + $0x228] sm:$0xff]
        %v762 = vld [vmem:[#allocation5 + $0x230] sm:$0xff]
        %v763 = vld [vmem:[#allocation5 + $0x238] sm:$0xff]
        %v764 = vld [vmem:[#allocation5 + $0x240] sm:$0xff]
        %v765 = vld [vmem:[#allocation5 + $0x248] sm:$0xff]
        %v766 = vld [vmem:[#allocation5 + $0x250] sm:$0xff]
        %v767 = vld [vmem:[#allocation5 + $0x258] sm:$0xff]
        %v768 = vld [vmem:[#allocation5 + $0x260] sm:$0xff]
        %v769 = vld [vmem:[#allocation5 + $0x268] sm:$0xff]
        %v770 = vld [vmem:[#allocation5 + $0x270] sm:$0xff]
        %v771 = vld [vmem:[#allocation5 + $0x278] sm:$0xff]
        %772 = vmatprep.subr.mxu0 0.0
        %773 = vmatpush1.msra.mxu0 %v692
        %774 = vmatprep.subr.mxu0 0.0
        %775 = vmatpush1.msra.mxu0 %v693
        %776 = vmatprep.subr.mxu0 0.0
        %777 = vmatpush1.msra.mxu0 %v694
        %778 = vmatprep.subr.mxu0 0.0
        %779 = vmatpush1.msra.mxu0 %v695
        %780 = vmatprep.subr.mxu0 0.0
        %781 = vmatpush1.msra.mxu0 %v696
        %782 = vmatprep.subr.mxu0 0.0
        %783 = vmatpush1.msra.mxu0 %v697
        %784 = vmatprep.subr.mxu0 0.0
        %785 = vmatpush1.msra.mxu0 %v698
        %786 = vmatprep.subr.mxu0 0.0
        %787 = vmatpush1.msra.mxu0 %v699
        %788 = vmatprep.subr.mxu0 0.0
        %789 = vmatpush1.msra.mxu0 %v700
        %790 = vmatprep.subr.mxu0 0.0
        %791 = vmatpush1.msra.mxu0 %v701
        %792 = vmatprep.subr.mxu0 0.0
        %793 = vmatpush1.msra.mxu0 %v702
        %794 = vmatprep.subr.mxu0 0.0
        %795 = vmatpush1.msra.mxu0 %v703
        %796 = vmatprep.subr.mxu0 0.0
        %797 = vmatpush1.msra.mxu0 %v704
        %798 = vmatprep.subr.mxu0 0.0
        %799 = vmatpush1.msra.mxu0 %v705
        %800 = vmatprep.subr.mxu0 0.0
        %801 = vmatpush1.msra.mxu0 %v706
        %802 = vmatprep.subr.mxu0 0.0
        %803 = vmatpush1.msra.mxu0 %v707
        %804 = vmatprep.subr.mxu0 0.0
        %805 = vmatpush1.msra.mxu0 %v708
        %806 = vmatprep.subr.mxu0 0.0
        %807 = vmatpush1.msra.mxu0 %v709
        %808 = vmatprep.subr.mxu0 0.0
        %809 = vmatpush1.msra.mxu0 %v710
        %810 = vmatprep.subr.mxu0 0.0
        %811 = vmatpush1.msra.mxu0 %v711
        %812 = vmatprep.subr.mxu0 0.0
        %813 = vmatpush1.msra.mxu0 %v712
        %814 = vmatprep.subr.mxu0 0.0
        %815 = vmatpush1.msra.mxu0 %v713
        %816 = vmatprep.subr.mxu0 0.0
        %817 = vmatpush1.msra.mxu0 %v714
        %818 = vmatprep.subr.mxu0 0.0
        %819 = vmatpush1.msra.mxu0 %v715
        %820 = vmatprep.subr.mxu0 0.0
        %821 = vmatpush1.msra.mxu0 %v716
        %822 = vmatprep.subr.mxu0 0.0
        %823 = vmatpush1.msra.mxu0 %v717
        %824 = vmatprep.subr.mxu0 0.0
        %825 = vmatpush1.msra.mxu0 %v718
        %826 = vmatprep.subr.mxu0 0.0
        %827 = vmatpush1.msra.mxu0 %v719
        %828 = vmatprep.subr.mxu0 0.0
        %829 = vmatpush1.msra.mxu0 %v720
        %830 = vmatprep.subr.mxu0 0.0
        %831 = vmatpush1.msra.mxu0 %v721
        %832 = vmatprep.subr.mxu0 0.0
        %833 = vmatpush1.msra.mxu0 %v722
        %834 = vmatprep.subr.mxu0 0.0
        %835 = vmatpush1.msra.mxu0 %v723
        %836 = vmatprep.mubr.f32.mxu0 %v683
        %837 = vmatmul.mubr.f32.gmra.mrb[0].mxu0 %v682
        %v838 = vpop.f32.mrb[0].mxu0
        %v839 = vadd.f32 0.0, %v838
        %v840 = vpop.f32.mrb[0].mxu0
        %841 = vmatprep.mubr.f32.mxu0 %v688
        %842 = vmatmul.mubr.f32.gmra.mrb[0].mxu0 %v687
        %v843 = vpop.f32.mrb[0].mxu0
        %v844 = vadd.f32 0.0, %v843
        %v845 = vpop.f32.mrb[0].mxu0
        %846 = vdwg.mxu0
        %847 = vmatprep.subr.mxu0 0.0
        %848 = vmatpush1.msra.mxu0 %v724
        %849 = vmatprep.subr.mxu0 0.0
        %850 = vmatpush1.msra.mxu0 %v725
        %851 = vmatprep.subr.mxu0 0.0
        %852 = vmatpush1.msra.mxu0 %v726
        %853 = vmatprep.subr.mxu0 0.0
        %854 = vmatpush1.msra.mxu0 %v727
        %855 = vmatprep.subr.mxu0 0.0
        %856 = vmatpush1.msra.mxu0 %v728
        %857 = vmatprep.subr.mxu0 0.0
        %858 = vmatpush1.msra.mxu0 %v729
        %859 = vmatprep.subr.mxu0 0.0
        %860 = vmatpush1.msra.mxu0 %v730
        %861 = vmatprep.subr.mxu0 0.0
        %862 = vmatpush1.msra.mxu0 %v731
        %863 = vmatprep.subr.mxu0 0.0
        %864 = vmatpush1.msra.mxu0 %v732
        %865 = vmatprep.subr.mxu0 0.0
        %866 = vmatpush1.msra.mxu0 %v733
        %867 = vmatprep.subr.mxu0 0.0
        %868 = vmatpush1.msra.mxu0 %v734
        %869 = vmatprep.subr.mxu0 0.0
        %870 = vmatpush1.msra.mxu0 %v735
        %871 = vmatprep.subr.mxu0 0.0
        %872 = vmatpush1.msra.mxu0 %v736
        %873 = vmatprep.subr.mxu0 0.0
        %874 = vmatpush1.msra.mxu0 %v737
        %875 = vmatprep.subr.mxu0 0.0
        %876 = vmatpush1.msra.mxu0 %v738
        %877 = vmatprep.subr.mxu0 0.0
        %878 = vmatpush1.msra.mxu0 %v739
        %879 = vmatprep.subr.mxu0 0.0
        %880 = vmatpush1.msra.mxu0 %v740
        %881 = vmatprep.subr.mxu0 0.0
        %882 = vmatpush1.msra.mxu0 %v741
        %883 = vmatprep.subr.mxu0 0.0
        %884 = vmatpush1.msra.mxu0 %v742
        %885 = vmatprep.subr.mxu0 0.0
        %886 = vmatpush1.msra.mxu0 %v743
        %887 = vmatprep.subr.mxu0 0.0
        %888 = vmatpush1.msra.mxu0 %v744
        %889 = vmatprep.subr.mxu0 0.0
        %890 = vmatpush1.msra.mxu0 %v745
        %891 = vmatprep.subr.mxu0 0.0
        %892 = vmatpush1.msra.mxu0 %v746
        %893 = vmatprep.subr.mxu0 0.0
        %894 = vmatpush1.msra.mxu0 %v747
        %895 = vmatprep.subr.mxu0 0.0
        %896 = vmatpush1.msra.mxu0 %v748
        %897 = vmatprep.subr.mxu0 0.0
        %898 = vmatpush1.msra.mxu0 %v749
        %899 = vmatprep.subr.mxu0 0.0
        %900 = vmatpush1.msra.mxu0 %v750
        %901 = vmatprep.subr.mxu0 0.0
        %902 = vmatpush1.msra.mxu0 %v751
        %903 = vmatprep.subr.mxu0 0.0
        %904 = vmatpush1.msra.mxu0 %v752
        %905 = vmatprep.subr.mxu0 0.0
        %906 = vmatpush1.msra.mxu0 %v753
        %907 = vmatprep.subr.mxu0 0.0
        %908 = vmatpush1.msra.mxu0 %v754
        %909 = vmatprep.subr.mxu0 0.0
        %910 = vmatpush1.msra.mxu0 %v755
        %911 = vmatprep.mubr.f32.mxu0 %v685
        %912 = vmatmul.mubr.f32.gmra.mrb[0].mxu0 %v684
        %v913 = vpop.f32.mrb[0].mxu0
        %v914 = vadd.f32 %v839, %v913
        %v915 = vpop.f32.mrb[0].mxu0
        %916 = vmatprep.mubr.f32.mxu0 %v690
        %917 = vmatmul.mubr.f32.gmra.mrb[0].mxu0 %v689
        %v918 = vpop.f32.mrb[0].mxu0
        %v919 = vadd.f32 %v844, %v918
        %v920 = vpop.f32.mrb[0].mxu0
        %921 = vdwg.mxu0
        %922 = vmatprep.subr.mxu0 0.0
        %923 = vmatpush1.msra.mxu0 %v756
        %924 = vmatprep.subr.mxu0 0.0
        %925 = vmatpush1.msra.mxu0 %v757
        %926 = vmatprep.subr.mxu0 0.0
        %927 = vmatpush1.msra.mxu0 %v758
        %928 = vmatprep.subr.mxu0 0.0
        %929 = vmatpush1.msra.mxu0 %v759
        %930 = vmatprep.subr.mxu0 0.0
        %931 = vmatpush1.msra.mxu0 %v760
        %932 = vmatprep.subr.mxu0 0.0
        %933 = vmatpush1.msra.mxu0 %v761
        %934 = vmatprep.subr.mxu0 0.0
        %935 = vmatpush1.msra.mxu0 %v762
        %936 = vmatprep.subr.mxu0 0.0
        %937 = vmatpush1.msra.mxu0 %v763
        %938 = vmatprep.subr.mxu0 0.0
        %939 = vmatpush1.msra.mxu0 %v764
        %940 = vmatprep.subr.mxu0 0.0
        %941 = vmatpush1.msra.mxu0 %v765
        %942 = vmatprep.subr.mxu0 0.0
        %943 = vmatpush1.msra.mxu0 %v766
        %944 = vmatprep.subr.mxu0 0.0
        %945 = vmatpush1.msra.mxu0 %v767
        %946 = vmatprep.subr.mxu0 0.0
        %947 = vmatpush1.msra.mxu0 %v768
        %948 = vmatprep.subr.mxu0 0.0
        %949 = vmatpush1.msra.mxu0 %v769
        %950 = vmatprep.subr.mxu0 0.0
        %951 = vmatpush1.msra.mxu0 %v770
        %952 = vmatprep.subr.mxu0 0.0
        %953 = vmatpush1.msra.mxu0 %v771
        %954 = vmatprep.subr.mxu0 0.0
        %955 = vmatpush1.msra.mxu0 0.0
        %956 = vmatprep.subr.mxu0 0.0
        %957 = vmatpush1.msra.mxu0 0.0
        %958 = vmatprep.subr.mxu0 0.0
        %959 = vmatpush1.msra.mxu0 0.0
        %960 = vmatprep.subr.mxu0 0.0
        %961 = vmatpush1.msra.mxu0 0.0
        %962 = vmatprep.subr.mxu0 0.0
        %963 = vmatpush1.msra.mxu0 0.0
        %964 = vmatprep.subr.mxu0 0.0
        %965 = vmatpush1.msra.mxu0 0.0
        %966 = vmatprep.subr.mxu0 0.0
        %967 = vmatpush1.msra.mxu0 0.0
        %968 = vmatprep.subr.mxu0 0.0
        %969 = vmatpush1.msra.mxu0 0.0
        %970 = vmatprep.subr.mxu0 0.0
        %971 = vmatpush1.msra.mxu0 0.0
        %972 = vmatprep.subr.mxu0 0.0
        %973 = vmatpush1.msra.mxu0 0.0
        %974 = vmatprep.subr.mxu0 0.0
        %975 = vmatpush1.msra.mxu0 0.0
        %976 = vmatprep.subr.mxu0 0.0
        %977 = vmatpush1.msra.mxu0 0.0
        %978 = vmatprep.subr.mxu0 0.0
        %979 = vmatpush1.msra.mxu0 0.0
        %980 = vmatprep.subr.mxu0 0.0
        %981 = vmatpush1.msra.mxu0 0.0
        %982 = vmatprep.subr.mxu0 0.0
        %983 = vmatpush1.msra.mxu0 0.0
        %984 = vmatprep.subr.mxu0 0.0
        %985 = vmatpush1.msra.mxu0 0.0
        %986 = vmatprep.mubr.f32.mxu0 0.0
        %987 = vmatmul.mubr.f32.gmra.mrb[0].mxu0 %v686
        %v988 = vpop.f32.mrb[0].mxu0
        %v989 = vadd.f32 %v914, %v988
        %v990 = vpop.f32.mrb[0].mxu0
        %991 = vmatprep.mubr.f32.mxu0 0.0
        %992 = vmatmul.mubr.f32.gmra.mrb[0].mxu0 %v691
        %v993 = vpop.f32.mrb[0].mxu0
        %v994 = vadd.f32 %v919, %v993
        %v995 = vpop.f32.mrb[0].mxu0
        %996 = vdwg.mxu0
        %v997 = vld [vmem:[%s3] sm:$0x1]
        %v999 = vlaneseq
        %v1000 = vshrl.u32 %v999, 7
        %v1001 = vsub.s32 0, %v1000
        %v1002 = vrot.slane %v997, %v1001
        %v1004 = vmul.f32 %v989, %v1002
        %v1005 = vmul.f32 %v994, %v1002
        %v1006 = vld [vmem:[%s4] sm:$0x1]
        %v1008 = vlaneseq
        %v1009 = vshrl.u32 %v1008, 7
        %v1010 = vsub.s32 0, %v1009
        %v1011 = vrot.slane %v1006, %v1010
        %v1013 = vadd.f32 %v1004, %v1011
        %v1014 = vadd.f32 %v1005, %v1011
        %v1015 = vtanh.pop %v1013
        %v1016 = vtanh.pop %v1014
        %1017 = vst [vmem:[#allocation3 + $0x2] sm:$0xff] %v1015
        %1018 = vst [vmem:[#allocation3 + $0xa] sm:$0xff] %v1016
        %v1019 = vld [vmem:[#allocation3] sm:$0xff]
        %v1020 = vld [vmem:[#allocation3 + $0x8] sm:$0xff]
        %1021 = vst [vmem:[#allocation4] sm:$0xff] %v1019
        %1022 = vst [vmem:[#allocation4 + $0x28] sm:$0xff] %v1020
        %v1023 = vld [vmem:[#allocation3 + $0x1] sm:$0xff]
        %v1024 = vld [vmem:[#allocation3 + $0x9] sm:$0xff]
        %1025 = vst [vmem:[#allocation4 + $0x8] sm:$0xff] %v1023
        %1026 = vst [vmem:[#allocation4 + $0x30] sm:$0xff] %v1024
        %v1027 = vld [vmem:[#allocation3 + $0x2] sm:$0xff]
        %v1028 = vld [vmem:[#allocation3 + $0xa] sm:$0xff]
        %1029 = vst [vmem:[#allocation4 + $0x10] sm:$0xff] %v1027
        %1030 = vst [vmem:[#allocation4 + $0x38] sm:$0xff] %v1028
        %v1031 = vld [vmem:[#allocation3 + $0x3] sm:$0xff]
        %v1032 = vld [vmem:[#allocation3 + $0xb] sm:$0xff]
        %1033 = vst [vmem:[#allocation4 + $0x18] sm:$0xff] %v1031
        %1034 = vst [vmem:[#allocation4 + $0x40] sm:$0xff] %v1032
        %v1035 = vld [vmem:[#allocation3 + $0x4] sm:$0xff]
        %v1036 = vld [vmem:[#allocation3 + $0xc] sm:$0xff]
        %1037 = vst [vmem:[#allocation4 + $0x20] sm:$0xff] %v1035
        %1038 = vst [vmem:[#allocation4 + $0x48] sm:$0xff] %v1036
        %v1039 = vld [vmem:[#allocation4] sm:$0xff]
        %v1040 = vld [vmem:[#allocation4 + $0x8] sm:$0xff]
        %v1041 = vld [vmem:[#allocation4 + $0x10] sm:$0xff]
        %v1042 = vld [vmem:[#allocation4 + $0x18] sm:$0xff]
        %v1043 = vld [vmem:[#allocation4 + $0x20] sm:$0xff]
        %v1044 = vld [vmem:[#allocation4 + $0x28] sm:$0xff]
        %v1045 = vld [vmem:[#allocation4 + $0x30] sm:$0xff]
        %v1046 = vld [vmem:[#allocation4 + $0x38] sm:$0xff]
        %v1047 = vld [vmem:[#allocation4 + $0x40] sm:$0xff]
        %v1048 = vld [vmem:[#allocation4 + $0x48] sm:$0xff]
        %v1049 = vld [vmem:[#allocation8] sm:$0xff]
        %v1050 = vld [vmem:[#allocation8 + $0x8] sm:$0xff]
        %v1051 = vld [vmem:[#allocation8 + $0x10] sm:$0xff]
        %v1052 = vld [vmem:[#allocation8 + $0x18] sm:$0xff]
        %v1053 = vld [vmem:[#allocation8 + $0x20] sm:$0xff]
        %v1054 = vld [vmem:[#allocation8 + $0x28] sm:$0xff]
        %v1055 = vld [vmem:[#allocation8 + $0x30] sm:$0xff]
        %v1056 = vld [vmem:[#allocation8 + $0x38] sm:$0xff]
        %v1057 = vld [vmem:[#allocation8 + $0x40] sm:$0xff]
        %v1058 = vld [vmem:[#allocation8 + $0x48] sm:$0xff]
        %v1059 = vld [vmem:[#allocation8 + $0x50] sm:$0xff]
        %v1060 = vld [vmem:[#allocation8 + $0x58] sm:$0xff]
        %v1061 = vld [vmem:[#allocation8 + $0x60] sm:$0xff]
        %v1062 = vld [vmem:[#allocation8 + $0x68] sm:$0xff]
        %v1063 = vld [vmem:[#allocation8 + $0x70] sm:$0xff]
        %v1064 = vld [vmem:[#allocation8 + $0x78] sm:$0xff]
        %v1065 = vld [vmem:[#allocation8 + $0x80] sm:$0xff]
        %v1066 = vld [vmem:[#allocation8 + $0x88] sm:$0xff]
        %v1067 = vld [vmem:[#allocation8 + $0x90] sm:$0xff]
        %v1068 = vld [vmem:[#allocation8 + $0x98] sm:$0xff]
        %v1069 = vld [vmem:[#allocation8 + $0xa0] sm:$0xff]
        %v1070 = vld [vmem:[#allocation8 + $0xa8] sm:$0xff]
        %v1071 = vld [vmem:[#allocation8 + $0xb0] sm:$0xff]
        %v1072 = vld [vmem:[#allocation8 + $0xb8] sm:$0xff]
        %v1073 = vld [vmem:[#allocation8 + $0xc0] sm:$0xff]
        %v1074 = vld [vmem:[#allocation8 + $0xc8] sm:$0xff]
        %v1075 = vld [vmem:[#allocation8 + $0xd0] sm:$0xff]
        %v1076 = vld [vmem:[#allocation8 + $0xd8] sm:$0xff]
        %v1077 = vld [vmem:[#allocation8 + $0xe0] sm:$0xff]
        %v1078 = vld [vmem:[#allocation8 + $0xe8] sm:$0xff]
        %v1079 = vld [vmem:[#allocation8 + $0xf0] sm:$0xff]
        %v1080 = vld [vmem:[#allocation8 + $0xf8] sm:$0xff]
        %v1081 = vld [vmem:[#allocation8 + $0x100] sm:$0xff]
        %v1082 = vld [vmem:[#allocation8 + $0x108] sm:$0xff]
        %v1083 = vld [vmem:[#allocation8 + $0x110] sm:$0xff]
        %v1084 = vld [vmem:[#allocation8 + $0x118] sm:$0xff]
        %v1085 = vld [vmem:[#allocation8 + $0x120] sm:$0xff]
        %v1086 = vld [vmem:[#allocation8 + $0x128] sm:$0xff]
        %v1087 = vld [vmem:[#allocation8 + $0x130] sm:$0xff]
        %v1088 = vld [vmem:[#allocation8 + $0x138] sm:$0xff]
        %v1089 = vld [vmem:[#allocation8 + $0x140] sm:$0xff]
        %v1090 = vld [vmem:[#allocation8 + $0x148] sm:$0xff]
        %v1091 = vld [vmem:[#allocation8 + $0x150] sm:$0xff]
        %v1092 = vld [vmem:[#allocation8 + $0x158] sm:$0xff]
        %v1093 = vld [vmem:[#allocation8 + $0x160] sm:$0xff]
        %v1094 = vld [vmem:[#allocation8 + $0x168] sm:$0xff]
        %v1095 = vld [vmem:[#allocation8 + $0x170] sm:$0xff]
        %v1096 = vld [vmem:[#allocation8 + $0x178] sm:$0xff]
        %v1097 = vld [vmem:[#allocation8 + $0x180] sm:$0xff]
        %v1098 = vld [vmem:[#allocation8 + $0x188] sm:$0xff]
        %v1099 = vld [vmem:[#allocation8 + $0x190] sm:$0xff]
        %v1100 = vld [vmem:[#allocation8 + $0x198] sm:$0xff]
        %v1101 = vld [vmem:[#allocation8 + $0x1a0] sm:$0xff]
        %v1102 = vld [vmem:[#allocation8 + $0x1a8] sm:$0xff]
        %v1103 = vld [vmem:[#allocation8 + $0x1b0] sm:$0xff]
        %v1104 = vld [vmem:[#allocation8 + $0x1b8] sm:$0xff]
        %v1105 = vld [vmem:[#allocation8 + $0x1c0] sm:$0xff]
        %v1106 = vld [vmem:[#allocation8 + $0x1c8] sm:$0xff]
        %v1107 = vld [vmem:[#allocation8 + $0x1d0] sm:$0xff]
        %v1108 = vld [vmem:[#allocation8 + $0x1d8] sm:$0xff]
        %v1109 = vld [vmem:[#allocation8 + $0x1e0] sm:$0xff]
        %v1110 = vld [vmem:[#allocation8 + $0x1e8] sm:$0xff]
        %v1111 = vld [vmem:[#allocation8 + $0x1f0] sm:$0xff]
        %v1112 = vld [vmem:[#allocation8 + $0x1f8] sm:$0xff]
        %v1113 = vld [vmem:[#allocation8 + $0x200] sm:$0xff]
        %v1114 = vld [vmem:[#allocation8 + $0x208] sm:$0xff]
        %v1115 = vld [vmem:[#allocation8 + $0x210] sm:$0xff]
        %v1116 = vld [vmem:[#allocation8 + $0x218] sm:$0xff]
        %v1117 = vld [vmem:[#allocation8 + $0x220] sm:$0xff]
        %v1118 = vld [vmem:[#allocation8 + $0x228] sm:$0xff]
        %v1119 = vld [vmem:[#allocation8 + $0x230] sm:$0xff]
        %v1120 = vld [vmem:[#allocation8 + $0x238] sm:$0xff]
        %v1121 = vld [vmem:[#allocation8 + $0x240] sm:$0xff]
        %v1122 = vld [vmem:[#allocation8 + $0x248] sm:$0xff]
        %v1123 = vld [vmem:[#allocation8 + $0x250] sm:$0xff]
        %v1124 = vld [vmem:[#allocation8 + $0x258] sm:$0xff]
        %v1125 = vld [vmem:[#allocation8 + $0x260] sm:$0xff]
        %v1126 = vld [vmem:[#allocation8 + $0x268] sm:$0xff]
        %v1127 = vld [vmem:[#allocation8 + $0x270] sm:$0xff]
        %v1128 = vld [vmem:[#allocation8 + $0x278] sm:$0xff]
        %1129 = vmatprep.subr.mxu0 0.0
        %1130 = vmatpush1.msra.mxu0 %v1049
        %1131 = vmatprep.subr.mxu0 0.0
        %1132 = vmatpush1.msra.mxu0 %v1050
        %1133 = vmatprep.subr.mxu0 0.0
        %1134 = vmatpush1.msra.mxu0 %v1051
        %1135 = vmatprep.subr.mxu0 0.0
        %1136 = vmatpush1.msra.mxu0 %v1052
        %1137 = vmatprep.subr.mxu0 0.0
        %1138 = vmatpush1.msra.mxu0 %v1053
        %1139 = vmatprep.subr.mxu0 0.0
        %1140 = vmatpush1.msra.mxu0 %v1054
        %1141 = vmatprep.subr.mxu0 0.0
        %1142 = vmatpush1.msra.mxu0 %v1055
        %1143 = vmatprep.subr.mxu0 0.0
        %1144 = vmatpush1.msra.mxu0 %v1056
        %1145 = vmatprep.subr.mxu0 0.0
        %1146 = vmatpush1.msra.mxu0 %v1057
        %1147 = vmatprep.subr.mxu0 0.0
        %1148 = vmatpush1.msra.mxu0 %v1058
        %1149 = vmatprep.subr.mxu0 0.0
        %1150 = vmatpush1.msra.mxu0 %v1059
        %1151 = vmatprep.subr.mxu0 0.0
        %1152 = vmatpush1.msra.mxu0 %v1060
        %1153 = vmatprep.subr.mxu0 0.0
        %1154 = vmatpush1.msra.mxu0 %v1061
        %1155 = vmatprep.subr.mxu0 0.0
        %1156 = vmatpush1.msra.mxu0 %v1062
        %1157 = vmatprep.subr.mxu0 0.0
        %1158 = vmatpush1.msra.mxu0 %v1063
        %1159 = vmatprep.subr.mxu0 0.0
        %1160 = vmatpush1.msra.mxu0 %v1064
        %1161 = vmatprep.subr.mxu0 0.0
        %1162 = vmatpush1.msra.mxu0 %v1065
        %1163 = vmatprep.subr.mxu0 0.0
        %1164 = vmatpush1.msra.mxu0 %v1066
        %1165 = vmatprep.subr.mxu0 0.0
        %1166 = vmatpush1.msra.mxu0 %v1067
        %1167 = vmatprep.subr.mxu0 0.0
        %1168 = vmatpush1.msra.mxu0 %v1068
        %1169 = vmatprep.subr.mxu0 0.0
        %1170 = vmatpush1.msra.mxu0 %v1069
        %1171 = vmatprep.subr.mxu0 0.0
        %1172 = vmatpush1.msra.mxu0 %v1070
        %1173 = vmatprep.subr.mxu0 0.0
        %1174 = vmatpush1.msra.mxu0 %v1071
        %1175 = vmatprep.subr.mxu0 0.0
        %1176 = vmatpush1.msra.mxu0 %v1072
        %1177 = vmatprep.subr.mxu0 0.0
        %1178 = vmatpush1.msra.mxu0 %v1073
        %1179 = vmatprep.subr.mxu0 0.0
        %1180 = vmatpush1.msra.mxu0 %v1074
        %1181 = vmatprep.subr.mxu0 0.0
        %1182 = vmatpush1.msra.mxu0 %v1075
        %1183 = vmatprep.subr.mxu0 0.0
        %1184 = vmatpush1.msra.mxu0 %v1076
        %1185 = vmatprep.subr.mxu0 0.0
        %1186 = vmatpush1.msra.mxu0 %v1077
        %1187 = vmatprep.subr.mxu0 0.0
        %1188 = vmatpush1.msra.mxu0 %v1078
        %1189 = vmatprep.subr.mxu0 0.0
        %1190 = vmatpush1.msra.mxu0 %v1079
        %1191 = vmatprep.subr.mxu0 0.0
        %1192 = vmatpush1.msra.mxu0 %v1080
        %1193 = vmatprep.mubr.f32.mxu0 %v1040
        %1194 = vmatmul.mubr.f32.gmra.mrb[0].mxu0 %v1039
        %v1195 = vpop.f32.mrb[0].mxu0
        %v1196 = vadd.f32 0.0, %v1195
        %v1197 = vpop.f32.mrb[0].mxu0
        %1198 = vmatprep.mubr.f32.mxu0 %v1045
        %1199 = vmatmul.mubr.f32.gmra.mrb[0].mxu0 %v1044
        %v1200 = vpop.f32.mrb[0].mxu0
        %v1201 = vadd.f32 0.0, %v1200
        %v1202 = vpop.f32.mrb[0].mxu0
        %1203 = vdwg.mxu0
        %1204 = vmatprep.subr.mxu0 0.0
        %1205 = vmatpush1.msra.mxu0 %v1081
        %1206 = vmatprep.subr.mxu0 0.0
        %1207 = vmatpush1.msra.mxu0 %v1082
        %1208 = vmatprep.subr.mxu0 0.0
        %1209 = vmatpush1.msra.mxu0 %v1083
        %1210 = vmatprep.subr.mxu0 0.0
        %1211 = vmatpush1.msra.mxu0 %v1084
        %1212 = vmatprep.subr.mxu0 0.0
        %1213 = vmatpush1.msra.mxu0 %v1085
        %1214 = vmatprep.subr.mxu0 0.0
        %1215 = vmatpush1.msra.mxu0 %v1086
        %1216 = vmatprep.subr.mxu0 0.0
        %1217 = vmatpush1.msra.mxu0 %v1087
        %1218 = vmatprep.subr.mxu0 0.0
        %1219 = vmatpush1.msra.mxu0 %v1088
        %1220 = vmatprep.subr.mxu0 0.0
        %1221 = vmatpush1.msra.mxu0 %v1089
        %1222 = vmatprep.subr.mxu0 0.0
        %1223 = vmatpush1.msra.mxu0 %v1090
        %1224 = vmatprep.subr.mxu0 0.0
        %1225 = vmatpush1.msra.mxu0 %v1091
        %1226 = vmatprep.subr.mxu0 0.0
        %1227 = vmatpush1.msra.mxu0 %v1092
        %1228 = vmatprep.subr.mxu0 0.0
        %1229 = vmatpush1.msra.mxu0 %v1093
        %1230 = vmatprep.subr.mxu0 0.0
        %1231 = vmatpush1.msra.mxu0 %v1094
        %1232 = vmatprep.subr.mxu0 0.0
        %1233 = vmatpush1.msra.mxu0 %v1095
        %1234 = vmatprep.subr.mxu0 0.0
        %1235 = vmatpush1.msra.mxu0 %v1096
        %1236 = vmatprep.subr.mxu0 0.0
        %1237 = vmatpush1.msra.mxu0 %v1097
        %1238 = vmatprep.subr.mxu0 0.0
        %1239 = vmatpush1.msra.mxu0 %v1098
        %1240 = vmatprep.subr.mxu0 0.0
        %1241 = vmatpush1.msra.mxu0 %v1099
        %1242 = vmatprep.subr.mxu0 0.0
        %1243 = vmatpush1.msra.mxu0 %v1100
        %1244 = vmatprep.subr.mxu0 0.0
        %1245 = vmatpush1.msra.mxu0 %v1101
        %1246 = vmatprep.subr.mxu0 0.0
        %1247 = vmatpush1.msra.mxu0 %v1102
        %1248 = vmatprep.subr.mxu0 0.0
        %1249 = vmatpush1.msra.mxu0 %v1103
        %1250 = vmatprep.subr.mxu0 0.0
        %1251 = vmatpush1.msra.mxu0 %v1104
        %1252 = vmatprep.subr.mxu0 0.0
        %1253 = vmatpush1.msra.mxu0 %v1105
        %1254 = vmatprep.subr.mxu0 0.0
        %1255 = vmatpush1.msra.mxu0 %v1106
        %1256 = vmatprep.subr.mxu0 0.0
        %1257 = vmatpush1.msra.mxu0 %v1107
        %1258 = vmatprep.subr.mxu0 0.0
        %1259 = vmatpush1.msra.mxu0 %v1108
        %1260 = vmatprep.subr.mxu0 0.0
        %1261 = vmatpush1.msra.mxu0 %v1109
        %1262 = vmatprep.subr.mxu0 0.0
        %1263 = vmatpush1.msra.mxu0 %v1110
        %1264 = vmatprep.subr.mxu0 0.0
        %1265 = vmatpush1.msra.mxu0 %v1111
        %1266 = vmatprep.subr.mxu0 0.0
        %1267 = vmatpush1.msra.mxu0 %v1112
        %1268 = vmatprep.mubr.f32.mxu0 %v1042
        %1269 = vmatmul.mubr.f32.gmra.mrb[0].mxu0 %v1041
        %v1270 = vpop.f32.mrb[0].mxu0
        %v1271 = vadd.f32 %v1196, %v1270
        %v1272 = vpop.f32.mrb[0].mxu0
        %1273 = vmatprep.mubr.f32.mxu0 %v1047
        %1274 = vmatmul.mubr.f32.gmra.mrb[0].mxu0 %v1046
        %v1275 = vpop.f32.mrb[0].mxu0
        %v1276 = vadd.f32 %v1201, %v1275
        %v1277 = vpop.f32.mrb[0].mxu0
        %1278 = vdwg.mxu0
        %1279 = vmatprep.subr.mxu0 0.0
        %1280 = vmatpush1.msra.mxu0 %v1113
        %1281 = vmatprep.subr.mxu0 0.0
        %1282 = vmatpush1.msra.mxu0 %v1114
        %1283 = vmatprep.subr.mxu0 0.0
        %1284 = vmatpush1.msra.mxu0 %v1115
        %1285 = vmatprep.subr.mxu0 0.0
        %1286 = vmatpush1.msra.mxu0 %v1116
        %1287 = vmatprep.subr.mxu0 0.0
        %1288 = vmatpush1.msra.mxu0 %v1117
        %1289 = vmatprep.subr.mxu0 0.0
        %1290 = vmatpush1.msra.mxu0 %v1118
        %1291 = vmatprep.subr.mxu0 0.0
        %1292 = vmatpush1.msra.mxu0 %v1119
        %1293 = vmatprep.subr.mxu0 0.0
        %1294 = vmatpush1.msra.mxu0 %v1120
        %1295 = vmatprep.subr.mxu0 0.0
        %1296 = vmatpush1.msra.mxu0 %v1121
        %1297 = vmatprep.subr.mxu0 0.0
        %1298 = vmatpush1.msra.mxu0 %v1122
        %1299 = vmatprep.subr.mxu0 0.0
        %1300 = vmatpush1.msra.mxu0 %v1123
        %1301 = vmatprep.subr.mxu0 0.0
        %1302 = vmatpush1.msra.mxu0 %v1124
        %1303 = vmatprep.subr.mxu0 0.0
        %1304 = vmatpush1.msra.mxu0 %v1125
        %1305 = vmatprep.subr.mxu0 0.0
        %1306 = vmatpush1.msra.mxu0 %v1126
        %1307 = vmatprep.subr.mxu0 0.0
        %1308 = vmatpush1.msra.mxu0 %v1127
        %1309 = vmatprep.subr.mxu0 0.0
        %1310 = vmatpush1.msra.mxu0 %v1128
        %1311 = vmatprep.subr.mxu0 0.0
        %1312 = vmatpush1.msra.mxu0 0.0
        %1313 = vmatprep.subr.mxu0 0.0
        %1314 = vmatpush1.msra.mxu0 0.0
        %1315 = vmatprep.subr.mxu0 0.0
        %1316 = vmatpush1.msra.mxu0 0.0
        %1317 = vmatprep.subr.mxu0 0.0
        %1318 = vmatpush1.msra.mxu0 0.0
        %1319 = vmatprep.subr.mxu0 0.0
        %1320 = vmatpush1.msra.mxu0 0.0
        %1321 = vmatprep.subr.mxu0 0.0
        %1322 = vmatpush1.msra.mxu0 0.0
        %1323 = vmatprep.subr.mxu0 0.0
        %1324 = vmatpush1.msra.mxu0 0.0
        %1325 = vmatprep.subr.mxu0 0.0
        %1326 = vmatpush1.msra.mxu0 0.0
        %1327 = vmatprep.subr.mxu0 0.0
        %1328 = vmatpush1.msra.mxu0 0.0
        %1329 = vmatprep.subr.mxu0 0.0
        %1330 = vmatpush1.msra.mxu0 0.0
        %1331 = vmatprep.subr.mxu0 0.0
        %1332 = vmatpush1.msra.mxu0 0.0
        %1333 = vmatprep.subr.mxu0 0.0
        %1334 = vmatpush1.msra.mxu0 0.0
        %1335 = vmatprep.subr.mxu0 0.0
        %1336 = vmatpush1.msra.mxu0 0.0
        %1337 = vmatprep.subr.mxu0 0.0
        %1338 = vmatpush1.msra.mxu0 0.0
        %1339 = vmatprep.subr.mxu0 0.0
        %1340 = vmatpush1.msra.mxu0 0.0
        %1341 = vmatprep.subr.mxu0 0.0
        %1342 = vmatpush1.msra.mxu0 0.0
        %1343 = vmatprep.mubr.f32.mxu0 0.0
        %1344 = vmatmul.mubr.f32.gmra.mrb[0].mxu0 %v1043
        %v1345 = vpop.f32.mrb[0].mxu0
        %v1346 = vadd.f32 %v1271, %v1345
        %v1347 = vpop.f32.mrb[0].mxu0
        %1348 = vmatprep.mubr.f32.mxu0 0.0
        %1349 = vmatmul.mubr.f32.gmra.mrb[0].mxu0 %v1048
        %v1350 = vpop.f32.mrb[0].mxu0
        %v1351 = vadd.f32 %v1276, %v1350
        %v1352 = vpop.f32.mrb[0].mxu0
        %1353 = vdwg.mxu0
        %v1354 = vld [vmem:[%s6] sm:$0x1]
        %v1356 = vlaneseq
        %v1357 = vshrl.u32 %v1356, 7
        %v1358 = vsub.s32 0, %v1357
        %v1359 = vrot.slane %v1354, %v1358
        %v1361 = vmul.f32 %v1346, %v1359
        %v1362 = vmul.f32 %v1351, %v1359
        %v1363 = vld [vmem:[%s7] sm:$0x1]
        %v1365 = vlaneseq
        %v1366 = vshrl.u32 %v1365, 7
        %v1367 = vsub.s32 0, %v1366
        %v1368 = vrot.slane %v1363, %v1367
        %v1370 = vadd.f32 %v1361, %v1368
        %v1371 = vadd.f32 %v1362, %v1368
        %v1372 = vtanh.pop %v1370
        %v1373 = vtanh.pop %v1371
        %1374 = vst [vmem:[#allocation2 + $0x2] sm:$0xff] %v1372
        %1375 = vst [vmem:[#allocation2 + $0xa] sm:$0xff] %v1373
        %v1376 = vld [vmem:[#allocation2] sm:$0xff]
        %v1377 = vld [vmem:[#allocation2 + $0x8] sm:$0xff]
        %1378 = vst [vmem:[#allocation4] sm:$0xff] %v1376
        %1379 = vst [vmem:[#allocation4 + $0x28] sm:$0xff] %v1377
        %v1380 = vld [vmem:[#allocation2 + $0x1] sm:$0xff]
        %v1381 = vld [vmem:[#allocation2 + $0x9] sm:$0xff]
        %1382 = vst [vmem:[#allocation4 + $0x8] sm:$0xff] %v1380
        %1383 = vst [vmem:[#allocation4 + $0x30] sm:$0xff] %v1381
        %v1384 = vld [vmem:[#allocation2 + $0x2] sm:$0xff]
        %v1385 = vld [vmem:[#allocation2 + $0xa] sm:$0xff]
        %1386 = vst [vmem:[#allocation4 + $0x10] sm:$0xff] %v1384
        %1387 = vst [vmem:[#allocation4 + $0x38] sm:$0xff] %v1385
        %v1388 = vld [vmem:[#allocation2 + $0x3] sm:$0xff]
        %v1389 = vld [vmem:[#allocation2 + $0xb] sm:$0xff]
        %1390 = vst [vmem:[#allocation4 + $0x18] sm:$0xff] %v1388
        %1391 = vst [vmem:[#allocation4 + $0x40] sm:$0xff] %v1389
        %v1392 = vld [vmem:[#allocation2 + $0x4] sm:$0xff]
        %v1393 = vld [vmem:[#allocation2 + $0xc] sm:$0xff]
        %1394 = vst [vmem:[#allocation4 + $0x20] sm:$0xff] %v1392
        %1395 = vst [vmem:[#allocation4 + $0x48] sm:$0xff] %v1393
        %v1396 = vld [vmem:[#allocation4] sm:$0xff]
        %v1397 = vld [vmem:[#allocation4 + $0x8] sm:$0xff]
        %v1398 = vld [vmem:[#allocation4 + $0x10] sm:$0xff]
        %v1399 = vld [vmem:[#allocation4 + $0x18] sm:$0xff]
        %v1400 = vld [vmem:[#allocation4 + $0x20] sm:$0xff]
        %v1401 = vld [vmem:[#allocation4 + $0x28] sm:$0xff]
        %v1402 = vld [vmem:[#allocation4 + $0x30] sm:$0xff]
        %v1403 = vld [vmem:[#allocation4 + $0x38] sm:$0xff]
        %v1404 = vld [vmem:[#allocation4 + $0x40] sm:$0xff]
        %v1405 = vld [vmem:[#allocation4 + $0x48] sm:$0xff]
        %v1406 = vld [vmem:[#allocation10] sm:$0xff]
        %v1407 = vld [vmem:[#allocation10 + $0x8] sm:$0xff]
        %v1408 = vld [vmem:[#allocation10 + $0x10] sm:$0xff]
        %v1409 = vld [vmem:[#allocation10 + $0x18] sm:$0xff]
        %v1410 = vld [vmem:[#allocation10 + $0x20] sm:$0xff]
        %v1411 = vld [vmem:[#allocation10 + $0x28] sm:$0xff]
        %v1412 = vld [vmem:[#allocation10 + $0x30] sm:$0xff]
        %v1413 = vld [vmem:[#allocation10 + $0x38] sm:$0xff]
        %v1414 = vld [vmem:[#allocation10 + $0x40] sm:$0xff]
        %v1415 = vld [vmem:[#allocation10 + $0x48] sm:$0xff]
        %v1416 = vld [vmem:[#allocation10 + $0x50] sm:$0xff]
        %v1417 = vld [vmem:[#allocation10 + $0x58] sm:$0xff]
        %v1418 = vld [vmem:[#allocation10 + $0x60] sm:$0xff]
        %v1419 = vld [vmem:[#allocation10 + $0x68] sm:$0xff]
        %v1420 = vld [vmem:[#allocation10 + $0x70] sm:$0xff]
        %v1421 = vld [vmem:[#allocation10 + $0x78] sm:$0xff]
        %v1422 = vld [vmem:[#allocation10 + $0x80] sm:$0xff]
        %v1423 = vld [vmem:[#allocation10 + $0x88] sm:$0xff]
        %v1424 = vld [vmem:[#allocation10 + $0x90] sm:$0xff]
        %v1425 = vld [vmem:[#allocation10 + $0x98] sm:$0xff]
        %v1426 = vld [vmem:[#allocation10 + $0xa0] sm:$0xff]
        %v1427 = vld [vmem:[#allocation10 + $0xa8] sm:$0xff]
        %v1428 = vld [vmem:[#allocation10 + $0xb0] sm:$0xff]
        %v1429 = vld [vmem:[#allocation10 + $0xb8] sm:$0xff]
        %v1430 = vld [vmem:[#allocation10 + $0xc0] sm:$0xff]
        %v1431 = vld [vmem:[#allocation10 + $0xc8] sm:$0xff]
        %v1432 = vld [vmem:[#allocation10 + $0xd0] sm:$0xff]
        %v1433 = vld [vmem:[#allocation10 + $0xd8] sm:$0xff]
        %v1434 = vld [vmem:[#allocation10 + $0xe0] sm:$0xff]
        %v1435 = vld [vmem:[#allocation10 + $0xe8] sm:$0xff]
        %v1436 = vld [vmem:[#allocation10 + $0xf0] sm:$0xff]
        %v1437 = vld [vmem:[#allocation10 + $0xf8] sm:$0xff]
        %v1438 = vld [vmem:[#allocation10 + $0x100] sm:$0xff]
        %v1439 = vld [vmem:[#allocation10 + $0x108] sm:$0xff]
        %v1440 = vld [vmem:[#allocation10 + $0x110] sm:$0xff]
        %v1441 = vld [vmem:[#allocation10 + $0x118] sm:$0xff]
        %v1442 = vld [vmem:[#allocation10 + $0x120] sm:$0xff]
        %v1443 = vld [vmem:[#allocation10 + $0x128] sm:$0xff]
        %v1444 = vld [vmem:[#allocation10 + $0x130] sm:$0xff]
        %v1445 = vld [vmem:[#allocation10 + $0x138] sm:$0xff]
        %v1446 = vld [vmem:[#allocation10 + $0x140] sm:$0xff]
        %v1447 = vld [vmem:[#allocation10 + $0x148] sm:$0xff]
        %v1448 = vld [vmem:[#allocation10 + $0x150] sm:$0xff]
        %v1449 = vld [vmem:[#allocation10 + $0x158] sm:$0xff]
        %v1450 = vld [vmem:[#allocation10 + $0x160] sm:$0xff]
        %v1451 = vld [vmem:[#allocation10 + $0x168] sm:$0xff]
        %v1452 = vld [vmem:[#allocation10 + $0x170] sm:$0xff]
        %v1453 = vld [vmem:[#allocation10 + $0x178] sm:$0xff]
        %v1454 = vld [vmem:[#allocation10 + $0x180] sm:$0xff]
        %v1455 = vld [vmem:[#allocation10 + $0x188] sm:$0xff]
        %v1456 = vld [vmem:[#allocation10 + $0x190] sm:$0xff]
        %v1457 = vld [vmem:[#allocation10 + $0x198] sm:$0xff]
        %v1458 = vld [vmem:[#allocation10 + $0x1a0] sm:$0xff]
        %v1459 = vld [vmem:[#allocation10 + $0x1a8] sm:$0xff]
        %v1460 = vld [vmem:[#allocation10 + $0x1b0] sm:$0xff]
        %v1461 = vld [vmem:[#allocation10 + $0x1b8] sm:$0xff]
        %v1462 = vld [vmem:[#allocation10 + $0x1c0] sm:$0xff]
        %v1463 = vld [vmem:[#allocation10 + $0x1c8] sm:$0xff]
        %v1464 = vld [vmem:[#allocation10 + $0x1d0] sm:$0xff]
        %v1465 = vld [vmem:[#allocation10 + $0x1d8] sm:$0xff]
        %v1466 = vld [vmem:[#allocation10 + $0x1e0] sm:$0xff]
        %v1467 = vld [vmem:[#allocation10 + $0x1e8] sm:$0xff]
        %v1468 = vld [vmem:[#allocation10 + $0x1f0] sm:$0xff]
        %v1469 = vld [vmem:[#allocation10 + $0x1f8] sm:$0xff]
        %v1470 = vld [vmem:[#allocation10 + $0x200] sm:$0xff]
        %v1471 = vld [vmem:[#allocation10 + $0x208] sm:$0xff]
        %v1472 = vld [vmem:[#allocation10 + $0x210] sm:$0xff]
        %v1473 = vld [vmem:[#allocation10 + $0x218] sm:$0xff]
        %v1474 = vld [vmem:[#allocation10 + $0x220] sm:$0xff]
        %v1475 = vld [vmem:[#allocation10 + $0x228] sm:$0xff]
        %v1476 = vld [vmem:[#allocation10 + $0x230] sm:$0xff]
        %v1477 = vld [vmem:[#allocation10 + $0x238] sm:$0xff]
        %v1478 = vld [vmem:[#allocation10 + $0x240] sm:$0xff]
        %v1479 = vld [vmem:[#allocation10 + $0x248] sm:$0xff]
        %v1480 = vld [vmem:[#allocation10 + $0x250] sm:$0xff]
        %v1481 = vld [vmem:[#allocation10 + $0x258] sm:$0xff]
        %v1482 = vld [vmem:[#allocation10 + $0x260] sm:$0xff]
        %v1483 = vld [vmem:[#allocation10 + $0x268] sm:$0xff]
        %v1484 = vld [vmem:[#allocation10 + $0x270] sm:$0xff]
        %v1485 = vld [vmem:[#allocation10 + $0x278] sm:$0xff]
        %1486 = vmatprep.subr.mxu0 0.0
        %1487 = vmatpush1.msra.mxu0 %v1406
        %1488 = vmatprep.subr.mxu0 0.0
        %1489 = vmatpush1.msra.mxu0 %v1407
        %1490 = vmatprep.subr.mxu0 0.0
        %1491 = vmatpush1.msra.mxu0 %v1408
        %1492 = vmatprep.subr.mxu0 0.0
        %1493 = vmatpush1.msra.mxu0 %v1409
        %1494 = vmatprep.subr.mxu0 0.0
        %1495 = vmatpush1.msra.mxu0 %v1410
        %1496 = vmatprep.subr.mxu0 0.0
        %1497 = vmatpush1.msra.mxu0 %v1411
        %1498 = vmatprep.subr.mxu0 0.0
        %1499 = vmatpush1.msra.mxu0 %v1412
        %1500 = vmatprep.subr.mxu0 0.0
        %1501 = vmatpush1.msra.mxu0 %v1413
        %1502 = vmatprep.subr.mxu0 0.0
        %1503 = vmatpush1.msra.mxu0 %v1414
        %1504 = vmatprep.subr.mxu0 0.0
        %1505 = vmatpush1.msra.mxu0 %v1415
        %1506 = vmatprep.subr.mxu0 0.0
        %1507 = vmatpush1.msra.mxu0 %v1416
        %1508 = vmatprep.subr.mxu0 0.0
        %1509 = vmatpush1.msra.mxu0 %v1417
        %1510 = vmatprep.subr.mxu0 0.0
        %1511 = vmatpush1.msra.mxu0 %v1418
        %1512 = vmatprep.subr.mxu0 0.0
        %1513 = vmatpush1.msra.mxu0 %v1419
        %1514 = vmatprep.subr.mxu0 0.0
        %1515 = vmatpush1.msra.mxu0 %v1420
        %1516 = vmatprep.subr.mxu0 0.0
        %1517 = vmatpush1.msra.mxu0 %v1421
        %1518 = vmatprep.subr.mxu0 0.0
        %1519 = vmatpush1.msra.mxu0 %v1422
        %1520 = vmatprep.subr.mxu0 0.0
        %1521 = vmatpush1.msra.mxu0 %v1423
        %1522 = vmatprep.subr.mxu0 0.0
        %1523 = vmatpush1.msra.mxu0 %v1424
        %1524 = vmatprep.subr.mxu0 0.0
        %1525 = vmatpush1.msra.mxu0 %v1425
        %1526 = vmatprep.subr.mxu0 0.0
        %1527 = vmatpush1.msra.mxu0 %v1426
        %1528 = vmatprep.subr.mxu0 0.0
        %1529 = vmatpush1.msra.mxu0 %v1427
        %1530 = vmatprep.subr.mxu0 0.0
        %1531 = vmatpush1.msra.mxu0 %v1428
        %1532 = vmatprep.subr.mxu0 0.0
        %1533 = vmatpush1.msra.mxu0 %v1429
        %1534 = vmatprep.subr.mxu0 0.0
        %1535 = vmatpush1.msra.mxu0 %v1430
        %1536 = vmatprep.subr.mxu0 0.0
        %1537 = vmatpush1.msra.mxu0 %v1431
        %1538 = vmatprep.subr.mxu0 0.0
        %1539 = vmatpush1.msra.mxu0 %v1432
        %1540 = vmatprep.subr.mxu0 0.0
        %1541 = vmatpush1.msra.mxu0 %v1433
        %1542 = vmatprep.subr.mxu0 0.0
        %1543 = vmatpush1.msra.mxu0 %v1434
        %1544 = vmatprep.subr.mxu0 0.0
        %1545 = vmatpush1.msra.mxu0 %v1435
        %1546 = vmatprep.subr.mxu0 0.0
        %1547 = vmatpush1.msra.mxu0 %v1436
        %1548 = vmatprep.subr.mxu0 0.0
        %1549 = vmatpush1.msra.mxu0 %v1437
        %1550 = vmatprep.mubr.f32.mxu0 %v1397
        %1551 = vmatmul.mubr.f32.gmra.mrb[0].mxu0 %v1396
        %v1552 = vpop.f32.mrb[0].mxu0
        %v1553 = vadd.f32 0.0, %v1552
        %v1554 = vpop.f32.mrb[0].mxu0
        %1555 = vmatprep.mubr.f32.mxu0 %v1402
        %1556 = vmatmul.mubr.f32.gmra.mrb[0].mxu0 %v1401
        %v1557 = vpop.f32.mrb[0].mxu0
        %v1558 = vadd.f32 0.0, %v1557
        %v1559 = vpop.f32.mrb[0].mxu0
        %1560 = vdwg.mxu0
        %1561 = vmatprep.subr.mxu0 0.0
        %1562 = vmatpush1.msra.mxu0 %v1438
        %1563 = vmatprep.subr.mxu0 0.0
        %1564 = vmatpush1.msra.mxu0 %v1439
        %1565 = vmatprep.subr.mxu0 0.0
        %1566 = vmatpush1.msra.mxu0 %v1440
        %1567 = vmatprep.subr.mxu0 0.0
        %1568 = vmatpush1.msra.mxu0 %v1441
        %1569 = vmatprep.subr.mxu0 0.0
        %1570 = vmatpush1.msra.mxu0 %v1442
        %1571 = vmatprep.subr.mxu0 0.0
        %1572 = vmatpush1.msra.mxu0 %v1443
        %1573 = vmatprep.subr.mxu0 0.0
        %1574 = vmatpush1.msra.mxu0 %v1444
        %1575 = vmatprep.subr.mxu0 0.0
        %1576 = vmatpush1.msra.mxu0 %v1445
        %1577 = vmatprep.subr.mxu0 0.0
        %1578 = vmatpush1.msra.mxu0 %v1446
        %1579 = vmatprep.subr.mxu0 0.0
        %1580 = vmatpush1.msra.mxu0 %v1447
        %1581 = vmatprep.subr.mxu0 0.0
        %1582 = vmatpush1.msra.mxu0 %v1448
        %1583 = vmatprep.subr.mxu0 0.0
        %1584 = vmatpush1.msra.mxu0 %v1449
        %1585 = vmatprep.subr.mxu0 0.0
        %1586 = vmatpush1.msra.mxu0 %v1450
        %1587 = vmatprep.subr.mxu0 0.0
        %1588 = vmatpush1.msra.mxu0 %v1451
        %1589 = vmatprep.subr.mxu0 0.0
        %1590 = vmatpush1.msra.mxu0 %v1452
        %1591 = vmatprep.subr.mxu0 0.0
        %1592 = vmatpush1.msra.mxu0 %v1453
        %1593 = vmatprep.subr.mxu0 0.0
        %1594 = vmatpush1.msra.mxu0 %v1454
        %1595 = vmatprep.subr.mxu0 0.0
        %1596 = vmatpush1.msra.mxu0 %v1455
        %1597 = vmatprep.subr.mxu0 0.0
        %1598 = vmatpush1.msra.mxu0 %v1456
        %1599 = vmatprep.subr.mxu0 0.0
        %1600 = vmatpush1.msra.mxu0 %v1457
        %1601 = vmatprep.subr.mxu0 0.0
        %1602 = vmatpush1.msra.mxu0 %v1458
        %1603 = vmatprep.subr.mxu0 0.0
        %1604 = vmatpush1.msra.mxu0 %v1459
        %1605 = vmatprep.subr.mxu0 0.0
        %1606 = vmatpush1.msra.mxu0 %v1460
        %1607 = vmatprep.subr.mxu0 0.0
        %1608 = vmatpush1.msra.mxu0 %v1461
        %1609 = vmatprep.subr.mxu0 0.0
        %1610 = vmatpush1.msra.mxu0 %v1462
        %1611 = vmatprep.subr.mxu0 0.0
        %1612 = vmatpush1.msra.mxu0 %v1463
        %1613 = vmatprep.subr.mxu0 0.0
        %1614 = vmatpush1.msra.mxu0 %v1464
        %1615 = vmatprep.subr.mxu0 0.0
        %1616 = vmatpush1.msra.mxu0 %v1465
        %1617 = vmatprep.subr.mxu0 0.0
        %1618 = vmatpush1.msra.mxu0 %v1466
        %1619 = vmatprep.subr.mxu0 0.0
        %1620 = vmatpush1.msra.mxu0 %v1467
        %1621 = vmatprep.subr.mxu0 0.0
        %1622 = vmatpush1.msra.mxu0 %v1468
        %1623 = vmatprep.subr.mxu0 0.0
        %1624 = vmatpush1.msra.mxu0 %v1469
        %1625 = vmatprep.mubr.f32.mxu0 %v1399
        %1626 = vmatmul.mubr.f32.gmra.mrb[0].mxu0 %v1398
        %v1627 = vpop.f32.mrb[0].mxu0
        %v1628 = vadd.f32 %v1553, %v1627
        %v1629 = vpop.f32.mrb[0].mxu0
        %1630 = vmatprep.mubr.f32.mxu0 %v1404
        %1631 = vmatmul.mubr.f32.gmra.mrb[0].mxu0 %v1403
        %v1632 = vpop.f32.mrb[0].mxu0
        %v1633 = vadd.f32 %v1558, %v1632
        %v1634 = vpop.f32.mrb[0].mxu0
        %1635 = vdwg.mxu0
        %1636 = vmatprep.subr.mxu0 0.0
        %1637 = vmatpush1.msra.mxu0 %v1470
        %1638 = vmatprep.subr.mxu0 0.0
        %1639 = vmatpush1.msra.mxu0 %v1471
        %1640 = vmatprep.subr.mxu0 0.0
        %1641 = vmatpush1.msra.mxu0 %v1472
        %1642 = vmatprep.subr.mxu0 0.0
        %1643 = vmatpush1.msra.mxu0 %v1473
        %1644 = vmatprep.subr.mxu0 0.0
        %1645 = vmatpush1.msra.mxu0 %v1474
        %1646 = vmatprep.subr.mxu0 0.0
        %1647 = vmatpush1.msra.mxu0 %v1475
        %1648 = vmatprep.subr.mxu0 0.0
        %1649 = vmatpush1.msra.mxu0 %v1476
        %1650 = vmatprep.subr.mxu0 0.0
        %1651 = vmatpush1.msra.mxu0 %v1477
        %1652 = vmatprep.subr.mxu0 0.0
        %1653 = vmatpush1.msra.mxu0 %v1478
        %1654 = vmatprep.subr.mxu0 0.0
        %1655 = vmatpush1.msra.mxu0 %v1479
        %1656 = vmatprep.subr.mxu0 0.0
        %1657 = vmatpush1.msra.mxu0 %v1480
        %1658 = vmatprep.subr.mxu0 0.0
        %1659 = vmatpush1.msra.mxu0 %v1481
        %1660 = vmatprep.subr.mxu0 0.0
        %1661 = vmatpush1.msra.mxu0 %v1482
        %1662 = vmatprep.subr.mxu0 0.0
        %1663 = vmatpush1.msra.mxu0 %v1483
        %1664 = vmatprep.subr.mxu0 0.0
        %1665 = vmatpush1.msra.mxu0 %v1484
        %1666 = vmatprep.subr.mxu0 0.0
        %1667 = vmatpush1.msra.mxu0 %v1485
        %1668 = vmatprep.subr.mxu0 0.0
        %1669 = vmatpush1.msra.mxu0 0.0
        %1670 = vmatprep.subr.mxu0 0.0
        %1671 = vmatpush1.msra.mxu0 0.0
        %1672 = vmatprep.subr.mxu0 0.0
        %1673 = vmatpush1.msra.mxu0 0.0
        %1674 = vmatprep.subr.mxu0 0.0
        %1675 = vmatpush1.msra.mxu0 0.0
        %1676 = vmatprep.subr.mxu0 0.0
        %1677 = vmatpush1.msra.mxu0 0.0
        %1678 = vmatprep.subr.mxu0 0.0
        %1679 = vmatpush1.msra.mxu0 0.0
        %1680 = vmatprep.subr.mxu0 0.0
        %1681 = vmatpush1.msra.mxu0 0.0
        %1682 = vmatprep.subr.mxu0 0.0
        %1683 = vmatpush1.msra.mxu0 0.0
        %1684 = vmatprep.subr.mxu0 0.0
        %1685 = vmatpush1.msra.mxu0 0.0
        %1686 = vmatprep.subr.mxu0 0.0
        %1687 = vmatpush1.msra.mxu0 0.0
        %1688 = vmatprep.subr.mxu0 0.0
        %1689 = vmatpush1.msra.mxu0 0.0
        %1690 = vmatprep.subr.mxu0 0.0
        %1691 = vmatpush1.msra.mxu0 0.0
        %1692 = vmatprep.subr.mxu0 0.0
        %1693 = vmatpush1.msra.mxu0 0.0
        %1694 = vmatprep.subr.mxu0 0.0
        %1695 = vmatpush1.msra.mxu0 0.0
        %1696 = vmatprep.subr.mxu0 0.0
        %1697 = vmatpush1.msra.mxu0 0.0
        %1698 = vmatprep.subr.mxu0 0.0
        %1699 = vmatpush1.msra.mxu0 0.0
        %1700 = vmatprep.mubr.f32.mxu0 0.0
        %1701 = vmatmul.mubr.f32.gmra.mrb[0].mxu0 %v1400
        %v1702 = vpop.f32.mrb[0].mxu0
        %v1703 = vadd.f32 %v1628, %v1702
        %v1704 = vpop.f32.mrb[0].mxu0
        %1705 = vmatprep.mubr.f32.mxu0 0.0
        %1706 = vmatmul.mubr.f32.gmra.mrb[0].mxu0 %v1405
        %v1707 = vpop.f32.mrb[0].mxu0
        %v1708 = vadd.f32 %v1633, %v1707
        %v1709 = vpop.f32.mrb[0].mxu0
        %1710 = vdwg.mxu0
        %v1711 = vld [vmem:[%s9] sm:$0x1]
        %v1713 = vlaneseq
        %v1714 = vshrl.u32 %v1713, 7
        %v1715 = vsub.s32 0, %v1714
        %v1716 = vrot.slane %v1711, %v1715
        %v1718 = vmul.f32 %v1703, %v1716
        %v1719 = vmul.f32 %v1708, %v1716
        %v1720 = vld [vmem:[%s10] sm:$0x1]
        %v1722 = vlaneseq
        %v1723 = vshrl.u32 %v1722, 7
        %v1724 = vsub.s32 0, %v1723
        %v1725 = vrot.slane %v1720, %v1724
        %v1727 = vadd.f32 %v1718, %v1725
        %v1728 = vadd.f32 %v1719, %v1725
        %v1729 = vtanh.pop %v1727
        %v1730 = vtanh.pop %v1728
        %1731 = vst [vmem:[#allocation3 + $0x2] sm:$0xff] %v1729
        %1732 = vst [vmem:[#allocation3 + $0xa] sm:$0xff] %v1730
        %v1733 = vld [vmem:[#allocation3] sm:$0xff]
        %v1734 = vld [vmem:[#allocation3 + $0x8] sm:$0xff]
        %1735 = vst [vmem:[#allocation4] sm:$0xff] %v1733
        %1736 = vst [vmem:[#allocation4 + $0x28] sm:$0xff] %v1734
        %v1737 = vld [vmem:[#allocation3 + $0x1] sm:$0xff]
        %v1738 = vld [vmem:[#allocation3 + $0x9] sm:$0xff]
        %1739 = vst [vmem:[#allocation4 + $0x8] sm:$0xff] %v1737
        %1740 = vst [vmem:[#allocation4 + $0x30] sm:$0xff] %v1738
        %v1741 = vld [vmem:[#allocation3 + $0x2] sm:$0xff]
        %v1742 = vld [vmem:[#allocation3 + $0xa] sm:$0xff]
        %1743 = vst [vmem:[#allocation4 + $0x10] sm:$0xff] %v1741
        %1744 = vst [vmem:[#allocation4 + $0x38] sm:$0xff] %v1742
        %v1745 = vld [vmem:[#allocation3 + $0x3] sm:$0xff]
        %v1746 = vld [vmem:[#allocation3 + $0xb] sm:$0xff]
        %1747 = vst [vmem:[#allocation4 + $0x18] sm:$0xff] %v1745
        %1748 = vst [vmem:[#allocation4 + $0x40] sm:$0xff] %v1746
        %v1749 = vld [vmem:[#allocation3 + $0x4] sm:$0xff]
        %v1750 = vld [vmem:[#allocation3 + $0xc] sm:$0xff]
        %1751 = vst [vmem:[#allocation4 + $0x20] sm:$0xff] %v1749
        %1752 = vst [vmem:[#allocation4 + $0x48] sm:$0xff] %v1750
        %v1753 = vld [vmem:[#allocation4] sm:$0xff]
        %v1754 = vld [vmem:[#allocation4 + $0x8] sm:$0xff]
        %v1755 = vld [vmem:[#allocation4 + $0x10] sm:$0xff]
        %v1756 = vld [vmem:[#allocation4 + $0x18] sm:$0xff]
        %v1757 = vld [vmem:[#allocation4 + $0x20] sm:$0xff]
        %v1758 = vld [vmem:[#allocation4 + $0x28] sm:$0xff]
        %v1759 = vld [vmem:[#allocation4 + $0x30] sm:$0xff]
        %v1760 = vld [vmem:[#allocation4 + $0x38] sm:$0xff]
        %v1761 = vld [vmem:[#allocation4 + $0x40] sm:$0xff]
        %v1762 = vld [vmem:[#allocation4 + $0x48] sm:$0xff]
        %v1763 = vld [vmem:[#allocation11] sm:$0xff]
        %v1764 = vld [vmem:[#allocation11 + $0x8] sm:$0xff]
        %v1765 = vld [vmem:[#allocation11 + $0x10] sm:$0xff]
        %v1766 = vld [vmem:[#allocation11 + $0x18] sm:$0xff]
        %v1767 = vld [vmem:[#allocation11 + $0x20] sm:$0xff]
        %v1768 = vld [vmem:[#allocation11 + $0x28] sm:$0xff]
        %v1769 = vld [vmem:[#allocation11 + $0x30] sm:$0xff]
        %v1770 = vld [vmem:[#allocation11 + $0x38] sm:$0xff]
        %v1771 = vld [vmem:[#allocation11 + $0x40] sm:$0xff]
        %v1772 = vld [vmem:[#allocation11 + $0x48] sm:$0xff]
        %v1773 = vld [vmem:[#allocation11 + $0x50] sm:$0xff]
        %v1774 = vld [vmem:[#allocation11 + $0x58] sm:$0xff]
        %v1775 = vld [vmem:[#allocation11 + $0x60] sm:$0xff]
        %v1776 = vld [vmem:[#allocation11 + $0x68] sm:$0xff]
        %v1777 = vld [vmem:[#allocation11 + $0x70] sm:$0xff]
        %v1778 = vld [vmem:[#allocation11 + $0x78] sm:$0xff]
        %v1779 = vld [vmem:[#allocation11 + $0x80] sm:$0xff]
        %v1780 = vld [vmem:[#allocation11 + $0x88] sm:$0xff]
        %v1781 = vld [vmem:[#allocation11 + $0x90] sm:$0xff]
        %v1782 = vld [vmem:[#allocation11 + $0x98] sm:$0xff]
        %v1783 = vld [vmem:[#allocation11 + $0xa0] sm:$0xff]
        %v1784 = vld [vmem:[#allocation11 + $0xa8] sm:$0xff]
        %v1785 = vld [vmem:[#allocation11 + $0xb0] sm:$0xff]
        %v1786 = vld [vmem:[#allocation11 + $0xb8] sm:$0xff]
        %v1787 = vld [vmem:[#allocation11 + $0xc0] sm:$0xff]
        %v1788 = vld [vmem:[#allocation11 + $0xc8] sm:$0xff]
        %v1789 = vld [vmem:[#allocation11 + $0xd0] sm:$0xff]
        %v1790 = vld [vmem:[#allocation11 + $0xd8] sm:$0xff]
        %v1791 = vld [vmem:[#allocation11 + $0xe0] sm:$0xff]
        %v1792 = vld [vmem:[#allocation11 + $0xe8] sm:$0xff]
        %v1793 = vld [vmem:[#allocation11 + $0xf0] sm:$0xff]
        %v1794 = vld [vmem:[#allocation11 + $0xf8] sm:$0xff]
        %v1795 = vld [vmem:[#allocation11 + $0x100] sm:$0xff]
        %v1796 = vld [vmem:[#allocation11 + $0x108] sm:$0xff]
        %v1797 = vld [vmem:[#allocation11 + $0x110] sm:$0xff]
        %v1798 = vld [vmem:[#allocation11 + $0x118] sm:$0xff]
        %v1799 = vld [vmem:[#allocation11 + $0x120] sm:$0xff]
        %v1800 = vld [vmem:[#allocation11 + $0x128] sm:$0xff]
        %v1801 = vld [vmem:[#allocation11 + $0x130] sm:$0xff]
        %v1802 = vld [vmem:[#allocation11 + $0x138] sm:$0xff]
        %v1803 = vld [vmem:[#allocation11 + $0x140] sm:$0xff]
        %v1804 = vld [vmem:[#allocation11 + $0x148] sm:$0xff]
        %v1805 = vld [vmem:[#allocation11 + $0x150] sm:$0xff]
        %v1806 = vld [vmem:[#allocation11 + $0x158] sm:$0xff]
        %v1807 = vld [vmem:[#allocation11 + $0x160] sm:$0xff]
        %v1808 = vld [vmem:[#allocation11 + $0x168] sm:$0xff]
        %v1809 = vld [vmem:[#allocation11 + $0x170] sm:$0xff]
        %v1810 = vld [vmem:[#allocation11 + $0x178] sm:$0xff]
        %v1811 = vld [vmem:[#allocation11 + $0x180] sm:$0xff]
        %v1812 = vld [vmem:[#allocation11 + $0x188] sm:$0xff]
        %v1813 = vld [vmem:[#allocation11 + $0x190] sm:$0xff]
        %v1814 = vld [vmem:[#allocation11 + $0x198] sm:$0xff]
        %v1815 = vld [vmem:[#allocation11 + $0x1a0] sm:$0xff]
        %v1816 = vld [vmem:[#allocation11 + $0x1a8] sm:$0xff]
        %v1817 = vld [vmem:[#allocation11 + $0x1b0] sm:$0xff]
        %v1818 = vld [vmem:[#allocation11 + $0x1b8] sm:$0xff]
        %v1819 = vld [vmem:[#allocation11 + $0x1c0] sm:$0xff]
        %v1820 = vld [vmem:[#allocation11 + $0x1c8] sm:$0xff]
        %v1821 = vld [vmem:[#allocation11 + $0x1d0] sm:$0xff]
        %v1822 = vld [vmem:[#allocation11 + $0x1d8] sm:$0xff]
        %v1823 = vld [vmem:[#allocation11 + $0x1e0] sm:$0xff]
        %v1824 = vld [vmem:[#allocation11 + $0x1e8] sm:$0xff]
        %v1825 = vld [vmem:[#allocation11 + $0x1f0] sm:$0xff]
        %v1826 = vld [vmem:[#allocation11 + $0x1f8] sm:$0xff]
        %v1827 = vld [vmem:[#allocation11 + $0x200] sm:$0xff]
        %v1828 = vld [vmem:[#allocation11 + $0x208] sm:$0xff]
        %v1829 = vld [vmem:[#allocation11 + $0x210] sm:$0xff]
        %v1830 = vld [vmem:[#allocation11 + $0x218] sm:$0xff]
        %v1831 = vld [vmem:[#allocation11 + $0x220] sm:$0xff]
        %v1832 = vld [vmem:[#allocation11 + $0x228] sm:$0xff]
        %v1833 = vld [vmem:[#allocation11 + $0x230] sm:$0xff]
        %v1834 = vld [vmem:[#allocation11 + $0x238] sm:$0xff]
        %v1835 = vld [vmem:[#allocation11 + $0x240] sm:$0xff]
        %v1836 = vld [vmem:[#allocation11 + $0x248] sm:$0xff]
        %v1837 = vld [vmem:[#allocation11 + $0x250] sm:$0xff]
        %v1838 = vld [vmem:[#allocation11 + $0x258] sm:$0xff]
        %v1839 = vld [vmem:[#allocation11 + $0x260] sm:$0xff]
        %v1840 = vld [vmem:[#allocation11 + $0x268] sm:$0xff]
        %v1841 = vld [vmem:[#allocation11 + $0x270] sm:$0xff]
        %v1842 = vld [vmem:[#allocation11 + $0x278] sm:$0xff]
        %1843 = vmatprep.subr.mxu0 0.0
        %1844 = vmatpush1.msra.mxu0 %v1763
        %1845 = vmatprep.subr.mxu0 0.0
        %1846 = vmatpush1.msra.mxu0 %v1764
        %1847 = vmatprep.subr.mxu0 0.0
        %1848 = vmatpush1.msra.mxu0 %v1765
        %1849 = vmatprep.subr.mxu0 0.0
        %1850 = vmatpush1.msra.mxu0 %v1766
        %1851 = vmatprep.subr.mxu0 0.0
        %1852 = vmatpush1.msra.mxu0 %v1767
        %1853 = vmatprep.subr.mxu0 0.0
        %1854 = vmatpush1.msra.mxu0 %v1768
        %1855 = vmatprep.subr.mxu0 0.0
        %1856 = vmatpush1.msra.mxu0 %v1769
        %1857 = vmatprep.subr.mxu0 0.0
        %1858 = vmatpush1.msra.mxu0 %v1770
        %1859 = vmatprep.subr.mxu0 0.0
        %1860 = vmatpush1.msra.mxu0 %v1771
        %1861 = vmatprep.subr.mxu0 0.0
        %1862 = vmatpush1.msra.mxu0 %v1772
        %1863 = vmatprep.subr.mxu0 0.0
        %1864 = vmatpush1.msra.mxu0 %v1773
        %1865 = vmatprep.subr.mxu0 0.0
        %1866 = vmatpush1.msra.mxu0 %v1774
        %1867 = vmatprep.subr.mxu0 0.0
        %1868 = vmatpush1.msra.mxu0 %v1775
        %1869 = vmatprep.subr.mxu0 0.0
        %1870 = vmatpush1.msra.mxu0 %v1776
        %1871 = vmatprep.subr.mxu0 0.0
        %1872 = vmatpush1.msra.mxu0 %v1777
        %1873 = vmatprep.subr.mxu0 0.0
        %1874 = vmatpush1.msra.mxu0 %v1778
        %1875 = vmatprep.subr.mxu0 0.0
        %1876 = vmatpush1.msra.mxu0 %v1779
        %1877 = vmatprep.subr.mxu0 0.0
        %1878 = vmatpush1.msra.mxu0 %v1780
        %1879 = vmatprep.subr.mxu0 0.0
        %1880 = vmatpush1.msra.mxu0 %v1781
        %1881 = vmatprep.subr.mxu0 0.0
        %1882 = vmatpush1.msra.mxu0 %v1782
        %1883 = vmatprep.subr.mxu0 0.0
        %1884 = vmatpush1.msra.mxu0 %v1783
        %1885 = vmatprep.subr.mxu0 0.0
        %1886 = vmatpush1.msra.mxu0 %v1784
        %1887 = vmatprep.subr.mxu0 0.0
        %1888 = vmatpush1.msra.mxu0 %v1785
        %1889 = vmatprep.subr.mxu0 0.0
        %1890 = vmatpush1.msra.mxu0 %v1786
        %1891 = vmatprep.subr.mxu0 0.0
        %1892 = vmatpush1.msra.mxu0 %v1787
        %1893 = vmatprep.subr.mxu0 0.0
        %1894 = vmatpush1.msra.mxu0 %v1788
        %1895 = vmatprep.subr.mxu0 0.0
        %1896 = vmatpush1.msra.mxu0 %v1789
        %1897 = vmatprep.subr.mxu0 0.0
        %1898 = vmatpush1.msra.mxu0 %v1790
        %1899 = vmatprep.subr.mxu0 0.0
        %1900 = vmatpush1.msra.mxu0 %v1791
        %1901 = vmatprep.subr.mxu0 0.0
        %1902 = vmatpush1.msra.mxu0 %v1792
        %1903 = vmatprep.subr.mxu0 0.0
        %1904 = vmatpush1.msra.mxu0 %v1793
        %1905 = vmatprep.subr.mxu0 0.0
        %1906 = vmatpush1.msra.mxu0 %v1794
        %1907 = vmatprep.mubr.f32.mxu0 %v1754
        %1908 = vmatmul.mubr.f32.gmra.mrb[0].mxu0 %v1753
        %v1909 = vpop.f32.mrb[0].mxu0
        %v1910 = vadd.f32 0.0, %v1909
        %v1911 = vpop.f32.mrb[0].mxu0
        %1912 = vmatprep.mubr.f32.mxu0 %v1759
        %1913 = vmatmul.mubr.f32.gmra.mrb[0].mxu0 %v1758
        %v1914 = vpop.f32.mrb[0].mxu0
        %v1915 = vadd.f32 0.0, %v1914
        %v1916 = vpop.f32.mrb[0].mxu0
        %1917 = vdwg.mxu0
        %1918 = vmatprep.subr.mxu0 0.0
        %1919 = vmatpush1.msra.mxu0 %v1795
        %1920 = vmatprep.subr.mxu0 0.0
        %1921 = vmatpush1.msra.mxu0 %v1796
        %1922 = vmatprep.subr.mxu0 0.0
        %1923 = vmatpush1.msra.mxu0 %v1797
        %1924 = vmatprep.subr.mxu0 0.0
        %1925 = vmatpush1.msra.mxu0 %v1798
        %1926 = vmatprep.subr.mxu0 0.0
        %1927 = vmatpush1.msra.mxu0 %v1799
        %1928 = vmatprep.subr.mxu0 0.0
        %1929 = vmatpush1.msra.mxu0 %v1800
        %1930 = vmatprep.subr.mxu0 0.0
        %1931 = vmatpush1.msra.mxu0 %v1801
        %1932 = vmatprep.subr.mxu0 0.0
        %1933 = vmatpush1.msra.mxu0 %v1802
        %1934 = vmatprep.subr.mxu0 0.0
        %1935 = vmatpush1.msra.mxu0 %v1803
        %1936 = vmatprep.subr.mxu0 0.0
        %1937 = vmatpush1.msra.mxu0 %v1804
        %1938 = vmatprep.subr.mxu0 0.0
        %1939 = vmatpush1.msra.mxu0 %v1805
        %1940 = vmatprep.subr.mxu0 0.0
        %1941 = vmatpush1.msra.mxu0 %v1806
        %1942 = vmatprep.subr.mxu0 0.0
        %1943 = vmatpush1.msra.mxu0 %v1807
        %1944 = vmatprep.subr.mxu0 0.0
        %1945 = vmatpush1.msra.mxu0 %v1808
        %1946 = vmatprep.subr.mxu0 0.0
        %1947 = vmatpush1.msra.mxu0 %v1809
        %1948 = vmatprep.subr.mxu0 0.0
        %1949 = vmatpush1.msra.mxu0 %v1810
        %1950 = vmatprep.subr.mxu0 0.0
        %1951 = vmatpush1.msra.mxu0 %v1811
        %1952 = vmatprep.subr.mxu0 0.0
        %1953 = vmatpush1.msra.mxu0 %v1812
        %1954 = vmatprep.subr.mxu0 0.0
        %1955 = vmatpush1.msra.mxu0 %v1813
        %1956 = vmatprep.subr.mxu0 0.0
        %1957 = vmatpush1.msra.mxu0 %v1814
        %1958 = vmatprep.subr.mxu0 0.0
        %1959 = vmatpush1.msra.mxu0 %v1815
        %1960 = vmatprep.subr.mxu0 0.0
        %1961 = vmatpush1.msra.mxu0 %v1816
        %1962 = vmatprep.subr.mxu0 0.0
        %1963 = vmatpush1.msra.mxu0 %v1817
        %1964 = vmatprep.subr.mxu0 0.0
        %1965 = vmatpush1.msra.mxu0 %v1818
        %1966 = vmatprep.subr.mxu0 0.0
        %1967 = vmatpush1.msra.mxu0 %v1819
        %1968 = vmatprep.subr.mxu0 0.0
        %1969 = vmatpush1.msra.mxu0 %v1820
        %1970 = vmatprep.subr.mxu0 0.0
        %1971 = vmatpush1.msra.mxu0 %v1821
        %1972 = vmatprep.subr.mxu0 0.0
        %1973 = vmatpush1.msra.mxu0 %v1822
        %1974 = vmatprep.subr.mxu0 0.0
        %1975 = vmatpush1.msra.mxu0 %v1823
        %1976 = vmatprep.subr.mxu0 0.0
        %1977 = vmatpush1.msra.mxu0 %v1824
        %1978 = vmatprep.subr.mxu0 0.0
        %1979 = vmatpush1.msra.mxu0 %v1825
        %1980 = vmatprep.subr.mxu0 0.0
        %1981 = vmatpush1.msra.mxu0 %v1826
        %1982 = vmatprep.mubr.f32.mxu0 %v1756
        %1983 = vmatmul.mubr.f32.gmra.mrb[0].mxu0 %v1755
        %v1984 = vpop.f32.mrb[0].mxu0
        %v1985 = vadd.f32 %v1910, %v1984
        %v1986 = vpop.f32.mrb[0].mxu0
        %1987 = vmatprep.mubr.f32.mxu0 %v1761
        %1988 = vmatmul.mubr.f32.gmra.mrb[0].mxu0 %v1760
        %v1989 = vpop.f32.mrb[0].mxu0
        %v1990 = vadd.f32 %v1915, %v1989
        %v1991 = vpop.f32.mrb[0].mxu0
        %1992 = vdwg.mxu0
        %1993 = vmatprep.subr.mxu0 0.0
        %1994 = vmatpush1.msra.mxu0 %v1827
        %1995 = vmatprep.subr.mxu0 0.0
        %1996 = vmatpush1.msra.mxu0 %v1828
        %1997 = vmatprep.subr.mxu0 0.0
        %1998 = vmatpush1.msra.mxu0 %v1829
        %1999 = vmatprep.subr.mxu0 0.0
        %2000 = vmatpush1.msra.mxu0 %v1830
        %2001 = vmatprep.subr.mxu0 0.0
        %2002 = vmatpush1.msra.mxu0 %v1831
        %2003 = vmatprep.subr.mxu0 0.0
        %2004 = vmatpush1.msra.mxu0 %v1832
        %2005 = vmatprep.subr.mxu0 0.0
        %2006 = vmatpush1.msra.mxu0 %v1833
        %2007 = vmatprep.subr.mxu0 0.0
        %2008 = vmatpush1.msra.mxu0 %v1834
        %2009 = vmatprep.subr.mxu0 0.0
        %2010 = vmatpush1.msra.mxu0 %v1835
        %2011 = vmatprep.subr.mxu0 0.0
        %2012 = vmatpush1.msra.mxu0 %v1836
        %2013 = vmatprep.subr.mxu0 0.0
        %2014 = vmatpush1.msra.mxu0 %v1837
        %2015 = vmatprep.subr.mxu0 0.0
        %2016 = vmatpush1.msra.mxu0 %v1838
        %2017 = vmatprep.subr.mxu0 0.0
        %2018 = vmatpush1.msra.mxu0 %v1839
        %2019 = vmatprep.subr.mxu0 0.0
        %2020 = vmatpush1.msra.mxu0 %v1840
        %2021 = vmatprep.subr.mxu0 0.0
        %2022 = vmatpush1.msra.mxu0 %v1841
        %2023 = vmatprep.subr.mxu0 0.0
        %2024 = vmatpush1.msra.mxu0 %v1842
        %2025 = vmatprep.subr.mxu0 0.0
        %2026 = vmatpush1.msra.mxu0 0.0
        %2027 = vmatprep.subr.mxu0 0.0
        %2028 = vmatpush1.msra.mxu0 0.0
        %2029 = vmatprep.subr.mxu0 0.0
        %2030 = vmatpush1.msra.mxu0 0.0
        %2031 = vmatprep.subr.mxu0 0.0
        %2032 = vmatpush1.msra.mxu0 0.0
        %2033 = vmatprep.subr.mxu0 0.0
        %2034 = vmatpush1.msra.mxu0 0.0
        %2035 = vmatprep.subr.mxu0 0.0
        %2036 = vmatpush1.msra.mxu0 0.0
        %2037 = vmatprep.subr.mxu0 0.0
        %2038 = vmatpush1.msra.mxu0 0.0
        %2039 = vmatprep.subr.mxu0 0.0
        %2040 = vmatpush1.msra.mxu0 0.0
        %2041 = vmatprep.subr.mxu0 0.0
        %2042 = vmatpush1.msra.mxu0 0.0
        %2043 = vmatprep.subr.mxu0 0.0
        %2044 = vmatpush1.msra.mxu0 0.0
        %2045 = vmatprep.subr.mxu0 0.0
        %2046 = vmatpush1.msra.mxu0 0.0
        %2047 = vmatprep.subr.mxu0 0.0
        %2048 = vmatpush1.msra.mxu0 0.0
        %2049 = vmatprep.subr.mxu0 0.0
        %2050 = vmatpush1.msra.mxu0 0.0
        %2051 = vmatprep.subr.mxu0 0.0
        %2052 = vmatpush1.msra.mxu0 0.0
        %2053 = vmatprep.subr.mxu0 0.0
        %2054 = vmatpush1.msra.mxu0 0.0
        %2055 = vmatprep.subr.mxu0 0.0
        %2056 = vmatpush1.msra.mxu0 0.0
        %2057 = vmatprep.mubr.f32.mxu0 0.0
        %2058 = vmatmul.mubr.f32.gmra.mrb[0].mxu0 %v1757
        %v2059 = vpop.f32.mrb[0].mxu0
        %v2060 = vadd.f32 %v1985, %v2059
        %v2061 = vpop.f32.mrb[0].mxu0
        %2062 = vmatprep.mubr.f32.mxu0 0.0
        %2063 = vmatmul.mubr.f32.gmra.mrb[0].mxu0 %v1762
        %v2064 = vpop.f32.mrb[0].mxu0
        %v2065 = vadd.f32 %v1990, %v2064
        %v2066 = vpop.f32.mrb[0].mxu0
        %2067 = vdwg.mxu0
        %v2068 = vld [vmem:[%s12] sm:$0x1]
        %v2070 = vlaneseq
        %v2071 = vshrl.u32 %v2070, 7
        %v2072 = vsub.s32 0, %v2071
        %v2073 = vrot.slane %v2068, %v2072
        %v2075 = vmul.f32 %v2060, %v2073
        %v2076 = vmul.f32 %v2065, %v2073
        %v2077 = vld [vmem:[%s13] sm:$0x1]
        %v2079 = vlaneseq
        %v2080 = vshrl.u32 %v2079, 7
        %v2081 = vsub.s32 0, %v2080
        %v2082 = vrot.slane %v2077, %v2081
        %v2084 = vadd.f32 %v2075, %v2082
        %v2085 = vadd.f32 %v2076, %v2082
        %v2086 = vtanh.pop %v2084
        %v2087 = vtanh.pop %v2085
        %2088 = vst [vmem:[#allocation2 + $0x2] sm:$0xff] %v2086
        %2089 = vst [vmem:[#allocation2 + $0xa] sm:$0xff] %v2087
        %v2090 = vld [vmem:[#allocation2] sm:$0xff]
        %v2091 = vld [vmem:[#allocation2 + $0x8] sm:$0xff]
        %2092 = vst [vmem:[#allocation4] sm:$0xff] %v2090
        %2093 = vst [vmem:[#allocation4 + $0x28] sm:$0xff] %v2091
        %v2094 = vld [vmem:[#allocation2 + $0x1] sm:$0xff]
        %v2095 = vld [vmem:[#allocation2 + $0x9] sm:$0xff]
        %2096 = vst [vmem:[#allocation4 + $0x8] sm:$0xff] %v2094
        %2097 = vst [vmem:[#allocation4 + $0x30] sm:$0xff] %v2095
        %v2098 = vld [vmem:[#allocation2 + $0x2] sm:$0xff]
        %v2099 = vld [vmem:[#allocation2 + $0xa] sm:$0xff]
        %2100 = vst [vmem:[#allocation4 + $0x10] sm:$0xff] %v2098
        %2101 = vst [vmem:[#allocation4 + $0x38] sm:$0xff] %v2099
        %v2102 = vld [vmem:[#allocation2 + $0x3] sm:$0xff]
        %v2103 = vld [vmem:[#allocation2 + $0xb] sm:$0xff]
        %2104 = vst [vmem:[#allocation4 + $0x18] sm:$0xff] %v2102
        %2105 = vst [vmem:[#allocation4 + $0x40] sm:$0xff] %v2103
        %v2106 = vld [vmem:[#allocation2 + $0x4] sm:$0xff]
        %v2107 = vld [vmem:[#allocation2 + $0xc] sm:$0xff]
        %2108 = vst [vmem:[#allocation4 + $0x20] sm:$0xff] %v2106
        %2109 = vst [vmem:[#allocation4 + $0x48] sm:$0xff] %v2107
        %v2110 = vld [vmem:[#allocation4] sm:$0xff]
        %v2111 = vld [vmem:[#allocation4 + $0x8] sm:$0xff]
        %v2112 = vld [vmem:[#allocation4 + $0x10] sm:$0xff]
        %v2113 = vld [vmem:[#allocation4 + $0x18] sm:$0xff]
        %v2114 = vld [vmem:[#allocation4 + $0x20] sm:$0xff]
        %v2115 = vld [vmem:[#allocation4 + $0x28] sm:$0xff]
        %v2116 = vld [vmem:[#allocation4 + $0x30] sm:$0xff]
        %v2117 = vld [vmem:[#allocation4 + $0x38] sm:$0xff]
        %v2118 = vld [vmem:[#allocation4 + $0x40] sm:$0xff]
        %v2119 = vld [vmem:[#allocation4 + $0x48] sm:$0xff]
        %v2120 = vld [vmem:[#allocation13] sm:$0xff]
        %v2121 = vld [vmem:[#allocation13 + $0x8] sm:$0xff]
        %v2122 = vld [vmem:[#allocation13 + $0x10] sm:$0xff]
        %v2123 = vld [vmem:[#allocation13 + $0x18] sm:$0xff]
        %v2124 = vld [vmem:[#allocation13 + $0x20] sm:$0xff]
        %v2125 = vld [vmem:[#allocation13 + $0x28] sm:$0xff]
        %v2126 = vld [vmem:[#allocation13 + $0x30] sm:$0xff]
        %v2127 = vld [vmem:[#allocation13 + $0x38] sm:$0xff]
        %v2128 = vld [vmem:[#allocation13 + $0x40] sm:$0xff]
        %v2129 = vld [vmem:[#allocation13 + $0x48] sm:$0xff]
        %v2130 = vld [vmem:[#allocation13 + $0x50] sm:$0xff]
        %v2131 = vld [vmem:[#allocation13 + $0x58] sm:$0xff]
        %v2132 = vld [vmem:[#allocation13 + $0x60] sm:$0xff]
        %v2133 = vld [vmem:[#allocation13 + $0x68] sm:$0xff]
        %v2134 = vld [vmem:[#allocation13 + $0x70] sm:$0xff]
        %v2135 = vld [vmem:[#allocation13 + $0x78] sm:$0xff]
        %v2136 = vld [vmem:[#allocation13 + $0x80] sm:$0xff]
        %v2137 = vld [vmem:[#allocation13 + $0x88] sm:$0xff]
        %v2138 = vld [vmem:[#allocation13 + $0x90] sm:$0xff]
        %v2139 = vld [vmem:[#allocation13 + $0x98] sm:$0xff]
        %v2140 = vld [vmem:[#allocation13 + $0xa0] sm:$0xff]
        %v2141 = vld [vmem:[#allocation13 + $0xa8] sm:$0xff]
        %v2142 = vld [vmem:[#allocation13 + $0xb0] sm:$0xff]
        %v2143 = vld [vmem:[#allocation13 + $0xb8] sm:$0xff]
        %v2144 = vld [vmem:[#allocation13 + $0xc0] sm:$0xff]
        %v2145 = vld [vmem:[#allocation13 + $0xc8] sm:$0xff]
        %v2146 = vld [vmem:[#allocation13 + $0xd0] sm:$0xff]
        %v2147 = vld [vmem:[#allocation13 + $0xd8] sm:$0xff]
        %v2148 = vld [vmem:[#allocation13 + $0xe0] sm:$0xff]
        %v2149 = vld [vmem:[#allocation13 + $0xe8] sm:$0xff]
        %v2150 = vld [vmem:[#allocation13 + $0xf0] sm:$0xff]
        %v2151 = vld [vmem:[#allocation13 + $0xf8] sm:$0xff]
        %v2152 = vld [vmem:[#allocation13 + $0x100] sm:$0xff]
        %v2153 = vld [vmem:[#allocation13 + $0x108] sm:$0xff]
        %v2154 = vld [vmem:[#allocation13 + $0x110] sm:$0xff]
        %v2155 = vld [vmem:[#allocation13 + $0x118] sm:$0xff]
        %v2156 = vld [vmem:[#allocation13 + $0x120] sm:$0xff]
        %v2157 = vld [vmem:[#allocation13 + $0x128] sm:$0xff]
        %v2158 = vld [vmem:[#allocation13 + $0x130] sm:$0xff]
        %v2159 = vld [vmem:[#allocation13 + $0x138] sm:$0xff]
        %v2160 = vld [vmem:[#allocation13 + $0x140] sm:$0xff]
        %v2161 = vld [vmem:[#allocation13 + $0x148] sm:$0xff]
        %v2162 = vld [vmem:[#allocation13 + $0x150] sm:$0xff]
        %v2163 = vld [vmem:[#allocation13 + $0x158] sm:$0xff]
        %v2164 = vld [vmem:[#allocation13 + $0x160] sm:$0xff]
        %v2165 = vld [vmem:[#allocation13 + $0x168] sm:$0xff]
        %v2166 = vld [vmem:[#allocation13 + $0x170] sm:$0xff]
        %v2167 = vld [vmem:[#allocation13 + $0x178] sm:$0xff]
        %v2168 = vld [vmem:[#allocation13 + $0x180] sm:$0xff]
        %v2169 = vld [vmem:[#allocation13 + $0x188] sm:$0xff]
        %v2170 = vld [vmem:[#allocation13 + $0x190] sm:$0xff]
        %v2171 = vld [vmem:[#allocation13 + $0x198] sm:$0xff]
        %v2172 = vld [vmem:[#allocation13 + $0x1a0] sm:$0xff]
        %v2173 = vld [vmem:[#allocation13 + $0x1a8] sm:$0xff]
        %v2174 = vld [vmem:[#allocation13 + $0x1b0] sm:$0xff]
        %v2175 = vld [vmem:[#allocation13 + $0x1b8] sm:$0xff]
        %v2176 = vld [vmem:[#allocation13 + $0x1c0] sm:$0xff]
        %v2177 = vld [vmem:[#allocation13 + $0x1c8] sm:$0xff]
        %v2178 = vld [vmem:[#allocation13 + $0x1d0] sm:$0xff]
        %v2179 = vld [vmem:[#allocation13 + $0x1d8] sm:$0xff]
        %v2180 = vld [vmem:[#allocation13 + $0x1e0] sm:$0xff]
        %v2181 = vld [vmem:[#allocation13 + $0x1e8] sm:$0xff]
        %v2182 = vld [vmem:[#allocation13 + $0x1f0] sm:$0xff]
        %v2183 = vld [vmem:[#allocation13 + $0x1f8] sm:$0xff]
        %v2184 = vld [vmem:[#allocation13 + $0x200] sm:$0xff]
        %v2185 = vld [vmem:[#allocation13 + $0x208] sm:$0xff]
        %v2186 = vld [vmem:[#allocation13 + $0x210] sm:$0xff]
        %v2187 = vld [vmem:[#allocation13 + $0x218] sm:$0xff]
        %v2188 = vld [vmem:[#allocation13 + $0x220] sm:$0xff]
        %v2189 = vld [vmem:[#allocation13 + $0x228] sm:$0xff]
        %v2190 = vld [vmem:[#allocation13 + $0x230] sm:$0xff]
        %v2191 = vld [vmem:[#allocation13 + $0x238] sm:$0xff]
        %v2192 = vld [vmem:[#allocation13 + $0x240] sm:$0xff]
        %v2193 = vld [vmem:[#allocation13 + $0x248] sm:$0xff]
        %v2194 = vld [vmem:[#allocation13 + $0x250] sm:$0xff]
        %v2195 = vld [vmem:[#allocation13 + $0x258] sm:$0xff]
        %v2196 = vld [vmem:[#allocation13 + $0x260] sm:$0xff]
        %v2197 = vld [vmem:[#allocation13 + $0x268] sm:$0xff]
        %v2198 = vld [vmem:[#allocation13 + $0x270] sm:$0xff]
        %v2199 = vld [vmem:[#allocation13 + $0x278] sm:$0xff]
        %2200 = vmatprep.subr.mxu0 0.0
        %2201 = vmatpush1.msra.mxu0 %v2120
        %2202 = vmatprep.subr.mxu0 0.0
        %2203 = vmatpush1.msra.mxu0 %v2121
        %2204 = vmatprep.subr.mxu0 0.0
        %2205 = vmatpush1.msra.mxu0 %v2122
        %2206 = vmatprep.subr.mxu0 0.0
        %2207 = vmatpush1.msra.mxu0 %v2123
        %2208 = vmatprep.subr.mxu0 0.0
        %2209 = vmatpush1.msra.mxu0 %v2124
        %2210 = vmatprep.subr.mxu0 0.0
        %2211 = vmatpush1.msra.mxu0 %v2125
        %2212 = vmatprep.subr.mxu0 0.0
        %2213 = vmatpush1.msra.mxu0 %v2126
        %2214 = vmatprep.subr.mxu0 0.0
        %2215 = vmatpush1.msra.mxu0 %v2127
        %2216 = vmatprep.subr.mxu0 0.0
        %2217 = vmatpush1.msra.mxu0 %v2128
        %2218 = vmatprep.subr.mxu0 0.0
        %2219 = vmatpush1.msra.mxu0 %v2129
        %2220 = vmatprep.subr.mxu0 0.0
        %2221 = vmatpush1.msra.mxu0 %v2130
        %2222 = vmatprep.subr.mxu0 0.0
        %2223 = vmatpush1.msra.mxu0 %v2131
        %2224 = vmatprep.subr.mxu0 0.0
        %2225 = vmatpush1.msra.mxu0 %v2132
        %2226 = vmatprep.subr.mxu0 0.0
        %2227 = vmatpush1.msra.mxu0 %v2133
        %2228 = vmatprep.subr.mxu0 0.0
        %2229 = vmatpush1.msra.mxu0 %v2134
        %2230 = vmatprep.subr.mxu0 0.0
        %2231 = vmatpush1.msra.mxu0 %v2135
        %2232 = vmatprep.subr.mxu0 0.0
        %2233 = vmatpush1.msra.mxu0 %v2136
        %2234 = vmatprep.subr.mxu0 0.0
        %2235 = vmatpush1.msra.mxu0 %v2137
        %2236 = vmatprep.subr.mxu0 0.0
        %2237 = vmatpush1.msra.mxu0 %v2138
        %2238 = vmatprep.subr.mxu0 0.0
        %2239 = vmatpush1.msra.mxu0 %v2139
        %2240 = vmatprep.subr.mxu0 0.0
        %2241 = vmatpush1.msra.mxu0 %v2140
        %2242 = vmatprep.subr.mxu0 0.0
        %2243 = vmatpush1.msra.mxu0 %v2141
        %2244 = vmatprep.subr.mxu0 0.0
        %2245 = vmatpush1.msra.mxu0 %v2142
        %2246 = vmatprep.subr.mxu0 0.0
        %2247 = vmatpush1.msra.mxu0 %v2143
        %2248 = vmatprep.subr.mxu0 0.0
        %2249 = vmatpush1.msra.mxu0 %v2144
        %2250 = vmatprep.subr.mxu0 0.0
        %2251 = vmatpush1.msra.mxu0 %v2145
        %2252 = vmatprep.subr.mxu0 0.0
        %2253 = vmatpush1.msra.mxu0 %v2146
        %2254 = vmatprep.subr.mxu0 0.0
        %2255 = vmatpush1.msra.mxu0 %v2147
        %2256 = vmatprep.subr.mxu0 0.0
        %2257 = vmatpush1.msra.mxu0 %v2148
        %2258 = vmatprep.subr.mxu0 0.0
        %2259 = vmatpush1.msra.mxu0 %v2149
        %2260 = vmatprep.subr.mxu0 0.0
        %2261 = vmatpush1.msra.mxu0 %v2150
        %2262 = vmatprep.subr.mxu0 0.0
        %2263 = vmatpush1.msra.mxu0 %v2151
        %2264 = vmatprep.mubr.f32.mxu0 %v2111
        %2265 = vmatmul.mubr.f32.gmra.mrb[0].mxu0 %v2110
        %v2266 = vpop.f32.mrb[0].mxu0
        %v2267 = vadd.f32 0.0, %v2266
        %v2268 = vpop.f32.mrb[0].mxu0
        %2269 = vmatprep.mubr.f32.mxu0 %v2116
        %2270 = vmatmul.mubr.f32.gmra.mrb[0].mxu0 %v2115
        %v2271 = vpop.f32.mrb[0].mxu0
        %v2272 = vadd.f32 0.0, %v2271
        %v2273 = vpop.f32.mrb[0].mxu0
        %2274 = vdwg.mxu0
        %2275 = vmatprep.subr.mxu0 0.0
        %2276 = vmatpush1.msra.mxu0 %v2152
        %2277 = vmatprep.subr.mxu0 0.0
        %2278 = vmatpush1.msra.mxu0 %v2153
        %2279 = vmatprep.subr.mxu0 0.0
        %2280 = vmatpush1.msra.mxu0 %v2154
        %2281 = vmatprep.subr.mxu0 0.0
        %2282 = vmatpush1.msra.mxu0 %v2155
        %2283 = vmatprep.subr.mxu0 0.0
        %2284 = vmatpush1.msra.mxu0 %v2156
        %2285 = vmatprep.subr.mxu0 0.0
        %2286 = vmatpush1.msra.mxu0 %v2157
        %2287 = vmatprep.subr.mxu0 0.0
        %2288 = vmatpush1.msra.mxu0 %v2158
        %2289 = vmatprep.subr.mxu0 0.0
        %2290 = vmatpush1.msra.mxu0 %v2159
        %2291 = vmatprep.subr.mxu0 0.0
        %2292 = vmatpush1.msra.mxu0 %v2160
        %2293 = vmatprep.subr.mxu0 0.0
        %2294 = vmatpush1.msra.mxu0 %v2161
        %2295 = vmatprep.subr.mxu0 0.0
        %2296 = vmatpush1.msra.mxu0 %v2162
        %2297 = vmatprep.subr.mxu0 0.0
        %2298 = vmatpush1.msra.mxu0 %v2163
        %2299 = vmatprep.subr.mxu0 0.0
        %2300 = vmatpush1.msra.mxu0 %v2164
        %2301 = vmatprep.subr.mxu0 0.0
        %2302 = vmatpush1.msra.mxu0 %v2165
        %2303 = vmatprep.subr.mxu0 0.0
        %2304 = vmatpush1.msra.mxu0 %v2166
        %2305 = vmatprep.subr.mxu0 0.0
        %2306 = vmatpush1.msra.mxu0 %v2167
        %2307 = vmatprep.subr.mxu0 0.0
        %2308 = vmatpush1.msra.mxu0 %v2168
        %2309 = vmatprep.subr.mxu0 0.0
        %2310 = vmatpush1.msra.mxu0 %v2169
        %2311 = vmatprep.subr.mxu0 0.0
        %2312 = vmatpush1.msra.mxu0 %v2170
        %2313 = vmatprep.subr.mxu0 0.0
        %2314 = vmatpush1.msra.mxu0 %v2171
        %2315 = vmatprep.subr.mxu0 0.0
        %2316 = vmatpush1.msra.mxu0 %v2172
        %2317 = vmatprep.subr.mxu0 0.0
        %2318 = vmatpush1.msra.mxu0 %v2173
        %2319 = vmatprep.subr.mxu0 0.0
        %2320 = vmatpush1.msra.mxu0 %v2174
        %2321 = vmatprep.subr.mxu0 0.0
        %2322 = vmatpush1.msra.mxu0 %v2175
        %2323 = vmatprep.subr.mxu0 0.0
        %2324 = vmatpush1.msra.mxu0 %v2176
        %2325 = vmatprep.subr.mxu0 0.0
        %2326 = vmatpush1.msra.mxu0 %v2177
        %2327 = vmatprep.subr.mxu0 0.0
        %2328 = vmatpush1.msra.mxu0 %v2178
        %2329 = vmatprep.subr.mxu0 0.0
        %2330 = vmatpush1.msra.mxu0 %v2179
        %2331 = vmatprep.subr.mxu0 0.0
        %2332 = vmatpush1.msra.mxu0 %v2180
        %2333 = vmatprep.subr.mxu0 0.0
        %2334 = vmatpush1.msra.mxu0 %v2181
        %2335 = vmatprep.subr.mxu0 0.0
        %2336 = vmatpush1.msra.mxu0 %v2182
        %2337 = vmatprep.subr.mxu0 0.0
        %2338 = vmatpush1.msra.mxu0 %v2183
        %2339 = vmatprep.mubr.f32.mxu0 %v2113
        %2340 = vmatmul.mubr.f32.gmra.mrb[0].mxu0 %v2112
        %v2341 = vpop.f32.mrb[0].mxu0
        %v2342 = vadd.f32 %v2267, %v2341
        %v2343 = vpop.f32.mrb[0].mxu0
        %2344 = vmatprep.mubr.f32.mxu0 %v2118
        %2345 = vmatmul.mubr.f32.gmra.mrb[0].mxu0 %v2117
        %v2346 = vpop.f32.mrb[0].mxu0
        %v2347 = vadd.f32 %v2272, %v2346
        %v2348 = vpop.f32.mrb[0].mxu0
        %2349 = vdwg.mxu0
        %2350 = vmatprep.subr.mxu0 0.0
        %2351 = vmatpush1.msra.mxu0 %v2184
        %2352 = vmatprep.subr.mxu0 0.0
        %2353 = vmatpush1.msra.mxu0 %v2185
        %2354 = vmatprep.subr.mxu0 0.0
        %2355 = vmatpush1.msra.mxu0 %v2186
        %2356 = vmatprep.subr.mxu0 0.0
        %2357 = vmatpush1.msra.mxu0 %v2187
        %2358 = vmatprep.subr.mxu0 0.0
        %2359 = vmatpush1.msra.mxu0 %v2188
        %2360 = vmatprep.subr.mxu0 0.0
        %2361 = vmatpush1.msra.mxu0 %v2189
        %2362 = vmatprep.subr.mxu0 0.0
        %2363 = vmatpush1.msra.mxu0 %v2190
        %2364 = vmatprep.subr.mxu0 0.0
        %2365 = vmatpush1.msra.mxu0 %v2191
        %2366 = vmatprep.subr.mxu0 0.0
        %2367 = vmatpush1.msra.mxu0 %v2192
        %2368 = vmatprep.subr.mxu0 0.0
        %2369 = vmatpush1.msra.mxu0 %v2193
        %2370 = vmatprep.subr.mxu0 0.0
        %2371 = vmatpush1.msra.mxu0 %v2194
        %2372 = vmatprep.subr.mxu0 0.0
        %2373 = vmatpush1.msra.mxu0 %v2195
        %2374 = vmatprep.subr.mxu0 0.0
        %2375 = vmatpush1.msra.mxu0 %v2196
        %2376 = vmatprep.subr.mxu0 0.0
        %2377 = vmatpush1.msra.mxu0 %v2197
        %2378 = vmatprep.subr.mxu0 0.0
        %2379 = vmatpush1.msra.mxu0 %v2198
        %2380 = vmatprep.subr.mxu0 0.0
        %2381 = vmatpush1.msra.mxu0 %v2199
        %2382 = vmatprep.subr.mxu0 0.0
        %2383 = vmatpush1.msra.mxu0 0.0
        %2384 = vmatprep.subr.mxu0 0.0
        %2385 = vmatpush1.msra.mxu0 0.0
        %2386 = vmatprep.subr.mxu0 0.0
        %2387 = vmatpush1.msra.mxu0 0.0
        %2388 = vmatprep.subr.mxu0 0.0
        %2389 = vmatpush1.msra.mxu0 0.0
        %2390 = vmatprep.subr.mxu0 0.0
        %2391 = vmatpush1.msra.mxu0 0.0
        %2392 = vmatprep.subr.mxu0 0.0
        %2393 = vmatpush1.msra.mxu0 0.0
        %2394 = vmatprep.subr.mxu0 0.0
        %2395 = vmatpush1.msra.mxu0 0.0
        %2396 = vmatprep.subr.mxu0 0.0
        %2397 = vmatpush1.msra.mxu0 0.0
        %2398 = vmatprep.subr.mxu0 0.0
        %2399 = vmatpush1.msra.mxu0 0.0
        %2400 = vmatprep.subr.mxu0 0.0
        %2401 = vmatpush1.msra.mxu0 0.0
        %2402 = vmatprep.subr.mxu0 0.0
        %2403 = vmatpush1.msra.mxu0 0.0
        %2404 = vmatprep.subr.mxu0 0.0
        %2405 = vmatpush1.msra.mxu0 0.0
        %2406 = vmatprep.subr.mxu0 0.0
        %2407 = vmatpush1.msra.mxu0 0.0
        %2408 = vmatprep.subr.mxu0 0.0
        %2409 = vmatpush1.msra.mxu0 0.0
        %2410 = vmatprep.subr.mxu0 0.0
        %2411 = vmatpush1.msra.mxu0 0.0
        %2412 = vmatprep.subr.mxu0 0.0
        %2413 = vmatpush1.msra.mxu0 0.0
        %2414 = vmatprep.mubr.f32.mxu0 0.0
        %2415 = vmatmul.mubr.f32.gmra.mrb[0].mxu0 %v2114
        %v2416 = vpop.f32.mrb[0].mxu0
        %v2417 = vadd.f32 %v2342, %v2416
        %v2418 = vpop.f32.mrb[0].mxu0
        %2419 = vmatprep.mubr.f32.mxu0 0.0
        %2420 = vmatmul.mubr.f32.gmra.mrb[0].mxu0 %v2119
        %v2421 = vpop.f32.mrb[0].mxu0
        %v2422 = vadd.f32 %v2347, %v2421
        %v2423 = vpop.f32.mrb[0].mxu0
        %2424 = vdwg.mxu0
        %v2425 = vld [vmem:[%s15] sm:$0x1]
        %v2427 = vlaneseq
        %v2428 = vshrl.u32 %v2427, 7
        %v2429 = vsub.s32 0, %v2428
        %v2430 = vrot.slane %v2425, %v2429
        %v2432 = vmul.f32 %v2417, %v2430
        %v2433 = vmul.f32 %v2422, %v2430
        %v2434 = vld [vmem:[%s16] sm:$0x1]
        %v2436 = vlaneseq
        %v2437 = vshrl.u32 %v2436, 7
        %v2438 = vsub.s32 0, %v2437
        %v2439 = vrot.slane %v2434, %v2438
        %v2441 = vadd.f32 %v2432, %v2439
        %v2442 = vadd.f32 %v2433, %v2439
        %2443 = vst [vmem:[%s629] sm:$0xff] %v2441
        %2444 = vst [vmem:[%s629 + $0x8] sm:$0xff] %v2442
        %s2445 = sand.u32 %s409, 1
        %s2446 = scalar_lea.sflag [#allocation7], %s2445
        %s2447 = sand.u32 %s409, 1
        %s2448 = smul.addr %s2447, 16
        %s2449 = scalar_lea.vmem [#allocation14], %s2448
        // Predicated region
        $region109: #{tpu_custom_call.1} parent=87 // pred_check
          %p2450 = pneg %p419
        $region110: #{tpu_custom_call.1} parent=87 // pred_check_branch
          %2452 = sbr.rel (%p2450) target = $region112
        $region111: #{tpu_custom_call.1} parent=87 // pred_region
          %s2454 = ssub.s32 256, 256
          %2455 = vsyncadd %s2446, %s2454
          %s2456 = smul.addr %s34, 2
          %s2457 = smul.addr %s2456, 128
          %s2458 = scalar_lea.hbm %s17, %s2457
          %s2459 = sshll.u32 %s2449, 4
          %s2460 = int_to_ptr.vmem [resolvable:$true] %s2459
          %2465 = dma.vmem_to_hbm [thread:$0]  %s2460, 256, %s2458, %s2446, 128, 128, 8
        $region112: #{tpu_custom_call.1} parent=87 // pred_fallthru
          _
      $region88: #{tpu_custom_call.1} parent=5 // pred_fallthru
        _
      %p2466 = scmp.le.s32.totalorder 2, %s29
      // Predicated region
      $region113: #{tpu_custom_call.1} parent=5 // pred_check
        %p2467 = pneg %p2466
      $region114: #{tpu_custom_call.1} parent=5 // pred_check_branch
        %2469 = sbr.rel (%p2467) target = $region116
      $region115: #{tpu_custom_call.1} parent=5 // pred_region
        %s2470 = ssub.s32 %s29, 2
        // Predicated region
        $region117: #{tpu_custom_call.1} parent=115 // pred_check
          %p2471 = pneg %p425
        $region118: #{tpu_custom_call.1} parent=115 // pred_check_branch
          %2473 = sbr.rel (%p2471) target = $region120
        $region119: #{tpu_custom_call.1} parent=115 // pred_region
          %s2474 = sand.u32 %s410, 1
          %s2475 = scalar_lea.sflag [#allocation7], %s2474
          %s2476 = sand.u32 %s410, 1
          %s2477 = smul.addr %s2476, 16
          %s2478 = scalar_lea.vmem [#allocation14], %s2477
          %2479 = dma.done %s2475, 256
        $region120: #{tpu_custom_call.1} parent=115 // pred_fallthru
          _
      $region116: #{tpu_custom_call.1} parent=5 // pred_fallthru
        _
    $region6: #{tpu_custom_call.1} parent=1 // loop_footer
      %s33 = sadd.s32 1, %s29
    $region7: #{tpu_custom_call.1} parent=1 // loop_footer_branch
      %28 = sbr.rel target = $region3
    $region8: #{tpu_custom_call.1} parent=1 // loop_exit
      _
    %2480 = vsyncpa [#allocation6], 1
    %s2481 = scalar_lea.sflag [#allocation6], 1
    %2482 = vsyncpa %s2481, 1
    %2483 = vsyncpa [#allocation9], 1
    %2484 = vsyncpa [#allocation12], 1
    %2485 = vsyncpa [#allocation7], 1
    %s2486 = scalar_lea.sflag [#allocation7], 1
    %2487 = vsyncpa %s2486, 1

</llo_original>
